<compile_context>
chip_gen: v5e
topology: v5e:2x2
jax: 0.10.0
libtpu: 0.0.40
codegen_flags: <defaults>
</compile_context>

<pallas_src>
import jax
import jax.numpy as jnp
from jax import lax
from jax.experimental import pallas as pl
from jax.experimental.pallas import tpu as pltpu

EPS = 1e-5
LANE = 128
# bf16 MXU operands (f32 accumulation) — the production setting per the perf review.
MATMUL_DTYPE = jnp.bfloat16


def _conv3x3_im2col(xp_ref, w_ref):
    """3x3 stride-1 conv of an already halo-padded NHWC VMEM buffer.

    Builds the (N*H*W, 9*C) im2col patch (feature order kh, kw, c matching the HWIO
    weight reshaped to (9*C, C)) directly in the matmul dtype and runs ONE MXU matmul
    with f32 accumulation.
    """
    n, hp, wp, c = xp_ref.shape
    h, w = hp - 2, wp - 2
    # TODO(synk): generate the kw=1,2 taps with pltpu.roll along W (idle XLU slot) instead
    # of unaligned interior slices once roll on a non-multiple-of-8 sublane extent is
    # verified to lower cleanly.
    taps = [
        xp_ref[:, kh:kh + h, kw:kw + w, :].reshape(n * h * w, c).astype(w_ref.dtype)
        for kh in range(3) for kw in range(3)
    ]
    patch = jnp.concatenate(taps, axis=-1)                        # (N*H*W, 9*C)
    return jnp.dot(patch, w_ref[...], preferred_element_type=jnp.float32)


def _bn_scale_shift(y, gamma, beta):
    """Training-mode BatchNorm folded to a per-channel scale/shift (two-pass variance).

    y: (M, C) f32; gamma/beta: (1, C) f32. Stats over M = N*H*W, biased variance.
    """
    inv_m = 1.0 / y.shape[0]
    mean = jnp.sum(y, axis=0, keepdims=True) * inv_m              # (1, C)
    var = jnp.sum(jnp.square(y - mean), axis=0, keepdims=True) * inv_m
    scale = gamma * lax.rsqrt(var + EPS)                          # (1, C)
    shift = beta - mean * scale                                   # (1, C)
    return y * scale + shift


def residual_fused_kernel(x_ref, w1_ref, w2_ref, g1_ref, bt1_ref, g2_ref, bt2_ref,
                          out_ref, xp_ref):
    """out = relu(bn2(conv2(relu(bn1(conv1(x))))) + x), fully fused in VMEM.

    xp_ref is a single (N, H+2, W+2, C) padded scratch shared between conv1's padded x
    and conv2's padded y1 (identity shortcut => Cin == Cout).
    """
    n, h, w, c = x_ref.shape

    # ---- zero ONLY the 1-pixel halo border (once; it survives the y1 overwrite) ----
    zrow = jnp.zeros((n, 1, w + 2, c), xp_ref.dtype)
    zcol = jnp.zeros((n, h, 1, c), xp_ref.dtype)
    xp_ref[:, 0:1, :, :] = zrow
    xp_ref[:, h + 1:h + 2, :, :] = zrow
    xp_ref[:, 1:h + 1, 0:1, :] = zcol
    xp_ref[:, 1:h + 1, w + 1:w + 2, :] = zcol

    # ---- conv1 (single K=9*C MXU matmul) + BN1 (fused scale/shift) + ReLU ----
    xp_ref[:, 1:h + 1, 1:w + 1, :] = x_ref[...]
    y1 = _bn_scale_shift(_conv3x3_im2col(xp_ref, w1_ref), g1_ref[...], bt1_ref[...])
    y1 = jnp.maximum(y1, 0.0)                                     # (N*H*W, C) f32

    # ---- conv2 + BN2 + identity shortcut + ReLU (y1 never touches HBM) ----
    xp_ref[:, 1:h + 1, 1:w + 1, :] = y1.reshape(n, h, w, c)       # reuse the same scratch
    z = _bn_scale_shift(_conv3x3_im2col(xp_ref, w2_ref), g2_ref[...], bt2_ref[...])
    out_ref[...] = jnp.maximum(z + x_ref[...].reshape(n * h * w, c), 0.0)


def _pad_channels(a, c_pad):
    """Zero-pad the last (channel) axis of `a` up to c_pad lanes."""
    extra = c_pad - a.shape[-1]
    if extra == 0:
        return a
    return jnp.pad(a, [(0, 0)] * (a.ndim - 1) + [(0, extra)])


def residual_forward(x_nchw, params, matmul_dtype=MATMUL_DTYPE):
    """Pallas implementation of Residual.forward (default config, identity shortcut)."""
    x = jnp.transpose(x_nchw, (0, 2, 3, 1)).astype(jnp.float32)   # NCHW -> NHWC
    n, h, w, cin = x.shape
    cout = params["w1"].shape[-1]
    assert cin == cout, "identity-shortcut path requires Cin == Cout"

    # Lane-dense channel padding (real ResNet stages already have C >= 128; toy C=4 is
    # padded so the MXU N-dim and the output vst run full-width, then sliced back off).
    c = pl.cdiv(cout, LANE) * LANE

    def prep_w(w_hwio):                                           # HWIO -> (9*C, C)
        wp = jnp.zeros((3, 3, c, c), jnp.float32)
        wp = wp.at[:, :, :w_hwio.shape[2], :w_hwio.shape[3]].set(w_hwio)
        return wp.reshape(9 * c, c).astype(matmul_dtype)

    xp = _pad_channels(x, c)                                      # (N,H,W,C) f32
    w1 = prep_w(params["w1"])
    w2 = prep_w(params["w2"])
    # conv biases b1/b2 intentionally dropped: a per-channel constant added before
    # training-mode BatchNorm cancels exactly (the batch mean absorbs it).
    g1, bt1, g2, bt2 = (_pad_channels(params[k].reshape(1, -1).astype(jnp.float32), c)
                        for k in ("g1", "bt1", "g2", "bt2"))

    out_flat = pl.pallas_call(
        residual_fused_kernel,
        out_shape=jax.ShapeDtypeStruct((n * h * w, c), jnp.float32),
        in_specs=[pl.BlockSpec(memory_space=pltpu.MemorySpace.VMEM) for _ in range(7)],
        out_specs=pl.BlockSpec(memory_space=pltpu.MemorySpace.VMEM),
        scratch_shapes=[pltpu.VMEM((n, h + 2, w + 2, c), jnp.float32)],  # shared padded buf
        # 48 MiB fits v7x's 64 MiB physical VMEM; v5e/v6e can go toward ~100 MiB once the
        # row-tiled grid uses larger spatial tiles.
        compiler_params=pltpu.CompilerParams(vmem_limit_bytes=48 * 1024 * 1024),
    )(xp, w1, w2, g1, bt1, g2, bt2)

    out = out_flat.reshape(n, h, w, c)[:, :, :, :cout]            # drop lane padding
    return jnp.transpose(out, (0, 3, 1, 2))                       # NHWC -> NCHW


def residual_reference(x_nchw, params):
    """Pure-JAX f32 reference (mirrors the PyTorch forward) for validation."""
    def conv(x, w_hwio, b, pad):
        w_oihw = jnp.transpose(w_hwio, (3, 2, 0, 1))
        y = lax.conv_general_dilated(
            x, w_oihw, window_strides=(1, 1), padding=((pad, pad), (pad, pad)),
            dimension_numbers=("NCHW", "OIHW", "NCHW"))
        return y + b.reshape(1, -1, 1, 1)

    def bn(y, g, bt):
        mean = jnp.mean(y, axis=(0, 2, 3), keepdims=True)
        var = jnp.mean(jnp.square(y - mean), axis=(0, 2, 3), keepdims=True)
        return (y - mean) / jnp.sqrt(var + EPS) * g.reshape(1, -1, 1, 1) + bt.reshape(1, -1, 1, 1)

    y = jnp.maximum(bn(conv(x_nchw, params["w1"], params["b1"], 1),
                       params["g1"], params["bt1"]), 0.0)
    y = bn(conv(y, params["w2"], params["b2"], 1), params["g2"], params["bt2"])
    return jnp.maximum(y + x_nchw, 0.0)


if __name__ == "__main__":
    # Residual(input_channels=4, num_channels=4)  (defaults: use_1_1_conv=False, stride=(1,1))
    N, C, H, W = 2, 4, 16, 16
    key = jax.random.PRNGKey(0)
    ks = jax.random.split(key, 9)

    x = jax.random.normal(ks[0], (N, C, H, W), jnp.float32)
    params = {
        "w1": 0.1 * jax.random.normal(ks[1], (3, 3, C, C), jnp.float32),   # conv1 weight (HWIO)
        "b1": 0.1 * jax.random.normal(ks[2], (C,), jnp.float32),           # conv1 bias
        "g1": 1.0 + 0.1 * jax.random.normal(ks[3], (C,), jnp.float32),     # bn1 gamma
        "bt1": 0.1 * jax.random.normal(ks[4], (C,), jnp.float32),          # bn1 beta
        "w2": 0.1 * jax.random.normal(ks[5], (3, 3, C, C), jnp.float32),   # conv2 weight (HWIO)
        "b2": 0.1 * jax.random.normal(ks[6], (C,), jnp.float32),           # conv2 bias
        "g2": 1.0 + 0.1 * jax.random.normal(ks[7], (C,), jnp.float32),     # bn2 gamma
        "bt2": 0.1 * jax.random.normal(ks[8], (C,), jnp.float32),          # bn2 beta
    }

    ref = jax.block_until_ready(residual_reference(x, params))

    # (1) f32-operand path: tight functional check against the f32 reference.
    out_f32 = jax.block_until_ready(residual_forward(x, params, matmul_dtype=jnp.float32))
    assert out_f32.shape == (N, C, H, W), out_f32.shape
    assert jnp.allclose(out_f32, ref, atol=2e-3, rtol=2e-3), \
        float(jnp.max(jnp.abs(out_f32 - ref)))

    # (2) default bf16-MXU path (production setting per perf review): bf16 operands perturb
    # the batch-norm statistics vs. the f32 reference, so the tolerance is looser.
    out_bf16 = jax.block_until_ready(residual_forward(x, params))
    assert out_bf16.shape == (N, C, H, W), out_bf16.shape
    assert jnp.allclose(out_bf16, ref, atol=1e-1, rtol=1e-1), \
        float(jnp.max(jnp.abs(out_bf16 - ref)))

    print("KERNEL_OK")
</pallas_src>

<mosaic_0001>
module attributes {stable_mosaic.version = 11 : i64} {
  func.func @residual_fused_kernel(%arg0: memref<2x16x16x128xf32, #tpu.memory_space<vmem>>, %arg1: memref<1152x128xf32, #tpu.memory_space<vmem>>, %arg2: memref<1152x128xf32, #tpu.memory_space<vmem>>, %arg3: memref<1x128xf32, #tpu.memory_space<vmem>>, %arg4: memref<1x128xf32, #tpu.memory_space<vmem>>, %arg5: memref<1x128xf32, #tpu.memory_space<vmem>>, %arg6: memref<1x128xf32, #tpu.memory_space<vmem>>, %arg7: memref<512x128xf32, #tpu.memory_space<vmem>>, %arg8: memref<2x18x18x128xf32, #tpu.memory_space<vmem>>) attributes {dimension_semantics = [], scalar_prefetch = 0 : i64, scratch_operands = 1 : i64, tpu.core_type = #tpu.core_type<tc>} {
    %cst = arith.constant 0.000000e+00 : f32
    %0 = vector.broadcast %cst : f32 to vector<2x1x18x128xf32>
    %cst_0 = arith.constant 0.000000e+00 : f32
    %1 = vector.broadcast %cst_0 : f32 to vector<2x16x1x128xf32>
    %c0 = arith.constant 0 : index
    %c0_1 = arith.constant 0 : index
    %c0_2 = arith.constant 0 : index
    %c0_3 = arith.constant 0 : index
    %2 = vector.load %arg8[%c0, %c0_1, %c0_2, %c0_3] : memref<2x18x18x128xf32, #tpu.memory_space<vmem>>, vector<2x1x18x128xf32>
    tpu.vector_store %arg8[%c0, %c0_1, %c0_2, %c0_3], %0 {strides = array<i32>} : memref<2x18x18x128xf32, #tpu.memory_space<vmem>>, vector<2x1x18x128xf32>,
    %c0_4 = arith.constant 0 : index
    %c17 = arith.constant 17 : index
    %c0_5 = arith.constant 0 : index
    %c0_6 = arith.constant 0 : index
    %3 = vector.load %arg8[%c0_4, %c17, %c0_5, %c0_6] : memref<2x18x18x128xf32, #tpu.memory_space<vmem>>, vector<2x1x18x128xf32>
    tpu.vector_store %arg8[%c0_4, %c17, %c0_5, %c0_6], %0 {strides = array<i32>} : memref<2x18x18x128xf32, #tpu.memory_space<vmem>>, vector<2x1x18x128xf32>,
    %c0_7 = arith.constant 0 : index
    %c1 = arith.constant 1 : index
    %c0_8 = arith.constant 0 : index
    %c0_9 = arith.constant 0 : index
    %4 = vector.load %arg8[%c0_7, %c1, %c0_8, %c0_9] : memref<2x18x18x128xf32, #tpu.memory_space<vmem>>, vector<2x16x1x128xf32>
    tpu.vector_store %arg8[%c0_7, %c1, %c0_8, %c0_9], %1 {strides = array<i32>} : memref<2x18x18x128xf32, #tpu.memory_space<vmem>>, vector<2x16x1x128xf32>,
    %c0_10 = arith.constant 0 : index
    %c1_11 = arith.constant 1 : index
    %c17_12 = arith.constant 17 : index
    %c0_13 = arith.constant 0 : index
    %5 = vector.load %arg8[%c0_10, %c1_11, %c17_12, %c0_13] : memref<2x18x18x128xf32, #tpu.memory_space<vmem>>, vector<2x16x1x128xf32>
    tpu.vector_store %arg8[%c0_10, %c1_11, %c17_12, %c0_13], %1 {strides = array<i32>} : memref<2x18x18x128xf32, #tpu.memory_space<vmem>>, vector<2x16x1x128xf32>,
    %c0_14 = arith.constant 0 : index
    %c0_15 = arith.constant 0 : index
    %c0_16 = arith.constant 0 : index
    %c0_17 = arith.constant 0 : index
    %6 = vector.load %arg0[%c0_14, %c0_15, %c0_16, %c0_17] : memref<2x16x16x128xf32, #tpu.memory_space<vmem>>, vector<2x16x16x128xf32>
    %c0_18 = arith.constant 0 : index
    %c1_19 = arith.constant 1 : index
    %c1_20 = arith.constant 1 : index
    %c0_21 = arith.constant 0 : index
    %7 = vector.load %arg8[%c0_18, %c1_19, %c1_20, %c0_21] : memref<2x18x18x128xf32, #tpu.memory_space<vmem>>, vector<2x16x16x128xf32>
    tpu.vector_store %arg8[%c0_18, %c1_19, %c1_20, %c0_21], %6 {strides = array<i32>} : memref<2x18x18x128xf32, #tpu.memory_space<vmem>>, vector<2x16x16x128xf32>,
    %c0_22 = arith.constant 0 : index
    %c0_23 = arith.constant 0 : index
    %c0_24 = arith.constant 0 : index
    %c0_25 = arith.constant 0 : index
    %8 = vector.load %arg8[%c0_22, %c0_23, %c0_24, %c0_25] : memref<2x18x18x128xf32, #tpu.memory_space<vmem>>, vector<2x16x16x128xf32>
    %9 = vector.shape_cast %8 : vector<2x16x16x128xf32> to vector<512x128xf32>
    %c0_26 = arith.constant 0 : index
    %c0_27 = arith.constant 0 : index
    %c1_28 = arith.constant 1 : index
    %c0_29 = arith.constant 0 : index
    %10 = vector.load %arg8[%c0_26, %c0_27, %c1_28, %c0_29] : memref<2x18x18x128xf32, #tpu.memory_space<vmem>>, vector<2x16x16x128xf32>
    %11 = vector.shape_cast %10 : vector<2x16x16x128xf32> to vector<512x128xf32>
    %c0_30 = arith.constant 0 : index
    %c0_31 = arith.constant 0 : index
    %c2 = arith.constant 2 : index
    %c0_32 = arith.constant 0 : index
    %12 = vector.load %arg8[%c0_30, %c0_31, %c2, %c0_32] : memref<2x18x18x128xf32, #tpu.memory_space<vmem>>, vector<2x16x16x128xf32>
    %13 = vector.shape_cast %12 : vector<2x16x16x128xf32> to vector<512x128xf32>
    %c0_33 = arith.constant 0 : index
    %c1_34 = arith.constant 1 : index
    %c0_35 = arith.constant 0 : index
    %c0_36 = arith.constant 0 : index
    %14 = vector.load %arg8[%c0_33, %c1_34, %c0_35, %c0_36] : memref<2x18x18x128xf32, #tpu.memory_space<vmem>>, vector<2x16x16x128xf32>
    %15 = vector.shape_cast %14 : vector<2x16x16x128xf32> to vector<512x128xf32>
    %c0_37 = arith.constant 0 : index
    %c1_38 = arith.constant 1 : index
    %c1_39 = arith.constant 1 : index
    %c0_40 = arith.constant 0 : index
    %16 = vector.load %arg8[%c0_37, %c1_38, %c1_39, %c0_40] : memref<2x18x18x128xf32, #tpu.memory_space<vmem>>, vector<2x16x16x128xf32>
    %17 = vector.shape_cast %16 : vector<2x16x16x128xf32> to vector<512x128xf32>
    %c0_41 = arith.constant 0 : index
    %c1_42 = arith.constant 1 : index
    %c2_43 = arith.constant 2 : index
    %c0_44 = arith.constant 0 : index
    %18 = vector.load %arg8[%c0_41, %c1_42, %c2_43, %c0_44] : memref<2x18x18x128xf32, #tpu.memory_space<vmem>>, vector<2x16x16x128xf32>
    %19 = vector.shape_cast %18 : vector<2x16x16x128xf32> to vector<512x128xf32>
    %c0_45 = arith.constant 0 : index
    %c2_46 = arith.constant 2 : index
    %c0_47 = arith.constant 0 : index
    %c0_48 = arith.constant 0 : index
    %20 = vector.load %arg8[%c0_45, %c2_46, %c0_47, %c0_48] : memref<2x18x18x128xf32, #tpu.memory_space<vmem>>, vector<2x16x16x128xf32>
    %21 = vector.shape_cast %20 : vector<2x16x16x128xf32> to vector<512x128xf32>
    %c0_49 = arith.constant 0 : index
    %c2_50 = arith.constant 2 : index
    %c1_51 = arith.constant 1 : index
    %c0_52 = arith.constant 0 : index
    %22 = vector.load %arg8[%c0_49, %c2_50, %c1_51, %c0_52] : memref<2x18x18x128xf32, #tpu.memory_space<vmem>>, vector<2x16x16x128xf32>
    %23 = vector.shape_cast %22 : vector<2x16x16x128xf32> to vector<512x128xf32>
    %c0_53 = arith.constant 0 : index
    %c2_54 = arith.constant 2 : index
    %c2_55 = arith.constant 2 : index
    %c0_56 = arith.constant 0 : index
    %24 = vector.load %arg8[%c0_53, %c2_54, %c2_55, %c0_56] : memref<2x18x18x128xf32, #tpu.memory_space<vmem>>, vector<2x16x16x128xf32>
    %25 = vector.shape_cast %24 : vector<2x16x16x128xf32> to vector<512x128xf32>
    %26 = tpu.concatenate %9, %11, %13, %15, %17, %19, %21, %23, %25 in 1 : vector<512x128xf32>, vector<512x128xf32>, vector<512x128xf32>, vector<512x128xf32>, vector<512x128xf32>, vector<512x128xf32>, vector<512x128xf32>, vector<512x128xf32>, vector<512x128xf32> -> vector<512x1152xf32>
    %c0_57 = arith.constant 0 : index
    %c0_58 = arith.constant 0 : index
    %27 = vector.load %arg1[%c0_57, %c0_58] : memref<1152x128xf32, #tpu.memory_space<vmem>>, vector<1152x128xf32>
    %cst_59 = arith.constant dense<0.000000e+00> : vector<512x128xf32>
    %28 = tpu.matmul %26, %27, %cst_59 {dimension_numbers = #tpu.dot_dimension_numbers<[1], [0], [0], [1], [0, 0, 1, 1], [], []>} : vector<512x1152xf32>, vector<1152x128xf32>, vector<512x128xf32> -> vector<512x128xf32>
    %c0_60 = arith.constant 0 : index
    %c0_61 = arith.constant 0 : index
    %29 = vector.load %arg3[%c0_60, %c0_61] : memref<1x128xf32, #tpu.memory_space<vmem>>, vector<1x128xf32>
    %c0_62 = arith.constant 0 : index
    %c0_63 = arith.constant 0 : index
    %30 = vector.load %arg4[%c0_62, %c0_63] : memref<1x128xf32, #tpu.memory_space<vmem>>, vector<1x128xf32>
    %cst_64 = arith.constant dense<0.000000e+00> : vector<128xf32>
    %31 = vector.multi_reduction <add>, %28, %cst_64 [0] : vector<512x128xf32> to vector<128xf32>
    %32 = vector.shape_cast %31 : vector<128xf32> to vector<1x128xf32>
    %cst_65 = arith.constant 0.001953125 : f32
    %33 = vector.broadcast %cst_65 : f32 to vector<1x128xf32>
    %34 = arith.mulf %32, %33 : vector<1x128xf32>
    %35 = vector.broadcast %34 : vector<1x128xf32> to vector<512x128xf32>
    %36 = arith.subf %28, %35 : vector<512x128xf32>
    %37 = arith.mulf %36, %36 : vector<512x128xf32>
    %cst_66 = arith.constant dense<0.000000e+00> : vector<128xf32>
    %38 = vector.multi_reduction <add>, %37, %cst_66 [0] : vector<512x128xf32> to vector<128xf32>
    %39 = vector.shape_cast %38 : vector<128xf32> to vector<1x128xf32>
    %cst_67 = arith.constant 0.001953125 : f32
    %40 = vector.broadcast %cst_67 : f32 to vector<1x128xf32>
    %41 = arith.mulf %39, %40 : vector<1x128xf32>
    %cst_68 = arith.constant 9.99999974E-6 : f32
    %42 = vector.broadcast %cst_68 : f32 to vector<1x128xf32>
    %43 = arith.addf %41, %42 : vector<1x128xf32>
    %44 = math.rsqrt %43 : vector<1x128xf32>
    %45 = arith.mulf %29, %44 : vector<1x128xf32>
    %46 = arith.mulf %34, %45 : vector<1x128xf32>
    %47 = arith.subf %30, %46 : vector<1x128xf32>
    %48 = vector.broadcast %45 : vector<1x128xf32> to vector<512x128xf32>
    %49 = arith.mulf %28, %48 : vector<512x128xf32>
    %50 = vector.broadcast %47 : vector<1x128xf32> to vector<512x128xf32>
    %51 = arith.addf %49, %50 : vector<512x128xf32>
    %cst_69 = arith.constant 0.000000e+00 : f32
    %52 = vector.broadcast %cst_69 : f32 to vector<512x128xf32>
    %53 = arith.maximumf %51, %52 : vector<512x128xf32>
    %54 = vector.shape_cast %53 : vector<512x128xf32> to vector<2x16x16x128xf32>
    %c0_70 = arith.constant 0 : index
    %c1_71 = arith.constant 1 : index
    %c1_72 = arith.constant 1 : index
    %c0_73 = arith.constant 0 : index
    %55 = vector.load %arg8[%c0_70, %c1_71, %c1_72, %c0_73] : memref<2x18x18x128xf32, #tpu.memory_space<vmem>>, vector<2x16x16x128xf32>
    tpu.vector_store %arg8[%c0_70, %c1_71, %c1_72, %c0_73], %54 {strides = array<i32>} : memref<2x18x18x128xf32, #tpu.memory_space<vmem>>, vector<2x16x16x128xf32>,
    %c0_74 = arith.constant 0 : index
    %c0_75 = arith.constant 0 : index
    %c0_76 = arith.constant 0 : index
    %c0_77 = arith.constant 0 : index
    %56 = vector.load %arg8[%c0_74, %c0_75, %c0_76, %c0_77] : memref<2x18x18x128xf32, #tpu.memory_space<vmem>>, vector<2x16x16x128xf32>
    %57 = vector.shape_cast %56 : vector<2x16x16x128xf32> to vector<512x128xf32>
    %c0_78 = arith.constant 0 : index
    %c0_79 = arith.constant 0 : index
    %c1_80 = arith.constant 1 : index
    %c0_81 = arith.constant 0 : index
    %58 = vector.load %arg8[%c0_78, %c0_79, %c1_80, %c0_81] : memref<2x18x18x128xf32, #tpu.memory_space<vmem>>, vector<2x16x16x128xf32>
    %59 = vector.shape_cast %58 : vector<2x16x16x128xf32> to vector<512x128xf32>
    %c0_82 = arith.constant 0 : index
    %c0_83 = arith.constant 0 : index
    %c2_84 = arith.constant 2 : index
    %c0_85 = arith.constant 0 : index
    %60 = vector.load %arg8[%c0_82, %c0_83, %c2_84, %c0_85] : memref<2x18x18x128xf32, #tpu.memory_space<vmem>>, vector<2x16x16x128xf32>
    %61 = vector.shape_cast %60 : vector<2x16x16x128xf32> to vector<512x128xf32>
    %c0_86 = arith.constant 0 : index
    %c1_87 = arith.constant 1 : index
    %c0_88 = arith.constant 0 : index
    %c0_89 = arith.constant 0 : index
    %62 = vector.load %arg8[%c0_86, %c1_87, %c0_88, %c0_89] : memref<2x18x18x128xf32, #tpu.memory_space<vmem>>, vector<2x16x16x128xf32>
    %63 = vector.shape_cast %62 : vector<2x16x16x128xf32> to vector<512x128xf32>
    %c0_90 = arith.constant 0 : index
    %c1_91 = arith.constant 1 : index
    %c1_92 = arith.constant 1 : index
    %c0_93 = arith.constant 0 : index
    %64 = vector.load %arg8[%c0_90, %c1_91, %c1_92, %c0_93] : memref<2x18x18x128xf32, #tpu.memory_space<vmem>>, vector<2x16x16x128xf32>
    %65 = vector.shape_cast %64 : vector<2x16x16x128xf32> to vector<512x128xf32>
    %c0_94 = arith.constant 0 : index
    %c1_95 = arith.constant 1 : index
    %c2_96 = arith.constant 2 : index
    %c0_97 = arith.constant 0 : index
    %66 = vector.load %arg8[%c0_94, %c1_95, %c2_96, %c0_97] : memref<2x18x18x128xf32, #tpu.memory_space<vmem>>, vector<2x16x16x128xf32>
    %67 = vector.shape_cast %66 : vector<2x16x16x128xf32> to vector<512x128xf32>
    %c0_98 = arith.constant 0 : index
    %c2_99 = arith.constant 2 : index
    %c0_100 = arith.constant 0 : index
    %c0_101 = arith.constant 0 : index
    %68 = vector.load %arg8[%c0_98, %c2_99, %c0_100, %c0_101] : memref<2x18x18x128xf32, #tpu.memory_space<vmem>>, vector<2x16x16x128xf32>
    %69 = vector.shape_cast %68 : vector<2x16x16x128xf32> to vector<512x128xf32>
    %c0_102 = arith.constant 0 : index
    %c2_103 = arith.constant 2 : index
    %c1_104 = arith.constant 1 : index
    %c0_105 = arith.constant 0 : index
    %70 = vector.load %arg8[%c0_102, %c2_103, %c1_104, %c0_105] : memref<2x18x18x128xf32, #tpu.memory_space<vmem>>, vector<2x16x16x128xf32>
    %71 = vector.shape_cast %70 : vector<2x16x16x128xf32> to vector<512x128xf32>
    %c0_106 = arith.constant 0 : index
    %c2_107 = arith.constant 2 : index
    %c2_108 = arith.constant 2 : index
    %c0_109 = arith.constant 0 : index
    %72 = vector.load %arg8[%c0_106, %c2_107, %c2_108, %c0_109] : memref<2x18x18x128xf32, #tpu.memory_space<vmem>>, vector<2x16x16x128xf32>
    %73 = vector.shape_cast %72 : vector<2x16x16x128xf32> to vector<512x128xf32>
    %74 = tpu.concatenate %57, %59, %61, %63, %65, %67, %69, %71, %73 in 1 : vector<512x128xf32>, vector<512x128xf32>, vector<512x128xf32>, vector<512x128xf32>, vector<512x128xf32>, vector<512x128xf32>, vector<512x128xf32>, vector<512x128xf32>, vector<512x128xf32> -> vector<512x1152xf32>
    %c0_110 = arith.constant 0 : index
    %c0_111 = arith.constant 0 : index
    %75 = vector.load %arg2[%c0_110, %c0_111] : memref<1152x128xf32, #tpu.memory_space<vmem>>, vector<1152x128xf32>
    %cst_112 = arith.constant dense<0.000000e+00> : vector<512x128xf32>
    %76 = tpu.matmul %74, %75, %cst_112 {dimension_numbers = #tpu.dot_dimension_numbers<[1], [0], [0], [1], [0, 0, 1, 1], [], []>} : vector<512x1152xf32>, vector<1152x128xf32>, vector<512x128xf32> -> vector<512x128xf32>
    %c0_113 = arith.constant 0 : index
    %c0_114 = arith.constant 0 : index
    %77 = vector.load %arg5[%c0_113, %c0_114] : memref<1x128xf32, #tpu.memory_space<vmem>>, vector<1x128xf32>
    %c0_115 = arith.constant 0 : index
    %c0_116 = arith.constant 0 : index
    %78 = vector.load %arg6[%c0_115, %c0_116] : memref<1x128xf32, #tpu.memory_space<vmem>>, vector<1x128xf32>
    %cst_117 = arith.constant dense<0.000000e+00> : vector<128xf32>
    %79 = vector.multi_reduction <add>, %76, %cst_117 [0] : vector<512x128xf32> to vector<128xf32>
    %80 = vector.shape_cast %79 : vector<128xf32> to vector<1x128xf32>
    %cst_118 = arith.constant 0.001953125 : f32
    %81 = vector.broadcast %cst_118 : f32 to vector<1x128xf32>
    %82 = arith.mulf %80, %81 : vector<1x128xf32>
    %83 = vector.broadcast %82 : vector<1x128xf32> to vector<512x128xf32>
    %84 = arith.subf %76, %83 : vector<512x128xf32>
    %85 = arith.mulf %84, %84 : vector<512x128xf32>
    %cst_119 = arith.constant dense<0.000000e+00> : vector<128xf32>
    %86 = vector.multi_reduction <add>, %85, %cst_119 [0] : vector<512x128xf32> to vector<128xf32>
    %87 = vector.shape_cast %86 : vector<128xf32> to vector<1x128xf32>
    %cst_120 = arith.constant 0.001953125 : f32
    %88 = vector.broadcast %cst_120 : f32 to vector<1x128xf32>
    %89 = arith.mulf %87, %88 : vector<1x128xf32>
    %cst_121 = arith.constant 9.99999974E-6 : f32
    %90 = vector.broadcast %cst_121 : f32 to vector<1x128xf32>
    %91 = arith.addf %89, %90 : vector<1x128xf32>
    %92 = math.rsqrt %91 : vector<1x128xf32>
    %93 = arith.mulf %77, %92 : vector<1x128xf32>
    %94 = arith.mulf %82, %93 : vector<1x128xf32>
    %95 = arith.subf %78, %94 : vector<1x128xf32>
    %96 = vector.broadcast %93 : vector<1x128xf32> to vector<512x128xf32>
    %97 = arith.mulf %76, %96 : vector<512x128xf32>
    %98 = vector.broadcast %95 : vector<1x128xf32> to vector<512x128xf32>
    %99 = arith.addf %97, %98 : vector<512x128xf32>
    %c0_122 = arith.constant 0 : index
    %c0_123 = arith.constant 0 : index
    %c0_124 = arith.constant 0 : index
    %c0_125 = arith.constant 0 : index
    %100 = vector.load %arg0[%c0_122, %c0_123, %c0_124, %c0_125] : memref<2x16x16x128xf32, #tpu.memory_space<vmem>>, vector<2x16x16x128xf32>
    %101 = vector.shape_cast %100 : vector<2x16x16x128xf32> to vector<512x128xf32>
    %102 = arith.addf %99, %101 : vector<512x128xf32>
    %cst_126 = arith.constant 0.000000e+00 : f32
    %103 = vector.broadcast %cst_126 : f32 to vector<512x128xf32>
    %104 = arith.maximumf %102, %103 : vector<512x128xf32>
    %c0_127 = arith.constant 0 : index
    %c0_128 = arith.constant 0 : index
    %105 = vector.load %arg7[%c0_127, %c0_128] : memref<512x128xf32, #tpu.memory_space<vmem>>, vector<512x128xf32>
    tpu.vector_store %arg7[%c0_127, %c0_128], %104 {strides = array<i32>} : memref<512x128xf32, #tpu.memory_space<vmem>>, vector<512x128xf32>,
    return
  }
}

</mosaic_0001>

<llo_original>
// kernel: tpu_custom_call.1
$region0: #{tpu_custom_call.1}
  #allocation0 [shape = 'u32[]', space=smem, size = 0x4, offset = 0x4, fixed_abs, tag = 'smem constant byte address 0x4 - core index']
  #allocation1 [shape = 'u32[72,128]{1,0:T(1,128)}', space=vmem, size = 0x9000, scoped, tag = 'internal scratch']
  #allocation2 [shape = 'f32[2,18,18,128]{3,2,1,0:T(8,128)}', space=vmem, size = 0x6c000, scoped, tag = 'scratch operand']
  %s0 = inlined_call_operand.hbm [shape: f32[2,16,16,128], index: 0, kind: input, shape index: {}]
  %s1 = inlined_call_operand.hbm [shape: f32[1152,128], index: 1, kind: input, shape index: {}]
  %s2 = inlined_call_operand.hbm [shape: f32[1152,128], index: 2, kind: input, shape index: {}]
  %s3 = inlined_call_operand.vmem [shape: f32[1,128], index: 3, kind: input, shape index: {}]
  %s4 = inlined_call_operand.vmem [shape: f32[1,128], index: 4, kind: input, shape index: {}]
  %s5 = inlined_call_operand.vmem [shape: f32[1,128], index: 5, kind: input, shape index: {}]
  %s6 = inlined_call_operand.vmem [shape: f32[1,128], index: 6, kind: input, shape index: {}]
  %s7 = inlined_call_operand.hbm [shape: f32[512,128], index: 7, kind: output, shape index: {}]
  %s8 = sld [smem:[#allocation0]]
  $region50: #{tpu_custom_call.1} parent=0
    _
  %s10 = ssub.s32 1, %s8
  %s11 = scalar_select 0, %s10, %s8
  $region1: #{tpu_custom_call.1} parent=0
    #allocation3 [shape = 'u8[262144]{0}', space=vmem, size = 0x40000, scoped, tag = 'input window, operand 0, single buffered']
    #allocation4 [shape = 's32[1]{0}', space=sflag, size = 0x4, scoped, tag = 'scoped memory for tpu_custom_call.1']
    #allocation5 [shape = 's32[1]{0}', space=sflag, size = 0x4, scoped, tag = 'scoped memory for tpu_custom_call.1']
    #allocation6 [shape = 'u8[589824]{0}', space=vmem, size = 0x90000, scoped, tag = 'input window, operand 1, single buffered']
    #allocation7 [shape = 's32[1]{0}', space=sflag, size = 0x4, scoped, tag = 'scoped memory for tpu_custom_call.1']
    #allocation8 [shape = 'u8[589824]{0}', space=vmem, size = 0x90000, scoped, tag = 'input window, operand 2, single buffered']
    #allocation9 [shape = 'u8[262144]{0}', space=vmem, size = 0x40000, scoped, tag = 'output window, operand 0, single buffered']
    %12 = vsyncpa [#allocation4], 0
    %13 = vsyncpa [#allocation7], 0
    %14 = vsyncpa [#allocation5], 0
    // Predicated region
    $region2: #{tpu_custom_call.1} parent=1 // pred_check
      _
    $region3: #{tpu_custom_call.1} parent=1 // pred_check_branch
      %16 = sbr.rel (0) target = $region5
    $region4: #{tpu_custom_call.1} parent=1 // pred_region
      %18 = vsyncadd [#allocation4], 0
      %s19 = sshll.u32 %s0, 4
      %s20 = int_to_ptr.hbm [resolvable:$true] %s19
      %s21 = sshll.u32 [#allocation3], 4
      %s22 = int_to_ptr.vmem [resolvable:$true] %s21
      %27 = dma.hbm_to_vmem [thread:$0]  %s20, 8192, %s22, [#allocation4], 128, 128, 8
    $region5: #{tpu_custom_call.1} parent=1 // pred_fallthru
      _
    // Predicated region
    $region6: #{tpu_custom_call.1} parent=1 // pred_check
      _
    $region7: #{tpu_custom_call.1} parent=1 // pred_check_branch
      %29 = sbr.rel (0) target = $region9
    $region8: #{tpu_custom_call.1} parent=1 // pred_region
      %31 = vsyncadd [#allocation7], 0
      %s32 = sshll.u32 %s1, 4
      %s33 = int_to_ptr.hbm [resolvable:$true] %s32
      %s34 = sshll.u32 [#allocation6], 4
      %s35 = int_to_ptr.vmem [resolvable:$true] %s34
      %40 = dma.hbm_to_vmem [thread:$0]  %s33, 18432, %s35, [#allocation7], 128, 128, 8
    $region9: #{tpu_custom_call.1} parent=1 // pred_fallthru
      _
    // Predicated region
    $region10: #{tpu_custom_call.1} parent=1 // pred_check
      _
    $region11: #{tpu_custom_call.1} parent=1 // pred_check_branch
      %42 = sbr.rel (0) target = $region13
    $region12: #{tpu_custom_call.1} parent=1 // pred_region
      %44 = vsyncadd [#allocation7], 0
      %s45 = sshll.u32 %s2, 4
      %s46 = int_to_ptr.hbm [resolvable:$true] %s45
      %s47 = sshll.u32 [#allocation8], 4
      %s48 = int_to_ptr.vmem [resolvable:$true] %s47
      %53 = dma.hbm_to_vmem [thread:$0]  %s46, 18432, %s48, [#allocation7], 128, 128, 8
    $region13: #{tpu_custom_call.1} parent=1 // pred_fallthru
      _
    // Predicated region
    $region14: #{tpu_custom_call.1} parent=1 // pred_check
      _
    $region15: #{tpu_custom_call.1} parent=1 // pred_check_branch
      %55 = sbr.rel (0) target = $region17
    $region16: #{tpu_custom_call.1} parent=1 // pred_region
      _
    $region17: #{tpu_custom_call.1} parent=1 // pred_fallthru
      _
    // Predicated region
    $region18: #{tpu_custom_call.1} parent=1 // pred_check
      _
    $region19: #{tpu_custom_call.1} parent=1 // pred_check_branch
      %57 = sbr.rel (0) target = $region21
    $region20: #{tpu_custom_call.1} parent=1 // pred_region
      _
    $region21: #{tpu_custom_call.1} parent=1 // pred_fallthru
      _
    // Predicated region
    $region22: #{tpu_custom_call.1} parent=1 // pred_check
      _
    $region23: #{tpu_custom_call.1} parent=1 // pred_check_branch
      %59 = sbr.rel (0) target = $region25
    $region24: #{tpu_custom_call.1} parent=1 // pred_region
      _
    $region25: #{tpu_custom_call.1} parent=1 // pred_fallthru
      _
    // Predicated region
    $region26: #{tpu_custom_call.1} parent=1 // pred_check
      _
    $region27: #{tpu_custom_call.1} parent=1 // pred_check_branch
      %61 = sbr.rel (0) target = $region29
    $region28: #{tpu_custom_call.1} parent=1 // pred_region
      _
    $region29: #{tpu_custom_call.1} parent=1 // pred_fallthru
      _
    // Predicated region
    $region30: #{tpu_custom_call.1} parent=1 // pred_check
      _
    $region31: #{tpu_custom_call.1} parent=1 // pred_check_branch
      %63 = sbr.rel (0) target = $region33
    $region32: #{tpu_custom_call.1} parent=1 // pred_region
      %65 = dma.done [#allocation4], 8192
    $region33: #{tpu_custom_call.1} parent=1 // pred_fallthru
      _
    // Predicated region
    $region34: #{tpu_custom_call.1} parent=1 // pred_check
      _
    $region35: #{tpu_custom_call.1} parent=1 // pred_check_branch
      %67 = sbr.rel (0) target = $region37
    $region36: #{tpu_custom_call.1} parent=1 // pred_region
      %69 = dma.done [#allocation7], 18432
    $region37: #{tpu_custom_call.1} parent=1 // pred_fallthru
      _
    // Predicated region
    $region38: #{tpu_custom_call.1} parent=1 // pred_check
      _
    $region39: #{tpu_custom_call.1} parent=1 // pred_check_branch
      %71 = sbr.rel (0) target = $region41
    $region40: #{tpu_custom_call.1} parent=1 // pred_region
      %73 = dma.done [#allocation7], 18432
    $region41: #{tpu_custom_call.1} parent=1 // pred_fallthru
      _
    %74 = vst [vmem:[#allocation2] sm:$0xff] 0.0
    %75 = vst [vmem:[#allocation2 + $0x8] sm:$0xff] 0.0
    %76 = vst [vmem:[#allocation2 + $0x10] sm:$0x3] 0.0
    %77 = vst [vmem:[#allocation2 + $0x1b0] sm:$0xff] 0.0
    %78 = vst [vmem:[#allocation2 + $0x1b8] sm:$0xff] 0.0
    %79 = vst [vmem:[#allocation2 + $0x1c0] sm:$0x3] 0.0
    %s80 = scalar_lea.vmem [#allocation2], 408
    %81 = vst [vmem:[%s80] sm:$0xff] 0.0
    %82 = vst [vmem:[%s80 + $0x8] sm:$0xff] 0.0
    %83 = vst [vmem:[%s80 + $0x10] sm:$0x3] 0.0
    %84 = vst [vmem:[%s80 + $0x1b0] sm:$0xff] 0.0
    %85 = vst [vmem:[%s80 + $0x1b8] sm:$0xff] 0.0
    %86 = vst [vmem:[%s80 + $0x1c0] sm:$0x3] 0.0
    %s87 = scalar_lea.vmem [#allocation2], 24
    %88 = vst [vmem:[%s87] sm:$0x1] 0.0
    %89 = vst [vmem:[%s87 + $0x18] sm:$0x1] 0.0
    %90 = vst [vmem:[%s87 + $0x30] sm:$0x1] 0.0
    %91 = vst [vmem:[%s87 + $0x48] sm:$0x1] 0.0
    %92 = vst [vmem:[%s87 + $0x60] sm:$0x1] 0.0
    %93 = vst [vmem:[%s87 + $0x78] sm:$0x1] 0.0
    %94 = vst [vmem:[%s87 + $0x90] sm:$0x1] 0.0
    %95 = vst [vmem:[%s87 + $0xa8] sm:$0x1] 0.0
    %96 = vst [vmem:[%s87 + $0xc0] sm:$0x1] 0.0
    %97 = vst [vmem:[%s87 + $0xd8] sm:$0x1] 0.0
    %98 = vst [vmem:[%s87 + $0xf0] sm:$0x1] 0.0
    %99 = vst [vmem:[%s87 + $0x108] sm:$0x1] 0.0
    %100 = vst [vmem:[%s87 + $0x120] sm:$0x1] 0.0
    %101 = vst [vmem:[%s87 + $0x138] sm:$0x1] 0.0
    %102 = vst [vmem:[%s87 + $0x150] sm:$0x1] 0.0
    %103 = vst [vmem:[%s87 + $0x168] sm:$0x1] 0.0
    %104 = vst [vmem:[%s87 + $0x1b0] sm:$0x1] 0.0
    %105 = vst [vmem:[%s87 + $0x1c8] sm:$0x1] 0.0
    %106 = vst [vmem:[%s87 + $0x1e0] sm:$0x1] 0.0
    %107 = vst [vmem:[%s87 + $0x1f8] sm:$0x1] 0.0
    %108 = vst [vmem:[%s87 + $0x210] sm:$0x1] 0.0
    %109 = vst [vmem:[%s87 + $0x228] sm:$0x1] 0.0
    %110 = vst [vmem:[%s87 + $0x240] sm:$0x1] 0.0
    %111 = vst [vmem:[%s87 + $0x258] sm:$0x1] 0.0
    %112 = vst [vmem:[%s87 + $0x270] sm:$0x1] 0.0
    %113 = vst [vmem:[%s87 + $0x288] sm:$0x1] 0.0
    %114 = vst [vmem:[%s87 + $0x2a0] sm:$0x1] 0.0
    %115 = vst [vmem:[%s87 + $0x2b8] sm:$0x1] 0.0
    %116 = vst [vmem:[%s87 + $0x2d0] sm:$0x1] 0.0
    %117 = vst [vmem:[%s87 + $0x2e8] sm:$0x1] 0.0
    %118 = vst [vmem:[%s87 + $0x300] sm:$0x1] 0.0
    %119 = vst [vmem:[%s87 + $0x318] sm:$0x1] 0.0
    %120 = vst [vmem:[%s87 + $0x11] sm:$0x1] 0.0
    %121 = vst [vmem:[%s87 + $0x29] sm:$0x1] 0.0
    %122 = vst [vmem:[%s87 + $0x41] sm:$0x1] 0.0
    %123 = vst [vmem:[%s87 + $0x59] sm:$0x1] 0.0
    %124 = vst [vmem:[%s87 + $0x71] sm:$0x1] 0.0
    %125 = vst [vmem:[%s87 + $0x89] sm:$0x1] 0.0
    %126 = vst [vmem:[%s87 + $0xa1] sm:$0x1] 0.0
    %127 = vst [vmem:[%s87 + $0xb9] sm:$0x1] 0.0
    %128 = vst [vmem:[%s87 + $0xd1] sm:$0x1] 0.0
    %129 = vst [vmem:[%s87 + $0xe9] sm:$0x1] 0.0
    %130 = vst [vmem:[%s87 + $0x101] sm:$0x1] 0.0
    %131 = vst [vmem:[%s87 + $0x119] sm:$0x1] 0.0
    %132 = vst [vmem:[%s87 + $0x131] sm:$0x1] 0.0
    %133 = vst [vmem:[%s87 + $0x149] sm:$0x1] 0.0
    %134 = vst [vmem:[%s87 + $0x161] sm:$0x1] 0.0
    %135 = vst [vmem:[%s87 + $0x179] sm:$0x1] 0.0
    %136 = vst [vmem:[%s87 + $0x1c1] sm:$0x1] 0.0
    %137 = vst [vmem:[%s87 + $0x1d9] sm:$0x1] 0.0
    %138 = vst [vmem:[%s87 + $0x1f1] sm:$0x1] 0.0
    %139 = vst [vmem:[%s87 + $0x209] sm:$0x1] 0.0
    %140 = vst [vmem:[%s87 + $0x221] sm:$0x1] 0.0
    %141 = vst [vmem:[%s87 + $0x239] sm:$0x1] 0.0
    %142 = vst [vmem:[%s87 + $0x251] sm:$0x1] 0.0
    %143 = vst [vmem:[%s87 + $0x269] sm:$0x1] 0.0
    %144 = vst [vmem:[%s87 + $0x281] sm:$0x1] 0.0
    %145 = vst [vmem:[%s87 + $0x299] sm:$0x1] 0.0
    %146 = vst [vmem:[%s87 + $0x2b1] sm:$0x1] 0.0
    %147 = vst [vmem:[%s87 + $0x2c9] sm:$0x1] 0.0
    %148 = vst [vmem:[%s87 + $0x2e1] sm:$0x1] 0.0
    %149 = vst [vmem:[%s87 + $0x2f9] sm:$0x1] 0.0
    %150 = vst [vmem:[%s87 + $0x311] sm:$0x1] 0.0
    %151 = vst [vmem:[%s87 + $0x329] sm:$0x1] 0.0
    %v152 = vld [vmem:[#allocation3] sm:$0xff]
    %v153 = vld [vmem:[#allocation3 + $0x8] sm:$0xff]
    %v154 = vld [vmem:[#allocation3 + $0x10] sm:$0xff]
    %v155 = vld [vmem:[#allocation3 + $0x18] sm:$0xff]
    %v156 = vld [vmem:[#allocation3 + $0x20] sm:$0xff]
    %v157 = vld [vmem:[#allocation3 + $0x28] sm:$0xff]
    %v158 = vld [vmem:[#allocation3 + $0x30] sm:$0xff]
    %v159 = vld [vmem:[#allocation3 + $0x38] sm:$0xff]
    %v160 = vld [vmem:[#allocation3 + $0x40] sm:$0xff]
    %v161 = vld [vmem:[#allocation3 + $0x48] sm:$0xff]
    %v162 = vld [vmem:[#allocation3 + $0x50] sm:$0xff]
    %v163 = vld [vmem:[#allocation3 + $0x58] sm:$0xff]
    %v164 = vld [vmem:[#allocation3 + $0x60] sm:$0xff]
    %v165 = vld [vmem:[#allocation3 + $0x68] sm:$0xff]
    %v166 = vld [vmem:[#allocation3 + $0x70] sm:$0xff]
    %v167 = vld [vmem:[#allocation3 + $0x78] sm:$0xff]
    %v168 = vld [vmem:[#allocation3 + $0x80] sm:$0xff]
    %v169 = vld [vmem:[#allocation3 + $0x88] sm:$0xff]
    %v170 = vld [vmem:[#allocation3 + $0x90] sm:$0xff]
    %v171 = vld [vmem:[#allocation3 + $0x98] sm:$0xff]
    %v172 = vld [vmem:[#allocation3 + $0xa0] sm:$0xff]
    %v173 = vld [vmem:[#allocation3 + $0xa8] sm:$0xff]
    %v174 = vld [vmem:[#allocation3 + $0xb0] sm:$0xff]
    %v175 = vld [vmem:[#allocation3 + $0xb8] sm:$0xff]
    %v176 = vld [vmem:[#allocation3 + $0xc0] sm:$0xff]
    %v177 = vld [vmem:[#allocation3 + $0xc8] sm:$0xff]
    %v178 = vld [vmem:[#allocation3 + $0xd0] sm:$0xff]
    %v179 = vld [vmem:[#allocation3 + $0xd8] sm:$0xff]
    %v180 = vld [vmem:[#allocation3 + $0xe0] sm:$0xff]
    %v181 = vld [vmem:[#allocation3 + $0xe8] sm:$0xff]
    %v182 = vld [vmem:[#allocation3 + $0xf0] sm:$0xff]
    %v183 = vld [vmem:[#allocation3 + $0xf8] sm:$0xff]
    %v184 = vld [vmem:[#allocation3 + $0x100] sm:$0xff]
    %v185 = vld [vmem:[#allocation3 + $0x108] sm:$0xff]
    %v186 = vld [vmem:[#allocation3 + $0x110] sm:$0xff]
    %v187 = vld [vmem:[#allocation3 + $0x118] sm:$0xff]
    %v188 = vld [vmem:[#allocation3 + $0x120] sm:$0xff]
    %v189 = vld [vmem:[#allocation3 + $0x128] sm:$0xff]
    %v190 = vld [vmem:[#allocation3 + $0x130] sm:$0xff]
    %v191 = vld [vmem:[#allocation3 + $0x138] sm:$0xff]
    %v192 = vld [vmem:[#allocation3 + $0x140] sm:$0xff]
    %v193 = vld [vmem:[#allocation3 + $0x148] sm:$0xff]
    %v194 = vld [vmem:[#allocation3 + $0x150] sm:$0xff]
    %v195 = vld [vmem:[#allocation3 + $0x158] sm:$0xff]
    %v196 = vld [vmem:[#allocation3 + $0x160] sm:$0xff]
    %v197 = vld [vmem:[#allocation3 + $0x168] sm:$0xff]
    %v198 = vld [vmem:[#allocation3 + $0x170] sm:$0xff]
    %v199 = vld [vmem:[#allocation3 + $0x178] sm:$0xff]
    %v200 = vld [vmem:[#allocation3 + $0x180] sm:$0xff]
    %v201 = vld [vmem:[#allocation3 + $0x188] sm:$0xff]
    %v202 = vld [vmem:[#allocation3 + $0x190] sm:$0xff]
    %v203 = vld [vmem:[#allocation3 + $0x198] sm:$0xff]
    %v204 = vld [vmem:[#allocation3 + $0x1a0] sm:$0xff]
    %v205 = vld [vmem:[#allocation3 + $0x1a8] sm:$0xff]
    %v206 = vld [vmem:[#allocation3 + $0x1b0] sm:$0xff]
    %v207 = vld [vmem:[#allocation3 + $0x1b8] sm:$0xff]
    %v208 = vld [vmem:[#allocation3 + $0x1c0] sm:$0xff]
    %v209 = vld [vmem:[#allocation3 + $0x1c8] sm:$0xff]
    %v210 = vld [vmem:[#allocation3 + $0x1d0] sm:$0xff]
    %v211 = vld [vmem:[#allocation3 + $0x1d8] sm:$0xff]
    %v212 = vld [vmem:[#allocation3 + $0x1e0] sm:$0xff]
    %v213 = vld [vmem:[#allocation3 + $0x1e8] sm:$0xff]
    %v214 = vld [vmem:[#allocation3 + $0x1f0] sm:$0xff]
    %v215 = vld [vmem:[#allocation3 + $0x1f8] sm:$0xff]
    %216 = vst [vmem:[%s87 + $0x1] sm:$0xff] %v152
    %217 = vst [vmem:[%s87 + $0x9] sm:$0xff] %v153
    %218 = vst [vmem:[%s87 + $0x19] sm:$0xff] %v154
    %219 = vst [vmem:[%s87 + $0x21] sm:$0xff] %v155
    %220 = vst [vmem:[%s87 + $0x31] sm:$0xff] %v156
    %221 = vst [vmem:[%s87 + $0x39] sm:$0xff] %v157
    %222 = vst [vmem:[%s87 + $0x49] sm:$0xff] %v158
    %223 = vst [vmem:[%s87 + $0x51] sm:$0xff] %v159
    %224 = vst [vmem:[%s87 + $0x61] sm:$0xff] %v160
    %225 = vst [vmem:[%s87 + $0x69] sm:$0xff] %v161
    %226 = vst [vmem:[%s87 + $0x79] sm:$0xff] %v162
    %227 = vst [vmem:[%s87 + $0x81] sm:$0xff] %v163
    %228 = vst [vmem:[%s87 + $0x91] sm:$0xff] %v164
    %229 = vst [vmem:[%s87 + $0x99] sm:$0xff] %v165
    %230 = vst [vmem:[%s87 + $0xa9] sm:$0xff] %v166
    %231 = vst [vmem:[%s87 + $0xb1] sm:$0xff] %v167
    %232 = vst [vmem:[%s87 + $0xc1] sm:$0xff] %v168
    %233 = vst [vmem:[%s87 + $0xc9] sm:$0xff] %v169
    %234 = vst [vmem:[%s87 + $0xd9] sm:$0xff] %v170
    %235 = vst [vmem:[%s87 + $0xe1] sm:$0xff] %v171
    %236 = vst [vmem:[%s87 + $0xf1] sm:$0xff] %v172
    %237 = vst [vmem:[%s87 + $0xf9] sm:$0xff] %v173
    %238 = vst [vmem:[%s87 + $0x109] sm:$0xff] %v174
    %239 = vst [vmem:[%s87 + $0x111] sm:$0xff] %v175
    %240 = vst [vmem:[%s87 + $0x121] sm:$0xff] %v176
    %241 = vst [vmem:[%s87 + $0x129] sm:$0xff] %v177
    %242 = vst [vmem:[%s87 + $0x139] sm:$0xff] %v178
    %243 = vst [vmem:[%s87 + $0x141] sm:$0xff] %v179
    %244 = vst [vmem:[%s87 + $0x151] sm:$0xff] %v180
    %245 = vst [vmem:[%s87 + $0x159] sm:$0xff] %v181
    %246 = vst [vmem:[%s87 + $0x169] sm:$0xff] %v182
    %247 = vst [vmem:[%s87 + $0x171] sm:$0xff] %v183
    %248 = vst [vmem:[%s87 + $0x1b1] sm:$0xff] %v184
    %249 = vst [vmem:[%s87 + $0x1b9] sm:$0xff] %v185
    %250 = vst [vmem:[%s87 + $0x1c9] sm:$0xff] %v186
    %251 = vst [vmem:[%s87 + $0x1d1] sm:$0xff] %v187
    %252 = vst [vmem:[%s87 + $0x1e1] sm:$0xff] %v188
    %253 = vst [vmem:[%s87 + $0x1e9] sm:$0xff] %v189
    %254 = vst [vmem:[%s87 + $0x1f9] sm:$0xff] %v190
    %255 = vst [vmem:[%s87 + $0x201] sm:$0xff] %v191
    %256 = vst [vmem:[%s87 + $0x211] sm:$0xff] %v192
    %257 = vst [vmem:[%s87 + $0x219] sm:$0xff] %v193
    %258 = vst [vmem:[%s87 + $0x229] sm:$0xff] %v194
    %259 = vst [vmem:[%s87 + $0x231] sm:$0xff] %v195
    %260 = vst [vmem:[%s87 + $0x241] sm:$0xff] %v196
    %261 = vst [vmem:[%s87 + $0x249] sm:$0xff] %v197
    %262 = vst [vmem:[%s87 + $0x259] sm:$0xff] %v198
    %263 = vst [vmem:[%s87 + $0x261] sm:$0xff] %v199
    %264 = vst [vmem:[%s87 + $0x271] sm:$0xff] %v200
    %265 = vst [vmem:[%s87 + $0x279] sm:$0xff] %v201
    %266 = vst [vmem:[%s87 + $0x289] sm:$0xff] %v202
    %267 = vst [vmem:[%s87 + $0x291] sm:$0xff] %v203
    %268 = vst [vmem:[%s87 + $0x2a1] sm:$0xff] %v204
    %269 = vst [vmem:[%s87 + $0x2a9] sm:$0xff] %v205
    %270 = vst [vmem:[%s87 + $0x2b9] sm:$0xff] %v206
    %271 = vst [vmem:[%s87 + $0x2c1] sm:$0xff] %v207
    %272 = vst [vmem:[%s87 + $0x2d1] sm:$0xff] %v208
    %273 = vst [vmem:[%s87 + $0x2d9] sm:$0xff] %v209
    %274 = vst [vmem:[%s87 + $0x2e9] sm:$0xff] %v210
    %275 = vst [vmem:[%s87 + $0x2f1] sm:$0xff] %v211
    %276 = vst [vmem:[%s87 + $0x301] sm:$0xff] %v212
    %277 = vst [vmem:[%s87 + $0x309] sm:$0xff] %v213
    %278 = vst [vmem:[%s87 + $0x319] sm:$0xff] %v214
    %279 = vst [vmem:[%s87 + $0x321] sm:$0xff] %v215
    %v280 = vld [vmem:[#allocation2] sm:$0xff]
    %v281 = vld [vmem:[#allocation2 + $0x8] sm:$0xff]
    %v282 = vld [vmem:[#allocation2 + $0x18] sm:$0xff]
    %v283 = vld [vmem:[#allocation2 + $0x20] sm:$0xff]
    %v284 = vld [vmem:[#allocation2 + $0x30] sm:$0xff]
    %v285 = vld [vmem:[#allocation2 + $0x38] sm:$0xff]
    %v286 = vld [vmem:[#allocation2 + $0x48] sm:$0xff]
    %v287 = vld [vmem:[#allocation2 + $0x50] sm:$0xff]
    %v288 = vld [vmem:[#allocation2 + $0x60] sm:$0xff]
    %v289 = vld [vmem:[#allocation2 + $0x68] sm:$0xff]
    %v290 = vld [vmem:[#allocation2 + $0x78] sm:$0xff]
    %v291 = vld [vmem:[#allocation2 + $0x80] sm:$0xff]
    %v292 = vld [vmem:[#allocation2 + $0x90] sm:$0xff]
    %v293 = vld [vmem:[#allocation2 + $0x98] sm:$0xff]
    %v294 = vld [vmem:[#allocation2 + $0xa8] sm:$0xff]
    %v295 = vld [vmem:[#allocation2 + $0xb0] sm:$0xff]
    %v296 = vld [vmem:[#allocation2 + $0xc0] sm:$0xff]
    %v297 = vld [vmem:[#allocation2 + $0xc8] sm:$0xff]
    %v298 = vld [vmem:[#allocation2 + $0xd8] sm:$0xff]
    %v299 = vld [vmem:[#allocation2 + $0xe0] sm:$0xff]
    %v300 = vld [vmem:[#allocation2 + $0xf0] sm:$0xff]
    %v301 = vld [vmem:[#allocation2 + $0xf8] sm:$0xff]
    %v302 = vld [vmem:[#allocation2 + $0x108] sm:$0xff]
    %v303 = vld [vmem:[#allocation2 + $0x110] sm:$0xff]
    %v304 = vld [vmem:[#allocation2 + $0x120] sm:$0xff]
    %v305 = vld [vmem:[#allocation2 + $0x128] sm:$0xff]
    %v306 = vld [vmem:[#allocation2 + $0x138] sm:$0xff]
    %v307 = vld [vmem:[#allocation2 + $0x140] sm:$0xff]
    %v308 = vld [vmem:[#allocation2 + $0x150] sm:$0xff]
    %v309 = vld [vmem:[#allocation2 + $0x158] sm:$0xff]
    %v310 = vld [vmem:[#allocation2 + $0x168] sm:$0xff]
    %v311 = vld [vmem:[#allocation2 + $0x170] sm:$0xff]
    %v312 = vld [vmem:[#allocation2 + $0x1b0] sm:$0xff]
    %v313 = vld [vmem:[#allocation2 + $0x1b8] sm:$0xff]
    %v314 = vld [vmem:[#allocation2 + $0x1c8] sm:$0xff]
    %v315 = vld [vmem:[#allocation2 + $0x1d0] sm:$0xff]
    %v316 = vld [vmem:[#allocation2 + $0x1e0] sm:$0xff]
    %v317 = vld [vmem:[#allocation2 + $0x1e8] sm:$0xff]
    %v318 = vld [vmem:[#allocation2 + $0x1f8] sm:$0xff]
    %v319 = vld [vmem:[#allocation2 + $0x200] sm:$0xff]
    %v320 = vld [vmem:[#allocation2 + $0x210] sm:$0xff]
    %v321 = vld [vmem:[#allocation2 + $0x218] sm:$0xff]
    %v322 = vld [vmem:[#allocation2 + $0x228] sm:$0xff]
    %v323 = vld [vmem:[#allocation2 + $0x230] sm:$0xff]
    %v324 = vld [vmem:[#allocation2 + $0x240] sm:$0xff]
    %v325 = vld [vmem:[#allocation2 + $0x248] sm:$0xff]
    %v326 = vld [vmem:[#allocation2 + $0x258] sm:$0xff]
    %v327 = vld [vmem:[#allocation2 + $0x260] sm:$0xff]
    %v328 = vld [vmem:[#allocation2 + $0x270] sm:$0xff]
    %v329 = vld [vmem:[#allocation2 + $0x278] sm:$0xff]
    %v330 = vld [vmem:[#allocation2 + $0x288] sm:$0xff]
    %v331 = vld [vmem:[#allocation2 + $0x290] sm:$0xff]
    %v332 = vld [vmem:[#allocation2 + $0x2a0] sm:$0xff]
    %v333 = vld [vmem:[#allocation2 + $0x2a8] sm:$0xff]
    %v334 = vld [vmem:[#allocation2 + $0x2b8] sm:$0xff]
    %v335 = vld [vmem:[#allocation2 + $0x2c0] sm:$0xff]
    %v336 = vld [vmem:[#allocation2 + $0x2d0] sm:$0xff]
    %v337 = vld [vmem:[#allocation2 + $0x2d8] sm:$0xff]
    %v338 = vld [vmem:[#allocation2 + $0x2e8] sm:$0xff]
    %v339 = vld [vmem:[#allocation2 + $0x2f0] sm:$0xff]
    %v340 = vld [vmem:[#allocation2 + $0x300] sm:$0xff]
    %v341 = vld [vmem:[#allocation2 + $0x308] sm:$0xff]
    %v342 = vld [vmem:[#allocation2 + $0x318] sm:$0xff]
    %v343 = vld [vmem:[#allocation2 + $0x320] sm:$0xff]
    %v344 = vld [vmem:[#allocation2 + $0x1] sm:$0xff]
    %v345 = vld [vmem:[#allocation2 + $0x9] sm:$0xff]
    %v346 = vld [vmem:[#allocation2 + $0x19] sm:$0xff]
    %v347 = vld [vmem:[#allocation2 + $0x21] sm:$0xff]
    %v348 = vld [vmem:[#allocation2 + $0x31] sm:$0xff]
    %v349 = vld [vmem:[#allocation2 + $0x39] sm:$0xff]
    %v350 = vld [vmem:[#allocation2 + $0x49] sm:$0xff]
    %v351 = vld [vmem:[#allocation2 + $0x51] sm:$0xff]
    %v352 = vld [vmem:[#allocation2 + $0x61] sm:$0xff]
    %v353 = vld [vmem:[#allocation2 + $0x69] sm:$0xff]
    %v354 = vld [vmem:[#allocation2 + $0x79] sm:$0xff]
    %v355 = vld [vmem:[#allocation2 + $0x81] sm:$0xff]
    %v356 = vld [vmem:[#allocation2 + $0x91] sm:$0xff]
    %v357 = vld [vmem:[#allocation2 + $0x99] sm:$0xff]
    %v358 = vld [vmem:[#allocation2 + $0xa9] sm:$0xff]
    %v359 = vld [vmem:[#allocation2 + $0xb1] sm:$0xff]
    %v360 = vld [vmem:[#allocation2 + $0xc1] sm:$0xff]
    %v361 = vld [vmem:[#allocation2 + $0xc9] sm:$0xff]
    %v362 = vld [vmem:[#allocation2 + $0xd9] sm:$0xff]
    %v363 = vld [vmem:[#allocation2 + $0xe1] sm:$0xff]
    %v364 = vld [vmem:[#allocation2 + $0xf1] sm:$0xff]
    %v365 = vld [vmem:[#allocation2 + $0xf9] sm:$0xff]
    %v366 = vld [vmem:[#allocation2 + $0x109] sm:$0xff]
    %v367 = vld [vmem:[#allocation2 + $0x111] sm:$0xff]
    %v368 = vld [vmem:[#allocation2 + $0x121] sm:$0xff]
    %v369 = vld [vmem:[#allocation2 + $0x129] sm:$0xff]
    %v370 = vld [vmem:[#allocation2 + $0x139] sm:$0xff]
    %v371 = vld [vmem:[#allocation2 + $0x141] sm:$0xff]
    %v372 = vld [vmem:[#allocation2 + $0x151] sm:$0xff]
    %v373 = vld [vmem:[#allocation2 + $0x159] sm:$0xff]
    %v374 = vld [vmem:[#allocation2 + $0x169] sm:$0xff]
    %v375 = vld [vmem:[#allocation2 + $0x171] sm:$0xff]
    %v376 = vld [vmem:[#allocation2 + $0x1b1] sm:$0xff]
    %v377 = vld [vmem:[#allocation2 + $0x1b9] sm:$0xff]
    %v378 = vld [vmem:[#allocation2 + $0x1c9] sm:$0xff]
    %v379 = vld [vmem:[#allocation2 + $0x1d1] sm:$0xff]
    %v380 = vld [vmem:[#allocation2 + $0x1e1] sm:$0xff]
    %v381 = vld [vmem:[#allocation2 + $0x1e9] sm:$0xff]
    %v382 = vld [vmem:[#allocation2 + $0x1f9] sm:$0xff]
    %v383 = vld [vmem:[#allocation2 + $0x201] sm:$0xff]
    %v384 = vld [vmem:[#allocation2 + $0x211] sm:$0xff]
    %v385 = vld [vmem:[#allocation2 + $0x219] sm:$0xff]
    %v386 = vld [vmem:[#allocation2 + $0x229] sm:$0xff]
    %v387 = vld [vmem:[#allocation2 + $0x231] sm:$0xff]
    %v388 = vld [vmem:[#allocation2 + $0x241] sm:$0xff]
    %v389 = vld [vmem:[#allocation2 + $0x249] sm:$0xff]
    %v390 = vld [vmem:[#allocation2 + $0x259] sm:$0xff]
    %v391 = vld [vmem:[#allocation2 + $0x261] sm:$0xff]
    %v392 = vld [vmem:[#allocation2 + $0x271] sm:$0xff]
    %v393 = vld [vmem:[#allocation2 + $0x279] sm:$0xff]
    %v394 = vld [vmem:[#allocation2 + $0x289] sm:$0xff]
    %v395 = vld [vmem:[#allocation2 + $0x291] sm:$0xff]
    %v396 = vld [vmem:[#allocation2 + $0x2a1] sm:$0xff]
    %v397 = vld [vmem:[#allocation2 + $0x2a9] sm:$0xff]
    %v398 = vld [vmem:[#allocation2 + $0x2b9] sm:$0xff]
    %v399 = vld [vmem:[#allocation2 + $0x2c1] sm:$0xff]
    %v400 = vld [vmem:[#allocation2 + $0x2d1] sm:$0xff]
    %v401 = vld [vmem:[#allocation2 + $0x2d9] sm:$0xff]
    %v402 = vld [vmem:[#allocation2 + $0x2e9] sm:$0xff]
    %v403 = vld [vmem:[#allocation2 + $0x2f1] sm:$0xff]
    %v404 = vld [vmem:[#allocation2 + $0x301] sm:$0xff]
    %v405 = vld [vmem:[#allocation2 + $0x309] sm:$0xff]
    %v406 = vld [vmem:[#allocation2 + $0x319] sm:$0xff]
    %v407 = vld [vmem:[#allocation2 + $0x321] sm:$0xff]
    %v408 = vld [vmem:[#allocation2 + $0x2] sm:$0xff]
    %v409 = vld [vmem:[#allocation2 + $0xa] sm:$0xff]
    %v410 = vld [vmem:[#allocation2 + $0x1a] sm:$0xff]
    %v411 = vld [vmem:[#allocation2 + $0x22] sm:$0xff]
    %v412 = vld [vmem:[#allocation2 + $0x32] sm:$0xff]
    %v413 = vld [vmem:[#allocation2 + $0x3a] sm:$0xff]
    %v414 = vld [vmem:[#allocation2 + $0x4a] sm:$0xff]
    %v415 = vld [vmem:[#allocation2 + $0x52] sm:$0xff]
    %v416 = vld [vmem:[#allocation2 + $0x62] sm:$0xff]
    %v417 = vld [vmem:[#allocation2 + $0x6a] sm:$0xff]
    %v418 = vld [vmem:[#allocation2 + $0x7a] sm:$0xff]
    %v419 = vld [vmem:[#allocation2 + $0x82] sm:$0xff]
    %v420 = vld [vmem:[#allocation2 + $0x92] sm:$0xff]
    %v421 = vld [vmem:[#allocation2 + $0x9a] sm:$0xff]
    %v422 = vld [vmem:[#allocation2 + $0xaa] sm:$0xff]
    %v423 = vld [vmem:[#allocation2 + $0xb2] sm:$0xff]
    %v424 = vld [vmem:[#allocation2 + $0xc2] sm:$0xff]
    %v425 = vld [vmem:[#allocation2 + $0xca] sm:$0xff]
    %v426 = vld [vmem:[#allocation2 + $0xda] sm:$0xff]
    %v427 = vld [vmem:[#allocation2 + $0xe2] sm:$0xff]
    %v428 = vld [vmem:[#allocation2 + $0xf2] sm:$0xff]
    %v429 = vld [vmem:[#allocation2 + $0xfa] sm:$0xff]
    %v430 = vld [vmem:[#allocation2 + $0x10a] sm:$0xff]
    %v431 = vld [vmem:[#allocation2 + $0x112] sm:$0xff]
    %v432 = vld [vmem:[#allocation2 + $0x122] sm:$0xff]
    %v433 = vld [vmem:[#allocation2 + $0x12a] sm:$0xff]
    %v434 = vld [vmem:[#allocation2 + $0x13a] sm:$0xff]
    %v435 = vld [vmem:[#allocation2 + $0x142] sm:$0xff]
    %v436 = vld [vmem:[#allocation2 + $0x152] sm:$0xff]
    %v437 = vld [vmem:[#allocation2 + $0x15a] sm:$0xff]
    %v438 = vld [vmem:[#allocation2 + $0x16a] sm:$0xff]
    %v439 = vld [vmem:[#allocation2 + $0x172] sm:$0xff]
    %v440 = vld [vmem:[#allocation2 + $0x1b2] sm:$0xff]
    %v441 = vld [vmem:[#allocation2 + $0x1ba] sm:$0xff]
    %v442 = vld [vmem:[#allocation2 + $0x1ca] sm:$0xff]
    %v443 = vld [vmem:[#allocation2 + $0x1d2] sm:$0xff]
    %v444 = vld [vmem:[#allocation2 + $0x1e2] sm:$0xff]
    %v445 = vld [vmem:[#allocation2 + $0x1ea] sm:$0xff]
    %v446 = vld [vmem:[#allocation2 + $0x1fa] sm:$0xff]
    %v447 = vld [vmem:[#allocation2 + $0x202] sm:$0xff]
    %v448 = vld [vmem:[#allocation2 + $0x212] sm:$0xff]
    %v449 = vld [vmem:[#allocation2 + $0x21a] sm:$0xff]
    %v450 = vld [vmem:[#allocation2 + $0x22a] sm:$0xff]
    %v451 = vld [vmem:[#allocation2 + $0x232] sm:$0xff]
    %v452 = vld [vmem:[#allocation2 + $0x242] sm:$0xff]
    %v453 = vld [vmem:[#allocation2 + $0x24a] sm:$0xff]
    %v454 = vld [vmem:[#allocation2 + $0x25a] sm:$0xff]
    %v455 = vld [vmem:[#allocation2 + $0x262] sm:$0xff]
    %v456 = vld [vmem:[#allocation2 + $0x272] sm:$0xff]
    %v457 = vld [vmem:[#allocation2 + $0x27a] sm:$0xff]
    %v458 = vld [vmem:[#allocation2 + $0x28a] sm:$0xff]
    %v459 = vld [vmem:[#allocation2 + $0x292] sm:$0xff]
    %v460 = vld [vmem:[#allocation2 + $0x2a2] sm:$0xff]
    %v461 = vld [vmem:[#allocation2 + $0x2aa] sm:$0xff]
    %v462 = vld [vmem:[#allocation2 + $0x2ba] sm:$0xff]
    %v463 = vld [vmem:[#allocation2 + $0x2c2] sm:$0xff]
    %v464 = vld [vmem:[#allocation2 + $0x2d2] sm:$0xff]
    %v465 = vld [vmem:[#allocation2 + $0x2da] sm:$0xff]
    %v466 = vld [vmem:[#allocation2 + $0x2ea] sm:$0xff]
    %v467 = vld [vmem:[#allocation2 + $0x2f2] sm:$0xff]
    %v468 = vld [vmem:[#allocation2 + $0x302] sm:$0xff]
    %v469 = vld [vmem:[#allocation2 + $0x30a] sm:$0xff]
    %v470 = vld [vmem:[#allocation2 + $0x31a] sm:$0xff]
    %v471 = vld [vmem:[#allocation2 + $0x322] sm:$0xff]
    %v472 = vld [vmem:[%s87] sm:$0xff]
    %v473 = vld [vmem:[%s87 + $0x8] sm:$0xff]
    %v474 = vld [vmem:[%s87 + $0x18] sm:$0xff]
    %v475 = vld [vmem:[%s87 + $0x20] sm:$0xff]
    %v476 = vld [vmem:[%s87 + $0x30] sm:$0xff]
    %v477 = vld [vmem:[%s87 + $0x38] sm:$0xff]
    %v478 = vld [vmem:[%s87 + $0x48] sm:$0xff]
    %v479 = vld [vmem:[%s87 + $0x50] sm:$0xff]
    %v480 = vld [vmem:[%s87 + $0x60] sm:$0xff]
    %v481 = vld [vmem:[%s87 + $0x68] sm:$0xff]
    %v482 = vld [vmem:[%s87 + $0x78] sm:$0xff]
    %v483 = vld [vmem:[%s87 + $0x80] sm:$0xff]
    %v484 = vld [vmem:[%s87 + $0x90] sm:$0xff]
    %v485 = vld [vmem:[%s87 + $0x98] sm:$0xff]
    %v486 = vld [vmem:[%s87 + $0xa8] sm:$0xff]
    %v487 = vld [vmem:[%s87 + $0xb0] sm:$0xff]
    %v488 = vld [vmem:[%s87 + $0xc0] sm:$0xff]
    %v489 = vld [vmem:[%s87 + $0xc8] sm:$0xff]
    %v490 = vld [vmem:[%s87 + $0xd8] sm:$0xff]
    %v491 = vld [vmem:[%s87 + $0xe0] sm:$0xff]
    %v492 = vld [vmem:[%s87 + $0xf0] sm:$0xff]
    %v493 = vld [vmem:[%s87 + $0xf8] sm:$0xff]
    %v494 = vld [vmem:[%s87 + $0x108] sm:$0xff]
    %v495 = vld [vmem:[%s87 + $0x110] sm:$0xff]
    %v496 = vld [vmem:[%s87 + $0x120] sm:$0xff]
    %v497 = vld [vmem:[%s87 + $0x128] sm:$0xff]
    %v498 = vld [vmem:[%s87 + $0x138] sm:$0xff]
    %v499 = vld [vmem:[%s87 + $0x140] sm:$0xff]
    %v500 = vld [vmem:[%s87 + $0x150] sm:$0xff]
    %v501 = vld [vmem:[%s87 + $0x158] sm:$0xff]
    %v502 = vld [vmem:[%s87 + $0x168] sm:$0xff]
    %v503 = vld [vmem:[%s87 + $0x170] sm:$0xff]
    %v504 = vld [vmem:[%s87 + $0x1b0] sm:$0xff]
    %v505 = vld [vmem:[%s87 + $0x1b8] sm:$0xff]
    %v506 = vld [vmem:[%s87 + $0x1c8] sm:$0xff]
    %v507 = vld [vmem:[%s87 + $0x1d0] sm:$0xff]
    %v508 = vld [vmem:[%s87 + $0x1e0] sm:$0xff]
    %v509 = vld [vmem:[%s87 + $0x1e8] sm:$0xff]
    %v510 = vld [vmem:[%s87 + $0x1f8] sm:$0xff]
    %v511 = vld [vmem:[%s87 + $0x200] sm:$0xff]
    %v512 = vld [vmem:[%s87 + $0x210] sm:$0xff]
    %v513 = vld [vmem:[%s87 + $0x218] sm:$0xff]
    %v514 = vld [vmem:[%s87 + $0x228] sm:$0xff]
    %v515 = vld [vmem:[%s87 + $0x230] sm:$0xff]
    %v516 = vld [vmem:[%s87 + $0x240] sm:$0xff]
    %v517 = vld [vmem:[%s87 + $0x248] sm:$0xff]
    %v518 = vld [vmem:[%s87 + $0x258] sm:$0xff]
    %v519 = vld [vmem:[%s87 + $0x260] sm:$0xff]
    %v520 = vld [vmem:[%s87 + $0x270] sm:$0xff]
    %v521 = vld [vmem:[%s87 + $0x278] sm:$0xff]
    %v522 = vld [vmem:[%s87 + $0x288] sm:$0xff]
    %v523 = vld [vmem:[%s87 + $0x290] sm:$0xff]
    %v524 = vld [vmem:[%s87 + $0x2a0] sm:$0xff]
    %v525 = vld [vmem:[%s87 + $0x2a8] sm:$0xff]
    %v526 = vld [vmem:[%s87 + $0x2b8] sm:$0xff]
    %v527 = vld [vmem:[%s87 + $0x2c0] sm:$0xff]
    %v528 = vld [vmem:[%s87 + $0x2d0] sm:$0xff]
    %v529 = vld [vmem:[%s87 + $0x2d8] sm:$0xff]
    %v530 = vld [vmem:[%s87 + $0x2e8] sm:$0xff]
    %v531 = vld [vmem:[%s87 + $0x2f0] sm:$0xff]
    %v532 = vld [vmem:[%s87 + $0x300] sm:$0xff]
    %v533 = vld [vmem:[%s87 + $0x308] sm:$0xff]
    %v534 = vld [vmem:[%s87 + $0x318] sm:$0xff]
    %v535 = vld [vmem:[%s87 + $0x320] sm:$0xff]
    %v536 = vld [vmem:[%s87 + $0x1] sm:$0xff]
    %v537 = vld [vmem:[%s87 + $0x9] sm:$0xff]
    %v538 = vld [vmem:[%s87 + $0x19] sm:$0xff]
    %v539 = vld [vmem:[%s87 + $0x21] sm:$0xff]
    %v540 = vld [vmem:[%s87 + $0x31] sm:$0xff]
    %v541 = vld [vmem:[%s87 + $0x39] sm:$0xff]
    %v542 = vld [vmem:[%s87 + $0x49] sm:$0xff]
    %v543 = vld [vmem:[%s87 + $0x51] sm:$0xff]
    %v544 = vld [vmem:[%s87 + $0x61] sm:$0xff]
    %v545 = vld [vmem:[%s87 + $0x69] sm:$0xff]
    %v546 = vld [vmem:[%s87 + $0x79] sm:$0xff]
    %v547 = vld [vmem:[%s87 + $0x81] sm:$0xff]
    %v548 = vld [vmem:[%s87 + $0x91] sm:$0xff]
    %v549 = vld [vmem:[%s87 + $0x99] sm:$0xff]
    %v550 = vld [vmem:[%s87 + $0xa9] sm:$0xff]
    %v551 = vld [vmem:[%s87 + $0xb1] sm:$0xff]
    %v552 = vld [vmem:[%s87 + $0xc1] sm:$0xff]
    %v553 = vld [vmem:[%s87 + $0xc9] sm:$0xff]
    %v554 = vld [vmem:[%s87 + $0xd9] sm:$0xff]
    %v555 = vld [vmem:[%s87 + $0xe1] sm:$0xff]
    %v556 = vld [vmem:[%s87 + $0xf1] sm:$0xff]
    %v557 = vld [vmem:[%s87 + $0xf9] sm:$0xff]
    %v558 = vld [vmem:[%s87 + $0x109] sm:$0xff]
    %v559 = vld [vmem:[%s87 + $0x111] sm:$0xff]
    %v560 = vld [vmem:[%s87 + $0x121] sm:$0xff]
    %v561 = vld [vmem:[%s87 + $0x129] sm:$0xff]
    %v562 = vld [vmem:[%s87 + $0x139] sm:$0xff]
    %v563 = vld [vmem:[%s87 + $0x141] sm:$0xff]
    %v564 = vld [vmem:[%s87 + $0x151] sm:$0xff]
    %v565 = vld [vmem:[%s87 + $0x159] sm:$0xff]
    %v566 = vld [vmem:[%s87 + $0x169] sm:$0xff]
    %v567 = vld [vmem:[%s87 + $0x171] sm:$0xff]
    %v568 = vld [vmem:[%s87 + $0x1b1] sm:$0xff]
    %v569 = vld [vmem:[%s87 + $0x1b9] sm:$0xff]
    %v570 = vld [vmem:[%s87 + $0x1c9] sm:$0xff]
    %v571 = vld [vmem:[%s87 + $0x1d1] sm:$0xff]
    %v572 = vld [vmem:[%s87 + $0x1e1] sm:$0xff]
    %v573 = vld [vmem:[%s87 + $0x1e9] sm:$0xff]
    %v574 = vld [vmem:[%s87 + $0x1f9] sm:$0xff]
    %v575 = vld [vmem:[%s87 + $0x201] sm:$0xff]
    %v576 = vld [vmem:[%s87 + $0x211] sm:$0xff]
    %v577 = vld [vmem:[%s87 + $0x219] sm:$0xff]
    %v578 = vld [vmem:[%s87 + $0x229] sm:$0xff]
    %v579 = vld [vmem:[%s87 + $0x231] sm:$0xff]
    %v580 = vld [vmem:[%s87 + $0x241] sm:$0xff]
    %v581 = vld [vmem:[%s87 + $0x249] sm:$0xff]
    %v582 = vld [vmem:[%s87 + $0x259] sm:$0xff]
    %v583 = vld [vmem:[%s87 + $0x261] sm:$0xff]
    %v584 = vld [vmem:[%s87 + $0x271] sm:$0xff]
    %v585 = vld [vmem:[%s87 + $0x279] sm:$0xff]
    %v586 = vld [vmem:[%s87 + $0x289] sm:$0xff]
    %v587 = vld [vmem:[%s87 + $0x291] sm:$0xff]
    %v588 = vld [vmem:[%s87 + $0x2a1] sm:$0xff]
    %v589 = vld [vmem:[%s87 + $0x2a9] sm:$0xff]
    %v590 = vld [vmem:[%s87 + $0x2b9] sm:$0xff]
    %v591 = vld [vmem:[%s87 + $0x2c1] sm:$0xff]
    %v592 = vld [vmem:[%s87 + $0x2d1] sm:$0xff]
    %v593 = vld [vmem:[%s87 + $0x2d9] sm:$0xff]
    %v594 = vld [vmem:[%s87 + $0x2e9] sm:$0xff]
    %v595 = vld [vmem:[%s87 + $0x2f1] sm:$0xff]
    %v596 = vld [vmem:[%s87 + $0x301] sm:$0xff]
    %v597 = vld [vmem:[%s87 + $0x309] sm:$0xff]
    %v598 = vld [vmem:[%s87 + $0x319] sm:$0xff]
    %v599 = vld [vmem:[%s87 + $0x321] sm:$0xff]
    %v600 = vld [vmem:[%s87 + $0x2] sm:$0xff]
    %v601 = vld [vmem:[%s87 + $0xa] sm:$0xff]
    %v602 = vld [vmem:[%s87 + $0x1a] sm:$0xff]
    %v603 = vld [vmem:[%s87 + $0x22] sm:$0xff]
    %v604 = vld [vmem:[%s87 + $0x32] sm:$0xff]
    %v605 = vld [vmem:[%s87 + $0x3a] sm:$0xff]
    %v606 = vld [vmem:[%s87 + $0x4a] sm:$0xff]
    %v607 = vld [vmem:[%s87 + $0x52] sm:$0xff]
    %v608 = vld [vmem:[%s87 + $0x62] sm:$0xff]
    %v609 = vld [vmem:[%s87 + $0x6a] sm:$0xff]
    %v610 = vld [vmem:[%s87 + $0x7a] sm:$0xff]
    %v611 = vld [vmem:[%s87 + $0x82] sm:$0xff]
    %v612 = vld [vmem:[%s87 + $0x92] sm:$0xff]
    %v613 = vld [vmem:[%s87 + $0x9a] sm:$0xff]
    %v614 = vld [vmem:[%s87 + $0xaa] sm:$0xff]
    %v615 = vld [vmem:[%s87 + $0xb2] sm:$0xff]
    %v616 = vld [vmem:[%s87 + $0xc2] sm:$0xff]
    %v617 = vld [vmem:[%s87 + $0xca] sm:$0xff]
    %v618 = vld [vmem:[%s87 + $0xda] sm:$0xff]
    %v619 = vld [vmem:[%s87 + $0xe2] sm:$0xff]
    %v620 = vld [vmem:[%s87 + $0xf2] sm:$0xff]
    %v621 = vld [vmem:[%s87 + $0xfa] sm:$0xff]
    %v622 = vld [vmem:[%s87 + $0x10a] sm:$0xff]
    %v623 = vld [vmem:[%s87 + $0x112] sm:$0xff]
    %v624 = vld [vmem:[%s87 + $0x122] sm:$0xff]
    %v625 = vld [vmem:[%s87 + $0x12a] sm:$0xff]
    %v626 = vld [vmem:[%s87 + $0x13a] sm:$0xff]
    %v627 = vld [vmem:[%s87 + $0x142] sm:$0xff]
    %v628 = vld [vmem:[%s87 + $0x152] sm:$0xff]
    %v629 = vld [vmem:[%s87 + $0x15a] sm:$0xff]
    %v630 = vld [vmem:[%s87 + $0x16a] sm:$0xff]
    %v631 = vld [vmem:[%s87 + $0x172] sm:$0xff]
    %v632 = vld [vmem:[%s87 + $0x1b2] sm:$0xff]
    %v633 = vld [vmem:[%s87 + $0x1ba] sm:$0xff]
    %v634 = vld [vmem:[%s87 + $0x1ca] sm:$0xff]
    %v635 = vld [vmem:[%s87 + $0x1d2] sm:$0xff]
    %v636 = vld [vmem:[%s87 + $0x1e2] sm:$0xff]
    %v637 = vld [vmem:[%s87 + $0x1ea] sm:$0xff]
    %v638 = vld [vmem:[%s87 + $0x1fa] sm:$0xff]
    %v639 = vld [vmem:[%s87 + $0x202] sm:$0xff]
    %v640 = vld [vmem:[%s87 + $0x212] sm:$0xff]
    %v641 = vld [vmem:[%s87 + $0x21a] sm:$0xff]
    %v642 = vld [vmem:[%s87 + $0x22a] sm:$0xff]
    %v643 = vld [vmem:[%s87 + $0x232] sm:$0xff]
    %v644 = vld [vmem:[%s87 + $0x242] sm:$0xff]
    %v645 = vld [vmem:[%s87 + $0x24a] sm:$0xff]
    %v646 = vld [vmem:[%s87 + $0x25a] sm:$0xff]
    %v647 = vld [vmem:[%s87 + $0x262] sm:$0xff]
    %v648 = vld [vmem:[%s87 + $0x272] sm:$0xff]
    %v649 = vld [vmem:[%s87 + $0x27a] sm:$0xff]
    %v650 = vld [vmem:[%s87 + $0x28a] sm:$0xff]
    %v651 = vld [vmem:[%s87 + $0x292] sm:$0xff]
    %v652 = vld [vmem:[%s87 + $0x2a2] sm:$0xff]
    %v653 = vld [vmem:[%s87 + $0x2aa] sm:$0xff]
    %v654 = vld [vmem:[%s87 + $0x2ba] sm:$0xff]
    %v655 = vld [vmem:[%s87 + $0x2c2] sm:$0xff]
    %v656 = vld [vmem:[%s87 + $0x2d2] sm:$0xff]
    %v657 = vld [vmem:[%s87 + $0x2da] sm:$0xff]
    %v658 = vld [vmem:[%s87 + $0x2ea] sm:$0xff]
    %v659 = vld [vmem:[%s87 + $0x2f2] sm:$0xff]
    %v660 = vld [vmem:[%s87 + $0x302] sm:$0xff]
    %v661 = vld [vmem:[%s87 + $0x30a] sm:$0xff]
    %v662 = vld [vmem:[%s87 + $0x31a] sm:$0xff]
    %v663 = vld [vmem:[%s87 + $0x322] sm:$0xff]
    %s664 = scalar_lea.vmem [#allocation2], 48
    %v665 = vld [vmem:[%s664] sm:$0xff]
    %v666 = vld [vmem:[%s664 + $0x8] sm:$0xff]
    %v667 = vld [vmem:[%s664 + $0x18] sm:$0xff]
    %v668 = vld [vmem:[%s664 + $0x20] sm:$0xff]
    %v669 = vld [vmem:[%s664 + $0x30] sm:$0xff]
    %v670 = vld [vmem:[%s664 + $0x38] sm:$0xff]
    %v671 = vld [vmem:[%s664 + $0x48] sm:$0xff]
    %v672 = vld [vmem:[%s664 + $0x50] sm:$0xff]
    %v673 = vld [vmem:[%s664 + $0x60] sm:$0xff]
    %v674 = vld [vmem:[%s664 + $0x68] sm:$0xff]
    %v675 = vld [vmem:[%s664 + $0x78] sm:$0xff]
    %v676 = vld [vmem:[%s664 + $0x80] sm:$0xff]
    %v677 = vld [vmem:[%s664 + $0x90] sm:$0xff]
    %v678 = vld [vmem:[%s664 + $0x98] sm:$0xff]
    %v679 = vld [vmem:[%s664 + $0xa8] sm:$0xff]
    %v680 = vld [vmem:[%s664 + $0xb0] sm:$0xff]
    %v681 = vld [vmem:[%s664 + $0xc0] sm:$0xff]
    %v682 = vld [vmem:[%s664 + $0xc8] sm:$0xff]
    %v683 = vld [vmem:[%s664 + $0xd8] sm:$0xff]
    %v684 = vld [vmem:[%s664 + $0xe0] sm:$0xff]
    %v685 = vld [vmem:[%s664 + $0xf0] sm:$0xff]
    %v686 = vld [vmem:[%s664 + $0xf8] sm:$0xff]
    %v687 = vld [vmem:[%s664 + $0x108] sm:$0xff]
    %v688 = vld [vmem:[%s664 + $0x110] sm:$0xff]
    %v689 = vld [vmem:[%s664 + $0x120] sm:$0xff]
    %v690 = vld [vmem:[%s664 + $0x128] sm:$0xff]
    %v691 = vld [vmem:[%s664 + $0x138] sm:$0xff]
    %v692 = vld [vmem:[%s664 + $0x140] sm:$0xff]
    %v693 = vld [vmem:[%s664 + $0x150] sm:$0xff]
    %v694 = vld [vmem:[%s664 + $0x158] sm:$0xff]
    %v695 = vld [vmem:[%s664 + $0x168] sm:$0xff]
    %v696 = vld [vmem:[%s664 + $0x170] sm:$0xff]
    %v697 = vld [vmem:[%s664 + $0x1b0] sm:$0xff]
    %v698 = vld [vmem:[%s664 + $0x1b8] sm:$0xff]
    %v699 = vld [vmem:[%s664 + $0x1c8] sm:$0xff]
    %v700 = vld [vmem:[%s664 + $0x1d0] sm:$0xff]
    %v701 = vld [vmem:[%s664 + $0x1e0] sm:$0xff]
    %v702 = vld [vmem:[%s664 + $0x1e8] sm:$0xff]
    %v703 = vld [vmem:[%s664 + $0x1f8] sm:$0xff]
    %v704 = vld [vmem:[%s664 + $0x200] sm:$0xff]
    %v705 = vld [vmem:[%s664 + $0x210] sm:$0xff]
    %v706 = vld [vmem:[%s664 + $0x218] sm:$0xff]
    %v707 = vld [vmem:[%s664 + $0x228] sm:$0xff]
    %v708 = vld [vmem:[%s664 + $0x230] sm:$0xff]
    %v709 = vld [vmem:[%s664 + $0x240] sm:$0xff]
    %v710 = vld [vmem:[%s664 + $0x248] sm:$0xff]
    %v711 = vld [vmem:[%s664 + $0x258] sm:$0xff]
    %v712 = vld [vmem:[%s664 + $0x260] sm:$0xff]
    %v713 = vld [vmem:[%s664 + $0x270] sm:$0xff]
    %v714 = vld [vmem:[%s664 + $0x278] sm:$0xff]
    %v715 = vld [vmem:[%s664 + $0x288] sm:$0xff]
    %v716 = vld [vmem:[%s664 + $0x290] sm:$0xff]
    %v717 = vld [vmem:[%s664 + $0x2a0] sm:$0xff]
    %v718 = vld [vmem:[%s664 + $0x2a8] sm:$0xff]
    %v719 = vld [vmem:[%s664 + $0x2b8] sm:$0xff]
    %v720 = vld [vmem:[%s664 + $0x2c0] sm:$0xff]
    %v721 = vld [vmem:[%s664 + $0x2d0] sm:$0xff]
    %v722 = vld [vmem:[%s664 + $0x2d8] sm:$0xff]
    %v723 = vld [vmem:[%s664 + $0x2e8] sm:$0xff]
    %v724 = vld [vmem:[%s664 + $0x2f0] sm:$0xff]
    %v725 = vld [vmem:[%s664 + $0x300] sm:$0xff]
    %v726 = vld [vmem:[%s664 + $0x308] sm:$0xff]
    %v727 = vld [vmem:[%s664 + $0x318] sm:$0xff]
    %v728 = vld [vmem:[%s664 + $0x320] sm:$0xff]
    %v729 = vld [vmem:[%s664 + $0x1] sm:$0xff]
    %v730 = vld [vmem:[%s664 + $0x9] sm:$0xff]
    %v731 = vld [vmem:[%s664 + $0x19] sm:$0xff]
    %v732 = vld [vmem:[%s664 + $0x21] sm:$0xff]
    %v733 = vld [vmem:[%s664 + $0x31] sm:$0xff]
    %v734 = vld [vmem:[%s664 + $0x39] sm:$0xff]
    %v735 = vld [vmem:[%s664 + $0x49] sm:$0xff]
    %v736 = vld [vmem:[%s664 + $0x51] sm:$0xff]
    %v737 = vld [vmem:[%s664 + $0x61] sm:$0xff]
    %v738 = vld [vmem:[%s664 + $0x69] sm:$0xff]
    %v739 = vld [vmem:[%s664 + $0x79] sm:$0xff]
    %v740 = vld [vmem:[%s664 + $0x81] sm:$0xff]
    %v741 = vld [vmem:[%s664 + $0x91] sm:$0xff]
    %v742 = vld [vmem:[%s664 + $0x99] sm:$0xff]
    %v743 = vld [vmem:[%s664 + $0xa9] sm:$0xff]
    %v744 = vld [vmem:[%s664 + $0xb1] sm:$0xff]
    %v745 = vld [vmem:[%s664 + $0xc1] sm:$0xff]
    %v746 = vld [vmem:[%s664 + $0xc9] sm:$0xff]
    %v747 = vld [vmem:[%s664 + $0xd9] sm:$0xff]
    %v748 = vld [vmem:[%s664 + $0xe1] sm:$0xff]
    %v749 = vld [vmem:[%s664 + $0xf1] sm:$0xff]
    %v750 = vld [vmem:[%s664 + $0xf9] sm:$0xff]
    %v751 = vld [vmem:[%s664 + $0x109] sm:$0xff]
    %v752 = vld [vmem:[%s664 + $0x111] sm:$0xff]
    %v753 = vld [vmem:[%s664 + $0x121] sm:$0xff]
    %v754 = vld [vmem:[%s664 + $0x129] sm:$0xff]
    %v755 = vld [vmem:[%s664 + $0x139] sm:$0xff]
    %v756 = vld [vmem:[%s664 + $0x141] sm:$0xff]
    %v757 = vld [vmem:[%s664 + $0x151] sm:$0xff]
    %v758 = vld [vmem:[%s664 + $0x159] sm:$0xff]
    %v759 = vld [vmem:[%s664 + $0x169] sm:$0xff]
    %v760 = vld [vmem:[%s664 + $0x171] sm:$0xff]
    %v761 = vld [vmem:[%s664 + $0x1b1] sm:$0xff]
    %v762 = vld [vmem:[%s664 + $0x1b9] sm:$0xff]
    %v763 = vld [vmem:[%s664 + $0x1c9] sm:$0xff]
    %v764 = vld [vmem:[%s664 + $0x1d1] sm:$0xff]
    %v765 = vld [vmem:[%s664 + $0x1e1] sm:$0xff]
    %v766 = vld [vmem:[%s664 + $0x1e9] sm:$0xff]
    %v767 = vld [vmem:[%s664 + $0x1f9] sm:$0xff]
    %v768 = vld [vmem:[%s664 + $0x201] sm:$0xff]
    %v769 = vld [vmem:[%s664 + $0x211] sm:$0xff]
    %v770 = vld [vmem:[%s664 + $0x219] sm:$0xff]
    %v771 = vld [vmem:[%s664 + $0x229] sm:$0xff]
    %v772 = vld [vmem:[%s664 + $0x231] sm:$0xff]
    %v773 = vld [vmem:[%s664 + $0x241] sm:$0xff]
    %v774 = vld [vmem:[%s664 + $0x249] sm:$0xff]
    %v775 = vld [vmem:[%s664 + $0x259] sm:$0xff]
    %v776 = vld [vmem:[%s664 + $0x261] sm:$0xff]
    %v777 = vld [vmem:[%s664 + $0x271] sm:$0xff]
    %v778 = vld [vmem:[%s664 + $0x279] sm:$0xff]
    %v779 = vld [vmem:[%s664 + $0x289] sm:$0xff]
    %v780 = vld [vmem:[%s664 + $0x291] sm:$0xff]
    %v781 = vld [vmem:[%s664 + $0x2a1] sm:$0xff]
    %v782 = vld [vmem:[%s664 + $0x2a9] sm:$0xff]
    %v783 = vld [vmem:[%s664 + $0x2b9] sm:$0xff]
    %v784 = vld [vmem:[%s664 + $0x2c1] sm:$0xff]
    %v785 = vld [vmem:[%s664 + $0x2d1] sm:$0xff]
    %v786 = vld [vmem:[%s664 + $0x2d9] sm:$0xff]
    %v787 = vld [vmem:[%s664 + $0x2e9] sm:$0xff]
    %v788 = vld [vmem:[%s664 + $0x2f1] sm:$0xff]
    %v789 = vld [vmem:[%s664 + $0x301] sm:$0xff]
    %v790 = vld [vmem:[%s664 + $0x309] sm:$0xff]
    %v791 = vld [vmem:[%s664 + $0x319] sm:$0xff]
    %v792 = vld [vmem:[%s664 + $0x321] sm:$0xff]
    %v793 = vld [vmem:[%s664 + $0x2] sm:$0xff]
    %v794 = vld [vmem:[%s664 + $0xa] sm:$0xff]
    %v795 = vld [vmem:[%s664 + $0x1a] sm:$0xff]
    %v796 = vld [vmem:[%s664 + $0x22] sm:$0xff]
    %v797 = vld [vmem:[%s664 + $0x32] sm:$0xff]
    %v798 = vld [vmem:[%s664 + $0x3a] sm:$0xff]
    %v799 = vld [vmem:[%s664 + $0x4a] sm:$0xff]
    %v800 = vld [vmem:[%s664 + $0x52] sm:$0xff]
    %v801 = vld [vmem:[%s664 + $0x62] sm:$0xff]
    %v802 = vld [vmem:[%s664 + $0x6a] sm:$0xff]
    %v803 = vld [vmem:[%s664 + $0x7a] sm:$0xff]
    %v804 = vld [vmem:[%s664 + $0x82] sm:$0xff]
    %v805 = vld [vmem:[%s664 + $0x92] sm:$0xff]
    %v806 = vld [vmem:[%s664 + $0x9a] sm:$0xff]
    %v807 = vld [vmem:[%s664 + $0xaa] sm:$0xff]
    %v808 = vld [vmem:[%s664 + $0xb2] sm:$0xff]
    %v809 = vld [vmem:[%s664 + $0xc2] sm:$0xff]
    %v810 = vld [vmem:[%s664 + $0xca] sm:$0xff]
    %v811 = vld [vmem:[%s664 + $0xda] sm:$0xff]
    %v812 = vld [vmem:[%s664 + $0xe2] sm:$0xff]
    %v813 = vld [vmem:[%s664 + $0xf2] sm:$0xff]
    %v814 = vld [vmem:[%s664 + $0xfa] sm:$0xff]
    %v815 = vld [vmem:[%s664 + $0x10a] sm:$0xff]
    %v816 = vld [vmem:[%s664 + $0x112] sm:$0xff]
    %v817 = vld [vmem:[%s664 + $0x122] sm:$0xff]
    %v818 = vld [vmem:[%s664 + $0x12a] sm:$0xff]
    %v819 = vld [vmem:[%s664 + $0x13a] sm:$0xff]
    %v820 = vld [vmem:[%s664 + $0x142] sm:$0xff]
    %v821 = vld [vmem:[%s664 + $0x152] sm:$0xff]
    %v822 = vld [vmem:[%s664 + $0x15a] sm:$0xff]
    %v823 = vld [vmem:[%s664 + $0x16a] sm:$0xff]
    %v824 = vld [vmem:[%s664 + $0x172] sm:$0xff]
    %v825 = vld [vmem:[%s664 + $0x1b2] sm:$0xff]
    %v826 = vld [vmem:[%s664 + $0x1ba] sm:$0xff]
    %v827 = vld [vmem:[%s664 + $0x1ca] sm:$0xff]
    %v828 = vld [vmem:[%s664 + $0x1d2] sm:$0xff]
    %v829 = vld [vmem:[%s664 + $0x1e2] sm:$0xff]
    %v830 = vld [vmem:[%s664 + $0x1ea] sm:$0xff]
    %v831 = vld [vmem:[%s664 + $0x1fa] sm:$0xff]
    %v832 = vld [vmem:[%s664 + $0x202] sm:$0xff]
    %v833 = vld [vmem:[%s664 + $0x212] sm:$0xff]
    %v834 = vld [vmem:[%s664 + $0x21a] sm:$0xff]
    %v835 = vld [vmem:[%s664 + $0x22a] sm:$0xff]
    %v836 = vld [vmem:[%s664 + $0x232] sm:$0xff]
    %v837 = vld [vmem:[%s664 + $0x242] sm:$0xff]
    %v838 = vld [vmem:[%s664 + $0x24a] sm:$0xff]
    %v839 = vld [vmem:[%s664 + $0x25a] sm:$0xff]
    %v840 = vld [vmem:[%s664 + $0x262] sm:$0xff]
    %v841 = vld [vmem:[%s664 + $0x272] sm:$0xff]
    %v842 = vld [vmem:[%s664 + $0x27a] sm:$0xff]
    %v843 = vld [vmem:[%s664 + $0x28a] sm:$0xff]
    %v844 = vld [vmem:[%s664 + $0x292] sm:$0xff]
    %v845 = vld [vmem:[%s664 + $0x2a2] sm:$0xff]
    %v846 = vld [vmem:[%s664 + $0x2aa] sm:$0xff]
    %v847 = vld [vmem:[%s664 + $0x2ba] sm:$0xff]
    %v848 = vld [vmem:[%s664 + $0x2c2] sm:$0xff]
    %v849 = vld [vmem:[%s664 + $0x2d2] sm:$0xff]
    %v850 = vld [vmem:[%s664 + $0x2da] sm:$0xff]
    %v851 = vld [vmem:[%s664 + $0x2ea] sm:$0xff]
    %v852 = vld [vmem:[%s664 + $0x2f2] sm:$0xff]
    %v853 = vld [vmem:[%s664 + $0x302] sm:$0xff]
    %v854 = vld [vmem:[%s664 + $0x30a] sm:$0xff]
    %v855 = vld [vmem:[%s664 + $0x31a] sm:$0xff]
    %v856 = vld [vmem:[%s664 + $0x322] sm:$0xff]
    %v857 = vld [vmem:[#allocation6] sm:$0xff]
    %v858 = vld [vmem:[#allocation6 + $0x8] sm:$0xff]
    %v859 = vld [vmem:[#allocation6 + $0x10] sm:$0xff]
    %v860 = vld [vmem:[#allocation6 + $0x18] sm:$0xff]
    %v861 = vld [vmem:[#allocation6 + $0x20] sm:$0xff]
    %v862 = vld [vmem:[#allocation6 + $0x28] sm:$0xff]
    %v863 = vld [vmem:[#allocation6 + $0x30] sm:$0xff]
    %v864 = vld [vmem:[#allocation6 + $0x38] sm:$0xff]
    %v865 = vld [vmem:[#allocation6 + $0x40] sm:$0xff]
    %v866 = vld [vmem:[#allocation6 + $0x48] sm:$0xff]
    %v867 = vld [vmem:[#allocation6 + $0x50] sm:$0xff]
    %v868 = vld [vmem:[#allocation6 + $0x58] sm:$0xff]
    %v869 = vld [vmem:[#allocation6 + $0x60] sm:$0xff]
    %v870 = vld [vmem:[#allocation6 + $0x68] sm:$0xff]
    %v871 = vld [vmem:[#allocation6 + $0x70] sm:$0xff]
    %v872 = vld [vmem:[#allocation6 + $0x78] sm:$0xff]
    %v873 = vld [vmem:[#allocation6 + $0x80] sm:$0xff]
    %v874 = vld [vmem:[#allocation6 + $0x88] sm:$0xff]
    %v875 = vld [vmem:[#allocation6 + $0x90] sm:$0xff]
    %v876 = vld [vmem:[#allocation6 + $0x98] sm:$0xff]
    %v877 = vld [vmem:[#allocation6 + $0xa0] sm:$0xff]
    %v878 = vld [vmem:[#allocation6 + $0xa8] sm:$0xff]
    %v879 = vld [vmem:[#allocation6 + $0xb0] sm:$0xff]
    %v880 = vld [vmem:[#allocation6 + $0xb8] sm:$0xff]
    %v881 = vld [vmem:[#allocation6 + $0xc0] sm:$0xff]
    %v882 = vld [vmem:[#allocation6 + $0xc8] sm:$0xff]
    %v883 = vld [vmem:[#allocation6 + $0xd0] sm:$0xff]
    %v884 = vld [vmem:[#allocation6 + $0xd8] sm:$0xff]
    %v885 = vld [vmem:[#allocation6 + $0xe0] sm:$0xff]
    %v886 = vld [vmem:[#allocation6 + $0xe8] sm:$0xff]
    %v887 = vld [vmem:[#allocation6 + $0xf0] sm:$0xff]
    %v888 = vld [vmem:[#allocation6 + $0xf8] sm:$0xff]
    %v889 = vld [vmem:[#allocation6 + $0x100] sm:$0xff]
    %v890 = vld [vmem:[#allocation6 + $0x108] sm:$0xff]
    %v891 = vld [vmem:[#allocation6 + $0x110] sm:$0xff]
    %v892 = vld [vmem:[#allocation6 + $0x118] sm:$0xff]
    %v893 = vld [vmem:[#allocation6 + $0x120] sm:$0xff]
    %v894 = vld [vmem:[#allocation6 + $0x128] sm:$0xff]
    %v895 = vld [vmem:[#allocation6 + $0x130] sm:$0xff]
    %v896 = vld [vmem:[#allocation6 + $0x138] sm:$0xff]
    %v897 = vld [vmem:[#allocation6 + $0x140] sm:$0xff]
    %v898 = vld [vmem:[#allocation6 + $0x148] sm:$0xff]
    %v899 = vld [vmem:[#allocation6 + $0x150] sm:$0xff]
    %v900 = vld [vmem:[#allocation6 + $0x158] sm:$0xff]
    %v901 = vld [vmem:[#allocation6 + $0x160] sm:$0xff]
    %v902 = vld [vmem:[#allocation6 + $0x168] sm:$0xff]
    %v903 = vld [vmem:[#allocation6 + $0x170] sm:$0xff]
    %v904 = vld [vmem:[#allocation6 + $0x178] sm:$0xff]
    %v905 = vld [vmem:[#allocation6 + $0x180] sm:$0xff]
    %v906 = vld [vmem:[#allocation6 + $0x188] sm:$0xff]
    %v907 = vld [vmem:[#allocation6 + $0x190] sm:$0xff]
    %v908 = vld [vmem:[#allocation6 + $0x198] sm:$0xff]
    %v909 = vld [vmem:[#allocation6 + $0x1a0] sm:$0xff]
    %v910 = vld [vmem:[#allocation6 + $0x1a8] sm:$0xff]
    %v911 = vld [vmem:[#allocation6 + $0x1b0] sm:$0xff]
    %v912 = vld [vmem:[#allocation6 + $0x1b8] sm:$0xff]
    %v913 = vld [vmem:[#allocation6 + $0x1c0] sm:$0xff]
    %v914 = vld [vmem:[#allocation6 + $0x1c8] sm:$0xff]
    %v915 = vld [vmem:[#allocation6 + $0x1d0] sm:$0xff]
    %v916 = vld [vmem:[#allocation6 + $0x1d8] sm:$0xff]
    %v917 = vld [vmem:[#allocation6 + $0x1e0] sm:$0xff]
    %v918 = vld [vmem:[#allocation6 + $0x1e8] sm:$0xff]
    %v919 = vld [vmem:[#allocation6 + $0x1f0] sm:$0xff]
    %v920 = vld [vmem:[#allocation6 + $0x1f8] sm:$0xff]
    %v921 = vld [vmem:[#allocation6 + $0x200] sm:$0xff]
    %v922 = vld [vmem:[#allocation6 + $0x208] sm:$0xff]
    %v923 = vld [vmem:[#allocation6 + $0x210] sm:$0xff]
    %v924 = vld [vmem:[#allocation6 + $0x218] sm:$0xff]
    %v925 = vld [vmem:[#allocation6 + $0x220] sm:$0xff]
    %v926 = vld [vmem:[#allocation6 + $0x228] sm:$0xff]
    %v927 = vld [vmem:[#allocation6 + $0x230] sm:$0xff]
    %v928 = vld [vmem:[#allocation6 + $0x238] sm:$0xff]
    %v929 = vld [vmem:[#allocation6 + $0x240] sm:$0xff]
    %v930 = vld [vmem:[#allocation6 + $0x248] sm:$0xff]
    %v931 = vld [vmem:[#allocation6 + $0x250] sm:$0xff]
    %v932 = vld [vmem:[#allocation6 + $0x258] sm:$0xff]
    %v933 = vld [vmem:[#allocation6 + $0x260] sm:$0xff]
    %v934 = vld [vmem:[#allocation6 + $0x268] sm:$0xff]
    %v935 = vld [vmem:[#allocation6 + $0x270] sm:$0xff]
    %v936 = vld [vmem:[#allocation6 + $0x278] sm:$0xff]
    %v937 = vld [vmem:[#allocation6 + $0x280] sm:$0xff]
    %v938 = vld [vmem:[#allocation6 + $0x288] sm:$0xff]
    %v939 = vld [vmem:[#allocation6 + $0x290] sm:$0xff]
    %v940 = vld [vmem:[#allocation6 + $0x298] sm:$0xff]
    %v941 = vld [vmem:[#allocation6 + $0x2a0] sm:$0xff]
    %v942 = vld [vmem:[#allocation6 + $0x2a8] sm:$0xff]
    %v943 = vld [vmem:[#allocation6 + $0x2b0] sm:$0xff]
    %v944 = vld [vmem:[#allocation6 + $0x2b8] sm:$0xff]
    %v945 = vld [vmem:[#allocation6 + $0x2c0] sm:$0xff]
    %v946 = vld [vmem:[#allocation6 + $0x2c8] sm:$0xff]
    %v947 = vld [vmem:[#allocation6 + $0x2d0] sm:$0xff]
    %v948 = vld [vmem:[#allocation6 + $0x2d8] sm:$0xff]
    %v949 = vld [vmem:[#allocation6 + $0x2e0] sm:$0xff]
    %v950 = vld [vmem:[#allocation6 + $0x2e8] sm:$0xff]
    %v951 = vld [vmem:[#allocation6 + $0x2f0] sm:$0xff]
    %v952 = vld [vmem:[#allocation6 + $0x2f8] sm:$0xff]
    %v953 = vld [vmem:[#allocation6 + $0x300] sm:$0xff]
    %v954 = vld [vmem:[#allocation6 + $0x308] sm:$0xff]
    %v955 = vld [vmem:[#allocation6 + $0x310] sm:$0xff]
    %v956 = vld [vmem:[#allocation6 + $0x318] sm:$0xff]
    %v957 = vld [vmem:[#allocation6 + $0x320] sm:$0xff]
    %v958 = vld [vmem:[#allocation6 + $0x328] sm:$0xff]
    %v959 = vld [vmem:[#allocation6 + $0x330] sm:$0xff]
    %v960 = vld [vmem:[#allocation6 + $0x338] sm:$0xff]
    %v961 = vld [vmem:[#allocation6 + $0x340] sm:$0xff]
    %v962 = vld [vmem:[#allocation6 + $0x348] sm:$0xff]
    %v963 = vld [vmem:[#allocation6 + $0x350] sm:$0xff]
    %v964 = vld [vmem:[#allocation6 + $0x358] sm:$0xff]
    %v965 = vld [vmem:[#allocation6 + $0x360] sm:$0xff]
    %v966 = vld [vmem:[#allocation6 + $0x368] sm:$0xff]
    %v967 = vld [vmem:[#allocation6 + $0x370] sm:$0xff]
    %v968 = vld [vmem:[#allocation6 + $0x378] sm:$0xff]
    %v969 = vld [vmem:[#allocation6 + $0x380] sm:$0xff]
    %v970 = vld [vmem:[#allocation6 + $0x388] sm:$0xff]
    %v971 = vld [vmem:[#allocation6 + $0x390] sm:$0xff]
    %v972 = vld [vmem:[#allocation6 + $0x398] sm:$0xff]
    %v973 = vld [vmem:[#allocation6 + $0x3a0] sm:$0xff]
    %v974 = vld [vmem:[#allocation6 + $0x3a8] sm:$0xff]
    %v975 = vld [vmem:[#allocation6 + $0x3b0] sm:$0xff]
    %v976 = vld [vmem:[#allocation6 + $0x3b8] sm:$0xff]
    %v977 = vld [vmem:[#allocation6 + $0x3c0] sm:$0xff]
    %v978 = vld [vmem:[#allocation6 + $0x3c8] sm:$0xff]
    %v979 = vld [vmem:[#allocation6 + $0x3d0] sm:$0xff]
    %v980 = vld [vmem:[#allocation6 + $0x3d8] sm:$0xff]
    %v981 = vld [vmem:[#allocation6 + $0x3e0] sm:$0xff]
    %v982 = vld [vmem:[#allocation6 + $0x3e8] sm:$0xff]
    %v983 = vld [vmem:[#allocation6 + $0x3f0] sm:$0xff]
    %v984 = vld [vmem:[#allocation6 + $0x3f8] sm:$0xff]
    %v985 = vld [vmem:[#allocation6 + $0x400] sm:$0xff]
    %v986 = vld [vmem:[#allocation6 + $0x408] sm:$0xff]
    %v987 = vld [vmem:[#allocation6 + $0x410] sm:$0xff]
    %v988 = vld [vmem:[#allocation6 + $0x418] sm:$0xff]
    %v989 = vld [vmem:[#allocation6 + $0x420] sm:$0xff]
    %v990 = vld [vmem:[#allocation6 + $0x428] sm:$0xff]
    %v991 = vld [vmem:[#allocation6 + $0x430] sm:$0xff]
    %v992 = vld [vmem:[#allocation6 + $0x438] sm:$0xff]
    %v993 = vld [vmem:[#allocation6 + $0x440] sm:$0xff]
    %v994 = vld [vmem:[#allocation6 + $0x448] sm:$0xff]
    %v995 = vld [vmem:[#allocation6 + $0x450] sm:$0xff]
    %v996 = vld [vmem:[#allocation6 + $0x458] sm:$0xff]
    %v997 = vld [vmem:[#allocation6 + $0x460] sm:$0xff]
    %v998 = vld [vmem:[#allocation6 + $0x468] sm:$0xff]
    %v999 = vld [vmem:[#allocation6 + $0x470] sm:$0xff]
    %v1000 = vld [vmem:[#allocation6 + $0x478] sm:$0xff]
    %1001 = vmatpush.msra.mxu0 %v872
    %1002 = vmatpush.msra.mxu0 %v871
    %1003 = vmatpush.msra.mxu0 %v870
    %1004 = vmatpush.msra.mxu0 %v869
    %1005 = vmatpush.msra.mxu0 %v868
    %1006 = vmatpush.msra.mxu0 %v867
    %1007 = vmatpush.msra.mxu0 %v866
    %1008 = vmatpush.msra.mxu0 %v865
    %1009 = vmatpush.msra.mxu0 %v864
    %1010 = vmatpush.msra.mxu0 %v863
    %1011 = vmatpush.msra.mxu0 %v862
    %1012 = vmatpush.msra.mxu0 %v861
    %1013 = vmatpush.msra.mxu0 %v860
    %1014 = vmatpush.msra.mxu0 %v859
    %1015 = vmatpush.msra.mxu0 %v858
    %1016 = vmatpush.msra.mxu0 %v857
    %1017 = vmatmul.f32.gmra.mxu0 %v280
    %v1018 = vpop.f32.mrf.mxu0
    %v1019 = vadd.f32 0.0, %v1018
    %1020 = vmatmul.f32.gmra.mxu0 %v281
    %v1021 = vpop.f32.mrf.mxu0
    %v1022 = vadd.f32 0.0, %v1021
    %1023 = vmatmul.f32.gmra.mxu0 %v282
    %v1024 = vpop.f32.mrf.mxu0
    %v1025 = vadd.f32 0.0, %v1024
    %1026 = vmatmul.f32.gmra.mxu0 %v283
    %v1027 = vpop.f32.mrf.mxu0
    %v1028 = vadd.f32 0.0, %v1027
    %1029 = vmatmul.f32.gmra.mxu0 %v284
    %v1030 = vpop.f32.mrf.mxu0
    %v1031 = vadd.f32 0.0, %v1030
    %1032 = vmatmul.f32.gmra.mxu0 %v285
    %v1033 = vpop.f32.mrf.mxu0
    %v1034 = vadd.f32 0.0, %v1033
    %1035 = vmatmul.f32.gmra.mxu0 %v286
    %v1036 = vpop.f32.mrf.mxu0
    %v1037 = vadd.f32 0.0, %v1036
    %1038 = vmatmul.f32.gmra.mxu0 %v287
    %v1039 = vpop.f32.mrf.mxu0
    %v1040 = vadd.f32 0.0, %v1039
    %1041 = vmatmul.f32.gmra.mxu0 %v288
    %v1042 = vpop.f32.mrf.mxu0
    %v1043 = vadd.f32 0.0, %v1042
    %1044 = vmatmul.f32.gmra.mxu0 %v289
    %v1045 = vpop.f32.mrf.mxu0
    %v1046 = vadd.f32 0.0, %v1045
    %1047 = vmatmul.f32.gmra.mxu0 %v290
    %v1048 = vpop.f32.mrf.mxu0
    %v1049 = vadd.f32 0.0, %v1048
    %1050 = vmatmul.f32.gmra.mxu0 %v291
    %v1051 = vpop.f32.mrf.mxu0
    %v1052 = vadd.f32 0.0, %v1051
    %1053 = vmatmul.f32.gmra.mxu0 %v292
    %v1054 = vpop.f32.mrf.mxu0
    %v1055 = vadd.f32 0.0, %v1054
    %1056 = vmatmul.f32.gmra.mxu0 %v293
    %v1057 = vpop.f32.mrf.mxu0
    %v1058 = vadd.f32 0.0, %v1057
    %1059 = vmatmul.f32.gmra.mxu0 %v294
    %v1060 = vpop.f32.mrf.mxu0
    %v1061 = vadd.f32 0.0, %v1060
    %1062 = vmatmul.f32.gmra.mxu0 %v295
    %v1063 = vpop.f32.mrf.mxu0
    %v1064 = vadd.f32 0.0, %v1063
    %1065 = vmatmul.f32.gmra.mxu0 %v296
    %v1066 = vpop.f32.mrf.mxu0
    %v1067 = vadd.f32 0.0, %v1066
    %1068 = vmatmul.f32.gmra.mxu0 %v297
    %v1069 = vpop.f32.mrf.mxu0
    %v1070 = vadd.f32 0.0, %v1069
    %1071 = vmatmul.f32.gmra.mxu0 %v298
    %v1072 = vpop.f32.mrf.mxu0
    %v1073 = vadd.f32 0.0, %v1072
    %1074 = vmatmul.f32.gmra.mxu0 %v299
    %v1075 = vpop.f32.mrf.mxu0
    %v1076 = vadd.f32 0.0, %v1075
    %1077 = vmatmul.f32.gmra.mxu0 %v300
    %v1078 = vpop.f32.mrf.mxu0
    %v1079 = vadd.f32 0.0, %v1078
    %1080 = vmatmul.f32.gmra.mxu0 %v301
    %v1081 = vpop.f32.mrf.mxu0
    %v1082 = vadd.f32 0.0, %v1081
    %1083 = vmatmul.f32.gmra.mxu0 %v302
    %v1084 = vpop.f32.mrf.mxu0
    %v1085 = vadd.f32 0.0, %v1084
    %1086 = vmatmul.f32.gmra.mxu0 %v303
    %v1087 = vpop.f32.mrf.mxu0
    %v1088 = vadd.f32 0.0, %v1087
    %1089 = vmatmul.f32.gmra.mxu0 %v304
    %v1090 = vpop.f32.mrf.mxu0
    %v1091 = vadd.f32 0.0, %v1090
    %1092 = vmatmul.f32.gmra.mxu0 %v305
    %v1093 = vpop.f32.mrf.mxu0
    %v1094 = vadd.f32 0.0, %v1093
    %1095 = vmatmul.f32.gmra.mxu0 %v306
    %v1096 = vpop.f32.mrf.mxu0
    %v1097 = vadd.f32 0.0, %v1096
    %1098 = vmatmul.f32.gmra.mxu0 %v307
    %v1099 = vpop.f32.mrf.mxu0
    %v1100 = vadd.f32 0.0, %v1099
    %1101 = vmatmul.f32.gmra.mxu0 %v308
    %v1102 = vpop.f32.mrf.mxu0
    %v1103 = vadd.f32 0.0, %v1102
    %1104 = vmatmul.f32.gmra.mxu0 %v309
    %v1105 = vpop.f32.mrf.mxu0
    %v1106 = vadd.f32 0.0, %v1105
    %1107 = vmatmul.f32.gmra.mxu0 %v310
    %v1108 = vpop.f32.mrf.mxu0
    %v1109 = vadd.f32 0.0, %v1108
    %1110 = vmatmul.f32.gmra.mxu0 %v311
    %v1111 = vpop.f32.mrf.mxu0
    %v1112 = vadd.f32 0.0, %v1111
    %1113 = vmatmul.f32.gmra.mxu0 %v312
    %v1114 = vpop.f32.mrf.mxu0
    %v1115 = vadd.f32 0.0, %v1114
    %1116 = vmatmul.f32.gmra.mxu0 %v313
    %v1117 = vpop.f32.mrf.mxu0
    %v1118 = vadd.f32 0.0, %v1117
    %1119 = vmatmul.f32.gmra.mxu0 %v314
    %v1120 = vpop.f32.mrf.mxu0
    %v1121 = vadd.f32 0.0, %v1120
    %1122 = vmatmul.f32.gmra.mxu0 %v315
    %v1123 = vpop.f32.mrf.mxu0
    %v1124 = vadd.f32 0.0, %v1123
    %1125 = vmatmul.f32.gmra.mxu0 %v316
    %v1126 = vpop.f32.mrf.mxu0
    %v1127 = vadd.f32 0.0, %v1126
    %1128 = vmatmul.f32.gmra.mxu0 %v317
    %v1129 = vpop.f32.mrf.mxu0
    %v1130 = vadd.f32 0.0, %v1129
    %1131 = vmatmul.f32.gmra.mxu0 %v318
    %v1132 = vpop.f32.mrf.mxu0
    %v1133 = vadd.f32 0.0, %v1132
    %1134 = vmatmul.f32.gmra.mxu0 %v319
    %v1135 = vpop.f32.mrf.mxu0
    %v1136 = vadd.f32 0.0, %v1135
    %1137 = vmatmul.f32.gmra.mxu0 %v320
    %v1138 = vpop.f32.mrf.mxu0
    %v1139 = vadd.f32 0.0, %v1138
    %1140 = vmatmul.f32.gmra.mxu0 %v321
    %v1141 = vpop.f32.mrf.mxu0
    %v1142 = vadd.f32 0.0, %v1141
    %1143 = vmatmul.f32.gmra.mxu0 %v322
    %v1144 = vpop.f32.mrf.mxu0
    %v1145 = vadd.f32 0.0, %v1144
    %1146 = vmatmul.f32.gmra.mxu0 %v323
    %v1147 = vpop.f32.mrf.mxu0
    %v1148 = vadd.f32 0.0, %v1147
    %1149 = vmatmul.f32.gmra.mxu0 %v324
    %v1150 = vpop.f32.mrf.mxu0
    %v1151 = vadd.f32 0.0, %v1150
    %1152 = vmatmul.f32.gmra.mxu0 %v325
    %v1153 = vpop.f32.mrf.mxu0
    %v1154 = vadd.f32 0.0, %v1153
    %1155 = vmatmul.f32.gmra.mxu0 %v326
    %v1156 = vpop.f32.mrf.mxu0
    %v1157 = vadd.f32 0.0, %v1156
    %1158 = vmatmul.f32.gmra.mxu0 %v327
    %v1159 = vpop.f32.mrf.mxu0
    %v1160 = vadd.f32 0.0, %v1159
    %1161 = vmatmul.f32.gmra.mxu0 %v328
    %v1162 = vpop.f32.mrf.mxu0
    %v1163 = vadd.f32 0.0, %v1162
    %1164 = vmatmul.f32.gmra.mxu0 %v329
    %v1165 = vpop.f32.mrf.mxu0
    %v1166 = vadd.f32 0.0, %v1165
    %1167 = vmatmul.f32.gmra.mxu0 %v330
    %v1168 = vpop.f32.mrf.mxu0
    %v1169 = vadd.f32 0.0, %v1168
    %1170 = vmatmul.f32.gmra.mxu0 %v331
    %v1171 = vpop.f32.mrf.mxu0
    %v1172 = vadd.f32 0.0, %v1171
    %1173 = vmatmul.f32.gmra.mxu0 %v332
    %v1174 = vpop.f32.mrf.mxu0
    %v1175 = vadd.f32 0.0, %v1174
    %1176 = vmatmul.f32.gmra.mxu0 %v333
    %v1177 = vpop.f32.mrf.mxu0
    %v1178 = vadd.f32 0.0, %v1177
    %1179 = vmatmul.f32.gmra.mxu0 %v334
    %v1180 = vpop.f32.mrf.mxu0
    %v1181 = vadd.f32 0.0, %v1180
    %1182 = vmatmul.f32.gmra.mxu0 %v335
    %v1183 = vpop.f32.mrf.mxu0
    %v1184 = vadd.f32 0.0, %v1183
    %1185 = vmatmul.f32.gmra.mxu0 %v336
    %v1186 = vpop.f32.mrf.mxu0
    %v1187 = vadd.f32 0.0, %v1186
    %1188 = vmatmul.f32.gmra.mxu0 %v337
    %v1189 = vpop.f32.mrf.mxu0
    %v1190 = vadd.f32 0.0, %v1189
    %1191 = vmatmul.f32.gmra.mxu0 %v338
    %v1192 = vpop.f32.mrf.mxu0
    %v1193 = vadd.f32 0.0, %v1192
    %1194 = vmatmul.f32.gmra.mxu0 %v339
    %v1195 = vpop.f32.mrf.mxu0
    %v1196 = vadd.f32 0.0, %v1195
    %1197 = vmatmul.f32.gmra.mxu0 %v340
    %v1198 = vpop.f32.mrf.mxu0
    %v1199 = vadd.f32 0.0, %v1198
    %1200 = vmatmul.f32.gmra.mxu0 %v341
    %v1201 = vpop.f32.mrf.mxu0
    %v1202 = vadd.f32 0.0, %v1201
    %1203 = vmatmul.f32.gmra.mxu0 %v342
    %v1204 = vpop.f32.mrf.mxu0
    %v1205 = vadd.f32 0.0, %v1204
    %1206 = vmatmul.f32.gmra.mxu0 %v343
    %v1207 = vpop.f32.mrf.mxu0
    %v1208 = vadd.f32 0.0, %v1207
    %1209 = vdwg.mxu0
    %1210 = vmatpush.msra.mxu0 %v888
    %1211 = vmatpush.msra.mxu0 %v887
    %1212 = vmatpush.msra.mxu0 %v886
    %1213 = vmatpush.msra.mxu0 %v885
    %1214 = vmatpush.msra.mxu0 %v884
    %1215 = vmatpush.msra.mxu0 %v883
    %1216 = vmatpush.msra.mxu0 %v882
    %1217 = vmatpush.msra.mxu0 %v881
    %1218 = vmatpush.msra.mxu0 %v880
    %1219 = vmatpush.msra.mxu0 %v879
    %1220 = vmatpush.msra.mxu0 %v878
    %1221 = vmatpush.msra.mxu0 %v877
    %1222 = vmatpush.msra.mxu0 %v876
    %1223 = vmatpush.msra.mxu0 %v875
    %1224 = vmatpush.msra.mxu0 %v874
    %1225 = vmatpush.msra.mxu0 %v873
    %1226 = vmatmul.f32.gmra.mxu0 %v344
    %v1227 = vpop.f32.mrf.mxu0
    %v1228 = vadd.f32 %v1019, %v1227
    %1229 = vmatmul.f32.gmra.mxu0 %v345
    %v1230 = vpop.f32.mrf.mxu0
    %v1231 = vadd.f32 %v1022, %v1230
    %1232 = vmatmul.f32.gmra.mxu0 %v346
    %v1233 = vpop.f32.mrf.mxu0
    %v1234 = vadd.f32 %v1025, %v1233
    %1235 = vmatmul.f32.gmra.mxu0 %v347
    %v1236 = vpop.f32.mrf.mxu0
    %v1237 = vadd.f32 %v1028, %v1236
    %1238 = vmatmul.f32.gmra.mxu0 %v348
    %v1239 = vpop.f32.mrf.mxu0
    %v1240 = vadd.f32 %v1031, %v1239
    %1241 = vmatmul.f32.gmra.mxu0 %v349
    %v1242 = vpop.f32.mrf.mxu0
    %v1243 = vadd.f32 %v1034, %v1242
    %1244 = vmatmul.f32.gmra.mxu0 %v350
    %v1245 = vpop.f32.mrf.mxu0
    %v1246 = vadd.f32 %v1037, %v1245
    %1247 = vmatmul.f32.gmra.mxu0 %v351
    %v1248 = vpop.f32.mrf.mxu0
    %v1249 = vadd.f32 %v1040, %v1248
    %1250 = vmatmul.f32.gmra.mxu0 %v352
    %v1251 = vpop.f32.mrf.mxu0
    %v1252 = vadd.f32 %v1043, %v1251
    %1253 = vmatmul.f32.gmra.mxu0 %v353
    %v1254 = vpop.f32.mrf.mxu0
    %v1255 = vadd.f32 %v1046, %v1254
    %1256 = vmatmul.f32.gmra.mxu0 %v354
    %v1257 = vpop.f32.mrf.mxu0
    %v1258 = vadd.f32 %v1049, %v1257
    %1259 = vmatmul.f32.gmra.mxu0 %v355
    %v1260 = vpop.f32.mrf.mxu0
    %v1261 = vadd.f32 %v1052, %v1260
    %1262 = vmatmul.f32.gmra.mxu0 %v356
    %v1263 = vpop.f32.mrf.mxu0
    %v1264 = vadd.f32 %v1055, %v1263
    %1265 = vmatmul.f32.gmra.mxu0 %v357
    %v1266 = vpop.f32.mrf.mxu0
    %v1267 = vadd.f32 %v1058, %v1266
    %1268 = vmatmul.f32.gmra.mxu0 %v358
    %v1269 = vpop.f32.mrf.mxu0
    %v1270 = vadd.f32 %v1061, %v1269
    %1271 = vmatmul.f32.gmra.mxu0 %v359
    %v1272 = vpop.f32.mrf.mxu0
    %v1273 = vadd.f32 %v1064, %v1272
    %1274 = vmatmul.f32.gmra.mxu0 %v360
    %v1275 = vpop.f32.mrf.mxu0
    %v1276 = vadd.f32 %v1067, %v1275
    %1277 = vmatmul.f32.gmra.mxu0 %v361
    %v1278 = vpop.f32.mrf.mxu0
    %v1279 = vadd.f32 %v1070, %v1278
    %1280 = vmatmul.f32.gmra.mxu0 %v362
    %v1281 = vpop.f32.mrf.mxu0
    %v1282 = vadd.f32 %v1073, %v1281
    %1283 = vmatmul.f32.gmra.mxu0 %v363
    %v1284 = vpop.f32.mrf.mxu0
    %v1285 = vadd.f32 %v1076, %v1284
    %1286 = vmatmul.f32.gmra.mxu0 %v364
    %v1287 = vpop.f32.mrf.mxu0
    %v1288 = vadd.f32 %v1079, %v1287
    %1289 = vmatmul.f32.gmra.mxu0 %v365
    %v1290 = vpop.f32.mrf.mxu0
    %v1291 = vadd.f32 %v1082, %v1290
    %1292 = vmatmul.f32.gmra.mxu0 %v366
    %v1293 = vpop.f32.mrf.mxu0
    %v1294 = vadd.f32 %v1085, %v1293
    %1295 = vmatmul.f32.gmra.mxu0 %v367
    %v1296 = vpop.f32.mrf.mxu0
    %v1297 = vadd.f32 %v1088, %v1296
    %1298 = vmatmul.f32.gmra.mxu0 %v368
    %v1299 = vpop.f32.mrf.mxu0
    %v1300 = vadd.f32 %v1091, %v1299
    %1301 = vmatmul.f32.gmra.mxu0 %v369
    %v1302 = vpop.f32.mrf.mxu0
    %v1303 = vadd.f32 %v1094, %v1302
    %1304 = vmatmul.f32.gmra.mxu0 %v370
    %v1305 = vpop.f32.mrf.mxu0
    %v1306 = vadd.f32 %v1097, %v1305
    %1307 = vmatmul.f32.gmra.mxu0 %v371
    %v1308 = vpop.f32.mrf.mxu0
    %v1309 = vadd.f32 %v1100, %v1308
    %1310 = vmatmul.f32.gmra.mxu0 %v372
    %v1311 = vpop.f32.mrf.mxu0
    %v1312 = vadd.f32 %v1103, %v1311
    %1313 = vmatmul.f32.gmra.mxu0 %v373
    %v1314 = vpop.f32.mrf.mxu0
    %v1315 = vadd.f32 %v1106, %v1314
    %1316 = vmatmul.f32.gmra.mxu0 %v374
    %v1317 = vpop.f32.mrf.mxu0
    %v1318 = vadd.f32 %v1109, %v1317
    %1319 = vmatmul.f32.gmra.mxu0 %v375
    %v1320 = vpop.f32.mrf.mxu0
    %v1321 = vadd.f32 %v1112, %v1320
    %1322 = vmatmul.f32.gmra.mxu0 %v376
    %v1323 = vpop.f32.mrf.mxu0
    %v1324 = vadd.f32 %v1115, %v1323
    %1325 = vmatmul.f32.gmra.mxu0 %v377
    %v1326 = vpop.f32.mrf.mxu0
    %v1327 = vadd.f32 %v1118, %v1326
    %1328 = vmatmul.f32.gmra.mxu0 %v378
    %v1329 = vpop.f32.mrf.mxu0
    %v1330 = vadd.f32 %v1121, %v1329
    %1331 = vmatmul.f32.gmra.mxu0 %v379
    %v1332 = vpop.f32.mrf.mxu0
    %v1333 = vadd.f32 %v1124, %v1332
    %1334 = vmatmul.f32.gmra.mxu0 %v380
    %v1335 = vpop.f32.mrf.mxu0
    %v1336 = vadd.f32 %v1127, %v1335
    %1337 = vmatmul.f32.gmra.mxu0 %v381
    %v1338 = vpop.f32.mrf.mxu0
    %v1339 = vadd.f32 %v1130, %v1338
    %1340 = vmatmul.f32.gmra.mxu0 %v382
    %v1341 = vpop.f32.mrf.mxu0
    %v1342 = vadd.f32 %v1133, %v1341
    %1343 = vmatmul.f32.gmra.mxu0 %v383
    %v1344 = vpop.f32.mrf.mxu0
    %v1345 = vadd.f32 %v1136, %v1344
    %1346 = vmatmul.f32.gmra.mxu0 %v384
    %v1347 = vpop.f32.mrf.mxu0
    %v1348 = vadd.f32 %v1139, %v1347
    %1349 = vmatmul.f32.gmra.mxu0 %v385
    %v1350 = vpop.f32.mrf.mxu0
    %v1351 = vadd.f32 %v1142, %v1350
    %1352 = vmatmul.f32.gmra.mxu0 %v386
    %v1353 = vpop.f32.mrf.mxu0
    %v1354 = vadd.f32 %v1145, %v1353
    %1355 = vmatmul.f32.gmra.mxu0 %v387
    %v1356 = vpop.f32.mrf.mxu0
    %v1357 = vadd.f32 %v1148, %v1356
    %1358 = vmatmul.f32.gmra.mxu0 %v388
    %v1359 = vpop.f32.mrf.mxu0
    %v1360 = vadd.f32 %v1151, %v1359
    %1361 = vmatmul.f32.gmra.mxu0 %v389
    %v1362 = vpop.f32.mrf.mxu0
    %v1363 = vadd.f32 %v1154, %v1362
    %1364 = vmatmul.f32.gmra.mxu0 %v390
    %v1365 = vpop.f32.mrf.mxu0
    %v1366 = vadd.f32 %v1157, %v1365
    %1367 = vmatmul.f32.gmra.mxu0 %v391
    %v1368 = vpop.f32.mrf.mxu0
    %v1369 = vadd.f32 %v1160, %v1368
    %1370 = vmatmul.f32.gmra.mxu0 %v392
    %v1371 = vpop.f32.mrf.mxu0
    %v1372 = vadd.f32 %v1163, %v1371
    %1373 = vmatmul.f32.gmra.mxu0 %v393
    %v1374 = vpop.f32.mrf.mxu0
    %v1375 = vadd.f32 %v1166, %v1374
    %1376 = vmatmul.f32.gmra.mxu0 %v394
    %v1377 = vpop.f32.mrf.mxu0
    %v1378 = vadd.f32 %v1169, %v1377
    %1379 = vmatmul.f32.gmra.mxu0 %v395
    %v1380 = vpop.f32.mrf.mxu0
    %v1381 = vadd.f32 %v1172, %v1380
    %1382 = vmatmul.f32.gmra.mxu0 %v396
    %v1383 = vpop.f32.mrf.mxu0
    %v1384 = vadd.f32 %v1175, %v1383
    %1385 = vmatmul.f32.gmra.mxu0 %v397
    %v1386 = vpop.f32.mrf.mxu0
    %v1387 = vadd.f32 %v1178, %v1386
    %1388 = vmatmul.f32.gmra.mxu0 %v398
    %v1389 = vpop.f32.mrf.mxu0
    %v1390 = vadd.f32 %v1181, %v1389
    %1391 = vmatmul.f32.gmra.mxu0 %v399
    %v1392 = vpop.f32.mrf.mxu0
    %v1393 = vadd.f32 %v1184, %v1392
    %1394 = vmatmul.f32.gmra.mxu0 %v400
    %v1395 = vpop.f32.mrf.mxu0
    %v1396 = vadd.f32 %v1187, %v1395
    %1397 = vmatmul.f32.gmra.mxu0 %v401
    %v1398 = vpop.f32.mrf.mxu0
    %v1399 = vadd.f32 %v1190, %v1398
    %1400 = vmatmul.f32.gmra.mxu0 %v402
    %v1401 = vpop.f32.mrf.mxu0
    %v1402 = vadd.f32 %v1193, %v1401
    %1403 = vmatmul.f32.gmra.mxu0 %v403
    %v1404 = vpop.f32.mrf.mxu0
    %v1405 = vadd.f32 %v1196, %v1404
    %1406 = vmatmul.f32.gmra.mxu0 %v404
    %v1407 = vpop.f32.mrf.mxu0
    %v1408 = vadd.f32 %v1199, %v1407
    %1409 = vmatmul.f32.gmra.mxu0 %v405
    %v1410 = vpop.f32.mrf.mxu0
    %v1411 = vadd.f32 %v1202, %v1410
    %1412 = vmatmul.f32.gmra.mxu0 %v406
    %v1413 = vpop.f32.mrf.mxu0
    %v1414 = vadd.f32 %v1205, %v1413
    %1415 = vmatmul.f32.gmra.mxu0 %v407
    %v1416 = vpop.f32.mrf.mxu0
    %v1417 = vadd.f32 %v1208, %v1416
    %1418 = vdwg.mxu0
    %1419 = vmatpush.msra.mxu0 %v904
    %1420 = vmatpush.msra.mxu0 %v903
    %1421 = vmatpush.msra.mxu0 %v902
    %1422 = vmatpush.msra.mxu0 %v901
    %1423 = vmatpush.msra.mxu0 %v900
    %1424 = vmatpush.msra.mxu0 %v899
    %1425 = vmatpush.msra.mxu0 %v898
    %1426 = vmatpush.msra.mxu0 %v897
    %1427 = vmatpush.msra.mxu0 %v896
    %1428 = vmatpush.msra.mxu0 %v895
    %1429 = vmatpush.msra.mxu0 %v894
    %1430 = vmatpush.msra.mxu0 %v893
    %1431 = vmatpush.msra.mxu0 %v892
    %1432 = vmatpush.msra.mxu0 %v891
    %1433 = vmatpush.msra.mxu0 %v890
    %1434 = vmatpush.msra.mxu0 %v889
    %1435 = vmatmul.f32.gmra.mxu0 %v408
    %v1436 = vpop.f32.mrf.mxu0
    %v1437 = vadd.f32 %v1228, %v1436
    %1438 = vmatmul.f32.gmra.mxu0 %v409
    %v1439 = vpop.f32.mrf.mxu0
    %v1440 = vadd.f32 %v1231, %v1439
    %1441 = vmatmul.f32.gmra.mxu0 %v410
    %v1442 = vpop.f32.mrf.mxu0
    %v1443 = vadd.f32 %v1234, %v1442
    %1444 = vmatmul.f32.gmra.mxu0 %v411
    %v1445 = vpop.f32.mrf.mxu0
    %v1446 = vadd.f32 %v1237, %v1445
    %1447 = vmatmul.f32.gmra.mxu0 %v412
    %v1448 = vpop.f32.mrf.mxu0
    %v1449 = vadd.f32 %v1240, %v1448
    %1450 = vmatmul.f32.gmra.mxu0 %v413
    %v1451 = vpop.f32.mrf.mxu0
    %v1452 = vadd.f32 %v1243, %v1451
    %1453 = vmatmul.f32.gmra.mxu0 %v414
    %v1454 = vpop.f32.mrf.mxu0
    %v1455 = vadd.f32 %v1246, %v1454
    %1456 = vmatmul.f32.gmra.mxu0 %v415
    %v1457 = vpop.f32.mrf.mxu0
    %v1458 = vadd.f32 %v1249, %v1457
    %1459 = vmatmul.f32.gmra.mxu0 %v416
    %v1460 = vpop.f32.mrf.mxu0
    %v1461 = vadd.f32 %v1252, %v1460
    %1462 = vmatmul.f32.gmra.mxu0 %v417
    %v1463 = vpop.f32.mrf.mxu0
    %v1464 = vadd.f32 %v1255, %v1463
    %1465 = vmatmul.f32.gmra.mxu0 %v418
    %v1466 = vpop.f32.mrf.mxu0
    %v1467 = vadd.f32 %v1258, %v1466
    %1468 = vmatmul.f32.gmra.mxu0 %v419
    %v1469 = vpop.f32.mrf.mxu0
    %v1470 = vadd.f32 %v1261, %v1469
    %1471 = vmatmul.f32.gmra.mxu0 %v420
    %v1472 = vpop.f32.mrf.mxu0
    %v1473 = vadd.f32 %v1264, %v1472
    %1474 = vmatmul.f32.gmra.mxu0 %v421
    %v1475 = vpop.f32.mrf.mxu0
    %v1476 = vadd.f32 %v1267, %v1475
    %1477 = vmatmul.f32.gmra.mxu0 %v422
    %v1478 = vpop.f32.mrf.mxu0
    %v1479 = vadd.f32 %v1270, %v1478
    %1480 = vmatmul.f32.gmra.mxu0 %v423
    %v1481 = vpop.f32.mrf.mxu0
    %v1482 = vadd.f32 %v1273, %v1481
    %1483 = vmatmul.f32.gmra.mxu0 %v424
    %v1484 = vpop.f32.mrf.mxu0
    %v1485 = vadd.f32 %v1276, %v1484
    %1486 = vmatmul.f32.gmra.mxu0 %v425
    %v1487 = vpop.f32.mrf.mxu0
    %v1488 = vadd.f32 %v1279, %v1487
    %1489 = vmatmul.f32.gmra.mxu0 %v426
    %v1490 = vpop.f32.mrf.mxu0
    %v1491 = vadd.f32 %v1282, %v1490
    %1492 = vmatmul.f32.gmra.mxu0 %v427
    %v1493 = vpop.f32.mrf.mxu0
    %v1494 = vadd.f32 %v1285, %v1493
    %1495 = vmatmul.f32.gmra.mxu0 %v428
    %v1496 = vpop.f32.mrf.mxu0
    %v1497 = vadd.f32 %v1288, %v1496
    %1498 = vmatmul.f32.gmra.mxu0 %v429
    %v1499 = vpop.f32.mrf.mxu0
    %v1500 = vadd.f32 %v1291, %v1499
    %1501 = vmatmul.f32.gmra.mxu0 %v430
    %v1502 = vpop.f32.mrf.mxu0
    %v1503 = vadd.f32 %v1294, %v1502
    %1504 = vmatmul.f32.gmra.mxu0 %v431
    %v1505 = vpop.f32.mrf.mxu0
    %v1506 = vadd.f32 %v1297, %v1505
    %1507 = vmatmul.f32.gmra.mxu0 %v432
    %v1508 = vpop.f32.mrf.mxu0
    %v1509 = vadd.f32 %v1300, %v1508
    %1510 = vmatmul.f32.gmra.mxu0 %v433
    %v1511 = vpop.f32.mrf.mxu0
    %v1512 = vadd.f32 %v1303, %v1511
    %1513 = vmatmul.f32.gmra.mxu0 %v434
    %v1514 = vpop.f32.mrf.mxu0
    %v1515 = vadd.f32 %v1306, %v1514
    %1516 = vmatmul.f32.gmra.mxu0 %v435
    %v1517 = vpop.f32.mrf.mxu0
    %v1518 = vadd.f32 %v1309, %v1517
    %1519 = vmatmul.f32.gmra.mxu0 %v436
    %v1520 = vpop.f32.mrf.mxu0
    %v1521 = vadd.f32 %v1312, %v1520
    %1522 = vmatmul.f32.gmra.mxu0 %v437
    %v1523 = vpop.f32.mrf.mxu0
    %v1524 = vadd.f32 %v1315, %v1523
    %1525 = vmatmul.f32.gmra.mxu0 %v438
    %v1526 = vpop.f32.mrf.mxu0
    %v1527 = vadd.f32 %v1318, %v1526
    %1528 = vmatmul.f32.gmra.mxu0 %v439
    %v1529 = vpop.f32.mrf.mxu0
    %v1530 = vadd.f32 %v1321, %v1529
    %1531 = vmatmul.f32.gmra.mxu0 %v440
    %v1532 = vpop.f32.mrf.mxu0
    %v1533 = vadd.f32 %v1324, %v1532
    %1534 = vmatmul.f32.gmra.mxu0 %v441
    %v1535 = vpop.f32.mrf.mxu0
    %v1536 = vadd.f32 %v1327, %v1535
    %1537 = vmatmul.f32.gmra.mxu0 %v442
    %v1538 = vpop.f32.mrf.mxu0
    %v1539 = vadd.f32 %v1330, %v1538
    %1540 = vmatmul.f32.gmra.mxu0 %v443
    %v1541 = vpop.f32.mrf.mxu0
    %v1542 = vadd.f32 %v1333, %v1541
    %1543 = vmatmul.f32.gmra.mxu0 %v444
    %v1544 = vpop.f32.mrf.mxu0
    %v1545 = vadd.f32 %v1336, %v1544
    %1546 = vmatmul.f32.gmra.mxu0 %v445
    %v1547 = vpop.f32.mrf.mxu0
    %v1548 = vadd.f32 %v1339, %v1547
    %1549 = vmatmul.f32.gmra.mxu0 %v446
    %v1550 = vpop.f32.mrf.mxu0
    %v1551 = vadd.f32 %v1342, %v1550
    %1552 = vmatmul.f32.gmra.mxu0 %v447
    %v1553 = vpop.f32.mrf.mxu0
    %v1554 = vadd.f32 %v1345, %v1553
    %1555 = vmatmul.f32.gmra.mxu0 %v448
    %v1556 = vpop.f32.mrf.mxu0
    %v1557 = vadd.f32 %v1348, %v1556
    %1558 = vmatmul.f32.gmra.mxu0 %v449
    %v1559 = vpop.f32.mrf.mxu0
    %v1560 = vadd.f32 %v1351, %v1559
    %1561 = vmatmul.f32.gmra.mxu0 %v450
    %v1562 = vpop.f32.mrf.mxu0
    %v1563 = vadd.f32 %v1354, %v1562
    %1564 = vmatmul.f32.gmra.mxu0 %v451
    %v1565 = vpop.f32.mrf.mxu0
    %v1566 = vadd.f32 %v1357, %v1565
    %1567 = vmatmul.f32.gmra.mxu0 %v452
    %v1568 = vpop.f32.mrf.mxu0
    %v1569 = vadd.f32 %v1360, %v1568
    %1570 = vmatmul.f32.gmra.mxu0 %v453
    %v1571 = vpop.f32.mrf.mxu0
    %v1572 = vadd.f32 %v1363, %v1571
    %1573 = vmatmul.f32.gmra.mxu0 %v454
    %v1574 = vpop.f32.mrf.mxu0
    %v1575 = vadd.f32 %v1366, %v1574
    %1576 = vmatmul.f32.gmra.mxu0 %v455
    %v1577 = vpop.f32.mrf.mxu0
    %v1578 = vadd.f32 %v1369, %v1577
    %1579 = vmatmul.f32.gmra.mxu0 %v456
    %v1580 = vpop.f32.mrf.mxu0
    %v1581 = vadd.f32 %v1372, %v1580
    %1582 = vmatmul.f32.gmra.mxu0 %v457
    %v1583 = vpop.f32.mrf.mxu0
    %v1584 = vadd.f32 %v1375, %v1583
    %1585 = vmatmul.f32.gmra.mxu0 %v458
    %v1586 = vpop.f32.mrf.mxu0
    %v1587 = vadd.f32 %v1378, %v1586
    %1588 = vmatmul.f32.gmra.mxu0 %v459
    %v1589 = vpop.f32.mrf.mxu0
    %v1590 = vadd.f32 %v1381, %v1589
    %1591 = vmatmul.f32.gmra.mxu0 %v460
    %v1592 = vpop.f32.mrf.mxu0
    %v1593 = vadd.f32 %v1384, %v1592
    %1594 = vmatmul.f32.gmra.mxu0 %v461
    %v1595 = vpop.f32.mrf.mxu0
    %v1596 = vadd.f32 %v1387, %v1595
    %1597 = vmatmul.f32.gmra.mxu0 %v462
    %v1598 = vpop.f32.mrf.mxu0
    %v1599 = vadd.f32 %v1390, %v1598
    %1600 = vmatmul.f32.gmra.mxu0 %v463
    %v1601 = vpop.f32.mrf.mxu0
    %v1602 = vadd.f32 %v1393, %v1601
    %1603 = vmatmul.f32.gmra.mxu0 %v464
    %v1604 = vpop.f32.mrf.mxu0
    %v1605 = vadd.f32 %v1396, %v1604
    %1606 = vmatmul.f32.gmra.mxu0 %v465
    %v1607 = vpop.f32.mrf.mxu0
    %v1608 = vadd.f32 %v1399, %v1607
    %1609 = vmatmul.f32.gmra.mxu0 %v466
    %v1610 = vpop.f32.mrf.mxu0
    %v1611 = vadd.f32 %v1402, %v1610
    %1612 = vmatmul.f32.gmra.mxu0 %v467
    %v1613 = vpop.f32.mrf.mxu0
    %v1614 = vadd.f32 %v1405, %v1613
    %1615 = vmatmul.f32.gmra.mxu0 %v468
    %v1616 = vpop.f32.mrf.mxu0
    %v1617 = vadd.f32 %v1408, %v1616
    %1618 = vmatmul.f32.gmra.mxu0 %v469
    %v1619 = vpop.f32.mrf.mxu0
    %v1620 = vadd.f32 %v1411, %v1619
    %1621 = vmatmul.f32.gmra.mxu0 %v470
    %v1622 = vpop.f32.mrf.mxu0
    %v1623 = vadd.f32 %v1414, %v1622
    %1624 = vmatmul.f32.gmra.mxu0 %v471
    %v1625 = vpop.f32.mrf.mxu0
    %v1626 = vadd.f32 %v1417, %v1625
    %1627 = vdwg.mxu0
    %1628 = vmatpush.msra.mxu0 %v920
    %1629 = vmatpush.msra.mxu0 %v919
    %1630 = vmatpush.msra.mxu0 %v918
    %1631 = vmatpush.msra.mxu0 %v917
    %1632 = vmatpush.msra.mxu0 %v916
    %1633 = vmatpush.msra.mxu0 %v915
    %1634 = vmatpush.msra.mxu0 %v914
    %1635 = vmatpush.msra.mxu0 %v913
    %1636 = vmatpush.msra.mxu0 %v912
    %1637 = vmatpush.msra.mxu0 %v911
    %1638 = vmatpush.msra.mxu0 %v910
    %1639 = vmatpush.msra.mxu0 %v909
    %1640 = vmatpush.msra.mxu0 %v908
    %1641 = vmatpush.msra.mxu0 %v907
    %1642 = vmatpush.msra.mxu0 %v906
    %1643 = vmatpush.msra.mxu0 %v905
    %1644 = vmatmul.f32.gmra.mxu0 %v472
    %v1645 = vpop.f32.mrf.mxu0
    %v1646 = vadd.f32 %v1437, %v1645
    %1647 = vmatmul.f32.gmra.mxu0 %v473
    %v1648 = vpop.f32.mrf.mxu0
    %v1649 = vadd.f32 %v1440, %v1648
    %1650 = vmatmul.f32.gmra.mxu0 %v474
    %v1651 = vpop.f32.mrf.mxu0
    %v1652 = vadd.f32 %v1443, %v1651
    %1653 = vmatmul.f32.gmra.mxu0 %v475
    %v1654 = vpop.f32.mrf.mxu0
    %v1655 = vadd.f32 %v1446, %v1654
    %1656 = vmatmul.f32.gmra.mxu0 %v476
    %v1657 = vpop.f32.mrf.mxu0
    %v1658 = vadd.f32 %v1449, %v1657
    %1659 = vmatmul.f32.gmra.mxu0 %v477
    %v1660 = vpop.f32.mrf.mxu0
    %v1661 = vadd.f32 %v1452, %v1660
    %1662 = vmatmul.f32.gmra.mxu0 %v478
    %v1663 = vpop.f32.mrf.mxu0
    %v1664 = vadd.f32 %v1455, %v1663
    %1665 = vmatmul.f32.gmra.mxu0 %v479
    %v1666 = vpop.f32.mrf.mxu0
    %v1667 = vadd.f32 %v1458, %v1666
    %1668 = vmatmul.f32.gmra.mxu0 %v480
    %v1669 = vpop.f32.mrf.mxu0
    %v1670 = vadd.f32 %v1461, %v1669
    %1671 = vmatmul.f32.gmra.mxu0 %v481
    %v1672 = vpop.f32.mrf.mxu0
    %v1673 = vadd.f32 %v1464, %v1672
    %1674 = vmatmul.f32.gmra.mxu0 %v482
    %v1675 = vpop.f32.mrf.mxu0
    %v1676 = vadd.f32 %v1467, %v1675
    %1677 = vmatmul.f32.gmra.mxu0 %v483
    %v1678 = vpop.f32.mrf.mxu0
    %v1679 = vadd.f32 %v1470, %v1678
    %1680 = vmatmul.f32.gmra.mxu0 %v484
    %v1681 = vpop.f32.mrf.mxu0
    %v1682 = vadd.f32 %v1473, %v1681
    %1683 = vmatmul.f32.gmra.mxu0 %v485
    %v1684 = vpop.f32.mrf.mxu0
    %v1685 = vadd.f32 %v1476, %v1684
    %1686 = vmatmul.f32.gmra.mxu0 %v486
    %v1687 = vpop.f32.mrf.mxu0
    %v1688 = vadd.f32 %v1479, %v1687
    %1689 = vmatmul.f32.gmra.mxu0 %v487
    %v1690 = vpop.f32.mrf.mxu0
    %v1691 = vadd.f32 %v1482, %v1690
    %1692 = vmatmul.f32.gmra.mxu0 %v488
    %v1693 = vpop.f32.mrf.mxu0
    %v1694 = vadd.f32 %v1485, %v1693
    %1695 = vmatmul.f32.gmra.mxu0 %v489
    %v1696 = vpop.f32.mrf.mxu0
    %v1697 = vadd.f32 %v1488, %v1696
    %1698 = vmatmul.f32.gmra.mxu0 %v490
    %v1699 = vpop.f32.mrf.mxu0
    %v1700 = vadd.f32 %v1491, %v1699
    %1701 = vmatmul.f32.gmra.mxu0 %v491
    %v1702 = vpop.f32.mrf.mxu0
    %v1703 = vadd.f32 %v1494, %v1702
    %1704 = vmatmul.f32.gmra.mxu0 %v492
    %v1705 = vpop.f32.mrf.mxu0
    %v1706 = vadd.f32 %v1497, %v1705
    %1707 = vmatmul.f32.gmra.mxu0 %v493
    %v1708 = vpop.f32.mrf.mxu0
    %v1709 = vadd.f32 %v1500, %v1708
    %1710 = vmatmul.f32.gmra.mxu0 %v494
    %v1711 = vpop.f32.mrf.mxu0
    %v1712 = vadd.f32 %v1503, %v1711
    %1713 = vmatmul.f32.gmra.mxu0 %v495
    %v1714 = vpop.f32.mrf.mxu0
    %v1715 = vadd.f32 %v1506, %v1714
    %1716 = vmatmul.f32.gmra.mxu0 %v496
    %v1717 = vpop.f32.mrf.mxu0
    %v1718 = vadd.f32 %v1509, %v1717
    %1719 = vmatmul.f32.gmra.mxu0 %v497
    %v1720 = vpop.f32.mrf.mxu0
    %v1721 = vadd.f32 %v1512, %v1720
    %1722 = vmatmul.f32.gmra.mxu0 %v498
    %v1723 = vpop.f32.mrf.mxu0
    %v1724 = vadd.f32 %v1515, %v1723
    %1725 = vmatmul.f32.gmra.mxu0 %v499
    %v1726 = vpop.f32.mrf.mxu0
    %v1727 = vadd.f32 %v1518, %v1726
    %1728 = vmatmul.f32.gmra.mxu0 %v500
    %v1729 = vpop.f32.mrf.mxu0
    %v1730 = vadd.f32 %v1521, %v1729
    %1731 = vmatmul.f32.gmra.mxu0 %v501
    %v1732 = vpop.f32.mrf.mxu0
    %v1733 = vadd.f32 %v1524, %v1732
    %1734 = vmatmul.f32.gmra.mxu0 %v502
    %v1735 = vpop.f32.mrf.mxu0
    %v1736 = vadd.f32 %v1527, %v1735
    %1737 = vmatmul.f32.gmra.mxu0 %v503
    %v1738 = vpop.f32.mrf.mxu0
    %v1739 = vadd.f32 %v1530, %v1738
    %1740 = vmatmul.f32.gmra.mxu0 %v504
    %v1741 = vpop.f32.mrf.mxu0
    %v1742 = vadd.f32 %v1533, %v1741
    %1743 = vmatmul.f32.gmra.mxu0 %v505
    %v1744 = vpop.f32.mrf.mxu0
    %v1745 = vadd.f32 %v1536, %v1744
    %1746 = vmatmul.f32.gmra.mxu0 %v506
    %v1747 = vpop.f32.mrf.mxu0
    %v1748 = vadd.f32 %v1539, %v1747
    %1749 = vmatmul.f32.gmra.mxu0 %v507
    %v1750 = vpop.f32.mrf.mxu0
    %v1751 = vadd.f32 %v1542, %v1750
    %1752 = vmatmul.f32.gmra.mxu0 %v508
    %v1753 = vpop.f32.mrf.mxu0
    %v1754 = vadd.f32 %v1545, %v1753
    %1755 = vmatmul.f32.gmra.mxu0 %v509
    %v1756 = vpop.f32.mrf.mxu0
    %v1757 = vadd.f32 %v1548, %v1756
    %1758 = vmatmul.f32.gmra.mxu0 %v510
    %v1759 = vpop.f32.mrf.mxu0
    %v1760 = vadd.f32 %v1551, %v1759
    %1761 = vmatmul.f32.gmra.mxu0 %v511
    %v1762 = vpop.f32.mrf.mxu0
    %v1763 = vadd.f32 %v1554, %v1762
    %1764 = vmatmul.f32.gmra.mxu0 %v512
    %v1765 = vpop.f32.mrf.mxu0
    %v1766 = vadd.f32 %v1557, %v1765
    %1767 = vmatmul.f32.gmra.mxu0 %v513
    %v1768 = vpop.f32.mrf.mxu0
    %v1769 = vadd.f32 %v1560, %v1768
    %1770 = vmatmul.f32.gmra.mxu0 %v514
    %v1771 = vpop.f32.mrf.mxu0
    %v1772 = vadd.f32 %v1563, %v1771
    %1773 = vmatmul.f32.gmra.mxu0 %v515
    %v1774 = vpop.f32.mrf.mxu0
    %v1775 = vadd.f32 %v1566, %v1774
    %1776 = vmatmul.f32.gmra.mxu0 %v516
    %v1777 = vpop.f32.mrf.mxu0
    %v1778 = vadd.f32 %v1569, %v1777
    %1779 = vmatmul.f32.gmra.mxu0 %v517
    %v1780 = vpop.f32.mrf.mxu0
    %v1781 = vadd.f32 %v1572, %v1780
    %1782 = vmatmul.f32.gmra.mxu0 %v518
    %v1783 = vpop.f32.mrf.mxu0
    %v1784 = vadd.f32 %v1575, %v1783
    %1785 = vmatmul.f32.gmra.mxu0 %v519
    %v1786 = vpop.f32.mrf.mxu0
    %v1787 = vadd.f32 %v1578, %v1786
    %1788 = vmatmul.f32.gmra.mxu0 %v520
    %v1789 = vpop.f32.mrf.mxu0
    %v1790 = vadd.f32 %v1581, %v1789
    %1791 = vmatmul.f32.gmra.mxu0 %v521
    %v1792 = vpop.f32.mrf.mxu0
    %v1793 = vadd.f32 %v1584, %v1792
    %1794 = vmatmul.f32.gmra.mxu0 %v522
    %v1795 = vpop.f32.mrf.mxu0
    %v1796 = vadd.f32 %v1587, %v1795
    %1797 = vmatmul.f32.gmra.mxu0 %v523
    %v1798 = vpop.f32.mrf.mxu0
    %v1799 = vadd.f32 %v1590, %v1798
    %1800 = vmatmul.f32.gmra.mxu0 %v524
    %v1801 = vpop.f32.mrf.mxu0
    %v1802 = vadd.f32 %v1593, %v1801
    %1803 = vmatmul.f32.gmra.mxu0 %v525
    %v1804 = vpop.f32.mrf.mxu0
    %v1805 = vadd.f32 %v1596, %v1804
    %1806 = vmatmul.f32.gmra.mxu0 %v526
    %v1807 = vpop.f32.mrf.mxu0
    %v1808 = vadd.f32 %v1599, %v1807
    %1809 = vmatmul.f32.gmra.mxu0 %v527
    %v1810 = vpop.f32.mrf.mxu0
    %v1811 = vadd.f32 %v1602, %v1810
    %1812 = vmatmul.f32.gmra.mxu0 %v528
    %v1813 = vpop.f32.mrf.mxu0
    %v1814 = vadd.f32 %v1605, %v1813
    %1815 = vmatmul.f32.gmra.mxu0 %v529
    %v1816 = vpop.f32.mrf.mxu0
    %v1817 = vadd.f32 %v1608, %v1816
    %1818 = vmatmul.f32.gmra.mxu0 %v530
    %v1819 = vpop.f32.mrf.mxu0
    %v1820 = vadd.f32 %v1611, %v1819
    %1821 = vmatmul.f32.gmra.mxu0 %v531
    %v1822 = vpop.f32.mrf.mxu0
    %v1823 = vadd.f32 %v1614, %v1822
    %1824 = vmatmul.f32.gmra.mxu0 %v532
    %v1825 = vpop.f32.mrf.mxu0
    %v1826 = vadd.f32 %v1617, %v1825
    %1827 = vmatmul.f32.gmra.mxu0 %v533
    %v1828 = vpop.f32.mrf.mxu0
    %v1829 = vadd.f32 %v1620, %v1828
    %1830 = vmatmul.f32.gmra.mxu0 %v534
    %v1831 = vpop.f32.mrf.mxu0
    %v1832 = vadd.f32 %v1623, %v1831
    %1833 = vmatmul.f32.gmra.mxu0 %v535
    %v1834 = vpop.f32.mrf.mxu0
    %v1835 = vadd.f32 %v1626, %v1834
    %1836 = vdwg.mxu0
    %1837 = vmatpush.msra.mxu0 %v936
    %1838 = vmatpush.msra.mxu0 %v935
    %1839 = vmatpush.msra.mxu0 %v934
    %1840 = vmatpush.msra.mxu0 %v933
    %1841 = vmatpush.msra.mxu0 %v932
    %1842 = vmatpush.msra.mxu0 %v931
    %1843 = vmatpush.msra.mxu0 %v930
    %1844 = vmatpush.msra.mxu0 %v929
    %1845 = vmatpush.msra.mxu0 %v928
    %1846 = vmatpush.msra.mxu0 %v927
    %1847 = vmatpush.msra.mxu0 %v926
    %1848 = vmatpush.msra.mxu0 %v925
    %1849 = vmatpush.msra.mxu0 %v924
    %1850 = vmatpush.msra.mxu0 %v923
    %1851 = vmatpush.msra.mxu0 %v922
    %1852 = vmatpush.msra.mxu0 %v921
    %1853 = vmatmul.f32.gmra.mxu0 %v536
    %v1854 = vpop.f32.mrf.mxu0
    %v1855 = vadd.f32 %v1646, %v1854
    %1856 = vmatmul.f32.gmra.mxu0 %v537
    %v1857 = vpop.f32.mrf.mxu0
    %v1858 = vadd.f32 %v1649, %v1857
    %1859 = vmatmul.f32.gmra.mxu0 %v538
    %v1860 = vpop.f32.mrf.mxu0
    %v1861 = vadd.f32 %v1652, %v1860
    %1862 = vmatmul.f32.gmra.mxu0 %v539
    %v1863 = vpop.f32.mrf.mxu0
    %v1864 = vadd.f32 %v1655, %v1863
    %1865 = vmatmul.f32.gmra.mxu0 %v540
    %v1866 = vpop.f32.mrf.mxu0
    %v1867 = vadd.f32 %v1658, %v1866
    %1868 = vmatmul.f32.gmra.mxu0 %v541
    %v1869 = vpop.f32.mrf.mxu0
    %v1870 = vadd.f32 %v1661, %v1869
    %1871 = vmatmul.f32.gmra.mxu0 %v542
    %v1872 = vpop.f32.mrf.mxu0
    %v1873 = vadd.f32 %v1664, %v1872
    %1874 = vmatmul.f32.gmra.mxu0 %v543
    %v1875 = vpop.f32.mrf.mxu0
    %v1876 = vadd.f32 %v1667, %v1875
    %1877 = vmatmul.f32.gmra.mxu0 %v544
    %v1878 = vpop.f32.mrf.mxu0
    %v1879 = vadd.f32 %v1670, %v1878
    %1880 = vmatmul.f32.gmra.mxu0 %v545
    %v1881 = vpop.f32.mrf.mxu0
    %v1882 = vadd.f32 %v1673, %v1881
    %1883 = vmatmul.f32.gmra.mxu0 %v546
    %v1884 = vpop.f32.mrf.mxu0
    %v1885 = vadd.f32 %v1676, %v1884
    %1886 = vmatmul.f32.gmra.mxu0 %v547
    %v1887 = vpop.f32.mrf.mxu0
    %v1888 = vadd.f32 %v1679, %v1887
    %1889 = vmatmul.f32.gmra.mxu0 %v548
    %v1890 = vpop.f32.mrf.mxu0
    %v1891 = vadd.f32 %v1682, %v1890
    %1892 = vmatmul.f32.gmra.mxu0 %v549
    %v1893 = vpop.f32.mrf.mxu0
    %v1894 = vadd.f32 %v1685, %v1893
    %1895 = vmatmul.f32.gmra.mxu0 %v550
    %v1896 = vpop.f32.mrf.mxu0
    %v1897 = vadd.f32 %v1688, %v1896
    %1898 = vmatmul.f32.gmra.mxu0 %v551
    %v1899 = vpop.f32.mrf.mxu0
    %v1900 = vadd.f32 %v1691, %v1899
    %1901 = vmatmul.f32.gmra.mxu0 %v552
    %v1902 = vpop.f32.mrf.mxu0
    %v1903 = vadd.f32 %v1694, %v1902
    %1904 = vmatmul.f32.gmra.mxu0 %v553
    %v1905 = vpop.f32.mrf.mxu0
    %v1906 = vadd.f32 %v1697, %v1905
    %1907 = vmatmul.f32.gmra.mxu0 %v554
    %v1908 = vpop.f32.mrf.mxu0
    %v1909 = vadd.f32 %v1700, %v1908
    %1910 = vmatmul.f32.gmra.mxu0 %v555
    %v1911 = vpop.f32.mrf.mxu0
    %v1912 = vadd.f32 %v1703, %v1911
    %1913 = vmatmul.f32.gmra.mxu0 %v556
    %v1914 = vpop.f32.mrf.mxu0
    %v1915 = vadd.f32 %v1706, %v1914
    %1916 = vmatmul.f32.gmra.mxu0 %v557
    %v1917 = vpop.f32.mrf.mxu0
    %v1918 = vadd.f32 %v1709, %v1917
    %1919 = vmatmul.f32.gmra.mxu0 %v558
    %v1920 = vpop.f32.mrf.mxu0
    %v1921 = vadd.f32 %v1712, %v1920
    %1922 = vmatmul.f32.gmra.mxu0 %v559
    %v1923 = vpop.f32.mrf.mxu0
    %v1924 = vadd.f32 %v1715, %v1923
    %1925 = vmatmul.f32.gmra.mxu0 %v560
    %v1926 = vpop.f32.mrf.mxu0
    %v1927 = vadd.f32 %v1718, %v1926
    %1928 = vmatmul.f32.gmra.mxu0 %v561
    %v1929 = vpop.f32.mrf.mxu0
    %v1930 = vadd.f32 %v1721, %v1929
    %1931 = vmatmul.f32.gmra.mxu0 %v562
    %v1932 = vpop.f32.mrf.mxu0
    %v1933 = vadd.f32 %v1724, %v1932
    %1934 = vmatmul.f32.gmra.mxu0 %v563
    %v1935 = vpop.f32.mrf.mxu0
    %v1936 = vadd.f32 %v1727, %v1935
    %1937 = vmatmul.f32.gmra.mxu0 %v564
    %v1938 = vpop.f32.mrf.mxu0
    %v1939 = vadd.f32 %v1730, %v1938
    %1940 = vmatmul.f32.gmra.mxu0 %v565
    %v1941 = vpop.f32.mrf.mxu0
    %v1942 = vadd.f32 %v1733, %v1941
    %1943 = vmatmul.f32.gmra.mxu0 %v566
    %v1944 = vpop.f32.mrf.mxu0
    %v1945 = vadd.f32 %v1736, %v1944
    %1946 = vmatmul.f32.gmra.mxu0 %v567
    %v1947 = vpop.f32.mrf.mxu0
    %v1948 = vadd.f32 %v1739, %v1947
    %1949 = vmatmul.f32.gmra.mxu0 %v568
    %v1950 = vpop.f32.mrf.mxu0
    %v1951 = vadd.f32 %v1742, %v1950
    %1952 = vmatmul.f32.gmra.mxu0 %v569
    %v1953 = vpop.f32.mrf.mxu0
    %v1954 = vadd.f32 %v1745, %v1953
    %1955 = vmatmul.f32.gmra.mxu0 %v570
    %v1956 = vpop.f32.mrf.mxu0
    %v1957 = vadd.f32 %v1748, %v1956
    %1958 = vmatmul.f32.gmra.mxu0 %v571
    %v1959 = vpop.f32.mrf.mxu0
    %v1960 = vadd.f32 %v1751, %v1959
    %1961 = vmatmul.f32.gmra.mxu0 %v572
    %v1962 = vpop.f32.mrf.mxu0
    %v1963 = vadd.f32 %v1754, %v1962
    %1964 = vmatmul.f32.gmra.mxu0 %v573
    %v1965 = vpop.f32.mrf.mxu0
    %v1966 = vadd.f32 %v1757, %v1965
    %1967 = vmatmul.f32.gmra.mxu0 %v574
    %v1968 = vpop.f32.mrf.mxu0
    %v1969 = vadd.f32 %v1760, %v1968
    %1970 = vmatmul.f32.gmra.mxu0 %v575
    %v1971 = vpop.f32.mrf.mxu0
    %v1972 = vadd.f32 %v1763, %v1971
    %1973 = vmatmul.f32.gmra.mxu0 %v576
    %v1974 = vpop.f32.mrf.mxu0
    %v1975 = vadd.f32 %v1766, %v1974
    %1976 = vmatmul.f32.gmra.mxu0 %v577
    %v1977 = vpop.f32.mrf.mxu0
    %v1978 = vadd.f32 %v1769, %v1977
    %1979 = vmatmul.f32.gmra.mxu0 %v578
    %v1980 = vpop.f32.mrf.mxu0
    %v1981 = vadd.f32 %v1772, %v1980
    %1982 = vmatmul.f32.gmra.mxu0 %v579
    %v1983 = vpop.f32.mrf.mxu0
    %v1984 = vadd.f32 %v1775, %v1983
    %1985 = vmatmul.f32.gmra.mxu0 %v580
    %v1986 = vpop.f32.mrf.mxu0
    %v1987 = vadd.f32 %v1778, %v1986
    %1988 = vmatmul.f32.gmra.mxu0 %v581
    %v1989 = vpop.f32.mrf.mxu0
    %v1990 = vadd.f32 %v1781, %v1989
    %1991 = vmatmul.f32.gmra.mxu0 %v582
    %v1992 = vpop.f32.mrf.mxu0
    %v1993 = vadd.f32 %v1784, %v1992
    %1994 = vmatmul.f32.gmra.mxu0 %v583
    %v1995 = vpop.f32.mrf.mxu0
    %v1996 = vadd.f32 %v1787, %v1995
    %1997 = vmatmul.f32.gmra.mxu0 %v584
    %v1998 = vpop.f32.mrf.mxu0
    %v1999 = vadd.f32 %v1790, %v1998
    %2000 = vmatmul.f32.gmra.mxu0 %v585
    %v2001 = vpop.f32.mrf.mxu0
    %v2002 = vadd.f32 %v1793, %v2001
    %2003 = vmatmul.f32.gmra.mxu0 %v586
    %v2004 = vpop.f32.mrf.mxu0
    %v2005 = vadd.f32 %v1796, %v2004
    %2006 = vmatmul.f32.gmra.mxu0 %v587
    %v2007 = vpop.f32.mrf.mxu0
    %v2008 = vadd.f32 %v1799, %v2007
    %2009 = vmatmul.f32.gmra.mxu0 %v588
    %v2010 = vpop.f32.mrf.mxu0
    %v2011 = vadd.f32 %v1802, %v2010
    %2012 = vmatmul.f32.gmra.mxu0 %v589
    %v2013 = vpop.f32.mrf.mxu0
    %v2014 = vadd.f32 %v1805, %v2013
    %2015 = vmatmul.f32.gmra.mxu0 %v590
    %v2016 = vpop.f32.mrf.mxu0
    %v2017 = vadd.f32 %v1808, %v2016
    %2018 = vmatmul.f32.gmra.mxu0 %v591
    %v2019 = vpop.f32.mrf.mxu0
    %v2020 = vadd.f32 %v1811, %v2019
    %2021 = vmatmul.f32.gmra.mxu0 %v592
    %v2022 = vpop.f32.mrf.mxu0
    %v2023 = vadd.f32 %v1814, %v2022
    %2024 = vmatmul.f32.gmra.mxu0 %v593
    %v2025 = vpop.f32.mrf.mxu0
    %v2026 = vadd.f32 %v1817, %v2025
    %2027 = vmatmul.f32.gmra.mxu0 %v594
    %v2028 = vpop.f32.mrf.mxu0
    %v2029 = vadd.f32 %v1820, %v2028
    %2030 = vmatmul.f32.gmra.mxu0 %v595
    %v2031 = vpop.f32.mrf.mxu0
    %v2032 = vadd.f32 %v1823, %v2031
    %2033 = vmatmul.f32.gmra.mxu0 %v596
    %v2034 = vpop.f32.mrf.mxu0
    %v2035 = vadd.f32 %v1826, %v2034
    %2036 = vmatmul.f32.gmra.mxu0 %v597
    %v2037 = vpop.f32.mrf.mxu0
    %v2038 = vadd.f32 %v1829, %v2037
    %2039 = vmatmul.f32.gmra.mxu0 %v598
    %v2040 = vpop.f32.mrf.mxu0
    %v2041 = vadd.f32 %v1832, %v2040
    %2042 = vmatmul.f32.gmra.mxu0 %v599
    %v2043 = vpop.f32.mrf.mxu0
    %v2044 = vadd.f32 %v1835, %v2043
    %2045 = vdwg.mxu0
    %2046 = vmatpush.msra.mxu0 %v952
    %2047 = vmatpush.msra.mxu0 %v951
    %2048 = vmatpush.msra.mxu0 %v950
    %2049 = vmatpush.msra.mxu0 %v949
    %2050 = vmatpush.msra.mxu0 %v948
    %2051 = vmatpush.msra.mxu0 %v947
    %2052 = vmatpush.msra.mxu0 %v946
    %2053 = vmatpush.msra.mxu0 %v945
    %2054 = vmatpush.msra.mxu0 %v944
    %2055 = vmatpush.msra.mxu0 %v943
    %2056 = vmatpush.msra.mxu0 %v942
    %2057 = vmatpush.msra.mxu0 %v941
    %2058 = vmatpush.msra.mxu0 %v940
    %2059 = vmatpush.msra.mxu0 %v939
    %2060 = vmatpush.msra.mxu0 %v938
    %2061 = vmatpush.msra.mxu0 %v937
    %2062 = vmatmul.f32.gmra.mxu0 %v600
    %v2063 = vpop.f32.mrf.mxu0
    %v2064 = vadd.f32 %v1855, %v2063
    %2065 = vmatmul.f32.gmra.mxu0 %v601
    %v2066 = vpop.f32.mrf.mxu0
    %v2067 = vadd.f32 %v1858, %v2066
    %2068 = vmatmul.f32.gmra.mxu0 %v602
    %v2069 = vpop.f32.mrf.mxu0
    %v2070 = vadd.f32 %v1861, %v2069
    %2071 = vmatmul.f32.gmra.mxu0 %v603
    %v2072 = vpop.f32.mrf.mxu0
    %v2073 = vadd.f32 %v1864, %v2072
    %2074 = vmatmul.f32.gmra.mxu0 %v604
    %v2075 = vpop.f32.mrf.mxu0
    %v2076 = vadd.f32 %v1867, %v2075
    %2077 = vmatmul.f32.gmra.mxu0 %v605
    %v2078 = vpop.f32.mrf.mxu0
    %v2079 = vadd.f32 %v1870, %v2078
    %2080 = vmatmul.f32.gmra.mxu0 %v606
    %v2081 = vpop.f32.mrf.mxu0
    %v2082 = vadd.f32 %v1873, %v2081
    %2083 = vmatmul.f32.gmra.mxu0 %v607
    %v2084 = vpop.f32.mrf.mxu0
    %v2085 = vadd.f32 %v1876, %v2084
    %2086 = vmatmul.f32.gmra.mxu0 %v608
    %v2087 = vpop.f32.mrf.mxu0
    %v2088 = vadd.f32 %v1879, %v2087
    %2089 = vmatmul.f32.gmra.mxu0 %v609
    %v2090 = vpop.f32.mrf.mxu0
    %v2091 = vadd.f32 %v1882, %v2090
    %2092 = vmatmul.f32.gmra.mxu0 %v610
    %v2093 = vpop.f32.mrf.mxu0
    %v2094 = vadd.f32 %v1885, %v2093
    %2095 = vmatmul.f32.gmra.mxu0 %v611
    %v2096 = vpop.f32.mrf.mxu0
    %v2097 = vadd.f32 %v1888, %v2096
    %2098 = vmatmul.f32.gmra.mxu0 %v612
    %v2099 = vpop.f32.mrf.mxu0
    %v2100 = vadd.f32 %v1891, %v2099
    %2101 = vmatmul.f32.gmra.mxu0 %v613
    %v2102 = vpop.f32.mrf.mxu0
    %v2103 = vadd.f32 %v1894, %v2102
    %2104 = vmatmul.f32.gmra.mxu0 %v614
    %v2105 = vpop.f32.mrf.mxu0
    %v2106 = vadd.f32 %v1897, %v2105
    %2107 = vmatmul.f32.gmra.mxu0 %v615
    %v2108 = vpop.f32.mrf.mxu0
    %v2109 = vadd.f32 %v1900, %v2108
    %2110 = vmatmul.f32.gmra.mxu0 %v616
    %v2111 = vpop.f32.mrf.mxu0
    %v2112 = vadd.f32 %v1903, %v2111
    %2113 = vmatmul.f32.gmra.mxu0 %v617
    %v2114 = vpop.f32.mrf.mxu0
    %v2115 = vadd.f32 %v1906, %v2114
    %2116 = vmatmul.f32.gmra.mxu0 %v618
    %v2117 = vpop.f32.mrf.mxu0
    %v2118 = vadd.f32 %v1909, %v2117
    %2119 = vmatmul.f32.gmra.mxu0 %v619
    %v2120 = vpop.f32.mrf.mxu0
    %v2121 = vadd.f32 %v1912, %v2120
    %2122 = vmatmul.f32.gmra.mxu0 %v620
    %v2123 = vpop.f32.mrf.mxu0
    %v2124 = vadd.f32 %v1915, %v2123
    %2125 = vmatmul.f32.gmra.mxu0 %v621
    %v2126 = vpop.f32.mrf.mxu0
    %v2127 = vadd.f32 %v1918, %v2126
    %2128 = vmatmul.f32.gmra.mxu0 %v622
    %v2129 = vpop.f32.mrf.mxu0
    %v2130 = vadd.f32 %v1921, %v2129
    %2131 = vmatmul.f32.gmra.mxu0 %v623
    %v2132 = vpop.f32.mrf.mxu0
    %v2133 = vadd.f32 %v1924, %v2132
    %2134 = vmatmul.f32.gmra.mxu0 %v624
    %v2135 = vpop.f32.mrf.mxu0
    %v2136 = vadd.f32 %v1927, %v2135
    %2137 = vmatmul.f32.gmra.mxu0 %v625
    %v2138 = vpop.f32.mrf.mxu0
    %v2139 = vadd.f32 %v1930, %v2138
    %2140 = vmatmul.f32.gmra.mxu0 %v626
    %v2141 = vpop.f32.mrf.mxu0
    %v2142 = vadd.f32 %v1933, %v2141
    %2143 = vmatmul.f32.gmra.mxu0 %v627
    %v2144 = vpop.f32.mrf.mxu0
    %v2145 = vadd.f32 %v1936, %v2144
    %2146 = vmatmul.f32.gmra.mxu0 %v628
    %v2147 = vpop.f32.mrf.mxu0
    %v2148 = vadd.f32 %v1939, %v2147
    %2149 = vmatmul.f32.gmra.mxu0 %v629
    %v2150 = vpop.f32.mrf.mxu0
    %v2151 = vadd.f32 %v1942, %v2150
    %2152 = vmatmul.f32.gmra.mxu0 %v630
    %v2153 = vpop.f32.mrf.mxu0
    %v2154 = vadd.f32 %v1945, %v2153
    %2155 = vmatmul.f32.gmra.mxu0 %v631
    %v2156 = vpop.f32.mrf.mxu0
    %v2157 = vadd.f32 %v1948, %v2156
    %2158 = vmatmul.f32.gmra.mxu0 %v632
    %v2159 = vpop.f32.mrf.mxu0
    %v2160 = vadd.f32 %v1951, %v2159
    %2161 = vmatmul.f32.gmra.mxu0 %v633
    %v2162 = vpop.f32.mrf.mxu0
    %v2163 = vadd.f32 %v1954, %v2162
    %2164 = vmatmul.f32.gmra.mxu0 %v634
    %v2165 = vpop.f32.mrf.mxu0
    %v2166 = vadd.f32 %v1957, %v2165
    %2167 = vmatmul.f32.gmra.mxu0 %v635
    %v2168 = vpop.f32.mrf.mxu0
    %v2169 = vadd.f32 %v1960, %v2168
    %2170 = vmatmul.f32.gmra.mxu0 %v636
    %v2171 = vpop.f32.mrf.mxu0
    %v2172 = vadd.f32 %v1963, %v2171
    %2173 = vmatmul.f32.gmra.mxu0 %v637
    %v2174 = vpop.f32.mrf.mxu0
    %v2175 = vadd.f32 %v1966, %v2174
    %2176 = vmatmul.f32.gmra.mxu0 %v638
    %v2177 = vpop.f32.mrf.mxu0
    %v2178 = vadd.f32 %v1969, %v2177
    %2179 = vmatmul.f32.gmra.mxu0 %v639
    %v2180 = vpop.f32.mrf.mxu0
    %v2181 = vadd.f32 %v1972, %v2180
    %2182 = vmatmul.f32.gmra.mxu0 %v640
    %v2183 = vpop.f32.mrf.mxu0
    %v2184 = vadd.f32 %v1975, %v2183
    %2185 = vmatmul.f32.gmra.mxu0 %v641
    %v2186 = vpop.f32.mrf.mxu0
    %v2187 = vadd.f32 %v1978, %v2186
    %2188 = vmatmul.f32.gmra.mxu0 %v642
    %v2189 = vpop.f32.mrf.mxu0
    %v2190 = vadd.f32 %v1981, %v2189
    %2191 = vmatmul.f32.gmra.mxu0 %v643
    %v2192 = vpop.f32.mrf.mxu0
    %v2193 = vadd.f32 %v1984, %v2192
    %2194 = vmatmul.f32.gmra.mxu0 %v644
    %v2195 = vpop.f32.mrf.mxu0
    %v2196 = vadd.f32 %v1987, %v2195
    %2197 = vmatmul.f32.gmra.mxu0 %v645
    %v2198 = vpop.f32.mrf.mxu0
    %v2199 = vadd.f32 %v1990, %v2198
    %2200 = vmatmul.f32.gmra.mxu0 %v646
    %v2201 = vpop.f32.mrf.mxu0
    %v2202 = vadd.f32 %v1993, %v2201
    %2203 = vmatmul.f32.gmra.mxu0 %v647
    %v2204 = vpop.f32.mrf.mxu0
    %v2205 = vadd.f32 %v1996, %v2204
    %2206 = vmatmul.f32.gmra.mxu0 %v648
    %v2207 = vpop.f32.mrf.mxu0
    %v2208 = vadd.f32 %v1999, %v2207
    %2209 = vmatmul.f32.gmra.mxu0 %v649
    %v2210 = vpop.f32.mrf.mxu0
    %v2211 = vadd.f32 %v2002, %v2210
    %2212 = vmatmul.f32.gmra.mxu0 %v650
    %v2213 = vpop.f32.mrf.mxu0
    %v2214 = vadd.f32 %v2005, %v2213
    %2215 = vmatmul.f32.gmra.mxu0 %v651
    %v2216 = vpop.f32.mrf.mxu0
    %v2217 = vadd.f32 %v2008, %v2216
    %2218 = vmatmul.f32.gmra.mxu0 %v652
    %v2219 = vpop.f32.mrf.mxu0
    %v2220 = vadd.f32 %v2011, %v2219
    %2221 = vmatmul.f32.gmra.mxu0 %v653
    %v2222 = vpop.f32.mrf.mxu0
    %v2223 = vadd.f32 %v2014, %v2222
    %2224 = vmatmul.f32.gmra.mxu0 %v654
    %v2225 = vpop.f32.mrf.mxu0
    %v2226 = vadd.f32 %v2017, %v2225
    %2227 = vmatmul.f32.gmra.mxu0 %v655
    %v2228 = vpop.f32.mrf.mxu0
    %v2229 = vadd.f32 %v2020, %v2228
    %2230 = vmatmul.f32.gmra.mxu0 %v656
    %v2231 = vpop.f32.mrf.mxu0
    %v2232 = vadd.f32 %v2023, %v2231
    %2233 = vmatmul.f32.gmra.mxu0 %v657
    %v2234 = vpop.f32.mrf.mxu0
    %v2235 = vadd.f32 %v2026, %v2234
    %2236 = vmatmul.f32.gmra.mxu0 %v658
    %v2237 = vpop.f32.mrf.mxu0
    %v2238 = vadd.f32 %v2029, %v2237
    %2239 = vmatmul.f32.gmra.mxu0 %v659
    %v2240 = vpop.f32.mrf.mxu0
    %v2241 = vadd.f32 %v2032, %v2240
    %2242 = vmatmul.f32.gmra.mxu0 %v660
    %v2243 = vpop.f32.mrf.mxu0
    %v2244 = vadd.f32 %v2035, %v2243
    %2245 = vmatmul.f32.gmra.mxu0 %v661
    %v2246 = vpop.f32.mrf.mxu0
    %v2247 = vadd.f32 %v2038, %v2246
    %2248 = vmatmul.f32.gmra.mxu0 %v662
    %v2249 = vpop.f32.mrf.mxu0
    %v2250 = vadd.f32 %v2041, %v2249
    %2251 = vmatmul.f32.gmra.mxu0 %v663
    %v2252 = vpop.f32.mrf.mxu0
    %v2253 = vadd.f32 %v2044, %v2252
    %2254 = vdwg.mxu0
    %2255 = vmatpush.msra.mxu0 %v968
    %2256 = vmatpush.msra.mxu0 %v967
    %2257 = vmatpush.msra.mxu0 %v966
    %2258 = vmatpush.msra.mxu0 %v965
    %2259 = vmatpush.msra.mxu0 %v964
    %2260 = vmatpush.msra.mxu0 %v963
    %2261 = vmatpush.msra.mxu0 %v962
    %2262 = vmatpush.msra.mxu0 %v961
    %2263 = vmatpush.msra.mxu0 %v960
    %2264 = vmatpush.msra.mxu0 %v959
    %2265 = vmatpush.msra.mxu0 %v958
    %2266 = vmatpush.msra.mxu0 %v957
    %2267 = vmatpush.msra.mxu0 %v956
    %2268 = vmatpush.msra.mxu0 %v955
    %2269 = vmatpush.msra.mxu0 %v954
    %2270 = vmatpush.msra.mxu0 %v953
    %2271 = vmatmul.f32.gmra.mxu0 %v665
    %v2272 = vpop.f32.mrf.mxu0
    %v2273 = vadd.f32 %v2064, %v2272
    %2274 = vmatmul.f32.gmra.mxu0 %v666
    %v2275 = vpop.f32.mrf.mxu0
    %v2276 = vadd.f32 %v2067, %v2275
    %2277 = vmatmul.f32.gmra.mxu0 %v667
    %v2278 = vpop.f32.mrf.mxu0
    %v2279 = vadd.f32 %v2070, %v2278
    %2280 = vmatmul.f32.gmra.mxu0 %v668
    %v2281 = vpop.f32.mrf.mxu0
    %v2282 = vadd.f32 %v2073, %v2281
    %2283 = vmatmul.f32.gmra.mxu0 %v669
    %v2284 = vpop.f32.mrf.mxu0
    %v2285 = vadd.f32 %v2076, %v2284
    %2286 = vmatmul.f32.gmra.mxu0 %v670
    %v2287 = vpop.f32.mrf.mxu0
    %v2288 = vadd.f32 %v2079, %v2287
    %2289 = vmatmul.f32.gmra.mxu0 %v671
    %v2290 = vpop.f32.mrf.mxu0
    %v2291 = vadd.f32 %v2082, %v2290
    %2292 = vmatmul.f32.gmra.mxu0 %v672
    %v2293 = vpop.f32.mrf.mxu0
    %v2294 = vadd.f32 %v2085, %v2293
    %2295 = vmatmul.f32.gmra.mxu0 %v673
    %v2296 = vpop.f32.mrf.mxu0
    %v2297 = vadd.f32 %v2088, %v2296
    %2298 = vmatmul.f32.gmra.mxu0 %v674
    %v2299 = vpop.f32.mrf.mxu0
    %v2300 = vadd.f32 %v2091, %v2299
    %2301 = vmatmul.f32.gmra.mxu0 %v675
    %v2302 = vpop.f32.mrf.mxu0
    %v2303 = vadd.f32 %v2094, %v2302
    %2304 = vmatmul.f32.gmra.mxu0 %v676
    %v2305 = vpop.f32.mrf.mxu0
    %v2306 = vadd.f32 %v2097, %v2305
    %2307 = vmatmul.f32.gmra.mxu0 %v677
    %v2308 = vpop.f32.mrf.mxu0
    %v2309 = vadd.f32 %v2100, %v2308
    %2310 = vmatmul.f32.gmra.mxu0 %v678
    %v2311 = vpop.f32.mrf.mxu0
    %v2312 = vadd.f32 %v2103, %v2311
    %2313 = vmatmul.f32.gmra.mxu0 %v679
    %v2314 = vpop.f32.mrf.mxu0
    %v2315 = vadd.f32 %v2106, %v2314
    %2316 = vmatmul.f32.gmra.mxu0 %v680
    %v2317 = vpop.f32.mrf.mxu0
    %v2318 = vadd.f32 %v2109, %v2317
    %2319 = vmatmul.f32.gmra.mxu0 %v681
    %v2320 = vpop.f32.mrf.mxu0
    %v2321 = vadd.f32 %v2112, %v2320
    %2322 = vmatmul.f32.gmra.mxu0 %v682
    %v2323 = vpop.f32.mrf.mxu0
    %v2324 = vadd.f32 %v2115, %v2323
    %2325 = vmatmul.f32.gmra.mxu0 %v683
    %v2326 = vpop.f32.mrf.mxu0
    %v2327 = vadd.f32 %v2118, %v2326
    %2328 = vmatmul.f32.gmra.mxu0 %v684
    %v2329 = vpop.f32.mrf.mxu0
    %v2330 = vadd.f32 %v2121, %v2329
    %2331 = vmatmul.f32.gmra.mxu0 %v685
    %v2332 = vpop.f32.mrf.mxu0
    %v2333 = vadd.f32 %v2124, %v2332
    %2334 = vmatmul.f32.gmra.mxu0 %v686
    %v2335 = vpop.f32.mrf.mxu0
    %v2336 = vadd.f32 %v2127, %v2335
    %2337 = vmatmul.f32.gmra.mxu0 %v687
    %v2338 = vpop.f32.mrf.mxu0
    %v2339 = vadd.f32 %v2130, %v2338
    %2340 = vmatmul.f32.gmra.mxu0 %v688
    %v2341 = vpop.f32.mrf.mxu0
    %v2342 = vadd.f32 %v2133, %v2341
    %2343 = vmatmul.f32.gmra.mxu0 %v689
    %v2344 = vpop.f32.mrf.mxu0
    %v2345 = vadd.f32 %v2136, %v2344
    %2346 = vmatmul.f32.gmra.mxu0 %v690
    %v2347 = vpop.f32.mrf.mxu0
    %v2348 = vadd.f32 %v2139, %v2347
    %2349 = vmatmul.f32.gmra.mxu0 %v691
    %v2350 = vpop.f32.mrf.mxu0
    %v2351 = vadd.f32 %v2142, %v2350
    %2352 = vmatmul.f32.gmra.mxu0 %v692
    %v2353 = vpop.f32.mrf.mxu0
    %v2354 = vadd.f32 %v2145, %v2353
    %2355 = vmatmul.f32.gmra.mxu0 %v693
    %v2356 = vpop.f32.mrf.mxu0
    %v2357 = vadd.f32 %v2148, %v2356
    %2358 = vmatmul.f32.gmra.mxu0 %v694
    %v2359 = vpop.f32.mrf.mxu0
    %v2360 = vadd.f32 %v2151, %v2359
    %2361 = vmatmul.f32.gmra.mxu0 %v695
    %v2362 = vpop.f32.mrf.mxu0
    %v2363 = vadd.f32 %v2154, %v2362
    %2364 = vmatmul.f32.gmra.mxu0 %v696
    %v2365 = vpop.f32.mrf.mxu0
    %v2366 = vadd.f32 %v2157, %v2365
    %2367 = vmatmul.f32.gmra.mxu0 %v697
    %v2368 = vpop.f32.mrf.mxu0
    %v2369 = vadd.f32 %v2160, %v2368
    %2370 = vmatmul.f32.gmra.mxu0 %v698
    %v2371 = vpop.f32.mrf.mxu0
    %v2372 = vadd.f32 %v2163, %v2371
    %2373 = vmatmul.f32.gmra.mxu0 %v699
    %v2374 = vpop.f32.mrf.mxu0
    %v2375 = vadd.f32 %v2166, %v2374
    %2376 = vmatmul.f32.gmra.mxu0 %v700
    %v2377 = vpop.f32.mrf.mxu0
    %v2378 = vadd.f32 %v2169, %v2377
    %2379 = vmatmul.f32.gmra.mxu0 %v701
    %v2380 = vpop.f32.mrf.mxu0
    %v2381 = vadd.f32 %v2172, %v2380
    %2382 = vmatmul.f32.gmra.mxu0 %v702
    %v2383 = vpop.f32.mrf.mxu0
    %v2384 = vadd.f32 %v2175, %v2383
    %2385 = vmatmul.f32.gmra.mxu0 %v703
    %v2386 = vpop.f32.mrf.mxu0
    %v2387 = vadd.f32 %v2178, %v2386
    %2388 = vmatmul.f32.gmra.mxu0 %v704
    %v2389 = vpop.f32.mrf.mxu0
    %v2390 = vadd.f32 %v2181, %v2389
    %2391 = vmatmul.f32.gmra.mxu0 %v705
    %v2392 = vpop.f32.mrf.mxu0
    %v2393 = vadd.f32 %v2184, %v2392
    %2394 = vmatmul.f32.gmra.mxu0 %v706
    %v2395 = vpop.f32.mrf.mxu0
    %v2396 = vadd.f32 %v2187, %v2395
    %2397 = vmatmul.f32.gmra.mxu0 %v707
    %v2398 = vpop.f32.mrf.mxu0
    %v2399 = vadd.f32 %v2190, %v2398
    %2400 = vmatmul.f32.gmra.mxu0 %v708
    %v2401 = vpop.f32.mrf.mxu0
    %v2402 = vadd.f32 %v2193, %v2401
    %2403 = vmatmul.f32.gmra.mxu0 %v709
    %v2404 = vpop.f32.mrf.mxu0
    %v2405 = vadd.f32 %v2196, %v2404
    %2406 = vmatmul.f32.gmra.mxu0 %v710
    %v2407 = vpop.f32.mrf.mxu0
    %v2408 = vadd.f32 %v2199, %v2407
    %2409 = vmatmul.f32.gmra.mxu0 %v711
    %v2410 = vpop.f32.mrf.mxu0
    %v2411 = vadd.f32 %v2202, %v2410
    %2412 = vmatmul.f32.gmra.mxu0 %v712
    %v2413 = vpop.f32.mrf.mxu0
    %v2414 = vadd.f32 %v2205, %v2413
    %2415 = vmatmul.f32.gmra.mxu0 %v713
    %v2416 = vpop.f32.mrf.mxu0
    %v2417 = vadd.f32 %v2208, %v2416
    %2418 = vmatmul.f32.gmra.mxu0 %v714
    %v2419 = vpop.f32.mrf.mxu0
    %v2420 = vadd.f32 %v2211, %v2419
    %2421 = vmatmul.f32.gmra.mxu0 %v715
    %v2422 = vpop.f32.mrf.mxu0
    %v2423 = vadd.f32 %v2214, %v2422
    %2424 = vmatmul.f32.gmra.mxu0 %v716
    %v2425 = vpop.f32.mrf.mxu0
    %v2426 = vadd.f32 %v2217, %v2425
    %2427 = vmatmul.f32.gmra.mxu0 %v717
    %v2428 = vpop.f32.mrf.mxu0
    %v2429 = vadd.f32 %v2220, %v2428
    %2430 = vmatmul.f32.gmra.mxu0 %v718
    %v2431 = vpop.f32.mrf.mxu0
    %v2432 = vadd.f32 %v2223, %v2431
    %2433 = vmatmul.f32.gmra.mxu0 %v719
    %v2434 = vpop.f32.mrf.mxu0
    %v2435 = vadd.f32 %v2226, %v2434
    %2436 = vmatmul.f32.gmra.mxu0 %v720
    %v2437 = vpop.f32.mrf.mxu0
    %v2438 = vadd.f32 %v2229, %v2437
    %2439 = vmatmul.f32.gmra.mxu0 %v721
    %v2440 = vpop.f32.mrf.mxu0
    %v2441 = vadd.f32 %v2232, %v2440
    %2442 = vmatmul.f32.gmra.mxu0 %v722
    %v2443 = vpop.f32.mrf.mxu0
    %v2444 = vadd.f32 %v2235, %v2443
    %2445 = vmatmul.f32.gmra.mxu0 %v723
    %v2446 = vpop.f32.mrf.mxu0
    %v2447 = vadd.f32 %v2238, %v2446
    %2448 = vmatmul.f32.gmra.mxu0 %v724
    %v2449 = vpop.f32.mrf.mxu0
    %v2450 = vadd.f32 %v2241, %v2449
    %2451 = vmatmul.f32.gmra.mxu0 %v725
    %v2452 = vpop.f32.mrf.mxu0
    %v2453 = vadd.f32 %v2244, %v2452
    %2454 = vmatmul.f32.gmra.mxu0 %v726
    %v2455 = vpop.f32.mrf.mxu0
    %v2456 = vadd.f32 %v2247, %v2455
    %2457 = vmatmul.f32.gmra.mxu0 %v727
    %v2458 = vpop.f32.mrf.mxu0
    %v2459 = vadd.f32 %v2250, %v2458
    %2460 = vmatmul.f32.gmra.mxu0 %v728
    %v2461 = vpop.f32.mrf.mxu0
    %v2462 = vadd.f32 %v2253, %v2461
    %2463 = vdwg.mxu0
    %2464 = vmatpush.msra.mxu0 %v984
    %2465 = vmatpush.msra.mxu0 %v983
    %2466 = vmatpush.msra.mxu0 %v982
    %2467 = vmatpush.msra.mxu0 %v981
    %2468 = vmatpush.msra.mxu0 %v980
    %2469 = vmatpush.msra.mxu0 %v979
    %2470 = vmatpush.msra.mxu0 %v978
    %2471 = vmatpush.msra.mxu0 %v977
    %2472 = vmatpush.msra.mxu0 %v976
    %2473 = vmatpush.msra.mxu0 %v975
    %2474 = vmatpush.msra.mxu0 %v974
    %2475 = vmatpush.msra.mxu0 %v973
    %2476 = vmatpush.msra.mxu0 %v972
    %2477 = vmatpush.msra.mxu0 %v971
    %2478 = vmatpush.msra.mxu0 %v970
    %2479 = vmatpush.msra.mxu0 %v969
    %2480 = vmatmul.f32.gmra.mxu0 %v729
    %v2481 = vpop.f32.mrf.mxu0
    %v2482 = vadd.f32 %v2273, %v2481
    %2483 = vmatmul.f32.gmra.mxu0 %v730
    %v2484 = vpop.f32.mrf.mxu0
    %v2485 = vadd.f32 %v2276, %v2484
    %2486 = vmatmul.f32.gmra.mxu0 %v731
    %v2487 = vpop.f32.mrf.mxu0
    %v2488 = vadd.f32 %v2279, %v2487
    %2489 = vmatmul.f32.gmra.mxu0 %v732
    %v2490 = vpop.f32.mrf.mxu0
    %v2491 = vadd.f32 %v2282, %v2490
    %2492 = vmatmul.f32.gmra.mxu0 %v733
    %v2493 = vpop.f32.mrf.mxu0
    %v2494 = vadd.f32 %v2285, %v2493
    %2495 = vmatmul.f32.gmra.mxu0 %v734
    %v2496 = vpop.f32.mrf.mxu0
    %v2497 = vadd.f32 %v2288, %v2496
    %2498 = vmatmul.f32.gmra.mxu0 %v735
    %v2499 = vpop.f32.mrf.mxu0
    %v2500 = vadd.f32 %v2291, %v2499
    %2501 = vmatmul.f32.gmra.mxu0 %v736
    %v2502 = vpop.f32.mrf.mxu0
    %v2503 = vadd.f32 %v2294, %v2502
    %2504 = vmatmul.f32.gmra.mxu0 %v737
    %v2505 = vpop.f32.mrf.mxu0
    %v2506 = vadd.f32 %v2297, %v2505
    %2507 = vmatmul.f32.gmra.mxu0 %v738
    %v2508 = vpop.f32.mrf.mxu0
    %v2509 = vadd.f32 %v2300, %v2508
    %2510 = vmatmul.f32.gmra.mxu0 %v739
    %v2511 = vpop.f32.mrf.mxu0
    %v2512 = vadd.f32 %v2303, %v2511
    %2513 = vmatmul.f32.gmra.mxu0 %v740
    %v2514 = vpop.f32.mrf.mxu0
    %v2515 = vadd.f32 %v2306, %v2514
    %2516 = vmatmul.f32.gmra.mxu0 %v741
    %v2517 = vpop.f32.mrf.mxu0
    %v2518 = vadd.f32 %v2309, %v2517
    %2519 = vmatmul.f32.gmra.mxu0 %v742
    %v2520 = vpop.f32.mrf.mxu0
    %v2521 = vadd.f32 %v2312, %v2520
    %2522 = vmatmul.f32.gmra.mxu0 %v743
    %v2523 = vpop.f32.mrf.mxu0
    %v2524 = vadd.f32 %v2315, %v2523
    %2525 = vmatmul.f32.gmra.mxu0 %v744
    %v2526 = vpop.f32.mrf.mxu0
    %v2527 = vadd.f32 %v2318, %v2526
    %2528 = vmatmul.f32.gmra.mxu0 %v745
    %v2529 = vpop.f32.mrf.mxu0
    %v2530 = vadd.f32 %v2321, %v2529
    %2531 = vmatmul.f32.gmra.mxu0 %v746
    %v2532 = vpop.f32.mrf.mxu0
    %v2533 = vadd.f32 %v2324, %v2532
    %2534 = vmatmul.f32.gmra.mxu0 %v747
    %v2535 = vpop.f32.mrf.mxu0
    %v2536 = vadd.f32 %v2327, %v2535
    %2537 = vmatmul.f32.gmra.mxu0 %v748
    %v2538 = vpop.f32.mrf.mxu0
    %v2539 = vadd.f32 %v2330, %v2538
    %2540 = vmatmul.f32.gmra.mxu0 %v749
    %v2541 = vpop.f32.mrf.mxu0
    %v2542 = vadd.f32 %v2333, %v2541
    %2543 = vmatmul.f32.gmra.mxu0 %v750
    %v2544 = vpop.f32.mrf.mxu0
    %v2545 = vadd.f32 %v2336, %v2544
    %2546 = vmatmul.f32.gmra.mxu0 %v751
    %v2547 = vpop.f32.mrf.mxu0
    %v2548 = vadd.f32 %v2339, %v2547
    %2549 = vmatmul.f32.gmra.mxu0 %v752
    %v2550 = vpop.f32.mrf.mxu0
    %v2551 = vadd.f32 %v2342, %v2550
    %2552 = vmatmul.f32.gmra.mxu0 %v753
    %v2553 = vpop.f32.mrf.mxu0
    %v2554 = vadd.f32 %v2345, %v2553
    %2555 = vmatmul.f32.gmra.mxu0 %v754
    %v2556 = vpop.f32.mrf.mxu0
    %v2557 = vadd.f32 %v2348, %v2556
    %2558 = vmatmul.f32.gmra.mxu0 %v755
    %v2559 = vpop.f32.mrf.mxu0
    %v2560 = vadd.f32 %v2351, %v2559
    %2561 = vmatmul.f32.gmra.mxu0 %v756
    %v2562 = vpop.f32.mrf.mxu0
    %v2563 = vadd.f32 %v2354, %v2562
    %2564 = vmatmul.f32.gmra.mxu0 %v757
    %v2565 = vpop.f32.mrf.mxu0
    %v2566 = vadd.f32 %v2357, %v2565
    %2567 = vmatmul.f32.gmra.mxu0 %v758
    %v2568 = vpop.f32.mrf.mxu0
    %v2569 = vadd.f32 %v2360, %v2568
    %2570 = vmatmul.f32.gmra.mxu0 %v759
    %v2571 = vpop.f32.mrf.mxu0
    %v2572 = vadd.f32 %v2363, %v2571
    %2573 = vmatmul.f32.gmra.mxu0 %v760
    %v2574 = vpop.f32.mrf.mxu0
    %v2575 = vadd.f32 %v2366, %v2574
    %2576 = vmatmul.f32.gmra.mxu0 %v761
    %v2577 = vpop.f32.mrf.mxu0
    %v2578 = vadd.f32 %v2369, %v2577
    %2579 = vmatmul.f32.gmra.mxu0 %v762
    %v2580 = vpop.f32.mrf.mxu0
    %v2581 = vadd.f32 %v2372, %v2580
    %2582 = vmatmul.f32.gmra.mxu0 %v763
    %v2583 = vpop.f32.mrf.mxu0
    %v2584 = vadd.f32 %v2375, %v2583
    %2585 = vmatmul.f32.gmra.mxu0 %v764
    %v2586 = vpop.f32.mrf.mxu0
    %v2587 = vadd.f32 %v2378, %v2586
    %2588 = vmatmul.f32.gmra.mxu0 %v765
    %v2589 = vpop.f32.mrf.mxu0
    %v2590 = vadd.f32 %v2381, %v2589
    %2591 = vmatmul.f32.gmra.mxu0 %v766
    %v2592 = vpop.f32.mrf.mxu0
    %v2593 = vadd.f32 %v2384, %v2592
    %2594 = vmatmul.f32.gmra.mxu0 %v767
    %v2595 = vpop.f32.mrf.mxu0
    %v2596 = vadd.f32 %v2387, %v2595
    %2597 = vmatmul.f32.gmra.mxu0 %v768
    %v2598 = vpop.f32.mrf.mxu0
    %v2599 = vadd.f32 %v2390, %v2598
    %2600 = vmatmul.f32.gmra.mxu0 %v769
    %v2601 = vpop.f32.mrf.mxu0
    %v2602 = vadd.f32 %v2393, %v2601
    %2603 = vmatmul.f32.gmra.mxu0 %v770
    %v2604 = vpop.f32.mrf.mxu0
    %v2605 = vadd.f32 %v2396, %v2604
    %2606 = vmatmul.f32.gmra.mxu0 %v771
    %v2607 = vpop.f32.mrf.mxu0
    %v2608 = vadd.f32 %v2399, %v2607
    %2609 = vmatmul.f32.gmra.mxu0 %v772
    %v2610 = vpop.f32.mrf.mxu0
    %v2611 = vadd.f32 %v2402, %v2610
    %2612 = vmatmul.f32.gmra.mxu0 %v773
    %v2613 = vpop.f32.mrf.mxu0
    %v2614 = vadd.f32 %v2405, %v2613
    %2615 = vmatmul.f32.gmra.mxu0 %v774
    %v2616 = vpop.f32.mrf.mxu0
    %v2617 = vadd.f32 %v2408, %v2616
    %2618 = vmatmul.f32.gmra.mxu0 %v775
    %v2619 = vpop.f32.mrf.mxu0
    %v2620 = vadd.f32 %v2411, %v2619
    %2621 = vmatmul.f32.gmra.mxu0 %v776
    %v2622 = vpop.f32.mrf.mxu0
    %v2623 = vadd.f32 %v2414, %v2622
    %2624 = vmatmul.f32.gmra.mxu0 %v777
    %v2625 = vpop.f32.mrf.mxu0
    %v2626 = vadd.f32 %v2417, %v2625
    %2627 = vmatmul.f32.gmra.mxu0 %v778
    %v2628 = vpop.f32.mrf.mxu0
    %v2629 = vadd.f32 %v2420, %v2628
    %2630 = vmatmul.f32.gmra.mxu0 %v779
    %v2631 = vpop.f32.mrf.mxu0
    %v2632 = vadd.f32 %v2423, %v2631
    %2633 = vmatmul.f32.gmra.mxu0 %v780
    %v2634 = vpop.f32.mrf.mxu0
    %v2635 = vadd.f32 %v2426, %v2634
    %2636 = vmatmul.f32.gmra.mxu0 %v781
    %v2637 = vpop.f32.mrf.mxu0
    %v2638 = vadd.f32 %v2429, %v2637
    %2639 = vmatmul.f32.gmra.mxu0 %v782
    %v2640 = vpop.f32.mrf.mxu0
    %v2641 = vadd.f32 %v2432, %v2640
    %2642 = vmatmul.f32.gmra.mxu0 %v783
    %v2643 = vpop.f32.mrf.mxu0
    %v2644 = vadd.f32 %v2435, %v2643
    %2645 = vmatmul.f32.gmra.mxu0 %v784
    %v2646 = vpop.f32.mrf.mxu0
    %v2647 = vadd.f32 %v2438, %v2646
    %2648 = vmatmul.f32.gmra.mxu0 %v785
    %v2649 = vpop.f32.mrf.mxu0
    %v2650 = vadd.f32 %v2441, %v2649
    %2651 = vmatmul.f32.gmra.mxu0 %v786
    %v2652 = vpop.f32.mrf.mxu0
    %v2653 = vadd.f32 %v2444, %v2652
    %2654 = vmatmul.f32.gmra.mxu0 %v787
    %v2655 = vpop.f32.mrf.mxu0
    %v2656 = vadd.f32 %v2447, %v2655
    %2657 = vmatmul.f32.gmra.mxu0 %v788
    %v2658 = vpop.f32.mrf.mxu0
    %v2659 = vadd.f32 %v2450, %v2658
    %2660 = vmatmul.f32.gmra.mxu0 %v789
    %v2661 = vpop.f32.mrf.mxu0
    %v2662 = vadd.f32 %v2453, %v2661
    %2663 = vmatmul.f32.gmra.mxu0 %v790
    %v2664 = vpop.f32.mrf.mxu0
    %v2665 = vadd.f32 %v2456, %v2664
    %2666 = vmatmul.f32.gmra.mxu0 %v791
    %v2667 = vpop.f32.mrf.mxu0
    %v2668 = vadd.f32 %v2459, %v2667
    %2669 = vmatmul.f32.gmra.mxu0 %v792
    %v2670 = vpop.f32.mrf.mxu0
    %v2671 = vadd.f32 %v2462, %v2670
    %2672 = vdwg.mxu0
    %2673 = vmatpush.msra.mxu0 %v1000
    %2674 = vmatpush.msra.mxu0 %v999
    %2675 = vmatpush.msra.mxu0 %v998
    %2676 = vmatpush.msra.mxu0 %v997
    %2677 = vmatpush.msra.mxu0 %v996
    %2678 = vmatpush.msra.mxu0 %v995
    %2679 = vmatpush.msra.mxu0 %v994
    %2680 = vmatpush.msra.mxu0 %v993
    %2681 = vmatpush.msra.mxu0 %v992
    %2682 = vmatpush.msra.mxu0 %v991
    %2683 = vmatpush.msra.mxu0 %v990
    %2684 = vmatpush.msra.mxu0 %v989
    %2685 = vmatpush.msra.mxu0 %v988
    %2686 = vmatpush.msra.mxu0 %v987
    %2687 = vmatpush.msra.mxu0 %v986
    %2688 = vmatpush.msra.mxu0 %v985
    %2689 = vmatmul.f32.gmra.mxu0 %v793
    %v2690 = vpop.f32.mrf.mxu0
    %v2691 = vadd.f32 %v2482, %v2690
    %2692 = vmatmul.f32.gmra.mxu0 %v794
    %v2693 = vpop.f32.mrf.mxu0
    %v2694 = vadd.f32 %v2485, %v2693
    %2695 = vmatmul.f32.gmra.mxu0 %v795
    %v2696 = vpop.f32.mrf.mxu0
    %v2697 = vadd.f32 %v2488, %v2696
    %2698 = vmatmul.f32.gmra.mxu0 %v796
    %v2699 = vpop.f32.mrf.mxu0
    %v2700 = vadd.f32 %v2491, %v2699
    %2701 = vmatmul.f32.gmra.mxu0 %v797
    %v2702 = vpop.f32.mrf.mxu0
    %v2703 = vadd.f32 %v2494, %v2702
    %2704 = vmatmul.f32.gmra.mxu0 %v798
    %v2705 = vpop.f32.mrf.mxu0
    %v2706 = vadd.f32 %v2497, %v2705
    %2707 = vmatmul.f32.gmra.mxu0 %v799
    %v2708 = vpop.f32.mrf.mxu0
    %v2709 = vadd.f32 %v2500, %v2708
    %2710 = vmatmul.f32.gmra.mxu0 %v800
    %v2711 = vpop.f32.mrf.mxu0
    %v2712 = vadd.f32 %v2503, %v2711
    %2713 = vmatmul.f32.gmra.mxu0 %v801
    %v2714 = vpop.f32.mrf.mxu0
    %v2715 = vadd.f32 %v2506, %v2714
    %2716 = vmatmul.f32.gmra.mxu0 %v802
    %v2717 = vpop.f32.mrf.mxu0
    %v2718 = vadd.f32 %v2509, %v2717
    %2719 = vmatmul.f32.gmra.mxu0 %v803
    %v2720 = vpop.f32.mrf.mxu0
    %v2721 = vadd.f32 %v2512, %v2720
    %2722 = vmatmul.f32.gmra.mxu0 %v804
    %v2723 = vpop.f32.mrf.mxu0
    %v2724 = vadd.f32 %v2515, %v2723
    %2725 = vmatmul.f32.gmra.mxu0 %v805
    %v2726 = vpop.f32.mrf.mxu0
    %v2727 = vadd.f32 %v2518, %v2726
    %2728 = vmatmul.f32.gmra.mxu0 %v806
    %v2729 = vpop.f32.mrf.mxu0
    %v2730 = vadd.f32 %v2521, %v2729
    %2731 = vmatmul.f32.gmra.mxu0 %v807
    %v2732 = vpop.f32.mrf.mxu0
    %v2733 = vadd.f32 %v2524, %v2732
    %2734 = vmatmul.f32.gmra.mxu0 %v808
    %v2735 = vpop.f32.mrf.mxu0
    %v2736 = vadd.f32 %v2527, %v2735
    %2737 = vmatmul.f32.gmra.mxu0 %v809
    %v2738 = vpop.f32.mrf.mxu0
    %v2739 = vadd.f32 %v2530, %v2738
    %2740 = vmatmul.f32.gmra.mxu0 %v810
    %v2741 = vpop.f32.mrf.mxu0
    %v2742 = vadd.f32 %v2533, %v2741
    %2743 = vmatmul.f32.gmra.mxu0 %v811
    %v2744 = vpop.f32.mrf.mxu0
    %v2745 = vadd.f32 %v2536, %v2744
    %2746 = vmatmul.f32.gmra.mxu0 %v812
    %v2747 = vpop.f32.mrf.mxu0
    %v2748 = vadd.f32 %v2539, %v2747
    %2749 = vmatmul.f32.gmra.mxu0 %v813
    %v2750 = vpop.f32.mrf.mxu0
    %v2751 = vadd.f32 %v2542, %v2750
    %2752 = vmatmul.f32.gmra.mxu0 %v814
    %v2753 = vpop.f32.mrf.mxu0
    %v2754 = vadd.f32 %v2545, %v2753
    %2755 = vmatmul.f32.gmra.mxu0 %v815
    %v2756 = vpop.f32.mrf.mxu0
    %v2757 = vadd.f32 %v2548, %v2756
    %2758 = vmatmul.f32.gmra.mxu0 %v816
    %v2759 = vpop.f32.mrf.mxu0
    %v2760 = vadd.f32 %v2551, %v2759
    %2761 = vmatmul.f32.gmra.mxu0 %v817
    %v2762 = vpop.f32.mrf.mxu0
    %v2763 = vadd.f32 %v2554, %v2762
    %2764 = vmatmul.f32.gmra.mxu0 %v818
    %v2765 = vpop.f32.mrf.mxu0
    %v2766 = vadd.f32 %v2557, %v2765
    %2767 = vmatmul.f32.gmra.mxu0 %v819
    %v2768 = vpop.f32.mrf.mxu0
    %v2769 = vadd.f32 %v2560, %v2768
    %2770 = vmatmul.f32.gmra.mxu0 %v820
    %v2771 = vpop.f32.mrf.mxu0
    %v2772 = vadd.f32 %v2563, %v2771
    %2773 = vmatmul.f32.gmra.mxu0 %v821
    %v2774 = vpop.f32.mrf.mxu0
    %v2775 = vadd.f32 %v2566, %v2774
    %2776 = vmatmul.f32.gmra.mxu0 %v822
    %v2777 = vpop.f32.mrf.mxu0
    %v2778 = vadd.f32 %v2569, %v2777
    %2779 = vmatmul.f32.gmra.mxu0 %v823
    %v2780 = vpop.f32.mrf.mxu0
    %v2781 = vadd.f32 %v2572, %v2780
    %2782 = vmatmul.f32.gmra.mxu0 %v824
    %v2783 = vpop.f32.mrf.mxu0
    %v2784 = vadd.f32 %v2575, %v2783
    %2785 = vmatmul.f32.gmra.mxu0 %v825
    %v2786 = vpop.f32.mrf.mxu0
    %v2787 = vadd.f32 %v2578, %v2786
    %2788 = vmatmul.f32.gmra.mxu0 %v826
    %v2789 = vpop.f32.mrf.mxu0
    %v2790 = vadd.f32 %v2581, %v2789
    %2791 = vmatmul.f32.gmra.mxu0 %v827
    %v2792 = vpop.f32.mrf.mxu0
    %v2793 = vadd.f32 %v2584, %v2792
    %2794 = vmatmul.f32.gmra.mxu0 %v828
    %v2795 = vpop.f32.mrf.mxu0
    %v2796 = vadd.f32 %v2587, %v2795
    %2797 = vmatmul.f32.gmra.mxu0 %v829
    %v2798 = vpop.f32.mrf.mxu0
    %v2799 = vadd.f32 %v2590, %v2798
    %2800 = vmatmul.f32.gmra.mxu0 %v830
    %v2801 = vpop.f32.mrf.mxu0
    %v2802 = vadd.f32 %v2593, %v2801
    %2803 = vmatmul.f32.gmra.mxu0 %v831
    %v2804 = vpop.f32.mrf.mxu0
    %v2805 = vadd.f32 %v2596, %v2804
    %2806 = vmatmul.f32.gmra.mxu0 %v832
    %v2807 = vpop.f32.mrf.mxu0
    %v2808 = vadd.f32 %v2599, %v2807
    %2809 = vmatmul.f32.gmra.mxu0 %v833
    %v2810 = vpop.f32.mrf.mxu0
    %v2811 = vadd.f32 %v2602, %v2810
    %2812 = vmatmul.f32.gmra.mxu0 %v834
    %v2813 = vpop.f32.mrf.mxu0
    %v2814 = vadd.f32 %v2605, %v2813
    %2815 = vmatmul.f32.gmra.mxu0 %v835
    %v2816 = vpop.f32.mrf.mxu0
    %v2817 = vadd.f32 %v2608, %v2816
    %2818 = vmatmul.f32.gmra.mxu0 %v836
    %v2819 = vpop.f32.mrf.mxu0
    %v2820 = vadd.f32 %v2611, %v2819
    %2821 = vmatmul.f32.gmra.mxu0 %v837
    %v2822 = vpop.f32.mrf.mxu0
    %v2823 = vadd.f32 %v2614, %v2822
    %2824 = vmatmul.f32.gmra.mxu0 %v838
    %v2825 = vpop.f32.mrf.mxu0
    %v2826 = vadd.f32 %v2617, %v2825
    %2827 = vmatmul.f32.gmra.mxu0 %v839
    %v2828 = vpop.f32.mrf.mxu0
    %v2829 = vadd.f32 %v2620, %v2828
    %2830 = vmatmul.f32.gmra.mxu0 %v840
    %v2831 = vpop.f32.mrf.mxu0
    %v2832 = vadd.f32 %v2623, %v2831
    %2833 = vmatmul.f32.gmra.mxu0 %v841
    %v2834 = vpop.f32.mrf.mxu0
    %v2835 = vadd.f32 %v2626, %v2834
    %2836 = vmatmul.f32.gmra.mxu0 %v842
    %v2837 = vpop.f32.mrf.mxu0
    %v2838 = vadd.f32 %v2629, %v2837
    %2839 = vmatmul.f32.gmra.mxu0 %v843
    %v2840 = vpop.f32.mrf.mxu0
    %v2841 = vadd.f32 %v2632, %v2840
    %2842 = vmatmul.f32.gmra.mxu0 %v844
    %v2843 = vpop.f32.mrf.mxu0
    %v2844 = vadd.f32 %v2635, %v2843
    %2845 = vmatmul.f32.gmra.mxu0 %v845
    %v2846 = vpop.f32.mrf.mxu0
    %v2847 = vadd.f32 %v2638, %v2846
    %2848 = vmatmul.f32.gmra.mxu0 %v846
    %v2849 = vpop.f32.mrf.mxu0
    %v2850 = vadd.f32 %v2641, %v2849
    %2851 = vmatmul.f32.gmra.mxu0 %v847
    %v2852 = vpop.f32.mrf.mxu0
    %v2853 = vadd.f32 %v2644, %v2852
    %2854 = vmatmul.f32.gmra.mxu0 %v848
    %v2855 = vpop.f32.mrf.mxu0
    %v2856 = vadd.f32 %v2647, %v2855
    %2857 = vmatmul.f32.gmra.mxu0 %v849
    %v2858 = vpop.f32.mrf.mxu0
    %v2859 = vadd.f32 %v2650, %v2858
    %2860 = vmatmul.f32.gmra.mxu0 %v850
    %v2861 = vpop.f32.mrf.mxu0
    %v2862 = vadd.f32 %v2653, %v2861
    %2863 = vmatmul.f32.gmra.mxu0 %v851
    %v2864 = vpop.f32.mrf.mxu0
    %v2865 = vadd.f32 %v2656, %v2864
    %2866 = vmatmul.f32.gmra.mxu0 %v852
    %v2867 = vpop.f32.mrf.mxu0
    %v2868 = vadd.f32 %v2659, %v2867
    %2869 = vmatmul.f32.gmra.mxu0 %v853
    %v2870 = vpop.f32.mrf.mxu0
    %v2871 = vadd.f32 %v2662, %v2870
    %2872 = vmatmul.f32.gmra.mxu0 %v854
    %v2873 = vpop.f32.mrf.mxu0
    %v2874 = vadd.f32 %v2665, %v2873
    %2875 = vmatmul.f32.gmra.mxu0 %v855
    %v2876 = vpop.f32.mrf.mxu0
    %v2877 = vadd.f32 %v2668, %v2876
    %2878 = vmatmul.f32.gmra.mxu0 %v856
    %v2879 = vpop.f32.mrf.mxu0
    %v2880 = vadd.f32 %v2671, %v2879
    %2881 = vdwg.mxu0
    %v2882 = vld [vmem:[%s3] sm:$0x1]
    %v2883 = vld [vmem:[%s4] sm:$0x1]
    %v2884 = vadd.f32 %v2691, %v2694
    %v2885 = vadd.f32 %v2884, %v2697
    %v2886 = vadd.f32 %v2885, %v2700
    %v2887 = vadd.f32 %v2886, %v2703
    %v2888 = vadd.f32 %v2887, %v2706
    %v2889 = vadd.f32 %v2888, %v2709
    %v2890 = vadd.f32 %v2889, %v2712
    %v2891 = vadd.f32 %v2890, %v2715
    %v2892 = vadd.f32 %v2891, %v2718
    %v2893 = vadd.f32 %v2892, %v2721
    %v2894 = vadd.f32 %v2893, %v2724
    %v2895 = vadd.f32 %v2894, %v2727
    %v2896 = vadd.f32 %v2895, %v2730
    %v2897 = vadd.f32 %v2896, %v2733
    %v2898 = vadd.f32 %v2897, %v2736
    %v2899 = vadd.f32 %v2898, %v2739
    %v2900 = vadd.f32 %v2899, %v2742
    %v2901 = vadd.f32 %v2900, %v2745
    %v2902 = vadd.f32 %v2901, %v2748
    %v2903 = vadd.f32 %v2902, %v2751
    %v2904 = vadd.f32 %v2903, %v2754
    %v2905 = vadd.f32 %v2904, %v2757
    %v2906 = vadd.f32 %v2905, %v2760
    %v2907 = vadd.f32 %v2906, %v2763
    %v2908 = vadd.f32 %v2907, %v2766
    %v2909 = vadd.f32 %v2908, %v2769
    %v2910 = vadd.f32 %v2909, %v2772
    %v2911 = vadd.f32 %v2910, %v2775
    %v2912 = vadd.f32 %v2911, %v2778
    %v2913 = vadd.f32 %v2912, %v2781
    %v2914 = vadd.f32 %v2913, %v2784
    %v2915 = vadd.f32 %v2914, %v2787
    %v2916 = vadd.f32 %v2915, %v2790
    %v2917 = vadd.f32 %v2916, %v2793
    %v2918 = vadd.f32 %v2917, %v2796
    %v2919 = vadd.f32 %v2918, %v2799
    %v2920 = vadd.f32 %v2919, %v2802
    %v2921 = vadd.f32 %v2920, %v2805
    %v2922 = vadd.f32 %v2921, %v2808
    %v2923 = vadd.f32 %v2922, %v2811
    %v2924 = vadd.f32 %v2923, %v2814
    %v2925 = vadd.f32 %v2924, %v2817
    %v2926 = vadd.f32 %v2925, %v2820
    %v2927 = vadd.f32 %v2926, %v2823
    %v2928 = vadd.f32 %v2927, %v2826
    %v2929 = vadd.f32 %v2928, %v2829
    %v2930 = vadd.f32 %v2929, %v2832
    %v2931 = vadd.f32 %v2930, %v2835
    %v2932 = vadd.f32 %v2931, %v2838
    %v2933 = vadd.f32 %v2932, %v2841
    %v2934 = vadd.f32 %v2933, %v2844
    %v2935 = vadd.f32 %v2934, %v2847
    %v2936 = vadd.f32 %v2935, %v2850
    %v2937 = vadd.f32 %v2936, %v2853
    %v2938 = vadd.f32 %v2937, %v2856
    %v2939 = vadd.f32 %v2938, %v2859
    %v2940 = vadd.f32 %v2939, %v2862
    %v2941 = vadd.f32 %v2940, %v2865
    %v2942 = vadd.f32 %v2941, %v2868
    %v2943 = vadd.f32 %v2942, %v2871
    %v2944 = vadd.f32 %v2943, %v2874
    %v2945 = vadd.f32 %v2944, %v2877
    %v2946 = vadd.f32 %v2945, %v2880
    %v2947 = vrot.slane %v2946, 4
    %v2948 = vadd.f32 %v2946, %v2947
    %v2949 = vrot.slane %v2948, 2
    %v2950 = vadd.f32 %v2948, %v2949
    %v2951 = vrot.slane %v2950, 1
    %v2952 = vadd.f32 %v2950, %v2951
    %v2953 = vmul.f32 %v2952, 0.001953125
    %v2954 = vsub.f32 %v2691, %v2953
    %v2955 = vsub.f32 %v2694, %v2953
    %v2956 = vsub.f32 %v2697, %v2953
    %v2957 = vsub.f32 %v2700, %v2953
    %v2958 = vsub.f32 %v2703, %v2953
    %v2959 = vsub.f32 %v2706, %v2953
    %v2960 = vsub.f32 %v2709, %v2953
    %v2961 = vsub.f32 %v2712, %v2953
    %v2962 = vsub.f32 %v2715, %v2953
    %v2963 = vsub.f32 %v2718, %v2953
    %v2964 = vsub.f32 %v2721, %v2953
    %v2965 = vsub.f32 %v2724, %v2953
    %v2966 = vsub.f32 %v2727, %v2953
    %v2967 = vsub.f32 %v2730, %v2953
    %v2968 = vsub.f32 %v2733, %v2953
    %v2969 = vsub.f32 %v2736, %v2953
    %v2970 = vsub.f32 %v2739, %v2953
    %v2971 = vsub.f32 %v2742, %v2953
    %v2972 = vsub.f32 %v2745, %v2953
    %v2973 = vsub.f32 %v2748, %v2953
    %v2974 = vsub.f32 %v2751, %v2953
    %v2975 = vsub.f32 %v2754, %v2953
    %v2976 = vsub.f32 %v2757, %v2953
    %v2977 = vsub.f32 %v2760, %v2953
    %v2978 = vsub.f32 %v2763, %v2953
    %v2979 = vsub.f32 %v2766, %v2953
    %v2980 = vsub.f32 %v2769, %v2953
    %v2981 = vsub.f32 %v2772, %v2953
    %v2982 = vsub.f32 %v2775, %v2953
    %v2983 = vsub.f32 %v2778, %v2953
    %v2984 = vsub.f32 %v2781, %v2953
    %v2985 = vsub.f32 %v2784, %v2953
    %v2986 = vsub.f32 %v2787, %v2953
    %v2987 = vsub.f32 %v2790, %v2953
    %v2988 = vsub.f32 %v2793, %v2953
    %v2989 = vsub.f32 %v2796, %v2953
    %v2990 = vsub.f32 %v2799, %v2953
    %v2991 = vsub.f32 %v2802, %v2953
    %v2992 = vsub.f32 %v2805, %v2953
    %v2993 = vsub.f32 %v2808, %v2953
    %v2994 = vsub.f32 %v2811, %v2953
    %v2995 = vsub.f32 %v2814, %v2953
    %v2996 = vsub.f32 %v2817, %v2953
    %v2997 = vsub.f32 %v2820, %v2953
    %v2998 = vsub.f32 %v2823, %v2953
    %v2999 = vsub.f32 %v2826, %v2953
    %v3000 = vsub.f32 %v2829, %v2953
    %v3001 = vsub.f32 %v2832, %v2953
    %v3002 = vsub.f32 %v2835, %v2953
    %v3003 = vsub.f32 %v2838, %v2953
    %v3004 = vsub.f32 %v2841, %v2953
    %v3005 = vsub.f32 %v2844, %v2953
    %v3006 = vsub.f32 %v2847, %v2953
    %v3007 = vsub.f32 %v2850, %v2953
    %v3008 = vsub.f32 %v2853, %v2953
    %v3009 = vsub.f32 %v2856, %v2953
    %v3010 = vsub.f32 %v2859, %v2953
    %v3011 = vsub.f32 %v2862, %v2953
    %v3012 = vsub.f32 %v2865, %v2953
    %v3013 = vsub.f32 %v2868, %v2953
    %v3014 = vsub.f32 %v2871, %v2953
    %v3015 = vsub.f32 %v2874, %v2953
    %v3016 = vsub.f32 %v2877, %v2953
    %v3017 = vsub.f32 %v2880, %v2953
    %v3018 = vmul.f32 %v2954, %v2954
    %v3019 = vmul.f32 %v2955, %v2955
    %v3020 = vmul.f32 %v2956, %v2956
    %v3021 = vmul.f32 %v2957, %v2957
    %v3022 = vmul.f32 %v2958, %v2958
    %v3023 = vmul.f32 %v2959, %v2959
    %v3024 = vmul.f32 %v2960, %v2960
    %v3025 = vmul.f32 %v2961, %v2961
    %v3026 = vmul.f32 %v2962, %v2962
    %v3027 = vmul.f32 %v2963, %v2963
    %v3028 = vmul.f32 %v2964, %v2964
    %v3029 = vmul.f32 %v2965, %v2965
    %v3030 = vmul.f32 %v2966, %v2966
    %v3031 = vmul.f32 %v2967, %v2967
    %v3032 = vmul.f32 %v2968, %v2968
    %v3033 = vmul.f32 %v2969, %v2969
    %v3034 = vmul.f32 %v2970, %v2970
    %v3035 = vmul.f32 %v2971, %v2971
    %v3036 = vmul.f32 %v2972, %v2972
    %v3037 = vmul.f32 %v2973, %v2973
    %v3038 = vmul.f32 %v2974, %v2974
    %v3039 = vmul.f32 %v2975, %v2975
    %v3040 = vmul.f32 %v2976, %v2976
    %v3041 = vmul.f32 %v2977, %v2977
    %v3042 = vmul.f32 %v2978, %v2978
    %v3043 = vmul.f32 %v2979, %v2979
    %v3044 = vmul.f32 %v2980, %v2980
    %v3045 = vmul.f32 %v2981, %v2981
    %v3046 = vmul.f32 %v2982, %v2982
    %v3047 = vmul.f32 %v2983, %v2983
    %v3048 = vmul.f32 %v2984, %v2984
    %v3049 = vmul.f32 %v2985, %v2985
    %v3050 = vmul.f32 %v2986, %v2986
    %v3051 = vmul.f32 %v2987, %v2987
    %v3052 = vmul.f32 %v2988, %v2988
    %v3053 = vmul.f32 %v2989, %v2989
    %v3054 = vmul.f32 %v2990, %v2990
    %v3055 = vmul.f32 %v2991, %v2991
    %v3056 = vmul.f32 %v2992, %v2992
    %v3057 = vmul.f32 %v2993, %v2993
    %v3058 = vmul.f32 %v2994, %v2994
    %v3059 = vmul.f32 %v2995, %v2995
    %v3060 = vmul.f32 %v2996, %v2996
    %v3061 = vmul.f32 %v2997, %v2997
    %v3062 = vmul.f32 %v2998, %v2998
    %v3063 = vmul.f32 %v2999, %v2999
    %v3064 = vmul.f32 %v3000, %v3000
    %v3065 = vmul.f32 %v3001, %v3001
    %v3066 = vmul.f32 %v3002, %v3002
    %v3067 = vmul.f32 %v3003, %v3003
    %v3068 = vmul.f32 %v3004, %v3004
    %v3069 = vmul.f32 %v3005, %v3005
    %v3070 = vmul.f32 %v3006, %v3006
    %v3071 = vmul.f32 %v3007, %v3007
    %v3072 = vmul.f32 %v3008, %v3008
    %v3073 = vmul.f32 %v3009, %v3009
    %v3074 = vmul.f32 %v3010, %v3010
    %v3075 = vmul.f32 %v3011, %v3011
    %v3076 = vmul.f32 %v3012, %v3012
    %v3077 = vmul.f32 %v3013, %v3013
    %v3078 = vmul.f32 %v3014, %v3014
    %v3079 = vmul.f32 %v3015, %v3015
    %v3080 = vmul.f32 %v3016, %v3016
    %v3081 = vmul.f32 %v3017, %v3017
    %v3082 = vadd.f32 %v3018, %v3019
    %v3083 = vadd.f32 %v3082, %v3020
    %v3084 = vadd.f32 %v3083, %v3021
    %v3085 = vadd.f32 %v3084, %v3022
    %v3086 = vadd.f32 %v3085, %v3023
    %v3087 = vadd.f32 %v3086, %v3024
    %v3088 = vadd.f32 %v3087, %v3025
    %v3089 = vadd.f32 %v3088, %v3026
    %v3090 = vadd.f32 %v3089, %v3027
    %v3091 = vadd.f32 %v3090, %v3028
    %v3092 = vadd.f32 %v3091, %v3029
    %v3093 = vadd.f32 %v3092, %v3030
    %v3094 = vadd.f32 %v3093, %v3031
    %v3095 = vadd.f32 %v3094, %v3032
    %v3096 = vadd.f32 %v3095, %v3033
    %v3097 = vadd.f32 %v3096, %v3034
    %v3098 = vadd.f32 %v3097, %v3035
    %v3099 = vadd.f32 %v3098, %v3036
    %v3100 = vadd.f32 %v3099, %v3037
    %v3101 = vadd.f32 %v3100, %v3038
    %v3102 = vadd.f32 %v3101, %v3039
    %v3103 = vadd.f32 %v3102, %v3040
    %v3104 = vadd.f32 %v3103, %v3041
    %v3105 = vadd.f32 %v3104, %v3042
    %v3106 = vadd.f32 %v3105, %v3043
    %v3107 = vadd.f32 %v3106, %v3044
    %v3108 = vadd.f32 %v3107, %v3045
    %v3109 = vadd.f32 %v3108, %v3046
    %v3110 = vadd.f32 %v3109, %v3047
    %v3111 = vadd.f32 %v3110, %v3048
    %v3112 = vadd.f32 %v3111, %v3049
    %v3113 = vadd.f32 %v3112, %v3050
    %v3114 = vadd.f32 %v3113, %v3051
    %v3115 = vadd.f32 %v3114, %v3052
    %v3116 = vadd.f32 %v3115, %v3053
    %v3117 = vadd.f32 %v3116, %v3054
    %v3118 = vadd.f32 %v3117, %v3055
    %v3119 = vadd.f32 %v3118, %v3056
    %v3120 = vadd.f32 %v3119, %v3057
    %v3121 = vadd.f32 %v3120, %v3058
    %v3122 = vadd.f32 %v3121, %v3059
    %v3123 = vadd.f32 %v3122, %v3060
    %v3124 = vadd.f32 %v3123, %v3061
    %v3125 = vadd.f32 %v3124, %v3062
    %v3126 = vadd.f32 %v3125, %v3063
    %v3127 = vadd.f32 %v3126, %v3064
    %v3128 = vadd.f32 %v3127, %v3065
    %v3129 = vadd.f32 %v3128, %v3066
    %v3130 = vadd.f32 %v3129, %v3067
    %v3131 = vadd.f32 %v3130, %v3068
    %v3132 = vadd.f32 %v3131, %v3069
    %v3133 = vadd.f32 %v3132, %v3070
    %v3134 = vadd.f32 %v3133, %v3071
    %v3135 = vadd.f32 %v3134, %v3072
    %v3136 = vadd.f32 %v3135, %v3073
    %v3137 = vadd.f32 %v3136, %v3074
    %v3138 = vadd.f32 %v3137, %v3075
    %v3139 = vadd.f32 %v3138, %v3076
    %v3140 = vadd.f32 %v3139, %v3077
    %v3141 = vadd.f32 %v3140, %v3078
    %v3142 = vadd.f32 %v3141, %v3079
    %v3143 = vadd.f32 %v3142, %v3080
    %v3144 = vadd.f32 %v3143, %v3081
    %v3145 = vrot.slane %v3144, 4
    %v3146 = vadd.f32 %v3144, %v3145
    %v3147 = vrot.slane %v3146, 2
    %v3148 = vadd.f32 %v3146, %v3147
    %v3149 = vrot.slane %v3148, 1
    %v3150 = vadd.f32 %v3148, %v3149
    %v3151 = vmul.f32 %v3150, 0.001953125
    %v3152 = vadd.f32 %v3151, 1e-05
    %v3153 = vrsqrt.pop %v3152
    %v3154 = vmul.f32 %v3153, %v3152
    %v3155 = vmul.f32 %v3154, %v3153
    %v3156 = vmul.f32 0.5, %v3155
    %v3157 = vsub.f32 1.5, %v3156
    %v3158 = vmul.f32 %v3153, %v3157
    %vm3159 = vweird.f32 %v3152
    %vm3160 = vweird.f32 %v3153
    %vm3161 = vmor %vm3159, %vm3160
    %v3162 = vsel %vm3161, %v3153, %v3158
    %v3163 = vmul.f32 %v2882, %v3162
    %v3164 = vmul.f32 %v2953, %v3163
    %v3165 = vsub.f32 %v2883, %v3164
    %v3167 = vperm.slane %v3163, 0
    %v3169 = vmul.f32 %v2691, %v3167
    %v3170 = vmul.f32 %v2694, %v3167
    %v3171 = vmul.f32 %v2697, %v3167
    %v3172 = vmul.f32 %v2700, %v3167
    %v3173 = vmul.f32 %v2703, %v3167
    %v3174 = vmul.f32 %v2706, %v3167
    %v3175 = vmul.f32 %v2709, %v3167
    %v3176 = vmul.f32 %v2712, %v3167
    %v3177 = vmul.f32 %v2715, %v3167
    %v3178 = vmul.f32 %v2718, %v3167
    %v3179 = vmul.f32 %v2721, %v3167
    %v3180 = vmul.f32 %v2724, %v3167
    %v3181 = vmul.f32 %v2727, %v3167
    %v3182 = vmul.f32 %v2730, %v3167
    %v3183 = vmul.f32 %v2733, %v3167
    %v3184 = vmul.f32 %v2736, %v3167
    %v3185 = vmul.f32 %v2739, %v3167
    %v3186 = vmul.f32 %v2742, %v3167
    %v3187 = vmul.f32 %v2745, %v3167
    %v3188 = vmul.f32 %v2748, %v3167
    %v3189 = vmul.f32 %v2751, %v3167
    %v3190 = vmul.f32 %v2754, %v3167
    %v3191 = vmul.f32 %v2757, %v3167
    %v3192 = vmul.f32 %v2760, %v3167
    %v3193 = vmul.f32 %v2763, %v3167
    %v3194 = vmul.f32 %v2766, %v3167
    %v3195 = vmul.f32 %v2769, %v3167
    %v3196 = vmul.f32 %v2772, %v3167
    %v3197 = vmul.f32 %v2775, %v3167
    %v3198 = vmul.f32 %v2778, %v3167
    %v3199 = vmul.f32 %v2781, %v3167
    %v3200 = vmul.f32 %v2784, %v3167
    %v3201 = vmul.f32 %v2787, %v3167
    %v3202 = vmul.f32 %v2790, %v3167
    %v3203 = vmul.f32 %v2793, %v3167
    %v3204 = vmul.f32 %v2796, %v3167
    %v3205 = vmul.f32 %v2799, %v3167
    %v3206 = vmul.f32 %v2802, %v3167
    %v3207 = vmul.f32 %v2805, %v3167
    %v3208 = vmul.f32 %v2808, %v3167
    %v3209 = vmul.f32 %v2811, %v3167
    %v3210 = vmul.f32 %v2814, %v3167
    %v3211 = vmul.f32 %v2817, %v3167
    %v3212 = vmul.f32 %v2820, %v3167
    %v3213 = vmul.f32 %v2823, %v3167
    %v3214 = vmul.f32 %v2826, %v3167
    %v3215 = vmul.f32 %v2829, %v3167
    %v3216 = vmul.f32 %v2832, %v3167
    %v3217 = vmul.f32 %v2835, %v3167
    %v3218 = vmul.f32 %v2838, %v3167
    %v3219 = vmul.f32 %v2841, %v3167
    %v3220 = vmul.f32 %v2844, %v3167
    %v3221 = vmul.f32 %v2847, %v3167
    %v3222 = vmul.f32 %v2850, %v3167
    %v3223 = vmul.f32 %v2853, %v3167
    %v3224 = vmul.f32 %v2856, %v3167
    %v3225 = vmul.f32 %v2859, %v3167
    %v3226 = vmul.f32 %v2862, %v3167
    %v3227 = vmul.f32 %v2865, %v3167
    %v3228 = vmul.f32 %v2868, %v3167
    %v3229 = vmul.f32 %v2871, %v3167
    %v3230 = vmul.f32 %v2874, %v3167
    %v3231 = vmul.f32 %v2877, %v3167
    %v3232 = vmul.f32 %v2880, %v3167
    %v3234 = vperm.slane %v3165, 0
    %v3236 = vadd.f32 %v3169, %v3234
    %v3237 = vadd.f32 %v3170, %v3234
    %v3238 = vadd.f32 %v3171, %v3234
    %v3239 = vadd.f32 %v3172, %v3234
    %v3240 = vadd.f32 %v3173, %v3234
    %v3241 = vadd.f32 %v3174, %v3234
    %v3242 = vadd.f32 %v3175, %v3234
    %v3243 = vadd.f32 %v3176, %v3234
    %v3244 = vadd.f32 %v3177, %v3234
    %v3245 = vadd.f32 %v3178, %v3234
    %v3246 = vadd.f32 %v3179, %v3234
    %v3247 = vadd.f32 %v3180, %v3234
    %v3248 = vadd.f32 %v3181, %v3234
    %v3249 = vadd.f32 %v3182, %v3234
    %v3250 = vadd.f32 %v3183, %v3234
    %v3251 = vadd.f32 %v3184, %v3234
    %v3252 = vadd.f32 %v3185, %v3234
    %v3253 = vadd.f32 %v3186, %v3234
    %v3254 = vadd.f32 %v3187, %v3234
    %v3255 = vadd.f32 %v3188, %v3234
    %v3256 = vadd.f32 %v3189, %v3234
    %v3257 = vadd.f32 %v3190, %v3234
    %v3258 = vadd.f32 %v3191, %v3234
    %v3259 = vadd.f32 %v3192, %v3234
    %v3260 = vadd.f32 %v3193, %v3234
    %v3261 = vadd.f32 %v3194, %v3234
    %v3262 = vadd.f32 %v3195, %v3234
    %v3263 = vadd.f32 %v3196, %v3234
    %v3264 = vadd.f32 %v3197, %v3234
    %v3265 = vadd.f32 %v3198, %v3234
    %v3266 = vadd.f32 %v3199, %v3234
    %v3267 = vadd.f32 %v3200, %v3234
    %v3268 = vadd.f32 %v3201, %v3234
    %v3269 = vadd.f32 %v3202, %v3234
    %v3270 = vadd.f32 %v3203, %v3234
    %v3271 = vadd.f32 %v3204, %v3234
    %v3272 = vadd.f32 %v3205, %v3234
    %v3273 = vadd.f32 %v3206, %v3234
    %v3274 = vadd.f32 %v3207, %v3234
    %v3275 = vadd.f32 %v3208, %v3234
    %v3276 = vadd.f32 %v3209, %v3234
    %v3277 = vadd.f32 %v3210, %v3234
    %v3278 = vadd.f32 %v3211, %v3234
    %v3279 = vadd.f32 %v3212, %v3234
    %v3280 = vadd.f32 %v3213, %v3234
    %v3281 = vadd.f32 %v3214, %v3234
    %v3282 = vadd.f32 %v3215, %v3234
    %v3283 = vadd.f32 %v3216, %v3234
    %v3284 = vadd.f32 %v3217, %v3234
    %v3285 = vadd.f32 %v3218, %v3234
    %v3286 = vadd.f32 %v3219, %v3234
    %v3287 = vadd.f32 %v3220, %v3234
    %v3288 = vadd.f32 %v3221, %v3234
    %v3289 = vadd.f32 %v3222, %v3234
    %v3290 = vadd.f32 %v3223, %v3234
    %v3291 = vadd.f32 %v3224, %v3234
    %v3292 = vadd.f32 %v3225, %v3234
    %v3293 = vadd.f32 %v3226, %v3234
    %v3294 = vadd.f32 %v3227, %v3234
    %v3295 = vadd.f32 %v3228, %v3234
    %v3296 = vadd.f32 %v3229, %v3234
    %v3297 = vadd.f32 %v3230, %v3234
    %v3298 = vadd.f32 %v3231, %v3234
    %v3299 = vadd.f32 %v3232, %v3234
    %v3300 = vmax.f32 %v3236, 0.0
    %v3301 = vmax.f32 %v3237, 0.0
    %v3302 = vmax.f32 %v3238, 0.0
    %v3303 = vmax.f32 %v3239, 0.0
    %v3304 = vmax.f32 %v3240, 0.0
    %v3305 = vmax.f32 %v3241, 0.0
    %v3306 = vmax.f32 %v3242, 0.0
    %v3307 = vmax.f32 %v3243, 0.0
    %v3308 = vmax.f32 %v3244, 0.0
    %v3309 = vmax.f32 %v3245, 0.0
    %v3310 = vmax.f32 %v3246, 0.0
    %v3311 = vmax.f32 %v3247, 0.0
    %v3312 = vmax.f32 %v3248, 0.0
    %v3313 = vmax.f32 %v3249, 0.0
    %v3314 = vmax.f32 %v3250, 0.0
    %v3315 = vmax.f32 %v3251, 0.0
    %v3316 = vmax.f32 %v3252, 0.0
    %v3317 = vmax.f32 %v3253, 0.0
    %v3318 = vmax.f32 %v3254, 0.0
    %v3319 = vmax.f32 %v3255, 0.0
    %v3320 = vmax.f32 %v3256, 0.0
    %v3321 = vmax.f32 %v3257, 0.0
    %v3322 = vmax.f32 %v3258, 0.0
    %v3323 = vmax.f32 %v3259, 0.0
    %v3324 = vmax.f32 %v3260, 0.0
    %v3325 = vmax.f32 %v3261, 0.0
    %v3326 = vmax.f32 %v3262, 0.0
    %v3327 = vmax.f32 %v3263, 0.0
    %v3328 = vmax.f32 %v3264, 0.0
    %v3329 = vmax.f32 %v3265, 0.0
    %v3330 = vmax.f32 %v3266, 0.0
    %v3331 = vmax.f32 %v3267, 0.0
    %v3332 = vmax.f32 %v3268, 0.0
    %v3333 = vmax.f32 %v3269, 0.0
    %v3334 = vmax.f32 %v3270, 0.0
    %v3335 = vmax.f32 %v3271, 0.0
    %v3336 = vmax.f32 %v3272, 0.0
    %v3337 = vmax.f32 %v3273, 0.0
    %v3338 = vmax.f32 %v3274, 0.0
    %v3339 = vmax.f32 %v3275, 0.0
    %v3340 = vmax.f32 %v3276, 0.0
    %v3341 = vmax.f32 %v3277, 0.0
    %v3342 = vmax.f32 %v3278, 0.0
    %v3343 = vmax.f32 %v3279, 0.0
    %v3344 = vmax.f32 %v3280, 0.0
    %v3345 = vmax.f32 %v3281, 0.0
    %v3346 = vmax.f32 %v3282, 0.0
    %v3347 = vmax.f32 %v3283, 0.0
    %v3348 = vmax.f32 %v3284, 0.0
    %v3349 = vmax.f32 %v3285, 0.0
    %v3350 = vmax.f32 %v3286, 0.0
    %v3351 = vmax.f32 %v3287, 0.0
    %v3352 = vmax.f32 %v3288, 0.0
    %v3353 = vmax.f32 %v3289, 0.0
    %v3354 = vmax.f32 %v3290, 0.0
    %v3355 = vmax.f32 %v3291, 0.0
    %v3356 = vmax.f32 %v3292, 0.0
    %v3357 = vmax.f32 %v3293, 0.0
    %v3358 = vmax.f32 %v3294, 0.0
    %v3359 = vmax.f32 %v3295, 0.0
    %v3360 = vmax.f32 %v3296, 0.0
    %v3361 = vmax.f32 %v3297, 0.0
    %v3362 = vmax.f32 %v3298, 0.0
    %v3363 = vmax.f32 %v3299, 0.0
    %3364 = vst [vmem:[%s87 + $0x1] sm:$0xff] %v3300
    %3365 = vst [vmem:[%s87 + $0x9] sm:$0xff] %v3301
    %3366 = vst [vmem:[%s87 + $0x19] sm:$0xff] %v3302
    %3367 = vst [vmem:[%s87 + $0x21] sm:$0xff] %v3303
    %3368 = vst [vmem:[%s87 + $0x31] sm:$0xff] %v3304
    %3369 = vst [vmem:[%s87 + $0x39] sm:$0xff] %v3305
    %3370 = vst [vmem:[%s87 + $0x49] sm:$0xff] %v3306
    %3371 = vst [vmem:[%s87 + $0x51] sm:$0xff] %v3307
    %3372 = vst [vmem:[%s87 + $0x61] sm:$0xff] %v3308
    %3373 = vst [vmem:[%s87 + $0x69] sm:$0xff] %v3309
    %3374 = vst [vmem:[%s87 + $0x79] sm:$0xff] %v3310
    %3375 = vst [vmem:[%s87 + $0x81] sm:$0xff] %v3311
    %3376 = vst [vmem:[%s87 + $0x91] sm:$0xff] %v3312
    %3377 = vst [vmem:[%s87 + $0x99] sm:$0xff] %v3313
    %3378 = vst [vmem:[%s87 + $0xa9] sm:$0xff] %v3314
    %3379 = vst [vmem:[%s87 + $0xb1] sm:$0xff] %v3315
    %3380 = vst [vmem:[%s87 + $0xc1] sm:$0xff] %v3316
    %3381 = vst [vmem:[%s87 + $0xc9] sm:$0xff] %v3317
    %3382 = vst [vmem:[%s87 + $0xd9] sm:$0xff] %v3318
    %3383 = vst [vmem:[%s87 + $0xe1] sm:$0xff] %v3319
    %3384 = vst [vmem:[%s87 + $0xf1] sm:$0xff] %v3320
    %3385 = vst [vmem:[%s87 + $0xf9] sm:$0xff] %v3321
    %3386 = vst [vmem:[%s87 + $0x109] sm:$0xff] %v3322
    %3387 = vst [vmem:[%s87 + $0x111] sm:$0xff] %v3323
    %3388 = vst [vmem:[%s87 + $0x121] sm:$0xff] %v3324
    %3389 = vst [vmem:[%s87 + $0x129] sm:$0xff] %v3325
    %3390 = vst [vmem:[%s87 + $0x139] sm:$0xff] %v3326
    %3391 = vst [vmem:[%s87 + $0x141] sm:$0xff] %v3327
    %3392 = vst [vmem:[%s87 + $0x151] sm:$0xff] %v3328
    %3393 = vst [vmem:[%s87 + $0x159] sm:$0xff] %v3329
    %3394 = vst [vmem:[%s87 + $0x169] sm:$0xff] %v3330
    %3395 = vst [vmem:[%s87 + $0x171] sm:$0xff] %v3331
    %3396 = vst [vmem:[%s87 + $0x1b1] sm:$0xff] %v3332
    %3397 = vst [vmem:[%s87 + $0x1b9] sm:$0xff] %v3333
    %3398 = vst [vmem:[%s87 + $0x1c9] sm:$0xff] %v3334
    %3399 = vst [vmem:[%s87 + $0x1d1] sm:$0xff] %v3335
    %3400 = vst [vmem:[%s87 + $0x1e1] sm:$0xff] %v3336
    %3401 = vst [vmem:[%s87 + $0x1e9] sm:$0xff] %v3337
    %3402 = vst [vmem:[%s87 + $0x1f9] sm:$0xff] %v3338
    %3403 = vst [vmem:[%s87 + $0x201] sm:$0xff] %v3339
    %3404 = vst [vmem:[%s87 + $0x211] sm:$0xff] %v3340
    %3405 = vst [vmem:[%s87 + $0x219] sm:$0xff] %v3341
    %3406 = vst [vmem:[%s87 + $0x229] sm:$0xff] %v3342
    %3407 = vst [vmem:[%s87 + $0x231] sm:$0xff] %v3343
    %3408 = vst [vmem:[%s87 + $0x241] sm:$0xff] %v3344
    %3409 = vst [vmem:[%s87 + $0x249] sm:$0xff] %v3345
    %3410 = vst [vmem:[%s87 + $0x259] sm:$0xff] %v3346
    %3411 = vst [vmem:[%s87 + $0x261] sm:$0xff] %v3347
    %3412 = vst [vmem:[%s87 + $0x271] sm:$0xff] %v3348
    %3413 = vst [vmem:[%s87 + $0x279] sm:$0xff] %v3349
    %3414 = vst [vmem:[%s87 + $0x289] sm:$0xff] %v3350
    %3415 = vst [vmem:[%s87 + $0x291] sm:$0xff] %v3351
    %3416 = vst [vmem:[%s87 + $0x2a1] sm:$0xff] %v3352
    %3417 = vst [vmem:[%s87 + $0x2a9] sm:$0xff] %v3353
    %3418 = vst [vmem:[%s87 + $0x2b9] sm:$0xff] %v3354
    %3419 = vst [vmem:[%s87 + $0x2c1] sm:$0xff] %v3355
    %3420 = vst [vmem:[%s87 + $0x2d1] sm:$0xff] %v3356
    %3421 = vst [vmem:[%s87 + $0x2d9] sm:$0xff] %v3357
    %3422 = vst [vmem:[%s87 + $0x2e9] sm:$0xff] %v3358
    %3423 = vst [vmem:[%s87 + $0x2f1] sm:$0xff] %v3359
    %3424 = vst [vmem:[%s87 + $0x301] sm:$0xff] %v3360
    %3425 = vst [vmem:[%s87 + $0x309] sm:$0xff] %v3361
    %3426 = vst [vmem:[%s87 + $0x319] sm:$0xff] %v3362
    %3427 = vst [vmem:[%s87 + $0x321] sm:$0xff] %v3363
    %v3428 = vld [vmem:[#allocation2] sm:$0xff]
    %v3429 = vld [vmem:[#allocation2 + $0x8] sm:$0xff]
    %v3430 = vld [vmem:[#allocation2 + $0x18] sm:$0xff]
    %v3431 = vld [vmem:[#allocation2 + $0x20] sm:$0xff]
    %v3432 = vld [vmem:[#allocation2 + $0x30] sm:$0xff]
    %v3433 = vld [vmem:[#allocation2 + $0x38] sm:$0xff]
    %v3434 = vld [vmem:[#allocation2 + $0x48] sm:$0xff]
    %v3435 = vld [vmem:[#allocation2 + $0x50] sm:$0xff]
    %v3436 = vld [vmem:[#allocation2 + $0x60] sm:$0xff]
    %v3437 = vld [vmem:[#allocation2 + $0x68] sm:$0xff]
    %v3438 = vld [vmem:[#allocation2 + $0x78] sm:$0xff]
    %v3439 = vld [vmem:[#allocation2 + $0x80] sm:$0xff]
    %v3440 = vld [vmem:[#allocation2 + $0x90] sm:$0xff]
    %v3441 = vld [vmem:[#allocation2 + $0x98] sm:$0xff]
    %v3442 = vld [vmem:[#allocation2 + $0xa8] sm:$0xff]
    %v3443 = vld [vmem:[#allocation2 + $0xb0] sm:$0xff]
    %v3444 = vld [vmem:[#allocation2 + $0xc0] sm:$0xff]
    %v3445 = vld [vmem:[#allocation2 + $0xc8] sm:$0xff]
    %v3446 = vld [vmem:[#allocation2 + $0xd8] sm:$0xff]
    %v3447 = vld [vmem:[#allocation2 + $0xe0] sm:$0xff]
    %v3448 = vld [vmem:[#allocation2 + $0xf0] sm:$0xff]
    %v3449 = vld [vmem:[#allocation2 + $0xf8] sm:$0xff]
    %v3450 = vld [vmem:[#allocation2 + $0x108] sm:$0xff]
    %v3451 = vld [vmem:[#allocation2 + $0x110] sm:$0xff]
    %v3452 = vld [vmem:[#allocation2 + $0x120] sm:$0xff]
    %v3453 = vld [vmem:[#allocation2 + $0x128] sm:$0xff]
    %v3454 = vld [vmem:[#allocation2 + $0x138] sm:$0xff]
    %v3455 = vld [vmem:[#allocation2 + $0x140] sm:$0xff]
    %v3456 = vld [vmem:[#allocation2 + $0x150] sm:$0xff]
    %v3457 = vld [vmem:[#allocation2 + $0x158] sm:$0xff]
    %v3458 = vld [vmem:[#allocation2 + $0x168] sm:$0xff]
    %v3459 = vld [vmem:[#allocation2 + $0x170] sm:$0xff]
    %v3460 = vld [vmem:[#allocation2 + $0x1b0] sm:$0xff]
    %v3461 = vld [vmem:[#allocation2 + $0x1b8] sm:$0xff]
    %v3462 = vld [vmem:[#allocation2 + $0x1c8] sm:$0xff]
    %v3463 = vld [vmem:[#allocation2 + $0x1d0] sm:$0xff]
    %v3464 = vld [vmem:[#allocation2 + $0x1e0] sm:$0xff]
    %v3465 = vld [vmem:[#allocation2 + $0x1e8] sm:$0xff]
    %v3466 = vld [vmem:[#allocation2 + $0x1f8] sm:$0xff]
    %v3467 = vld [vmem:[#allocation2 + $0x200] sm:$0xff]
    %v3468 = vld [vmem:[#allocation2 + $0x210] sm:$0xff]
    %v3469 = vld [vmem:[#allocation2 + $0x218] sm:$0xff]
    %v3470 = vld [vmem:[#allocation2 + $0x228] sm:$0xff]
    %v3471 = vld [vmem:[#allocation2 + $0x230] sm:$0xff]
    %v3472 = vld [vmem:[#allocation2 + $0x240] sm:$0xff]
    %v3473 = vld [vmem:[#allocation2 + $0x248] sm:$0xff]
    %v3474 = vld [vmem:[#allocation2 + $0x258] sm:$0xff]
    %v3475 = vld [vmem:[#allocation2 + $0x260] sm:$0xff]
    %v3476 = vld [vmem:[#allocation2 + $0x270] sm:$0xff]
    %v3477 = vld [vmem:[#allocation2 + $0x278] sm:$0xff]
    %v3478 = vld [vmem:[#allocation2 + $0x288] sm:$0xff]
    %v3479 = vld [vmem:[#allocation2 + $0x290] sm:$0xff]
    %v3480 = vld [vmem:[#allocation2 + $0x2a0] sm:$0xff]
    %v3481 = vld [vmem:[#allocation2 + $0x2a8] sm:$0xff]
    %v3482 = vld [vmem:[#allocation2 + $0x2b8] sm:$0xff]
    %v3483 = vld [vmem:[#allocation2 + $0x2c0] sm:$0xff]
    %v3484 = vld [vmem:[#allocation2 + $0x2d0] sm:$0xff]
    %v3485 = vld [vmem:[#allocation2 + $0x2d8] sm:$0xff]
    %v3486 = vld [vmem:[#allocation2 + $0x2e8] sm:$0xff]
    %v3487 = vld [vmem:[#allocation2 + $0x2f0] sm:$0xff]
    %v3488 = vld [vmem:[#allocation2 + $0x300] sm:$0xff]
    %v3489 = vld [vmem:[#allocation2 + $0x308] sm:$0xff]
    %v3490 = vld [vmem:[#allocation2 + $0x318] sm:$0xff]
    %v3491 = vld [vmem:[#allocation2 + $0x320] sm:$0xff]
    %v3492 = vld [vmem:[#allocation2 + $0x1] sm:$0xff]
    %v3493 = vld [vmem:[#allocation2 + $0x9] sm:$0xff]
    %v3494 = vld [vmem:[#allocation2 + $0x19] sm:$0xff]
    %v3495 = vld [vmem:[#allocation2 + $0x21] sm:$0xff]
    %v3496 = vld [vmem:[#allocation2 + $0x31] sm:$0xff]
    %v3497 = vld [vmem:[#allocation2 + $0x39] sm:$0xff]
    %v3498 = vld [vmem:[#allocation2 + $0x49] sm:$0xff]
    %v3499 = vld [vmem:[#allocation2 + $0x51] sm:$0xff]
    %v3500 = vld [vmem:[#allocation2 + $0x61] sm:$0xff]
    %v3501 = vld [vmem:[#allocation2 + $0x69] sm:$0xff]
    %v3502 = vld [vmem:[#allocation2 + $0x79] sm:$0xff]
    %v3503 = vld [vmem:[#allocation2 + $0x81] sm:$0xff]
    %v3504 = vld [vmem:[#allocation2 + $0x91] sm:$0xff]
    %v3505 = vld [vmem:[#allocation2 + $0x99] sm:$0xff]
    %v3506 = vld [vmem:[#allocation2 + $0xa9] sm:$0xff]
    %v3507 = vld [vmem:[#allocation2 + $0xb1] sm:$0xff]
    %v3508 = vld [vmem:[#allocation2 + $0xc1] sm:$0xff]
    %v3509 = vld [vmem:[#allocation2 + $0xc9] sm:$0xff]
    %v3510 = vld [vmem:[#allocation2 + $0xd9] sm:$0xff]
    %v3511 = vld [vmem:[#allocation2 + $0xe1] sm:$0xff]
    %v3512 = vld [vmem:[#allocation2 + $0xf1] sm:$0xff]
    %v3513 = vld [vmem:[#allocation2 + $0xf9] sm:$0xff]
    %v3514 = vld [vmem:[#allocation2 + $0x109] sm:$0xff]
    %v3515 = vld [vmem:[#allocation2 + $0x111] sm:$0xff]
    %v3516 = vld [vmem:[#allocation2 + $0x121] sm:$0xff]
    %v3517 = vld [vmem:[#allocation2 + $0x129] sm:$0xff]
    %v3518 = vld [vmem:[#allocation2 + $0x139] sm:$0xff]
    %v3519 = vld [vmem:[#allocation2 + $0x141] sm:$0xff]
    %v3520 = vld [vmem:[#allocation2 + $0x151] sm:$0xff]
    %v3521 = vld [vmem:[#allocation2 + $0x159] sm:$0xff]
    %v3522 = vld [vmem:[#allocation2 + $0x169] sm:$0xff]
    %v3523 = vld [vmem:[#allocation2 + $0x171] sm:$0xff]
    %v3524 = vld [vmem:[#allocation2 + $0x1b1] sm:$0xff]
    %v3525 = vld [vmem:[#allocation2 + $0x1b9] sm:$0xff]
    %v3526 = vld [vmem:[#allocation2 + $0x1c9] sm:$0xff]
    %v3527 = vld [vmem:[#allocation2 + $0x1d1] sm:$0xff]
    %v3528 = vld [vmem:[#allocation2 + $0x1e1] sm:$0xff]
    %v3529 = vld [vmem:[#allocation2 + $0x1e9] sm:$0xff]
    %v3530 = vld [vmem:[#allocation2 + $0x1f9] sm:$0xff]
    %v3531 = vld [vmem:[#allocation2 + $0x201] sm:$0xff]
    %v3532 = vld [vmem:[#allocation2 + $0x211] sm:$0xff]
    %v3533 = vld [vmem:[#allocation2 + $0x219] sm:$0xff]
    %v3534 = vld [vmem:[#allocation2 + $0x229] sm:$0xff]
    %v3535 = vld [vmem:[#allocation2 + $0x231] sm:$0xff]
    %v3536 = vld [vmem:[#allocation2 + $0x241] sm:$0xff]
    %v3537 = vld [vmem:[#allocation2 + $0x249] sm:$0xff]
    %v3538 = vld [vmem:[#allocation2 + $0x259] sm:$0xff]
    %v3539 = vld [vmem:[#allocation2 + $0x261] sm:$0xff]
    %v3540 = vld [vmem:[#allocation2 + $0x271] sm:$0xff]
    %v3541 = vld [vmem:[#allocation2 + $0x279] sm:$0xff]
    %v3542 = vld [vmem:[#allocation2 + $0x289] sm:$0xff]
    %v3543 = vld [vmem:[#allocation2 + $0x291] sm:$0xff]
    %v3544 = vld [vmem:[#allocation2 + $0x2a1] sm:$0xff]
    %v3545 = vld [vmem:[#allocation2 + $0x2a9] sm:$0xff]
    %v3546 = vld [vmem:[#allocation2 + $0x2b9] sm:$0xff]
    %v3547 = vld [vmem:[#allocation2 + $0x2c1] sm:$0xff]
    %v3548 = vld [vmem:[#allocation2 + $0x2d1] sm:$0xff]
    %v3549 = vld [vmem:[#allocation2 + $0x2d9] sm:$0xff]
    %v3550 = vld [vmem:[#allocation2 + $0x2e9] sm:$0xff]
    %v3551 = vld [vmem:[#allocation2 + $0x2f1] sm:$0xff]
    %v3552 = vld [vmem:[#allocation2 + $0x301] sm:$0xff]
    %v3553 = vld [vmem:[#allocation2 + $0x309] sm:$0xff]
    %v3554 = vld [vmem:[#allocation2 + $0x319] sm:$0xff]
    %v3555 = vld [vmem:[#allocation2 + $0x321] sm:$0xff]
    %v3556 = vld [vmem:[#allocation2 + $0x2] sm:$0xff]
    %v3557 = vld [vmem:[#allocation2 + $0xa] sm:$0xff]
    %v3558 = vld [vmem:[#allocation2 + $0x1a] sm:$0xff]
    %v3559 = vld [vmem:[#allocation2 + $0x22] sm:$0xff]
    %v3560 = vld [vmem:[#allocation2 + $0x32] sm:$0xff]
    %v3561 = vld [vmem:[#allocation2 + $0x3a] sm:$0xff]
    %v3562 = vld [vmem:[#allocation2 + $0x4a] sm:$0xff]
    %v3563 = vld [vmem:[#allocation2 + $0x52] sm:$0xff]
    %v3564 = vld [vmem:[#allocation2 + $0x62] sm:$0xff]
    %v3565 = vld [vmem:[#allocation2 + $0x6a] sm:$0xff]
    %v3566 = vld [vmem:[#allocation2 + $0x7a] sm:$0xff]
    %v3567 = vld [vmem:[#allocation2 + $0x82] sm:$0xff]
    %v3568 = vld [vmem:[#allocation2 + $0x92] sm:$0xff]
    %v3569 = vld [vmem:[#allocation2 + $0x9a] sm:$0xff]
    %v3570 = vld [vmem:[#allocation2 + $0xaa] sm:$0xff]
    %v3571 = vld [vmem:[#allocation2 + $0xb2] sm:$0xff]
    %v3572 = vld [vmem:[#allocation2 + $0xc2] sm:$0xff]
    %v3573 = vld [vmem:[#allocation2 + $0xca] sm:$0xff]
    %v3574 = vld [vmem:[#allocation2 + $0xda] sm:$0xff]
    %v3575 = vld [vmem:[#allocation2 + $0xe2] sm:$0xff]
    %v3576 = vld [vmem:[#allocation2 + $0xf2] sm:$0xff]
    %v3577 = vld [vmem:[#allocation2 + $0xfa] sm:$0xff]
    %v3578 = vld [vmem:[#allocation2 + $0x10a] sm:$0xff]
    %v3579 = vld [vmem:[#allocation2 + $0x112] sm:$0xff]
    %v3580 = vld [vmem:[#allocation2 + $0x122] sm:$0xff]
    %v3581 = vld [vmem:[#allocation2 + $0x12a] sm:$0xff]
    %v3582 = vld [vmem:[#allocation2 + $0x13a] sm:$0xff]
    %v3583 = vld [vmem:[#allocation2 + $0x142] sm:$0xff]
    %v3584 = vld [vmem:[#allocation2 + $0x152] sm:$0xff]
    %v3585 = vld [vmem:[#allocation2 + $0x15a] sm:$0xff]
    %v3586 = vld [vmem:[#allocation2 + $0x16a] sm:$0xff]
    %v3587 = vld [vmem:[#allocation2 + $0x172] sm:$0xff]
    %v3588 = vld [vmem:[#allocation2 + $0x1b2] sm:$0xff]
    %v3589 = vld [vmem:[#allocation2 + $0x1ba] sm:$0xff]
    %v3590 = vld [vmem:[#allocation2 + $0x1ca] sm:$0xff]
    %v3591 = vld [vmem:[#allocation2 + $0x1d2] sm:$0xff]
    %v3592 = vld [vmem:[#allocation2 + $0x1e2] sm:$0xff]
    %v3593 = vld [vmem:[#allocation2 + $0x1ea] sm:$0xff]
    %v3594 = vld [vmem:[#allocation2 + $0x1fa] sm:$0xff]
    %v3595 = vld [vmem:[#allocation2 + $0x202] sm:$0xff]
    %v3596 = vld [vmem:[#allocation2 + $0x212] sm:$0xff]
    %v3597 = vld [vmem:[#allocation2 + $0x21a] sm:$0xff]
    %v3598 = vld [vmem:[#allocation2 + $0x22a] sm:$0xff]
    %v3599 = vld [vmem:[#allocation2 + $0x232] sm:$0xff]
    %v3600 = vld [vmem:[#allocation2 + $0x242] sm:$0xff]
    %v3601 = vld [vmem:[#allocation2 + $0x24a] sm:$0xff]
    %v3602 = vld [vmem:[#allocation2 + $0x25a] sm:$0xff]
    %v3603 = vld [vmem:[#allocation2 + $0x262] sm:$0xff]
    %v3604 = vld [vmem:[#allocation2 + $0x272] sm:$0xff]
    %v3605 = vld [vmem:[#allocation2 + $0x27a] sm:$0xff]
    %v3606 = vld [vmem:[#allocation2 + $0x28a] sm:$0xff]
    %v3607 = vld [vmem:[#allocation2 + $0x292] sm:$0xff]
    %v3608 = vld [vmem:[#allocation2 + $0x2a2] sm:$0xff]
    %v3609 = vld [vmem:[#allocation2 + $0x2aa] sm:$0xff]
    %v3610 = vld [vmem:[#allocation2 + $0x2ba] sm:$0xff]
    %v3611 = vld [vmem:[#allocation2 + $0x2c2] sm:$0xff]
    %v3612 = vld [vmem:[#allocation2 + $0x2d2] sm:$0xff]
    %v3613 = vld [vmem:[#allocation2 + $0x2da] sm:$0xff]
    %v3614 = vld [vmem:[#allocation2 + $0x2ea] sm:$0xff]
    %v3615 = vld [vmem:[#allocation2 + $0x2f2] sm:$0xff]
    %v3616 = vld [vmem:[#allocation2 + $0x302] sm:$0xff]
    %v3617 = vld [vmem:[#allocation2 + $0x30a] sm:$0xff]
    %v3618 = vld [vmem:[#allocation2 + $0x31a] sm:$0xff]
    %v3619 = vld [vmem:[#allocation2 + $0x322] sm:$0xff]
    %v3620 = vld [vmem:[%s87] sm:$0xff]
    %v3621 = vld [vmem:[%s87 + $0x8] sm:$0xff]
    %v3622 = vld [vmem:[%s87 + $0x18] sm:$0xff]
    %v3623 = vld [vmem:[%s87 + $0x20] sm:$0xff]
    %v3624 = vld [vmem:[%s87 + $0x30] sm:$0xff]
    %v3625 = vld [vmem:[%s87 + $0x38] sm:$0xff]
    %v3626 = vld [vmem:[%s87 + $0x48] sm:$0xff]
    %v3627 = vld [vmem:[%s87 + $0x50] sm:$0xff]
    %v3628 = vld [vmem:[%s87 + $0x60] sm:$0xff]
    %v3629 = vld [vmem:[%s87 + $0x68] sm:$0xff]
    %v3630 = vld [vmem:[%s87 + $0x78] sm:$0xff]
    %v3631 = vld [vmem:[%s87 + $0x80] sm:$0xff]
    %v3632 = vld [vmem:[%s87 + $0x90] sm:$0xff]
    %v3633 = vld [vmem:[%s87 + $0x98] sm:$0xff]
    %v3634 = vld [vmem:[%s87 + $0xa8] sm:$0xff]
    %v3635 = vld [vmem:[%s87 + $0xb0] sm:$0xff]
    %v3636 = vld [vmem:[%s87 + $0xc0] sm:$0xff]
    %v3637 = vld [vmem:[%s87 + $0xc8] sm:$0xff]
    %v3638 = vld [vmem:[%s87 + $0xd8] sm:$0xff]
    %v3639 = vld [vmem:[%s87 + $0xe0] sm:$0xff]
    %v3640 = vld [vmem:[%s87 + $0xf0] sm:$0xff]
    %v3641 = vld [vmem:[%s87 + $0xf8] sm:$0xff]
    %v3642 = vld [vmem:[%s87 + $0x108] sm:$0xff]
    %v3643 = vld [vmem:[%s87 + $0x110] sm:$0xff]
    %v3644 = vld [vmem:[%s87 + $0x120] sm:$0xff]
    %v3645 = vld [vmem:[%s87 + $0x128] sm:$0xff]
    %v3646 = vld [vmem:[%s87 + $0x138] sm:$0xff]
    %v3647 = vld [vmem:[%s87 + $0x140] sm:$0xff]
    %v3648 = vld [vmem:[%s87 + $0x150] sm:$0xff]
    %v3649 = vld [vmem:[%s87 + $0x158] sm:$0xff]
    %v3650 = vld [vmem:[%s87 + $0x168] sm:$0xff]
    %v3651 = vld [vmem:[%s87 + $0x170] sm:$0xff]
    %v3652 = vld [vmem:[%s87 + $0x1b0] sm:$0xff]
    %v3653 = vld [vmem:[%s87 + $0x1b8] sm:$0xff]
    %v3654 = vld [vmem:[%s87 + $0x1c8] sm:$0xff]
    %v3655 = vld [vmem:[%s87 + $0x1d0] sm:$0xff]
    %v3656 = vld [vmem:[%s87 + $0x1e0] sm:$0xff]
    %v3657 = vld [vmem:[%s87 + $0x1e8] sm:$0xff]
    %v3658 = vld [vmem:[%s87 + $0x1f8] sm:$0xff]
    %v3659 = vld [vmem:[%s87 + $0x200] sm:$0xff]
    %v3660 = vld [vmem:[%s87 + $0x210] sm:$0xff]
    %v3661 = vld [vmem:[%s87 + $0x218] sm:$0xff]
    %v3662 = vld [vmem:[%s87 + $0x228] sm:$0xff]
    %v3663 = vld [vmem:[%s87 + $0x230] sm:$0xff]
    %v3664 = vld [vmem:[%s87 + $0x240] sm:$0xff]
    %v3665 = vld [vmem:[%s87 + $0x248] sm:$0xff]
    %v3666 = vld [vmem:[%s87 + $0x258] sm:$0xff]
    %v3667 = vld [vmem:[%s87 + $0x260] sm:$0xff]
    %v3668 = vld [vmem:[%s87 + $0x270] sm:$0xff]
    %v3669 = vld [vmem:[%s87 + $0x278] sm:$0xff]
    %v3670 = vld [vmem:[%s87 + $0x288] sm:$0xff]
    %v3671 = vld [vmem:[%s87 + $0x290] sm:$0xff]
    %v3672 = vld [vmem:[%s87 + $0x2a0] sm:$0xff]
    %v3673 = vld [vmem:[%s87 + $0x2a8] sm:$0xff]
    %v3674 = vld [vmem:[%s87 + $0x2b8] sm:$0xff]
    %v3675 = vld [vmem:[%s87 + $0x2c0] sm:$0xff]
    %v3676 = vld [vmem:[%s87 + $0x2d0] sm:$0xff]
    %v3677 = vld [vmem:[%s87 + $0x2d8] sm:$0xff]
    %v3678 = vld [vmem:[%s87 + $0x2e8] sm:$0xff]
    %v3679 = vld [vmem:[%s87 + $0x2f0] sm:$0xff]
    %v3680 = vld [vmem:[%s87 + $0x300] sm:$0xff]
    %v3681 = vld [vmem:[%s87 + $0x308] sm:$0xff]
    %v3682 = vld [vmem:[%s87 + $0x318] sm:$0xff]
    %v3683 = vld [vmem:[%s87 + $0x320] sm:$0xff]
    %v3684 = vld [vmem:[%s87 + $0x1] sm:$0xff]
    %v3685 = vld [vmem:[%s87 + $0x9] sm:$0xff]
    %v3686 = vld [vmem:[%s87 + $0x19] sm:$0xff]
    %v3687 = vld [vmem:[%s87 + $0x21] sm:$0xff]
    %v3688 = vld [vmem:[%s87 + $0x31] sm:$0xff]
    %v3689 = vld [vmem:[%s87 + $0x39] sm:$0xff]
    %v3690 = vld [vmem:[%s87 + $0x49] sm:$0xff]
    %v3691 = vld [vmem:[%s87 + $0x51] sm:$0xff]
    %v3692 = vld [vmem:[%s87 + $0x61] sm:$0xff]
    %v3693 = vld [vmem:[%s87 + $0x69] sm:$0xff]
    %v3694 = vld [vmem:[%s87 + $0x79] sm:$0xff]
    %v3695 = vld [vmem:[%s87 + $0x81] sm:$0xff]
    %v3696 = vld [vmem:[%s87 + $0x91] sm:$0xff]
    %v3697 = vld [vmem:[%s87 + $0x99] sm:$0xff]
    %v3698 = vld [vmem:[%s87 + $0xa9] sm:$0xff]
    %v3699 = vld [vmem:[%s87 + $0xb1] sm:$0xff]
    %v3700 = vld [vmem:[%s87 + $0xc1] sm:$0xff]
    %v3701 = vld [vmem:[%s87 + $0xc9] sm:$0xff]
    %v3702 = vld [vmem:[%s87 + $0xd9] sm:$0xff]
    %v3703 = vld [vmem:[%s87 + $0xe1] sm:$0xff]
    %v3704 = vld [vmem:[%s87 + $0xf1] sm:$0xff]
    %v3705 = vld [vmem:[%s87 + $0xf9] sm:$0xff]
    %v3706 = vld [vmem:[%s87 + $0x109] sm:$0xff]
    %v3707 = vld [vmem:[%s87 + $0x111] sm:$0xff]
    %v3708 = vld [vmem:[%s87 + $0x121] sm:$0xff]
    %v3709 = vld [vmem:[%s87 + $0x129] sm:$0xff]
    %v3710 = vld [vmem:[%s87 + $0x139] sm:$0xff]
    %v3711 = vld [vmem:[%s87 + $0x141] sm:$0xff]
    %v3712 = vld [vmem:[%s87 + $0x151] sm:$0xff]
    %v3713 = vld [vmem:[%s87 + $0x159] sm:$0xff]
    %v3714 = vld [vmem:[%s87 + $0x169] sm:$0xff]
    %v3715 = vld [vmem:[%s87 + $0x171] sm:$0xff]
    %v3716 = vld [vmem:[%s87 + $0x1b1] sm:$0xff]
    %v3717 = vld [vmem:[%s87 + $0x1b9] sm:$0xff]
    %v3718 = vld [vmem:[%s87 + $0x1c9] sm:$0xff]
    %v3719 = vld [vmem:[%s87 + $0x1d1] sm:$0xff]
    %v3720 = vld [vmem:[%s87 + $0x1e1] sm:$0xff]
    %v3721 = vld [vmem:[%s87 + $0x1e9] sm:$0xff]
    %v3722 = vld [vmem:[%s87 + $0x1f9] sm:$0xff]
    %v3723 = vld [vmem:[%s87 + $0x201] sm:$0xff]
    %v3724 = vld [vmem:[%s87 + $0x211] sm:$0xff]
    %v3725 = vld [vmem:[%s87 + $0x219] sm:$0xff]
    %v3726 = vld [vmem:[%s87 + $0x229] sm:$0xff]
    %v3727 = vld [vmem:[%s87 + $0x231] sm:$0xff]
    %v3728 = vld [vmem:[%s87 + $0x241] sm:$0xff]
    %v3729 = vld [vmem:[%s87 + $0x249] sm:$0xff]
    %v3730 = vld [vmem:[%s87 + $0x259] sm:$0xff]
    %v3731 = vld [vmem:[%s87 + $0x261] sm:$0xff]
    %v3732 = vld [vmem:[%s87 + $0x271] sm:$0xff]
    %v3733 = vld [vmem:[%s87 + $0x279] sm:$0xff]
    %v3734 = vld [vmem:[%s87 + $0x289] sm:$0xff]
    %v3735 = vld [vmem:[%s87 + $0x291] sm:$0xff]
    %v3736 = vld [vmem:[%s87 + $0x2a1] sm:$0xff]
    %v3737 = vld [vmem:[%s87 + $0x2a9] sm:$0xff]
    %v3738 = vld [vmem:[%s87 + $0x2b9] sm:$0xff]
    %v3739 = vld [vmem:[%s87 + $0x2c1] sm:$0xff]
    %v3740 = vld [vmem:[%s87 + $0x2d1] sm:$0xff]
    %v3741 = vld [vmem:[%s87 + $0x2d9] sm:$0xff]
    %v3742 = vld [vmem:[%s87 + $0x2e9] sm:$0xff]
    %v3743 = vld [vmem:[%s87 + $0x2f1] sm:$0xff]
    %v3744 = vld [vmem:[%s87 + $0x301] sm:$0xff]
    %v3745 = vld [vmem:[%s87 + $0x309] sm:$0xff]
    %v3746 = vld [vmem:[%s87 + $0x319] sm:$0xff]
    %v3747 = vld [vmem:[%s87 + $0x321] sm:$0xff]
    %v3748 = vld [vmem:[%s87 + $0x2] sm:$0xff]
    %v3749 = vld [vmem:[%s87 + $0xa] sm:$0xff]
    %v3750 = vld [vmem:[%s87 + $0x1a] sm:$0xff]
    %v3751 = vld [vmem:[%s87 + $0x22] sm:$0xff]
    %v3752 = vld [vmem:[%s87 + $0x32] sm:$0xff]
    %v3753 = vld [vmem:[%s87 + $0x3a] sm:$0xff]
    %v3754 = vld [vmem:[%s87 + $0x4a] sm:$0xff]
    %v3755 = vld [vmem:[%s87 + $0x52] sm:$0xff]
    %v3756 = vld [vmem:[%s87 + $0x62] sm:$0xff]
    %v3757 = vld [vmem:[%s87 + $0x6a] sm:$0xff]
    %v3758 = vld [vmem:[%s87 + $0x7a] sm:$0xff]
    %v3759 = vld [vmem:[%s87 + $0x82] sm:$0xff]
    %v3760 = vld [vmem:[%s87 + $0x92] sm:$0xff]
    %v3761 = vld [vmem:[%s87 + $0x9a] sm:$0xff]
    %v3762 = vld [vmem:[%s87 + $0xaa] sm:$0xff]
    %v3763 = vld [vmem:[%s87 + $0xb2] sm:$0xff]
    %v3764 = vld [vmem:[%s87 + $0xc2] sm:$0xff]
    %v3765 = vld [vmem:[%s87 + $0xca] sm:$0xff]
    %v3766 = vld [vmem:[%s87 + $0xda] sm:$0xff]
    %v3767 = vld [vmem:[%s87 + $0xe2] sm:$0xff]
    %v3768 = vld [vmem:[%s87 + $0xf2] sm:$0xff]
    %v3769 = vld [vmem:[%s87 + $0xfa] sm:$0xff]
    %v3770 = vld [vmem:[%s87 + $0x10a] sm:$0xff]
    %v3771 = vld [vmem:[%s87 + $0x112] sm:$0xff]
    %v3772 = vld [vmem:[%s87 + $0x122] sm:$0xff]
    %v3773 = vld [vmem:[%s87 + $0x12a] sm:$0xff]
    %v3774 = vld [vmem:[%s87 + $0x13a] sm:$0xff]
    %v3775 = vld [vmem:[%s87 + $0x142] sm:$0xff]
    %v3776 = vld [vmem:[%s87 + $0x152] sm:$0xff]
    %v3777 = vld [vmem:[%s87 + $0x15a] sm:$0xff]
    %v3778 = vld [vmem:[%s87 + $0x16a] sm:$0xff]
    %v3779 = vld [vmem:[%s87 + $0x172] sm:$0xff]
    %v3780 = vld [vmem:[%s87 + $0x1b2] sm:$0xff]
    %v3781 = vld [vmem:[%s87 + $0x1ba] sm:$0xff]
    %v3782 = vld [vmem:[%s87 + $0x1ca] sm:$0xff]
    %v3783 = vld [vmem:[%s87 + $0x1d2] sm:$0xff]
    %v3784 = vld [vmem:[%s87 + $0x1e2] sm:$0xff]
    %v3785 = vld [vmem:[%s87 + $0x1ea] sm:$0xff]
    %v3786 = vld [vmem:[%s87 + $0x1fa] sm:$0xff]
    %v3787 = vld [vmem:[%s87 + $0x202] sm:$0xff]
    %v3788 = vld [vmem:[%s87 + $0x212] sm:$0xff]
    %v3789 = vld [vmem:[%s87 + $0x21a] sm:$0xff]
    %v3790 = vld [vmem:[%s87 + $0x22a] sm:$0xff]
    %v3791 = vld [vmem:[%s87 + $0x232] sm:$0xff]
    %v3792 = vld [vmem:[%s87 + $0x242] sm:$0xff]
    %v3793 = vld [vmem:[%s87 + $0x24a] sm:$0xff]
    %v3794 = vld [vmem:[%s87 + $0x25a] sm:$0xff]
    %v3795 = vld [vmem:[%s87 + $0x262] sm:$0xff]
    %v3796 = vld [vmem:[%s87 + $0x272] sm:$0xff]
    %v3797 = vld [vmem:[%s87 + $0x27a] sm:$0xff]
    %v3798 = vld [vmem:[%s87 + $0x28a] sm:$0xff]
    %v3799 = vld [vmem:[%s87 + $0x292] sm:$0xff]
    %v3800 = vld [vmem:[%s87 + $0x2a2] sm:$0xff]
    %v3801 = vld [vmem:[%s87 + $0x2aa] sm:$0xff]
    %v3802 = vld [vmem:[%s87 + $0x2ba] sm:$0xff]
    %v3803 = vld [vmem:[%s87 + $0x2c2] sm:$0xff]
    %v3804 = vld [vmem:[%s87 + $0x2d2] sm:$0xff]
    %v3805 = vld [vmem:[%s87 + $0x2da] sm:$0xff]
    %v3806 = vld [vmem:[%s87 + $0x2ea] sm:$0xff]
    %v3807 = vld [vmem:[%s87 + $0x2f2] sm:$0xff]
    %v3808 = vld [vmem:[%s87 + $0x302] sm:$0xff]
    %v3809 = vld [vmem:[%s87 + $0x30a] sm:$0xff]
    %v3810 = vld [vmem:[%s87 + $0x31a] sm:$0xff]
    %v3811 = vld [vmem:[%s87 + $0x322] sm:$0xff]
    %v3812 = vld [vmem:[%s664] sm:$0xff]
    %v3813 = vld [vmem:[%s664 + $0x8] sm:$0xff]
    %v3814 = vld [vmem:[%s664 + $0x18] sm:$0xff]
    %v3815 = vld [vmem:[%s664 + $0x20] sm:$0xff]
    %v3816 = vld [vmem:[%s664 + $0x30] sm:$0xff]
    %v3817 = vld [vmem:[%s664 + $0x38] sm:$0xff]
    %v3818 = vld [vmem:[%s664 + $0x48] sm:$0xff]
    %v3819 = vld [vmem:[%s664 + $0x50] sm:$0xff]
    %v3820 = vld [vmem:[%s664 + $0x60] sm:$0xff]
    %v3821 = vld [vmem:[%s664 + $0x68] sm:$0xff]
    %v3822 = vld [vmem:[%s664 + $0x78] sm:$0xff]
    %v3823 = vld [vmem:[%s664 + $0x80] sm:$0xff]
    %v3824 = vld [vmem:[%s664 + $0x90] sm:$0xff]
    %v3825 = vld [vmem:[%s664 + $0x98] sm:$0xff]
    %v3826 = vld [vmem:[%s664 + $0xa8] sm:$0xff]
    %v3827 = vld [vmem:[%s664 + $0xb0] sm:$0xff]
    %v3828 = vld [vmem:[%s664 + $0xc0] sm:$0xff]
    %v3829 = vld [vmem:[%s664 + $0xc8] sm:$0xff]
    %v3830 = vld [vmem:[%s664 + $0xd8] sm:$0xff]
    %v3831 = vld [vmem:[%s664 + $0xe0] sm:$0xff]
    %v3832 = vld [vmem:[%s664 + $0xf0] sm:$0xff]
    %v3833 = vld [vmem:[%s664 + $0xf8] sm:$0xff]
    %v3834 = vld [vmem:[%s664 + $0x108] sm:$0xff]
    %v3835 = vld [vmem:[%s664 + $0x110] sm:$0xff]
    %v3836 = vld [vmem:[%s664 + $0x120] sm:$0xff]
    %v3837 = vld [vmem:[%s664 + $0x128] sm:$0xff]
    %v3838 = vld [vmem:[%s664 + $0x138] sm:$0xff]
    %v3839 = vld [vmem:[%s664 + $0x140] sm:$0xff]
    %v3840 = vld [vmem:[%s664 + $0x150] sm:$0xff]
    %v3841 = vld [vmem:[%s664 + $0x158] sm:$0xff]
    %v3842 = vld [vmem:[%s664 + $0x168] sm:$0xff]
    %v3843 = vld [vmem:[%s664 + $0x170] sm:$0xff]
    %v3844 = vld [vmem:[%s664 + $0x1b0] sm:$0xff]
    %v3845 = vld [vmem:[%s664 + $0x1b8] sm:$0xff]
    %v3846 = vld [vmem:[%s664 + $0x1c8] sm:$0xff]
    %v3847 = vld [vmem:[%s664 + $0x1d0] sm:$0xff]
    %v3848 = vld [vmem:[%s664 + $0x1e0] sm:$0xff]
    %v3849 = vld [vmem:[%s664 + $0x1e8] sm:$0xff]
    %v3850 = vld [vmem:[%s664 + $0x1f8] sm:$0xff]
    %v3851 = vld [vmem:[%s664 + $0x200] sm:$0xff]
    %v3852 = vld [vmem:[%s664 + $0x210] sm:$0xff]
    %v3853 = vld [vmem:[%s664 + $0x218] sm:$0xff]
    %v3854 = vld [vmem:[%s664 + $0x228] sm:$0xff]
    %v3855 = vld [vmem:[%s664 + $0x230] sm:$0xff]
    %v3856 = vld [vmem:[%s664 + $0x240] sm:$0xff]
    %v3857 = vld [vmem:[%s664 + $0x248] sm:$0xff]
    %v3858 = vld [vmem:[%s664 + $0x258] sm:$0xff]
    %v3859 = vld [vmem:[%s664 + $0x260] sm:$0xff]
    %v3860 = vld [vmem:[%s664 + $0x270] sm:$0xff]
    %v3861 = vld [vmem:[%s664 + $0x278] sm:$0xff]
    %v3862 = vld [vmem:[%s664 + $0x288] sm:$0xff]
    %v3863 = vld [vmem:[%s664 + $0x290] sm:$0xff]
    %v3864 = vld [vmem:[%s664 + $0x2a0] sm:$0xff]
    %v3865 = vld [vmem:[%s664 + $0x2a8] sm:$0xff]
    %v3866 = vld [vmem:[%s664 + $0x2b8] sm:$0xff]
    %v3867 = vld [vmem:[%s664 + $0x2c0] sm:$0xff]
    %v3868 = vld [vmem:[%s664 + $0x2d0] sm:$0xff]
    %v3869 = vld [vmem:[%s664 + $0x2d8] sm:$0xff]
    %v3870 = vld [vmem:[%s664 + $0x2e8] sm:$0xff]
    %v3871 = vld [vmem:[%s664 + $0x2f0] sm:$0xff]
    %v3872 = vld [vmem:[%s664 + $0x300] sm:$0xff]
    %v3873 = vld [vmem:[%s664 + $0x308] sm:$0xff]
    %v3874 = vld [vmem:[%s664 + $0x318] sm:$0xff]
    %v3875 = vld [vmem:[%s664 + $0x320] sm:$0xff]
    %v3876 = vld [vmem:[%s664 + $0x1] sm:$0xff]
    %v3877 = vld [vmem:[%s664 + $0x9] sm:$0xff]
    %v3878 = vld [vmem:[%s664 + $0x19] sm:$0xff]
    %v3879 = vld [vmem:[%s664 + $0x21] sm:$0xff]
    %v3880 = vld [vmem:[%s664 + $0x31] sm:$0xff]
    %v3881 = vld [vmem:[%s664 + $0x39] sm:$0xff]
    %v3882 = vld [vmem:[%s664 + $0x49] sm:$0xff]
    %v3883 = vld [vmem:[%s664 + $0x51] sm:$0xff]
    %v3884 = vld [vmem:[%s664 + $0x61] sm:$0xff]
    %v3885 = vld [vmem:[%s664 + $0x69] sm:$0xff]
    %v3886 = vld [vmem:[%s664 + $0x79] sm:$0xff]
    %v3887 = vld [vmem:[%s664 + $0x81] sm:$0xff]
    %v3888 = vld [vmem:[%s664 + $0x91] sm:$0xff]
    %v3889 = vld [vmem:[%s664 + $0x99] sm:$0xff]
    %v3890 = vld [vmem:[%s664 + $0xa9] sm:$0xff]
    %v3891 = vld [vmem:[%s664 + $0xb1] sm:$0xff]
    %v3892 = vld [vmem:[%s664 + $0xc1] sm:$0xff]
    %v3893 = vld [vmem:[%s664 + $0xc9] sm:$0xff]
    %v3894 = vld [vmem:[%s664 + $0xd9] sm:$0xff]
    %v3895 = vld [vmem:[%s664 + $0xe1] sm:$0xff]
    %v3896 = vld [vmem:[%s664 + $0xf1] sm:$0xff]
    %v3897 = vld [vmem:[%s664 + $0xf9] sm:$0xff]
    %v3898 = vld [vmem:[%s664 + $0x109] sm:$0xff]
    %v3899 = vld [vmem:[%s664 + $0x111] sm:$0xff]
    %v3900 = vld [vmem:[%s664 + $0x121] sm:$0xff]
    %v3901 = vld [vmem:[%s664 + $0x129] sm:$0xff]
    %v3902 = vld [vmem:[%s664 + $0x139] sm:$0xff]
    %v3903 = vld [vmem:[%s664 + $0x141] sm:$0xff]
    %v3904 = vld [vmem:[%s664 + $0x151] sm:$0xff]
    %v3905 = vld [vmem:[%s664 + $0x159] sm:$0xff]
    %v3906 = vld [vmem:[%s664 + $0x169] sm:$0xff]
    %v3907 = vld [vmem:[%s664 + $0x171] sm:$0xff]
    %v3908 = vld [vmem:[%s664 + $0x1b1] sm:$0xff]
    %v3909 = vld [vmem:[%s664 + $0x1b9] sm:$0xff]
    %v3910 = vld [vmem:[%s664 + $0x1c9] sm:$0xff]
    %v3911 = vld [vmem:[%s664 + $0x1d1] sm:$0xff]
    %v3912 = vld [vmem:[%s664 + $0x1e1] sm:$0xff]
    %v3913 = vld [vmem:[%s664 + $0x1e9] sm:$0xff]
    %v3914 = vld [vmem:[%s664 + $0x1f9] sm:$0xff]
    %v3915 = vld [vmem:[%s664 + $0x201] sm:$0xff]
    %v3916 = vld [vmem:[%s664 + $0x211] sm:$0xff]
    %v3917 = vld [vmem:[%s664 + $0x219] sm:$0xff]
    %v3918 = vld [vmem:[%s664 + $0x229] sm:$0xff]
    %v3919 = vld [vmem:[%s664 + $0x231] sm:$0xff]
    %v3920 = vld [vmem:[%s664 + $0x241] sm:$0xff]
    %v3921 = vld [vmem:[%s664 + $0x249] sm:$0xff]
    %v3922 = vld [vmem:[%s664 + $0x259] sm:$0xff]
    %v3923 = vld [vmem:[%s664 + $0x261] sm:$0xff]
    %v3924 = vld [vmem:[%s664 + $0x271] sm:$0xff]
    %v3925 = vld [vmem:[%s664 + $0x279] sm:$0xff]
    %v3926 = vld [vmem:[%s664 + $0x289] sm:$0xff]
    %v3927 = vld [vmem:[%s664 + $0x291] sm:$0xff]
    %v3928 = vld [vmem:[%s664 + $0x2a1] sm:$0xff]
    %v3929 = vld [vmem:[%s664 + $0x2a9] sm:$0xff]
    %v3930 = vld [vmem:[%s664 + $0x2b9] sm:$0xff]
    %v3931 = vld [vmem:[%s664 + $0x2c1] sm:$0xff]
    %v3932 = vld [vmem:[%s664 + $0x2d1] sm:$0xff]
    %v3933 = vld [vmem:[%s664 + $0x2d9] sm:$0xff]
    %v3934 = vld [vmem:[%s664 + $0x2e9] sm:$0xff]
    %v3935 = vld [vmem:[%s664 + $0x2f1] sm:$0xff]
    %v3936 = vld [vmem:[%s664 + $0x301] sm:$0xff]
    %v3937 = vld [vmem:[%s664 + $0x309] sm:$0xff]
    %v3938 = vld [vmem:[%s664 + $0x319] sm:$0xff]
    %v3939 = vld [vmem:[%s664 + $0x321] sm:$0xff]
    %v3940 = vld [vmem:[%s664 + $0x2] sm:$0xff]
    %v3941 = vld [vmem:[%s664 + $0xa] sm:$0xff]
    %v3942 = vld [vmem:[%s664 + $0x1a] sm:$0xff]
    %v3943 = vld [vmem:[%s664 + $0x22] sm:$0xff]
    %v3944 = vld [vmem:[%s664 + $0x32] sm:$0xff]
    %v3945 = vld [vmem:[%s664 + $0x3a] sm:$0xff]
    %v3946 = vld [vmem:[%s664 + $0x4a] sm:$0xff]
    %v3947 = vld [vmem:[%s664 + $0x52] sm:$0xff]
    %v3948 = vld [vmem:[%s664 + $0x62] sm:$0xff]
    %v3949 = vld [vmem:[%s664 + $0x6a] sm:$0xff]
    %v3950 = vld [vmem:[%s664 + $0x7a] sm:$0xff]
    %v3951 = vld [vmem:[%s664 + $0x82] sm:$0xff]
    %v3952 = vld [vmem:[%s664 + $0x92] sm:$0xff]
    %v3953 = vld [vmem:[%s664 + $0x9a] sm:$0xff]
    %v3954 = vld [vmem:[%s664 + $0xaa] sm:$0xff]
    %v3955 = vld [vmem:[%s664 + $0xb2] sm:$0xff]
    %v3956 = vld [vmem:[%s664 + $0xc2] sm:$0xff]
    %v3957 = vld [vmem:[%s664 + $0xca] sm:$0xff]
    %v3958 = vld [vmem:[%s664 + $0xda] sm:$0xff]
    %v3959 = vld [vmem:[%s664 + $0xe2] sm:$0xff]
    %v3960 = vld [vmem:[%s664 + $0xf2] sm:$0xff]
    %v3961 = vld [vmem:[%s664 + $0xfa] sm:$0xff]
    %v3962 = vld [vmem:[%s664 + $0x10a] sm:$0xff]
    %v3963 = vld [vmem:[%s664 + $0x112] sm:$0xff]
    %v3964 = vld [vmem:[%s664 + $0x122] sm:$0xff]
    %v3965 = vld [vmem:[%s664 + $0x12a] sm:$0xff]
    %v3966 = vld [vmem:[%s664 + $0x13a] sm:$0xff]
    %v3967 = vld [vmem:[%s664 + $0x142] sm:$0xff]
    %v3968 = vld [vmem:[%s664 + $0x152] sm:$0xff]
    %v3969 = vld [vmem:[%s664 + $0x15a] sm:$0xff]
    %v3970 = vld [vmem:[%s664 + $0x16a] sm:$0xff]
    %v3971 = vld [vmem:[%s664 + $0x172] sm:$0xff]
    %v3972 = vld [vmem:[%s664 + $0x1b2] sm:$0xff]
    %v3973 = vld [vmem:[%s664 + $0x1ba] sm:$0xff]
    %v3974 = vld [vmem:[%s664 + $0x1ca] sm:$0xff]
    %v3975 = vld [vmem:[%s664 + $0x1d2] sm:$0xff]
    %v3976 = vld [vmem:[%s664 + $0x1e2] sm:$0xff]
    %v3977 = vld [vmem:[%s664 + $0x1ea] sm:$0xff]
    %v3978 = vld [vmem:[%s664 + $0x1fa] sm:$0xff]
    %v3979 = vld [vmem:[%s664 + $0x202] sm:$0xff]
    %v3980 = vld [vmem:[%s664 + $0x212] sm:$0xff]
    %v3981 = vld [vmem:[%s664 + $0x21a] sm:$0xff]
    %v3982 = vld [vmem:[%s664 + $0x22a] sm:$0xff]
    %v3983 = vld [vmem:[%s664 + $0x232] sm:$0xff]
    %v3984 = vld [vmem:[%s664 + $0x242] sm:$0xff]
    %v3985 = vld [vmem:[%s664 + $0x24a] sm:$0xff]
    %v3986 = vld [vmem:[%s664 + $0x25a] sm:$0xff]
    %v3987 = vld [vmem:[%s664 + $0x262] sm:$0xff]
    %v3988 = vld [vmem:[%s664 + $0x272] sm:$0xff]
    %v3989 = vld [vmem:[%s664 + $0x27a] sm:$0xff]
    %v3990 = vld [vmem:[%s664 + $0x28a] sm:$0xff]
    %v3991 = vld [vmem:[%s664 + $0x292] sm:$0xff]
    %v3992 = vld [vmem:[%s664 + $0x2a2] sm:$0xff]
    %v3993 = vld [vmem:[%s664 + $0x2aa] sm:$0xff]
    %v3994 = vld [vmem:[%s664 + $0x2ba] sm:$0xff]
    %v3995 = vld [vmem:[%s664 + $0x2c2] sm:$0xff]
    %v3996 = vld [vmem:[%s664 + $0x2d2] sm:$0xff]
    %v3997 = vld [vmem:[%s664 + $0x2da] sm:$0xff]
    %v3998 = vld [vmem:[%s664 + $0x2ea] sm:$0xff]
    %v3999 = vld [vmem:[%s664 + $0x2f2] sm:$0xff]
    %v4000 = vld [vmem:[%s664 + $0x302] sm:$0xff]
    %v4001 = vld [vmem:[%s664 + $0x30a] sm:$0xff]
    %v4002 = vld [vmem:[%s664 + $0x31a] sm:$0xff]
    %v4003 = vld [vmem:[%s664 + $0x322] sm:$0xff]
    %v4004 = vld [vmem:[#allocation8] sm:$0xff]
    %v4005 = vld [vmem:[#allocation8 + $0x8] sm:$0xff]
    %v4006 = vld [vmem:[#allocation8 + $0x10] sm:$0xff]
    %v4007 = vld [vmem:[#allocation8 + $0x18] sm:$0xff]
    %v4008 = vld [vmem:[#allocation8 + $0x20] sm:$0xff]
    %v4009 = vld [vmem:[#allocation8 + $0x28] sm:$0xff]
    %v4010 = vld [vmem:[#allocation8 + $0x30] sm:$0xff]
    %v4011 = vld [vmem:[#allocation8 + $0x38] sm:$0xff]
    %v4012 = vld [vmem:[#allocation8 + $0x40] sm:$0xff]
    %v4013 = vld [vmem:[#allocation8 + $0x48] sm:$0xff]
    %v4014 = vld [vmem:[#allocation8 + $0x50] sm:$0xff]
    %v4015 = vld [vmem:[#allocation8 + $0x58] sm:$0xff]
    %v4016 = vld [vmem:[#allocation8 + $0x60] sm:$0xff]
    %v4017 = vld [vmem:[#allocation8 + $0x68] sm:$0xff]
    %v4018 = vld [vmem:[#allocation8 + $0x70] sm:$0xff]
    %v4019 = vld [vmem:[#allocation8 + $0x78] sm:$0xff]
    %v4020 = vld [vmem:[#allocation8 + $0x80] sm:$0xff]
    %v4021 = vld [vmem:[#allocation8 + $0x88] sm:$0xff]
    %v4022 = vld [vmem:[#allocation8 + $0x90] sm:$0xff]
    %v4023 = vld [vmem:[#allocation8 + $0x98] sm:$0xff]
    %v4024 = vld [vmem:[#allocation8 + $0xa0] sm:$0xff]
    %v4025 = vld [vmem:[#allocation8 + $0xa8] sm:$0xff]
    %v4026 = vld [vmem:[#allocation8 + $0xb0] sm:$0xff]
    %v4027 = vld [vmem:[#allocation8 + $0xb8] sm:$0xff]
    %v4028 = vld [vmem:[#allocation8 + $0xc0] sm:$0xff]
    %v4029 = vld [vmem:[#allocation8 + $0xc8] sm:$0xff]
    %v4030 = vld [vmem:[#allocation8 + $0xd0] sm:$0xff]
    %v4031 = vld [vmem:[#allocation8 + $0xd8] sm:$0xff]
    %v4032 = vld [vmem:[#allocation8 + $0xe0] sm:$0xff]
    %v4033 = vld [vmem:[#allocation8 + $0xe8] sm:$0xff]
    %v4034 = vld [vmem:[#allocation8 + $0xf0] sm:$0xff]
    %v4035 = vld [vmem:[#allocation8 + $0xf8] sm:$0xff]
    %v4036 = vld [vmem:[#allocation8 + $0x100] sm:$0xff]
    %v4037 = vld [vmem:[#allocation8 + $0x108] sm:$0xff]
    %v4038 = vld [vmem:[#allocation8 + $0x110] sm:$0xff]
    %v4039 = vld [vmem:[#allocation8 + $0x118] sm:$0xff]
    %v4040 = vld [vmem:[#allocation8 + $0x120] sm:$0xff]
    %v4041 = vld [vmem:[#allocation8 + $0x128] sm:$0xff]
    %v4042 = vld [vmem:[#allocation8 + $0x130] sm:$0xff]
    %v4043 = vld [vmem:[#allocation8 + $0x138] sm:$0xff]
    %v4044 = vld [vmem:[#allocation8 + $0x140] sm:$0xff]
    %v4045 = vld [vmem:[#allocation8 + $0x148] sm:$0xff]
    %v4046 = vld [vmem:[#allocation8 + $0x150] sm:$0xff]
    %v4047 = vld [vmem:[#allocation8 + $0x158] sm:$0xff]
    %v4048 = vld [vmem:[#allocation8 + $0x160] sm:$0xff]
    %v4049 = vld [vmem:[#allocation8 + $0x168] sm:$0xff]
    %v4050 = vld [vmem:[#allocation8 + $0x170] sm:$0xff]
    %v4051 = vld [vmem:[#allocation8 + $0x178] sm:$0xff]
    %v4052 = vld [vmem:[#allocation8 + $0x180] sm:$0xff]
    %v4053 = vld [vmem:[#allocation8 + $0x188] sm:$0xff]
    %v4054 = vld [vmem:[#allocation8 + $0x190] sm:$0xff]
    %v4055 = vld [vmem:[#allocation8 + $0x198] sm:$0xff]
    %v4056 = vld [vmem:[#allocation8 + $0x1a0] sm:$0xff]
    %v4057 = vld [vmem:[#allocation8 + $0x1a8] sm:$0xff]
    %v4058 = vld [vmem:[#allocation8 + $0x1b0] sm:$0xff]
    %v4059 = vld [vmem:[#allocation8 + $0x1b8] sm:$0xff]
    %v4060 = vld [vmem:[#allocation8 + $0x1c0] sm:$0xff]
    %v4061 = vld [vmem:[#allocation8 + $0x1c8] sm:$0xff]
    %v4062 = vld [vmem:[#allocation8 + $0x1d0] sm:$0xff]
    %v4063 = vld [vmem:[#allocation8 + $0x1d8] sm:$0xff]
    %v4064 = vld [vmem:[#allocation8 + $0x1e0] sm:$0xff]
    %v4065 = vld [vmem:[#allocation8 + $0x1e8] sm:$0xff]
    %v4066 = vld [vmem:[#allocation8 + $0x1f0] sm:$0xff]
    %v4067 = vld [vmem:[#allocation8 + $0x1f8] sm:$0xff]
    %v4068 = vld [vmem:[#allocation8 + $0x200] sm:$0xff]
    %v4069 = vld [vmem:[#allocation8 + $0x208] sm:$0xff]
    %v4070 = vld [vmem:[#allocation8 + $0x210] sm:$0xff]
    %v4071 = vld [vmem:[#allocation8 + $0x218] sm:$0xff]
    %v4072 = vld [vmem:[#allocation8 + $0x220] sm:$0xff]
    %v4073 = vld [vmem:[#allocation8 + $0x228] sm:$0xff]
    %v4074 = vld [vmem:[#allocation8 + $0x230] sm:$0xff]
    %v4075 = vld [vmem:[#allocation8 + $0x238] sm:$0xff]
    %v4076 = vld [vmem:[#allocation8 + $0x240] sm:$0xff]
    %v4077 = vld [vmem:[#allocation8 + $0x248] sm:$0xff]
    %v4078 = vld [vmem:[#allocation8 + $0x250] sm:$0xff]
    %v4079 = vld [vmem:[#allocation8 + $0x258] sm:$0xff]
    %v4080 = vld [vmem:[#allocation8 + $0x260] sm:$0xff]
    %v4081 = vld [vmem:[#allocation8 + $0x268] sm:$0xff]
    %v4082 = vld [vmem:[#allocation8 + $0x270] sm:$0xff]
    %v4083 = vld [vmem:[#allocation8 + $0x278] sm:$0xff]
    %v4084 = vld [vmem:[#allocation8 + $0x280] sm:$0xff]
    %v4085 = vld [vmem:[#allocation8 + $0x288] sm:$0xff]
    %v4086 = vld [vmem:[#allocation8 + $0x290] sm:$0xff]
    %v4087 = vld [vmem:[#allocation8 + $0x298] sm:$0xff]
    %v4088 = vld [vmem:[#allocation8 + $0x2a0] sm:$0xff]
    %v4089 = vld [vmem:[#allocation8 + $0x2a8] sm:$0xff]
    %v4090 = vld [vmem:[#allocation8 + $0x2b0] sm:$0xff]
    %v4091 = vld [vmem:[#allocation8 + $0x2b8] sm:$0xff]
    %v4092 = vld [vmem:[#allocation8 + $0x2c0] sm:$0xff]
    %v4093 = vld [vmem:[#allocation8 + $0x2c8] sm:$0xff]
    %v4094 = vld [vmem:[#allocation8 + $0x2d0] sm:$0xff]
    %v4095 = vld [vmem:[#allocation8 + $0x2d8] sm:$0xff]
    %v4096 = vld [vmem:[#allocation8 + $0x2e0] sm:$0xff]
    %v4097 = vld [vmem:[#allocation8 + $0x2e8] sm:$0xff]
    %v4098 = vld [vmem:[#allocation8 + $0x2f0] sm:$0xff]
    %v4099 = vld [vmem:[#allocation8 + $0x2f8] sm:$0xff]
    %v4100 = vld [vmem:[#allocation8 + $0x300] sm:$0xff]
    %v4101 = vld [vmem:[#allocation8 + $0x308] sm:$0xff]
    %v4102 = vld [vmem:[#allocation8 + $0x310] sm:$0xff]
    %v4103 = vld [vmem:[#allocation8 + $0x318] sm:$0xff]
    %v4104 = vld [vmem:[#allocation8 + $0x320] sm:$0xff]
    %v4105 = vld [vmem:[#allocation8 + $0x328] sm:$0xff]
    %v4106 = vld [vmem:[#allocation8 + $0x330] sm:$0xff]
    %v4107 = vld [vmem:[#allocation8 + $0x338] sm:$0xff]
    %v4108 = vld [vmem:[#allocation8 + $0x340] sm:$0xff]
    %v4109 = vld [vmem:[#allocation8 + $0x348] sm:$0xff]
    %v4110 = vld [vmem:[#allocation8 + $0x350] sm:$0xff]
    %v4111 = vld [vmem:[#allocation8 + $0x358] sm:$0xff]
    %v4112 = vld [vmem:[#allocation8 + $0x360] sm:$0xff]
    %v4113 = vld [vmem:[#allocation8 + $0x368] sm:$0xff]
    %v4114 = vld [vmem:[#allocation8 + $0x370] sm:$0xff]
    %v4115 = vld [vmem:[#allocation8 + $0x378] sm:$0xff]
    %v4116 = vld [vmem:[#allocation8 + $0x380] sm:$0xff]
    %v4117 = vld [vmem:[#allocation8 + $0x388] sm:$0xff]
    %v4118 = vld [vmem:[#allocation8 + $0x390] sm:$0xff]
    %v4119 = vld [vmem:[#allocation8 + $0x398] sm:$0xff]
    %v4120 = vld [vmem:[#allocation8 + $0x3a0] sm:$0xff]
    %v4121 = vld [vmem:[#allocation8 + $0x3a8] sm:$0xff]
    %v4122 = vld [vmem:[#allocation8 + $0x3b0] sm:$0xff]
    %v4123 = vld [vmem:[#allocation8 + $0x3b8] sm:$0xff]
    %v4124 = vld [vmem:[#allocation8 + $0x3c0] sm:$0xff]
    %v4125 = vld [vmem:[#allocation8 + $0x3c8] sm:$0xff]
    %v4126 = vld [vmem:[#allocation8 + $0x3d0] sm:$0xff]
    %v4127 = vld [vmem:[#allocation8 + $0x3d8] sm:$0xff]
    %v4128 = vld [vmem:[#allocation8 + $0x3e0] sm:$0xff]
    %v4129 = vld [vmem:[#allocation8 + $0x3e8] sm:$0xff]
    %v4130 = vld [vmem:[#allocation8 + $0x3f0] sm:$0xff]
    %v4131 = vld [vmem:[#allocation8 + $0x3f8] sm:$0xff]
    %v4132 = vld [vmem:[#allocation8 + $0x400] sm:$0xff]
    %v4133 = vld [vmem:[#allocation8 + $0x408] sm:$0xff]
    %v4134 = vld [vmem:[#allocation8 + $0x410] sm:$0xff]
    %v4135 = vld [vmem:[#allocation8 + $0x418] sm:$0xff]
    %v4136 = vld [vmem:[#allocation8 + $0x420] sm:$0xff]
    %v4137 = vld [vmem:[#allocation8 + $0x428] sm:$0xff]
    %v4138 = vld [vmem:[#allocation8 + $0x430] sm:$0xff]
    %v4139 = vld [vmem:[#allocation8 + $0x438] sm:$0xff]
    %v4140 = vld [vmem:[#allocation8 + $0x440] sm:$0xff]
    %v4141 = vld [vmem:[#allocation8 + $0x448] sm:$0xff]
    %v4142 = vld [vmem:[#allocation8 + $0x450] sm:$0xff]
    %v4143 = vld [vmem:[#allocation8 + $0x458] sm:$0xff]
    %v4144 = vld [vmem:[#allocation8 + $0x460] sm:$0xff]
    %v4145 = vld [vmem:[#allocation8 + $0x468] sm:$0xff]
    %v4146 = vld [vmem:[#allocation8 + $0x470] sm:$0xff]
    %v4147 = vld [vmem:[#allocation8 + $0x478] sm:$0xff]
    %4148 = vmatpush.msra.mxu0 %v4019
    %4149 = vmatpush.msra.mxu0 %v4018
    %4150 = vmatpush.msra.mxu0 %v4017
    %4151 = vmatpush.msra.mxu0 %v4016
    %4152 = vmatpush.msra.mxu0 %v4015
    %4153 = vmatpush.msra.mxu0 %v4014
    %4154 = vmatpush.msra.mxu0 %v4013
    %4155 = vmatpush.msra.mxu0 %v4012
    %4156 = vmatpush.msra.mxu0 %v4011
    %4157 = vmatpush.msra.mxu0 %v4010
    %4158 = vmatpush.msra.mxu0 %v4009
    %4159 = vmatpush.msra.mxu0 %v4008
    %4160 = vmatpush.msra.mxu0 %v4007
    %4161 = vmatpush.msra.mxu0 %v4006
    %4162 = vmatpush.msra.mxu0 %v4005
    %4163 = vmatpush.msra.mxu0 %v4004
    %4164 = vmatmul.f32.gmra.mxu0 %v3428
    %v4165 = vpop.f32.mrf.mxu0
    %v4166 = vadd.f32 0.0, %v4165
    %4167 = vmatmul.f32.gmra.mxu0 %v3429
    %v4168 = vpop.f32.mrf.mxu0
    %v4169 = vadd.f32 0.0, %v4168
    %4170 = vmatmul.f32.gmra.mxu0 %v3430
    %v4171 = vpop.f32.mrf.mxu0
    %v4172 = vadd.f32 0.0, %v4171
    %4173 = vmatmul.f32.gmra.mxu0 %v3431
    %v4174 = vpop.f32.mrf.mxu0
    %v4175 = vadd.f32 0.0, %v4174
    %4176 = vmatmul.f32.gmra.mxu0 %v3432
    %v4177 = vpop.f32.mrf.mxu0
    %v4178 = vadd.f32 0.0, %v4177
    %4179 = vmatmul.f32.gmra.mxu0 %v3433
    %v4180 = vpop.f32.mrf.mxu0
    %v4181 = vadd.f32 0.0, %v4180
    %4182 = vmatmul.f32.gmra.mxu0 %v3434
    %v4183 = vpop.f32.mrf.mxu0
    %v4184 = vadd.f32 0.0, %v4183
    %4185 = vmatmul.f32.gmra.mxu0 %v3435
    %v4186 = vpop.f32.mrf.mxu0
    %v4187 = vadd.f32 0.0, %v4186
    %4188 = vmatmul.f32.gmra.mxu0 %v3436
    %v4189 = vpop.f32.mrf.mxu0
    %v4190 = vadd.f32 0.0, %v4189
    %4191 = vmatmul.f32.gmra.mxu0 %v3437
    %v4192 = vpop.f32.mrf.mxu0
    %v4193 = vadd.f32 0.0, %v4192
    %4194 = vmatmul.f32.gmra.mxu0 %v3438
    %v4195 = vpop.f32.mrf.mxu0
    %v4196 = vadd.f32 0.0, %v4195
    %4197 = vmatmul.f32.gmra.mxu0 %v3439
    %v4198 = vpop.f32.mrf.mxu0
    %v4199 = vadd.f32 0.0, %v4198
    %4200 = vmatmul.f32.gmra.mxu0 %v3440
    %v4201 = vpop.f32.mrf.mxu0
    %v4202 = vadd.f32 0.0, %v4201
    %4203 = vmatmul.f32.gmra.mxu0 %v3441
    %v4204 = vpop.f32.mrf.mxu0
    %v4205 = vadd.f32 0.0, %v4204
    %4206 = vmatmul.f32.gmra.mxu0 %v3442
    %v4207 = vpop.f32.mrf.mxu0
    %v4208 = vadd.f32 0.0, %v4207
    %4209 = vmatmul.f32.gmra.mxu0 %v3443
    %v4210 = vpop.f32.mrf.mxu0
    %v4211 = vadd.f32 0.0, %v4210
    %4212 = vmatmul.f32.gmra.mxu0 %v3444
    %v4213 = vpop.f32.mrf.mxu0
    %v4214 = vadd.f32 0.0, %v4213
    %4215 = vmatmul.f32.gmra.mxu0 %v3445
    %v4216 = vpop.f32.mrf.mxu0
    %v4217 = vadd.f32 0.0, %v4216
    %4218 = vmatmul.f32.gmra.mxu0 %v3446
    %v4219 = vpop.f32.mrf.mxu0
    %v4220 = vadd.f32 0.0, %v4219
    %4221 = vmatmul.f32.gmra.mxu0 %v3447
    %v4222 = vpop.f32.mrf.mxu0
    %v4223 = vadd.f32 0.0, %v4222
    %4224 = vmatmul.f32.gmra.mxu0 %v3448
    %v4225 = vpop.f32.mrf.mxu0
    %v4226 = vadd.f32 0.0, %v4225
    %4227 = vmatmul.f32.gmra.mxu0 %v3449
    %v4228 = vpop.f32.mrf.mxu0
    %v4229 = vadd.f32 0.0, %v4228
    %4230 = vmatmul.f32.gmra.mxu0 %v3450
    %v4231 = vpop.f32.mrf.mxu0
    %v4232 = vadd.f32 0.0, %v4231
    %4233 = vmatmul.f32.gmra.mxu0 %v3451
    %v4234 = vpop.f32.mrf.mxu0
    %v4235 = vadd.f32 0.0, %v4234
    %4236 = vmatmul.f32.gmra.mxu0 %v3452
    %v4237 = vpop.f32.mrf.mxu0
    %v4238 = vadd.f32 0.0, %v4237
    %4239 = vmatmul.f32.gmra.mxu0 %v3453
    %v4240 = vpop.f32.mrf.mxu0
    %v4241 = vadd.f32 0.0, %v4240
    %4242 = vmatmul.f32.gmra.mxu0 %v3454
    %v4243 = vpop.f32.mrf.mxu0
    %v4244 = vadd.f32 0.0, %v4243
    %4245 = vmatmul.f32.gmra.mxu0 %v3455
    %v4246 = vpop.f32.mrf.mxu0
    %v4247 = vadd.f32 0.0, %v4246
    %4248 = vmatmul.f32.gmra.mxu0 %v3456
    %v4249 = vpop.f32.mrf.mxu0
    %v4250 = vadd.f32 0.0, %v4249
    %4251 = vmatmul.f32.gmra.mxu0 %v3457
    %v4252 = vpop.f32.mrf.mxu0
    %v4253 = vadd.f32 0.0, %v4252
    %4254 = vmatmul.f32.gmra.mxu0 %v3458
    %v4255 = vpop.f32.mrf.mxu0
    %v4256 = vadd.f32 0.0, %v4255
    %4257 = vmatmul.f32.gmra.mxu0 %v3459
    %v4258 = vpop.f32.mrf.mxu0
    %v4259 = vadd.f32 0.0, %v4258
    %4260 = vmatmul.f32.gmra.mxu0 %v3460
    %v4261 = vpop.f32.mrf.mxu0
    %v4262 = vadd.f32 0.0, %v4261
    %4263 = vmatmul.f32.gmra.mxu0 %v3461
    %v4264 = vpop.f32.mrf.mxu0
    %v4265 = vadd.f32 0.0, %v4264
    %4266 = vmatmul.f32.gmra.mxu0 %v3462
    %v4267 = vpop.f32.mrf.mxu0
    %v4268 = vadd.f32 0.0, %v4267
    %4269 = vmatmul.f32.gmra.mxu0 %v3463
    %v4270 = vpop.f32.mrf.mxu0
    %v4271 = vadd.f32 0.0, %v4270
    %4272 = vmatmul.f32.gmra.mxu0 %v3464
    %v4273 = vpop.f32.mrf.mxu0
    %v4274 = vadd.f32 0.0, %v4273
    %4275 = vmatmul.f32.gmra.mxu0 %v3465
    %v4276 = vpop.f32.mrf.mxu0
    %v4277 = vadd.f32 0.0, %v4276
    %4278 = vmatmul.f32.gmra.mxu0 %v3466
    %v4279 = vpop.f32.mrf.mxu0
    %v4280 = vadd.f32 0.0, %v4279
    %4281 = vmatmul.f32.gmra.mxu0 %v3467
    %v4282 = vpop.f32.mrf.mxu0
    %v4283 = vadd.f32 0.0, %v4282
    %4284 = vmatmul.f32.gmra.mxu0 %v3468
    %v4285 = vpop.f32.mrf.mxu0
    %v4286 = vadd.f32 0.0, %v4285
    %4287 = vmatmul.f32.gmra.mxu0 %v3469
    %v4288 = vpop.f32.mrf.mxu0
    %v4289 = vadd.f32 0.0, %v4288
    %4290 = vmatmul.f32.gmra.mxu0 %v3470
    %v4291 = vpop.f32.mrf.mxu0
    %v4292 = vadd.f32 0.0, %v4291
    %4293 = vmatmul.f32.gmra.mxu0 %v3471
    %v4294 = vpop.f32.mrf.mxu0
    %v4295 = vadd.f32 0.0, %v4294
    %4296 = vmatmul.f32.gmra.mxu0 %v3472
    %v4297 = vpop.f32.mrf.mxu0
    %v4298 = vadd.f32 0.0, %v4297
    %4299 = vmatmul.f32.gmra.mxu0 %v3473
    %v4300 = vpop.f32.mrf.mxu0
    %v4301 = vadd.f32 0.0, %v4300
    %4302 = vmatmul.f32.gmra.mxu0 %v3474
    %v4303 = vpop.f32.mrf.mxu0
    %v4304 = vadd.f32 0.0, %v4303
    %4305 = vmatmul.f32.gmra.mxu0 %v3475
    %v4306 = vpop.f32.mrf.mxu0
    %v4307 = vadd.f32 0.0, %v4306
    %4308 = vmatmul.f32.gmra.mxu0 %v3476
    %v4309 = vpop.f32.mrf.mxu0
    %v4310 = vadd.f32 0.0, %v4309
    %4311 = vmatmul.f32.gmra.mxu0 %v3477
    %v4312 = vpop.f32.mrf.mxu0
    %v4313 = vadd.f32 0.0, %v4312
    %4314 = vmatmul.f32.gmra.mxu0 %v3478
    %v4315 = vpop.f32.mrf.mxu0
    %v4316 = vadd.f32 0.0, %v4315
    %4317 = vmatmul.f32.gmra.mxu0 %v3479
    %v4318 = vpop.f32.mrf.mxu0
    %v4319 = vadd.f32 0.0, %v4318
    %4320 = vmatmul.f32.gmra.mxu0 %v3480
    %v4321 = vpop.f32.mrf.mxu0
    %v4322 = vadd.f32 0.0, %v4321
    %4323 = vmatmul.f32.gmra.mxu0 %v3481
    %v4324 = vpop.f32.mrf.mxu0
    %v4325 = vadd.f32 0.0, %v4324
    %4326 = vmatmul.f32.gmra.mxu0 %v3482
    %v4327 = vpop.f32.mrf.mxu0
    %v4328 = vadd.f32 0.0, %v4327
    %4329 = vmatmul.f32.gmra.mxu0 %v3483
    %v4330 = vpop.f32.mrf.mxu0
    %v4331 = vadd.f32 0.0, %v4330
    %4332 = vmatmul.f32.gmra.mxu0 %v3484
    %v4333 = vpop.f32.mrf.mxu0
    %v4334 = vadd.f32 0.0, %v4333
    %4335 = vmatmul.f32.gmra.mxu0 %v3485
    %v4336 = vpop.f32.mrf.mxu0
    %v4337 = vadd.f32 0.0, %v4336
    %4338 = vmatmul.f32.gmra.mxu0 %v3486
    %v4339 = vpop.f32.mrf.mxu0
    %v4340 = vadd.f32 0.0, %v4339
    %4341 = vmatmul.f32.gmra.mxu0 %v3487
    %v4342 = vpop.f32.mrf.mxu0
    %v4343 = vadd.f32 0.0, %v4342
    %4344 = vmatmul.f32.gmra.mxu0 %v3488
    %v4345 = vpop.f32.mrf.mxu0
    %v4346 = vadd.f32 0.0, %v4345
    %4347 = vmatmul.f32.gmra.mxu0 %v3489
    %v4348 = vpop.f32.mrf.mxu0
    %v4349 = vadd.f32 0.0, %v4348
    %4350 = vmatmul.f32.gmra.mxu0 %v3490
    %v4351 = vpop.f32.mrf.mxu0
    %v4352 = vadd.f32 0.0, %v4351
    %4353 = vmatmul.f32.gmra.mxu0 %v3491
    %v4354 = vpop.f32.mrf.mxu0
    %v4355 = vadd.f32 0.0, %v4354
    %4356 = vdwg.mxu0
    %4357 = vmatpush.msra.mxu0 %v4035
    %4358 = vmatpush.msra.mxu0 %v4034
    %4359 = vmatpush.msra.mxu0 %v4033
    %4360 = vmatpush.msra.mxu0 %v4032
    %4361 = vmatpush.msra.mxu0 %v4031
    %4362 = vmatpush.msra.mxu0 %v4030
    %4363 = vmatpush.msra.mxu0 %v4029
    %4364 = vmatpush.msra.mxu0 %v4028
    %4365 = vmatpush.msra.mxu0 %v4027
    %4366 = vmatpush.msra.mxu0 %v4026
    %4367 = vmatpush.msra.mxu0 %v4025
    %4368 = vmatpush.msra.mxu0 %v4024
    %4369 = vmatpush.msra.mxu0 %v4023
    %4370 = vmatpush.msra.mxu0 %v4022
    %4371 = vmatpush.msra.mxu0 %v4021
    %4372 = vmatpush.msra.mxu0 %v4020
    %4373 = vmatmul.f32.gmra.mxu0 %v3492
    %v4374 = vpop.f32.mrf.mxu0
    %v4375 = vadd.f32 %v4166, %v4374
    %4376 = vmatmul.f32.gmra.mxu0 %v3493
    %v4377 = vpop.f32.mrf.mxu0
    %v4378 = vadd.f32 %v4169, %v4377
    %4379 = vmatmul.f32.gmra.mxu0 %v3494
    %v4380 = vpop.f32.mrf.mxu0
    %v4381 = vadd.f32 %v4172, %v4380
    %4382 = vmatmul.f32.gmra.mxu0 %v3495
    %v4383 = vpop.f32.mrf.mxu0
    %v4384 = vadd.f32 %v4175, %v4383
    %4385 = vmatmul.f32.gmra.mxu0 %v3496
    %v4386 = vpop.f32.mrf.mxu0
    %v4387 = vadd.f32 %v4178, %v4386
    %4388 = vmatmul.f32.gmra.mxu0 %v3497
    %v4389 = vpop.f32.mrf.mxu0
    %v4390 = vadd.f32 %v4181, %v4389
    %4391 = vmatmul.f32.gmra.mxu0 %v3498
    %v4392 = vpop.f32.mrf.mxu0
    %v4393 = vadd.f32 %v4184, %v4392
    %4394 = vmatmul.f32.gmra.mxu0 %v3499
    %v4395 = vpop.f32.mrf.mxu0
    %v4396 = vadd.f32 %v4187, %v4395
    %4397 = vmatmul.f32.gmra.mxu0 %v3500
    %v4398 = vpop.f32.mrf.mxu0
    %v4399 = vadd.f32 %v4190, %v4398
    %4400 = vmatmul.f32.gmra.mxu0 %v3501
    %v4401 = vpop.f32.mrf.mxu0
    %v4402 = vadd.f32 %v4193, %v4401
    %4403 = vmatmul.f32.gmra.mxu0 %v3502
    %v4404 = vpop.f32.mrf.mxu0
    %v4405 = vadd.f32 %v4196, %v4404
    %4406 = vmatmul.f32.gmra.mxu0 %v3503
    %v4407 = vpop.f32.mrf.mxu0
    %v4408 = vadd.f32 %v4199, %v4407
    %4409 = vmatmul.f32.gmra.mxu0 %v3504
    %v4410 = vpop.f32.mrf.mxu0
    %v4411 = vadd.f32 %v4202, %v4410
    %4412 = vmatmul.f32.gmra.mxu0 %v3505
    %v4413 = vpop.f32.mrf.mxu0
    %v4414 = vadd.f32 %v4205, %v4413
    %4415 = vmatmul.f32.gmra.mxu0 %v3506
    %v4416 = vpop.f32.mrf.mxu0
    %v4417 = vadd.f32 %v4208, %v4416
    %4418 = vmatmul.f32.gmra.mxu0 %v3507
    %v4419 = vpop.f32.mrf.mxu0
    %v4420 = vadd.f32 %v4211, %v4419
    %4421 = vmatmul.f32.gmra.mxu0 %v3508
    %v4422 = vpop.f32.mrf.mxu0
    %v4423 = vadd.f32 %v4214, %v4422
    %4424 = vmatmul.f32.gmra.mxu0 %v3509
    %v4425 = vpop.f32.mrf.mxu0
    %v4426 = vadd.f32 %v4217, %v4425
    %4427 = vmatmul.f32.gmra.mxu0 %v3510
    %v4428 = vpop.f32.mrf.mxu0
    %v4429 = vadd.f32 %v4220, %v4428
    %4430 = vmatmul.f32.gmra.mxu0 %v3511
    %v4431 = vpop.f32.mrf.mxu0
    %v4432 = vadd.f32 %v4223, %v4431
    %4433 = vmatmul.f32.gmra.mxu0 %v3512
    %v4434 = vpop.f32.mrf.mxu0
    %v4435 = vadd.f32 %v4226, %v4434
    %4436 = vmatmul.f32.gmra.mxu0 %v3513
    %v4437 = vpop.f32.mrf.mxu0
    %v4438 = vadd.f32 %v4229, %v4437
    %4439 = vmatmul.f32.gmra.mxu0 %v3514
    %v4440 = vpop.f32.mrf.mxu0
    %v4441 = vadd.f32 %v4232, %v4440
    %4442 = vmatmul.f32.gmra.mxu0 %v3515
    %v4443 = vpop.f32.mrf.mxu0
    %v4444 = vadd.f32 %v4235, %v4443
    %4445 = vmatmul.f32.gmra.mxu0 %v3516
    %v4446 = vpop.f32.mrf.mxu0
    %v4447 = vadd.f32 %v4238, %v4446
    %4448 = vmatmul.f32.gmra.mxu0 %v3517
    %v4449 = vpop.f32.mrf.mxu0
    %v4450 = vadd.f32 %v4241, %v4449
    %4451 = vmatmul.f32.gmra.mxu0 %v3518
    %v4452 = vpop.f32.mrf.mxu0
    %v4453 = vadd.f32 %v4244, %v4452
    %4454 = vmatmul.f32.gmra.mxu0 %v3519
    %v4455 = vpop.f32.mrf.mxu0
    %v4456 = vadd.f32 %v4247, %v4455
    %4457 = vmatmul.f32.gmra.mxu0 %v3520
    %v4458 = vpop.f32.mrf.mxu0
    %v4459 = vadd.f32 %v4250, %v4458
    %4460 = vmatmul.f32.gmra.mxu0 %v3521
    %v4461 = vpop.f32.mrf.mxu0
    %v4462 = vadd.f32 %v4253, %v4461
    %4463 = vmatmul.f32.gmra.mxu0 %v3522
    %v4464 = vpop.f32.mrf.mxu0
    %v4465 = vadd.f32 %v4256, %v4464
    %4466 = vmatmul.f32.gmra.mxu0 %v3523
    %v4467 = vpop.f32.mrf.mxu0
    %v4468 = vadd.f32 %v4259, %v4467
    %4469 = vmatmul.f32.gmra.mxu0 %v3524
    %v4470 = vpop.f32.mrf.mxu0
    %v4471 = vadd.f32 %v4262, %v4470
    %4472 = vmatmul.f32.gmra.mxu0 %v3525
    %v4473 = vpop.f32.mrf.mxu0
    %v4474 = vadd.f32 %v4265, %v4473
    %4475 = vmatmul.f32.gmra.mxu0 %v3526
    %v4476 = vpop.f32.mrf.mxu0
    %v4477 = vadd.f32 %v4268, %v4476
    %4478 = vmatmul.f32.gmra.mxu0 %v3527
    %v4479 = vpop.f32.mrf.mxu0
    %v4480 = vadd.f32 %v4271, %v4479
    %4481 = vmatmul.f32.gmra.mxu0 %v3528
    %v4482 = vpop.f32.mrf.mxu0
    %v4483 = vadd.f32 %v4274, %v4482
    %4484 = vmatmul.f32.gmra.mxu0 %v3529
    %v4485 = vpop.f32.mrf.mxu0
    %v4486 = vadd.f32 %v4277, %v4485
    %4487 = vmatmul.f32.gmra.mxu0 %v3530
    %v4488 = vpop.f32.mrf.mxu0
    %v4489 = vadd.f32 %v4280, %v4488
    %4490 = vmatmul.f32.gmra.mxu0 %v3531
    %v4491 = vpop.f32.mrf.mxu0
    %v4492 = vadd.f32 %v4283, %v4491
    %4493 = vmatmul.f32.gmra.mxu0 %v3532
    %v4494 = vpop.f32.mrf.mxu0
    %v4495 = vadd.f32 %v4286, %v4494
    %4496 = vmatmul.f32.gmra.mxu0 %v3533
    %v4497 = vpop.f32.mrf.mxu0
    %v4498 = vadd.f32 %v4289, %v4497
    %4499 = vmatmul.f32.gmra.mxu0 %v3534
    %v4500 = vpop.f32.mrf.mxu0
    %v4501 = vadd.f32 %v4292, %v4500
    %4502 = vmatmul.f32.gmra.mxu0 %v3535
    %v4503 = vpop.f32.mrf.mxu0
    %v4504 = vadd.f32 %v4295, %v4503
    %4505 = vmatmul.f32.gmra.mxu0 %v3536
    %v4506 = vpop.f32.mrf.mxu0
    %v4507 = vadd.f32 %v4298, %v4506
    %4508 = vmatmul.f32.gmra.mxu0 %v3537
    %v4509 = vpop.f32.mrf.mxu0
    %v4510 = vadd.f32 %v4301, %v4509
    %4511 = vmatmul.f32.gmra.mxu0 %v3538
    %v4512 = vpop.f32.mrf.mxu0
    %v4513 = vadd.f32 %v4304, %v4512
    %4514 = vmatmul.f32.gmra.mxu0 %v3539
    %v4515 = vpop.f32.mrf.mxu0
    %v4516 = vadd.f32 %v4307, %v4515
    %4517 = vmatmul.f32.gmra.mxu0 %v3540
    %v4518 = vpop.f32.mrf.mxu0
    %v4519 = vadd.f32 %v4310, %v4518
    %4520 = vmatmul.f32.gmra.mxu0 %v3541
    %v4521 = vpop.f32.mrf.mxu0
    %v4522 = vadd.f32 %v4313, %v4521
    %4523 = vmatmul.f32.gmra.mxu0 %v3542
    %v4524 = vpop.f32.mrf.mxu0
    %v4525 = vadd.f32 %v4316, %v4524
    %4526 = vmatmul.f32.gmra.mxu0 %v3543
    %v4527 = vpop.f32.mrf.mxu0
    %v4528 = vadd.f32 %v4319, %v4527
    %4529 = vmatmul.f32.gmra.mxu0 %v3544
    %v4530 = vpop.f32.mrf.mxu0
    %v4531 = vadd.f32 %v4322, %v4530
    %4532 = vmatmul.f32.gmra.mxu0 %v3545
    %v4533 = vpop.f32.mrf.mxu0
    %v4534 = vadd.f32 %v4325, %v4533
    %4535 = vmatmul.f32.gmra.mxu0 %v3546
    %v4536 = vpop.f32.mrf.mxu0
    %v4537 = vadd.f32 %v4328, %v4536
    %4538 = vmatmul.f32.gmra.mxu0 %v3547
    %v4539 = vpop.f32.mrf.mxu0
    %v4540 = vadd.f32 %v4331, %v4539
    %4541 = vmatmul.f32.gmra.mxu0 %v3548
    %v4542 = vpop.f32.mrf.mxu0
    %v4543 = vadd.f32 %v4334, %v4542
    %4544 = vmatmul.f32.gmra.mxu0 %v3549
    %v4545 = vpop.f32.mrf.mxu0
    %v4546 = vadd.f32 %v4337, %v4545
    %4547 = vmatmul.f32.gmra.mxu0 %v3550
    %v4548 = vpop.f32.mrf.mxu0
    %v4549 = vadd.f32 %v4340, %v4548
    %4550 = vmatmul.f32.gmra.mxu0 %v3551
    %v4551 = vpop.f32.mrf.mxu0
    %v4552 = vadd.f32 %v4343, %v4551
    %4553 = vmatmul.f32.gmra.mxu0 %v3552
    %v4554 = vpop.f32.mrf.mxu0
    %v4555 = vadd.f32 %v4346, %v4554
    %4556 = vmatmul.f32.gmra.mxu0 %v3553
    %v4557 = vpop.f32.mrf.mxu0
    %v4558 = vadd.f32 %v4349, %v4557
    %4559 = vmatmul.f32.gmra.mxu0 %v3554
    %v4560 = vpop.f32.mrf.mxu0
    %v4561 = vadd.f32 %v4352, %v4560
    %4562 = vmatmul.f32.gmra.mxu0 %v3555
    %v4563 = vpop.f32.mrf.mxu0
    %v4564 = vadd.f32 %v4355, %v4563
    %4565 = vdwg.mxu0
    %4566 = vmatpush.msra.mxu0 %v4051
    %4567 = vmatpush.msra.mxu0 %v4050
    %4568 = vmatpush.msra.mxu0 %v4049
    %4569 = vmatpush.msra.mxu0 %v4048
    %4570 = vmatpush.msra.mxu0 %v4047
    %4571 = vmatpush.msra.mxu0 %v4046
    %4572 = vmatpush.msra.mxu0 %v4045
    %4573 = vmatpush.msra.mxu0 %v4044
    %4574 = vmatpush.msra.mxu0 %v4043
    %4575 = vmatpush.msra.mxu0 %v4042
    %4576 = vmatpush.msra.mxu0 %v4041
    %4577 = vmatpush.msra.mxu0 %v4040
    %4578 = vmatpush.msra.mxu0 %v4039
    %4579 = vmatpush.msra.mxu0 %v4038
    %4580 = vmatpush.msra.mxu0 %v4037
    %4581 = vmatpush.msra.mxu0 %v4036
    %4582 = vmatmul.f32.gmra.mxu0 %v3556
    %v4583 = vpop.f32.mrf.mxu0
    %v4584 = vadd.f32 %v4375, %v4583
    %4585 = vmatmul.f32.gmra.mxu0 %v3557
    %v4586 = vpop.f32.mrf.mxu0
    %v4587 = vadd.f32 %v4378, %v4586
    %4588 = vmatmul.f32.gmra.mxu0 %v3558
    %v4589 = vpop.f32.mrf.mxu0
    %v4590 = vadd.f32 %v4381, %v4589
    %4591 = vmatmul.f32.gmra.mxu0 %v3559
    %v4592 = vpop.f32.mrf.mxu0
    %v4593 = vadd.f32 %v4384, %v4592
    %4594 = vmatmul.f32.gmra.mxu0 %v3560
    %v4595 = vpop.f32.mrf.mxu0
    %v4596 = vadd.f32 %v4387, %v4595
    %4597 = vmatmul.f32.gmra.mxu0 %v3561
    %v4598 = vpop.f32.mrf.mxu0
    %v4599 = vadd.f32 %v4390, %v4598
    %4600 = vmatmul.f32.gmra.mxu0 %v3562
    %v4601 = vpop.f32.mrf.mxu0
    %v4602 = vadd.f32 %v4393, %v4601
    %4603 = vmatmul.f32.gmra.mxu0 %v3563
    %v4604 = vpop.f32.mrf.mxu0
    %v4605 = vadd.f32 %v4396, %v4604
    %4606 = vmatmul.f32.gmra.mxu0 %v3564
    %v4607 = vpop.f32.mrf.mxu0
    %v4608 = vadd.f32 %v4399, %v4607
    %4609 = vmatmul.f32.gmra.mxu0 %v3565
    %v4610 = vpop.f32.mrf.mxu0
    %v4611 = vadd.f32 %v4402, %v4610
    %4612 = vmatmul.f32.gmra.mxu0 %v3566
    %v4613 = vpop.f32.mrf.mxu0
    %v4614 = vadd.f32 %v4405, %v4613
    %4615 = vmatmul.f32.gmra.mxu0 %v3567
    %v4616 = vpop.f32.mrf.mxu0
    %v4617 = vadd.f32 %v4408, %v4616
    %4618 = vmatmul.f32.gmra.mxu0 %v3568
    %v4619 = vpop.f32.mrf.mxu0
    %v4620 = vadd.f32 %v4411, %v4619
    %4621 = vmatmul.f32.gmra.mxu0 %v3569
    %v4622 = vpop.f32.mrf.mxu0
    %v4623 = vadd.f32 %v4414, %v4622
    %4624 = vmatmul.f32.gmra.mxu0 %v3570
    %v4625 = vpop.f32.mrf.mxu0
    %v4626 = vadd.f32 %v4417, %v4625
    %4627 = vmatmul.f32.gmra.mxu0 %v3571
    %v4628 = vpop.f32.mrf.mxu0
    %v4629 = vadd.f32 %v4420, %v4628
    %4630 = vmatmul.f32.gmra.mxu0 %v3572
    %v4631 = vpop.f32.mrf.mxu0
    %v4632 = vadd.f32 %v4423, %v4631
    %4633 = vmatmul.f32.gmra.mxu0 %v3573
    %v4634 = vpop.f32.mrf.mxu0
    %v4635 = vadd.f32 %v4426, %v4634
    %4636 = vmatmul.f32.gmra.mxu0 %v3574
    %v4637 = vpop.f32.mrf.mxu0
    %v4638 = vadd.f32 %v4429, %v4637
    %4639 = vmatmul.f32.gmra.mxu0 %v3575
    %v4640 = vpop.f32.mrf.mxu0
    %v4641 = vadd.f32 %v4432, %v4640
    %4642 = vmatmul.f32.gmra.mxu0 %v3576
    %v4643 = vpop.f32.mrf.mxu0
    %v4644 = vadd.f32 %v4435, %v4643
    %4645 = vmatmul.f32.gmra.mxu0 %v3577
    %v4646 = vpop.f32.mrf.mxu0
    %v4647 = vadd.f32 %v4438, %v4646
    %4648 = vmatmul.f32.gmra.mxu0 %v3578
    %v4649 = vpop.f32.mrf.mxu0
    %v4650 = vadd.f32 %v4441, %v4649
    %4651 = vmatmul.f32.gmra.mxu0 %v3579
    %v4652 = vpop.f32.mrf.mxu0
    %v4653 = vadd.f32 %v4444, %v4652
    %4654 = vmatmul.f32.gmra.mxu0 %v3580
    %v4655 = vpop.f32.mrf.mxu0
    %v4656 = vadd.f32 %v4447, %v4655
    %4657 = vmatmul.f32.gmra.mxu0 %v3581
    %v4658 = vpop.f32.mrf.mxu0
    %v4659 = vadd.f32 %v4450, %v4658
    %4660 = vmatmul.f32.gmra.mxu0 %v3582
    %v4661 = vpop.f32.mrf.mxu0
    %v4662 = vadd.f32 %v4453, %v4661
    %4663 = vmatmul.f32.gmra.mxu0 %v3583
    %v4664 = vpop.f32.mrf.mxu0
    %v4665 = vadd.f32 %v4456, %v4664
    %4666 = vmatmul.f32.gmra.mxu0 %v3584
    %v4667 = vpop.f32.mrf.mxu0
    %v4668 = vadd.f32 %v4459, %v4667
    %4669 = vmatmul.f32.gmra.mxu0 %v3585
    %v4670 = vpop.f32.mrf.mxu0
    %v4671 = vadd.f32 %v4462, %v4670
    %4672 = vmatmul.f32.gmra.mxu0 %v3586
    %v4673 = vpop.f32.mrf.mxu0
    %v4674 = vadd.f32 %v4465, %v4673
    %4675 = vmatmul.f32.gmra.mxu0 %v3587
    %v4676 = vpop.f32.mrf.mxu0
    %v4677 = vadd.f32 %v4468, %v4676
    %4678 = vmatmul.f32.gmra.mxu0 %v3588
    %v4679 = vpop.f32.mrf.mxu0
    %v4680 = vadd.f32 %v4471, %v4679
    %4681 = vmatmul.f32.gmra.mxu0 %v3589
    %v4682 = vpop.f32.mrf.mxu0
    %v4683 = vadd.f32 %v4474, %v4682
    %4684 = vmatmul.f32.gmra.mxu0 %v3590
    %v4685 = vpop.f32.mrf.mxu0
    %v4686 = vadd.f32 %v4477, %v4685
    %4687 = vmatmul.f32.gmra.mxu0 %v3591
    %v4688 = vpop.f32.mrf.mxu0
    %v4689 = vadd.f32 %v4480, %v4688
    %4690 = vmatmul.f32.gmra.mxu0 %v3592
    %v4691 = vpop.f32.mrf.mxu0
    %v4692 = vadd.f32 %v4483, %v4691
    %4693 = vmatmul.f32.gmra.mxu0 %v3593
    %v4694 = vpop.f32.mrf.mxu0
    %v4695 = vadd.f32 %v4486, %v4694
    %4696 = vmatmul.f32.gmra.mxu0 %v3594
    %v4697 = vpop.f32.mrf.mxu0
    %v4698 = vadd.f32 %v4489, %v4697
    %4699 = vmatmul.f32.gmra.mxu0 %v3595
    %v4700 = vpop.f32.mrf.mxu0
    %v4701 = vadd.f32 %v4492, %v4700
    %4702 = vmatmul.f32.gmra.mxu0 %v3596
    %v4703 = vpop.f32.mrf.mxu0
    %v4704 = vadd.f32 %v4495, %v4703
    %4705 = vmatmul.f32.gmra.mxu0 %v3597
    %v4706 = vpop.f32.mrf.mxu0
    %v4707 = vadd.f32 %v4498, %v4706
    %4708 = vmatmul.f32.gmra.mxu0 %v3598
    %v4709 = vpop.f32.mrf.mxu0
    %v4710 = vadd.f32 %v4501, %v4709
    %4711 = vmatmul.f32.gmra.mxu0 %v3599
    %v4712 = vpop.f32.mrf.mxu0
    %v4713 = vadd.f32 %v4504, %v4712
    %4714 = vmatmul.f32.gmra.mxu0 %v3600
    %v4715 = vpop.f32.mrf.mxu0
    %v4716 = vadd.f32 %v4507, %v4715
    %4717 = vmatmul.f32.gmra.mxu0 %v3601
    %v4718 = vpop.f32.mrf.mxu0
    %v4719 = vadd.f32 %v4510, %v4718
    %4720 = vmatmul.f32.gmra.mxu0 %v3602
    %v4721 = vpop.f32.mrf.mxu0
    %v4722 = vadd.f32 %v4513, %v4721
    %4723 = vmatmul.f32.gmra.mxu0 %v3603
    %v4724 = vpop.f32.mrf.mxu0
    %v4725 = vadd.f32 %v4516, %v4724
    %4726 = vmatmul.f32.gmra.mxu0 %v3604
    %v4727 = vpop.f32.mrf.mxu0
    %v4728 = vadd.f32 %v4519, %v4727
    %4729 = vmatmul.f32.gmra.mxu0 %v3605
    %v4730 = vpop.f32.mrf.mxu0
    %v4731 = vadd.f32 %v4522, %v4730
    %4732 = vmatmul.f32.gmra.mxu0 %v3606
    %v4733 = vpop.f32.mrf.mxu0
    %v4734 = vadd.f32 %v4525, %v4733
    %4735 = vmatmul.f32.gmra.mxu0 %v3607
    %v4736 = vpop.f32.mrf.mxu0
    %v4737 = vadd.f32 %v4528, %v4736
    %4738 = vmatmul.f32.gmra.mxu0 %v3608
    %v4739 = vpop.f32.mrf.mxu0
    %v4740 = vadd.f32 %v4531, %v4739
    %4741 = vmatmul.f32.gmra.mxu0 %v3609
    %v4742 = vpop.f32.mrf.mxu0
    %v4743 = vadd.f32 %v4534, %v4742
    %4744 = vmatmul.f32.gmra.mxu0 %v3610
    %v4745 = vpop.f32.mrf.mxu0
    %v4746 = vadd.f32 %v4537, %v4745
    %4747 = vmatmul.f32.gmra.mxu0 %v3611
    %v4748 = vpop.f32.mrf.mxu0
    %v4749 = vadd.f32 %v4540, %v4748
    %4750 = vmatmul.f32.gmra.mxu0 %v3612
    %v4751 = vpop.f32.mrf.mxu0
    %v4752 = vadd.f32 %v4543, %v4751
    %4753 = vmatmul.f32.gmra.mxu0 %v3613
    %v4754 = vpop.f32.mrf.mxu0
    %v4755 = vadd.f32 %v4546, %v4754
    %4756 = vmatmul.f32.gmra.mxu0 %v3614
    %v4757 = vpop.f32.mrf.mxu0
    %v4758 = vadd.f32 %v4549, %v4757
    %4759 = vmatmul.f32.gmra.mxu0 %v3615
    %v4760 = vpop.f32.mrf.mxu0
    %v4761 = vadd.f32 %v4552, %v4760
    %4762 = vmatmul.f32.gmra.mxu0 %v3616
    %v4763 = vpop.f32.mrf.mxu0
    %v4764 = vadd.f32 %v4555, %v4763
    %4765 = vmatmul.f32.gmra.mxu0 %v3617
    %v4766 = vpop.f32.mrf.mxu0
    %v4767 = vadd.f32 %v4558, %v4766
    %4768 = vmatmul.f32.gmra.mxu0 %v3618
    %v4769 = vpop.f32.mrf.mxu0
    %v4770 = vadd.f32 %v4561, %v4769
    %4771 = vmatmul.f32.gmra.mxu0 %v3619
    %v4772 = vpop.f32.mrf.mxu0
    %v4773 = vadd.f32 %v4564, %v4772
    %4774 = vdwg.mxu0
    %4775 = vmatpush.msra.mxu0 %v4067
    %4776 = vmatpush.msra.mxu0 %v4066
    %4777 = vmatpush.msra.mxu0 %v4065
    %4778 = vmatpush.msra.mxu0 %v4064
    %4779 = vmatpush.msra.mxu0 %v4063
    %4780 = vmatpush.msra.mxu0 %v4062
    %4781 = vmatpush.msra.mxu0 %v4061
    %4782 = vmatpush.msra.mxu0 %v4060
    %4783 = vmatpush.msra.mxu0 %v4059
    %4784 = vmatpush.msra.mxu0 %v4058
    %4785 = vmatpush.msra.mxu0 %v4057
    %4786 = vmatpush.msra.mxu0 %v4056
    %4787 = vmatpush.msra.mxu0 %v4055
    %4788 = vmatpush.msra.mxu0 %v4054
    %4789 = vmatpush.msra.mxu0 %v4053
    %4790 = vmatpush.msra.mxu0 %v4052
    %4791 = vmatmul.f32.gmra.mxu0 %v3620
    %v4792 = vpop.f32.mrf.mxu0
    %v4793 = vadd.f32 %v4584, %v4792
    %4794 = vmatmul.f32.gmra.mxu0 %v3621
    %v4795 = vpop.f32.mrf.mxu0
    %v4796 = vadd.f32 %v4587, %v4795
    %4797 = vmatmul.f32.gmra.mxu0 %v3622
    %v4798 = vpop.f32.mrf.mxu0
    %v4799 = vadd.f32 %v4590, %v4798
    %4800 = vmatmul.f32.gmra.mxu0 %v3623
    %v4801 = vpop.f32.mrf.mxu0
    %v4802 = vadd.f32 %v4593, %v4801
    %4803 = vmatmul.f32.gmra.mxu0 %v3624
    %v4804 = vpop.f32.mrf.mxu0
    %v4805 = vadd.f32 %v4596, %v4804
    %4806 = vmatmul.f32.gmra.mxu0 %v3625
    %v4807 = vpop.f32.mrf.mxu0
    %v4808 = vadd.f32 %v4599, %v4807
    %4809 = vmatmul.f32.gmra.mxu0 %v3626
    %v4810 = vpop.f32.mrf.mxu0
    %v4811 = vadd.f32 %v4602, %v4810
    %4812 = vmatmul.f32.gmra.mxu0 %v3627
    %v4813 = vpop.f32.mrf.mxu0
    %v4814 = vadd.f32 %v4605, %v4813
    %4815 = vmatmul.f32.gmra.mxu0 %v3628
    %v4816 = vpop.f32.mrf.mxu0
    %v4817 = vadd.f32 %v4608, %v4816
    %4818 = vmatmul.f32.gmra.mxu0 %v3629
    %v4819 = vpop.f32.mrf.mxu0
    %v4820 = vadd.f32 %v4611, %v4819
    %4821 = vmatmul.f32.gmra.mxu0 %v3630
    %v4822 = vpop.f32.mrf.mxu0
    %v4823 = vadd.f32 %v4614, %v4822
    %4824 = vmatmul.f32.gmra.mxu0 %v3631
    %v4825 = vpop.f32.mrf.mxu0
    %v4826 = vadd.f32 %v4617, %v4825
    %4827 = vmatmul.f32.gmra.mxu0 %v3632
    %v4828 = vpop.f32.mrf.mxu0
    %v4829 = vadd.f32 %v4620, %v4828
    %4830 = vmatmul.f32.gmra.mxu0 %v3633
    %v4831 = vpop.f32.mrf.mxu0
    %v4832 = vadd.f32 %v4623, %v4831
    %4833 = vmatmul.f32.gmra.mxu0 %v3634
    %v4834 = vpop.f32.mrf.mxu0
    %v4835 = vadd.f32 %v4626, %v4834
    %4836 = vmatmul.f32.gmra.mxu0 %v3635
    %v4837 = vpop.f32.mrf.mxu0
    %v4838 = vadd.f32 %v4629, %v4837
    %4839 = vmatmul.f32.gmra.mxu0 %v3636
    %v4840 = vpop.f32.mrf.mxu0
    %v4841 = vadd.f32 %v4632, %v4840
    %4842 = vmatmul.f32.gmra.mxu0 %v3637
    %v4843 = vpop.f32.mrf.mxu0
    %v4844 = vadd.f32 %v4635, %v4843
    %4845 = vmatmul.f32.gmra.mxu0 %v3638
    %v4846 = vpop.f32.mrf.mxu0
    %v4847 = vadd.f32 %v4638, %v4846
    %4848 = vmatmul.f32.gmra.mxu0 %v3639
    %v4849 = vpop.f32.mrf.mxu0
    %v4850 = vadd.f32 %v4641, %v4849
    %4851 = vmatmul.f32.gmra.mxu0 %v3640
    %v4852 = vpop.f32.mrf.mxu0
    %v4853 = vadd.f32 %v4644, %v4852
    %4854 = vmatmul.f32.gmra.mxu0 %v3641
    %v4855 = vpop.f32.mrf.mxu0
    %v4856 = vadd.f32 %v4647, %v4855
    %4857 = vmatmul.f32.gmra.mxu0 %v3642
    %v4858 = vpop.f32.mrf.mxu0
    %v4859 = vadd.f32 %v4650, %v4858
    %4860 = vmatmul.f32.gmra.mxu0 %v3643
    %v4861 = vpop.f32.mrf.mxu0
    %v4862 = vadd.f32 %v4653, %v4861
    %4863 = vmatmul.f32.gmra.mxu0 %v3644
    %v4864 = vpop.f32.mrf.mxu0
    %v4865 = vadd.f32 %v4656, %v4864
    %4866 = vmatmul.f32.gmra.mxu0 %v3645
    %v4867 = vpop.f32.mrf.mxu0
    %v4868 = vadd.f32 %v4659, %v4867
    %4869 = vmatmul.f32.gmra.mxu0 %v3646
    %v4870 = vpop.f32.mrf.mxu0
    %v4871 = vadd.f32 %v4662, %v4870
    %4872 = vmatmul.f32.gmra.mxu0 %v3647
    %v4873 = vpop.f32.mrf.mxu0
    %v4874 = vadd.f32 %v4665, %v4873
    %4875 = vmatmul.f32.gmra.mxu0 %v3648
    %v4876 = vpop.f32.mrf.mxu0
    %v4877 = vadd.f32 %v4668, %v4876
    %4878 = vmatmul.f32.gmra.mxu0 %v3649
    %v4879 = vpop.f32.mrf.mxu0
    %v4880 = vadd.f32 %v4671, %v4879
    %4881 = vmatmul.f32.gmra.mxu0 %v3650
    %v4882 = vpop.f32.mrf.mxu0
    %v4883 = vadd.f32 %v4674, %v4882
    %4884 = vmatmul.f32.gmra.mxu0 %v3651
    %v4885 = vpop.f32.mrf.mxu0
    %v4886 = vadd.f32 %v4677, %v4885
    %4887 = vmatmul.f32.gmra.mxu0 %v3652
    %v4888 = vpop.f32.mrf.mxu0
    %v4889 = vadd.f32 %v4680, %v4888
    %4890 = vmatmul.f32.gmra.mxu0 %v3653
    %v4891 = vpop.f32.mrf.mxu0
    %v4892 = vadd.f32 %v4683, %v4891
    %4893 = vmatmul.f32.gmra.mxu0 %v3654
    %v4894 = vpop.f32.mrf.mxu0
    %v4895 = vadd.f32 %v4686, %v4894
    %4896 = vmatmul.f32.gmra.mxu0 %v3655
    %v4897 = vpop.f32.mrf.mxu0
    %v4898 = vadd.f32 %v4689, %v4897
    %4899 = vmatmul.f32.gmra.mxu0 %v3656
    %v4900 = vpop.f32.mrf.mxu0
    %v4901 = vadd.f32 %v4692, %v4900
    %4902 = vmatmul.f32.gmra.mxu0 %v3657
    %v4903 = vpop.f32.mrf.mxu0
    %v4904 = vadd.f32 %v4695, %v4903
    %4905 = vmatmul.f32.gmra.mxu0 %v3658
    %v4906 = vpop.f32.mrf.mxu0
    %v4907 = vadd.f32 %v4698, %v4906
    %4908 = vmatmul.f32.gmra.mxu0 %v3659
    %v4909 = vpop.f32.mrf.mxu0
    %v4910 = vadd.f32 %v4701, %v4909
    %4911 = vmatmul.f32.gmra.mxu0 %v3660
    %v4912 = vpop.f32.mrf.mxu0
    %v4913 = vadd.f32 %v4704, %v4912
    %4914 = vmatmul.f32.gmra.mxu0 %v3661
    %v4915 = vpop.f32.mrf.mxu0
    %v4916 = vadd.f32 %v4707, %v4915
    %4917 = vmatmul.f32.gmra.mxu0 %v3662
    %v4918 = vpop.f32.mrf.mxu0
    %v4919 = vadd.f32 %v4710, %v4918
    %4920 = vmatmul.f32.gmra.mxu0 %v3663
    %v4921 = vpop.f32.mrf.mxu0
    %v4922 = vadd.f32 %v4713, %v4921
    %4923 = vmatmul.f32.gmra.mxu0 %v3664
    %v4924 = vpop.f32.mrf.mxu0
    %v4925 = vadd.f32 %v4716, %v4924
    %4926 = vmatmul.f32.gmra.mxu0 %v3665
    %v4927 = vpop.f32.mrf.mxu0
    %v4928 = vadd.f32 %v4719, %v4927
    %4929 = vmatmul.f32.gmra.mxu0 %v3666
    %v4930 = vpop.f32.mrf.mxu0
    %v4931 = vadd.f32 %v4722, %v4930
    %4932 = vmatmul.f32.gmra.mxu0 %v3667
    %v4933 = vpop.f32.mrf.mxu0
    %v4934 = vadd.f32 %v4725, %v4933
    %4935 = vmatmul.f32.gmra.mxu0 %v3668
    %v4936 = vpop.f32.mrf.mxu0
    %v4937 = vadd.f32 %v4728, %v4936
    %4938 = vmatmul.f32.gmra.mxu0 %v3669
    %v4939 = vpop.f32.mrf.mxu0
    %v4940 = vadd.f32 %v4731, %v4939
    %4941 = vmatmul.f32.gmra.mxu0 %v3670
    %v4942 = vpop.f32.mrf.mxu0
    %v4943 = vadd.f32 %v4734, %v4942
    %4944 = vmatmul.f32.gmra.mxu0 %v3671
    %v4945 = vpop.f32.mrf.mxu0
    %v4946 = vadd.f32 %v4737, %v4945
    %4947 = vmatmul.f32.gmra.mxu0 %v3672
    %v4948 = vpop.f32.mrf.mxu0
    %v4949 = vadd.f32 %v4740, %v4948
    %4950 = vmatmul.f32.gmra.mxu0 %v3673
    %v4951 = vpop.f32.mrf.mxu0
    %v4952 = vadd.f32 %v4743, %v4951
    %4953 = vmatmul.f32.gmra.mxu0 %v3674
    %v4954 = vpop.f32.mrf.mxu0
    %v4955 = vadd.f32 %v4746, %v4954
    %4956 = vmatmul.f32.gmra.mxu0 %v3675
    %v4957 = vpop.f32.mrf.mxu0
    %v4958 = vadd.f32 %v4749, %v4957
    %4959 = vmatmul.f32.gmra.mxu0 %v3676
    %v4960 = vpop.f32.mrf.mxu0
    %v4961 = vadd.f32 %v4752, %v4960
    %4962 = vmatmul.f32.gmra.mxu0 %v3677
    %v4963 = vpop.f32.mrf.mxu0
    %v4964 = vadd.f32 %v4755, %v4963
    %4965 = vmatmul.f32.gmra.mxu0 %v3678
    %v4966 = vpop.f32.mrf.mxu0
    %v4967 = vadd.f32 %v4758, %v4966
    %4968 = vmatmul.f32.gmra.mxu0 %v3679
    %v4969 = vpop.f32.mrf.mxu0
    %v4970 = vadd.f32 %v4761, %v4969
    %4971 = vmatmul.f32.gmra.mxu0 %v3680
    %v4972 = vpop.f32.mrf.mxu0
    %v4973 = vadd.f32 %v4764, %v4972
    %4974 = vmatmul.f32.gmra.mxu0 %v3681
    %v4975 = vpop.f32.mrf.mxu0
    %v4976 = vadd.f32 %v4767, %v4975
    %4977 = vmatmul.f32.gmra.mxu0 %v3682
    %v4978 = vpop.f32.mrf.mxu0
    %v4979 = vadd.f32 %v4770, %v4978
    %4980 = vmatmul.f32.gmra.mxu0 %v3683
    %v4981 = vpop.f32.mrf.mxu0
    %v4982 = vadd.f32 %v4773, %v4981
    %4983 = vdwg.mxu0
    %4984 = vmatpush.msra.mxu0 %v4083
    %4985 = vmatpush.msra.mxu0 %v4082
    %4986 = vmatpush.msra.mxu0 %v4081
    %4987 = vmatpush.msra.mxu0 %v4080
    %4988 = vmatpush.msra.mxu0 %v4079
    %4989 = vmatpush.msra.mxu0 %v4078
    %4990 = vmatpush.msra.mxu0 %v4077
    %4991 = vmatpush.msra.mxu0 %v4076
    %4992 = vmatpush.msra.mxu0 %v4075
    %4993 = vmatpush.msra.mxu0 %v4074
    %4994 = vmatpush.msra.mxu0 %v4073
    %4995 = vmatpush.msra.mxu0 %v4072
    %4996 = vmatpush.msra.mxu0 %v4071
    %4997 = vmatpush.msra.mxu0 %v4070
    %4998 = vmatpush.msra.mxu0 %v4069
    %4999 = vmatpush.msra.mxu0 %v4068
    %5000 = vmatmul.f32.gmra.mxu0 %v3684
    %v5001 = vpop.f32.mrf.mxu0
    %v5002 = vadd.f32 %v4793, %v5001
    %5003 = vmatmul.f32.gmra.mxu0 %v3685
    %v5004 = vpop.f32.mrf.mxu0
    %v5005 = vadd.f32 %v4796, %v5004
    %5006 = vmatmul.f32.gmra.mxu0 %v3686
    %v5007 = vpop.f32.mrf.mxu0
    %v5008 = vadd.f32 %v4799, %v5007
    %5009 = vmatmul.f32.gmra.mxu0 %v3687
    %v5010 = vpop.f32.mrf.mxu0
    %v5011 = vadd.f32 %v4802, %v5010
    %5012 = vmatmul.f32.gmra.mxu0 %v3688
    %v5013 = vpop.f32.mrf.mxu0
    %v5014 = vadd.f32 %v4805, %v5013
    %5015 = vmatmul.f32.gmra.mxu0 %v3689
    %v5016 = vpop.f32.mrf.mxu0
    %v5017 = vadd.f32 %v4808, %v5016
    %5018 = vmatmul.f32.gmra.mxu0 %v3690
    %v5019 = vpop.f32.mrf.mxu0
    %v5020 = vadd.f32 %v4811, %v5019
    %5021 = vmatmul.f32.gmra.mxu0 %v3691
    %v5022 = vpop.f32.mrf.mxu0
    %v5023 = vadd.f32 %v4814, %v5022
    %5024 = vmatmul.f32.gmra.mxu0 %v3692
    %v5025 = vpop.f32.mrf.mxu0
    %v5026 = vadd.f32 %v4817, %v5025
    %5027 = vmatmul.f32.gmra.mxu0 %v3693
    %v5028 = vpop.f32.mrf.mxu0
    %v5029 = vadd.f32 %v4820, %v5028
    %5030 = vmatmul.f32.gmra.mxu0 %v3694
    %v5031 = vpop.f32.mrf.mxu0
    %v5032 = vadd.f32 %v4823, %v5031
    %5033 = vmatmul.f32.gmra.mxu0 %v3695
    %v5034 = vpop.f32.mrf.mxu0
    %v5035 = vadd.f32 %v4826, %v5034
    %5036 = vmatmul.f32.gmra.mxu0 %v3696
    %v5037 = vpop.f32.mrf.mxu0
    %v5038 = vadd.f32 %v4829, %v5037
    %5039 = vmatmul.f32.gmra.mxu0 %v3697
    %v5040 = vpop.f32.mrf.mxu0
    %v5041 = vadd.f32 %v4832, %v5040
    %5042 = vmatmul.f32.gmra.mxu0 %v3698
    %v5043 = vpop.f32.mrf.mxu0
    %v5044 = vadd.f32 %v4835, %v5043
    %5045 = vmatmul.f32.gmra.mxu0 %v3699
    %v5046 = vpop.f32.mrf.mxu0
    %v5047 = vadd.f32 %v4838, %v5046
    %5048 = vmatmul.f32.gmra.mxu0 %v3700
    %v5049 = vpop.f32.mrf.mxu0
    %v5050 = vadd.f32 %v4841, %v5049
    %5051 = vmatmul.f32.gmra.mxu0 %v3701
    %v5052 = vpop.f32.mrf.mxu0
    %v5053 = vadd.f32 %v4844, %v5052
    %5054 = vmatmul.f32.gmra.mxu0 %v3702
    %v5055 = vpop.f32.mrf.mxu0
    %v5056 = vadd.f32 %v4847, %v5055
    %5057 = vmatmul.f32.gmra.mxu0 %v3703
    %v5058 = vpop.f32.mrf.mxu0
    %v5059 = vadd.f32 %v4850, %v5058
    %5060 = vmatmul.f32.gmra.mxu0 %v3704
    %v5061 = vpop.f32.mrf.mxu0
    %v5062 = vadd.f32 %v4853, %v5061
    %5063 = vmatmul.f32.gmra.mxu0 %v3705
    %v5064 = vpop.f32.mrf.mxu0
    %v5065 = vadd.f32 %v4856, %v5064
    %5066 = vmatmul.f32.gmra.mxu0 %v3706
    %v5067 = vpop.f32.mrf.mxu0
    %v5068 = vadd.f32 %v4859, %v5067
    %5069 = vmatmul.f32.gmra.mxu0 %v3707
    %v5070 = vpop.f32.mrf.mxu0
    %v5071 = vadd.f32 %v4862, %v5070
    %5072 = vmatmul.f32.gmra.mxu0 %v3708
    %v5073 = vpop.f32.mrf.mxu0
    %v5074 = vadd.f32 %v4865, %v5073
    %5075 = vmatmul.f32.gmra.mxu0 %v3709
    %v5076 = vpop.f32.mrf.mxu0
    %v5077 = vadd.f32 %v4868, %v5076
    %5078 = vmatmul.f32.gmra.mxu0 %v3710
    %v5079 = vpop.f32.mrf.mxu0
    %v5080 = vadd.f32 %v4871, %v5079
    %5081 = vmatmul.f32.gmra.mxu0 %v3711
    %v5082 = vpop.f32.mrf.mxu0
    %v5083 = vadd.f32 %v4874, %v5082
    %5084 = vmatmul.f32.gmra.mxu0 %v3712
    %v5085 = vpop.f32.mrf.mxu0
    %v5086 = vadd.f32 %v4877, %v5085
    %5087 = vmatmul.f32.gmra.mxu0 %v3713
    %v5088 = vpop.f32.mrf.mxu0
    %v5089 = vadd.f32 %v4880, %v5088
    %5090 = vmatmul.f32.gmra.mxu0 %v3714
    %v5091 = vpop.f32.mrf.mxu0
    %v5092 = vadd.f32 %v4883, %v5091
    %5093 = vmatmul.f32.gmra.mxu0 %v3715
    %v5094 = vpop.f32.mrf.mxu0
    %v5095 = vadd.f32 %v4886, %v5094
    %5096 = vmatmul.f32.gmra.mxu0 %v3716
    %v5097 = vpop.f32.mrf.mxu0
    %v5098 = vadd.f32 %v4889, %v5097
    %5099 = vmatmul.f32.gmra.mxu0 %v3717
    %v5100 = vpop.f32.mrf.mxu0
    %v5101 = vadd.f32 %v4892, %v5100
    %5102 = vmatmul.f32.gmra.mxu0 %v3718
    %v5103 = vpop.f32.mrf.mxu0
    %v5104 = vadd.f32 %v4895, %v5103
    %5105 = vmatmul.f32.gmra.mxu0 %v3719
    %v5106 = vpop.f32.mrf.mxu0
    %v5107 = vadd.f32 %v4898, %v5106
    %5108 = vmatmul.f32.gmra.mxu0 %v3720
    %v5109 = vpop.f32.mrf.mxu0
    %v5110 = vadd.f32 %v4901, %v5109
    %5111 = vmatmul.f32.gmra.mxu0 %v3721
    %v5112 = vpop.f32.mrf.mxu0
    %v5113 = vadd.f32 %v4904, %v5112
    %5114 = vmatmul.f32.gmra.mxu0 %v3722
    %v5115 = vpop.f32.mrf.mxu0
    %v5116 = vadd.f32 %v4907, %v5115
    %5117 = vmatmul.f32.gmra.mxu0 %v3723
    %v5118 = vpop.f32.mrf.mxu0
    %v5119 = vadd.f32 %v4910, %v5118
    %5120 = vmatmul.f32.gmra.mxu0 %v3724
    %v5121 = vpop.f32.mrf.mxu0
    %v5122 = vadd.f32 %v4913, %v5121
    %5123 = vmatmul.f32.gmra.mxu0 %v3725
    %v5124 = vpop.f32.mrf.mxu0
    %v5125 = vadd.f32 %v4916, %v5124
    %5126 = vmatmul.f32.gmra.mxu0 %v3726
    %v5127 = vpop.f32.mrf.mxu0
    %v5128 = vadd.f32 %v4919, %v5127
    %5129 = vmatmul.f32.gmra.mxu0 %v3727
    %v5130 = vpop.f32.mrf.mxu0
    %v5131 = vadd.f32 %v4922, %v5130
    %5132 = vmatmul.f32.gmra.mxu0 %v3728
    %v5133 = vpop.f32.mrf.mxu0
    %v5134 = vadd.f32 %v4925, %v5133
    %5135 = vmatmul.f32.gmra.mxu0 %v3729
    %v5136 = vpop.f32.mrf.mxu0
    %v5137 = vadd.f32 %v4928, %v5136
    %5138 = vmatmul.f32.gmra.mxu0 %v3730
    %v5139 = vpop.f32.mrf.mxu0
    %v5140 = vadd.f32 %v4931, %v5139
    %5141 = vmatmul.f32.gmra.mxu0 %v3731
    %v5142 = vpop.f32.mrf.mxu0
    %v5143 = vadd.f32 %v4934, %v5142
    %5144 = vmatmul.f32.gmra.mxu0 %v3732
    %v5145 = vpop.f32.mrf.mxu0
    %v5146 = vadd.f32 %v4937, %v5145
    %5147 = vmatmul.f32.gmra.mxu0 %v3733
    %v5148 = vpop.f32.mrf.mxu0
    %v5149 = vadd.f32 %v4940, %v5148
    %5150 = vmatmul.f32.gmra.mxu0 %v3734
    %v5151 = vpop.f32.mrf.mxu0
    %v5152 = vadd.f32 %v4943, %v5151
    %5153 = vmatmul.f32.gmra.mxu0 %v3735
    %v5154 = vpop.f32.mrf.mxu0
    %v5155 = vadd.f32 %v4946, %v5154
    %5156 = vmatmul.f32.gmra.mxu0 %v3736
    %v5157 = vpop.f32.mrf.mxu0
    %v5158 = vadd.f32 %v4949, %v5157
    %5159 = vmatmul.f32.gmra.mxu0 %v3737
    %v5160 = vpop.f32.mrf.mxu0
    %v5161 = vadd.f32 %v4952, %v5160
    %5162 = vmatmul.f32.gmra.mxu0 %v3738
    %v5163 = vpop.f32.mrf.mxu0
    %v5164 = vadd.f32 %v4955, %v5163
    %5165 = vmatmul.f32.gmra.mxu0 %v3739
    %v5166 = vpop.f32.mrf.mxu0
    %v5167 = vadd.f32 %v4958, %v5166
    %5168 = vmatmul.f32.gmra.mxu0 %v3740
    %v5169 = vpop.f32.mrf.mxu0
    %v5170 = vadd.f32 %v4961, %v5169
    %5171 = vmatmul.f32.gmra.mxu0 %v3741
    %v5172 = vpop.f32.mrf.mxu0
    %v5173 = vadd.f32 %v4964, %v5172
    %5174 = vmatmul.f32.gmra.mxu0 %v3742
    %v5175 = vpop.f32.mrf.mxu0
    %v5176 = vadd.f32 %v4967, %v5175
    %5177 = vmatmul.f32.gmra.mxu0 %v3743
    %v5178 = vpop.f32.mrf.mxu0
    %v5179 = vadd.f32 %v4970, %v5178
    %5180 = vmatmul.f32.gmra.mxu0 %v3744
    %v5181 = vpop.f32.mrf.mxu0
    %v5182 = vadd.f32 %v4973, %v5181
    %5183 = vmatmul.f32.gmra.mxu0 %v3745
    %v5184 = vpop.f32.mrf.mxu0
    %v5185 = vadd.f32 %v4976, %v5184
    %5186 = vmatmul.f32.gmra.mxu0 %v3746
    %v5187 = vpop.f32.mrf.mxu0
    %v5188 = vadd.f32 %v4979, %v5187
    %5189 = vmatmul.f32.gmra.mxu0 %v3747
    %v5190 = vpop.f32.mrf.mxu0
    %v5191 = vadd.f32 %v4982, %v5190
    %5192 = vdwg.mxu0
    %5193 = vmatpush.msra.mxu0 %v4099
    %5194 = vmatpush.msra.mxu0 %v4098
    %5195 = vmatpush.msra.mxu0 %v4097
    %5196 = vmatpush.msra.mxu0 %v4096
    %5197 = vmatpush.msra.mxu0 %v4095
    %5198 = vmatpush.msra.mxu0 %v4094
    %5199 = vmatpush.msra.mxu0 %v4093
    %5200 = vmatpush.msra.mxu0 %v4092
    %5201 = vmatpush.msra.mxu0 %v4091
    %5202 = vmatpush.msra.mxu0 %v4090
    %5203 = vmatpush.msra.mxu0 %v4089
    %5204 = vmatpush.msra.mxu0 %v4088
    %5205 = vmatpush.msra.mxu0 %v4087
    %5206 = vmatpush.msra.mxu0 %v4086
    %5207 = vmatpush.msra.mxu0 %v4085
    %5208 = vmatpush.msra.mxu0 %v4084
    %5209 = vmatmul.f32.gmra.mxu0 %v3748
    %v5210 = vpop.f32.mrf.mxu0
    %v5211 = vadd.f32 %v5002, %v5210
    %5212 = vmatmul.f32.gmra.mxu0 %v3749
    %v5213 = vpop.f32.mrf.mxu0
    %v5214 = vadd.f32 %v5005, %v5213
    %5215 = vmatmul.f32.gmra.mxu0 %v3750
    %v5216 = vpop.f32.mrf.mxu0
    %v5217 = vadd.f32 %v5008, %v5216
    %5218 = vmatmul.f32.gmra.mxu0 %v3751
    %v5219 = vpop.f32.mrf.mxu0
    %v5220 = vadd.f32 %v5011, %v5219
    %5221 = vmatmul.f32.gmra.mxu0 %v3752
    %v5222 = vpop.f32.mrf.mxu0
    %v5223 = vadd.f32 %v5014, %v5222
    %5224 = vmatmul.f32.gmra.mxu0 %v3753
    %v5225 = vpop.f32.mrf.mxu0
    %v5226 = vadd.f32 %v5017, %v5225
    %5227 = vmatmul.f32.gmra.mxu0 %v3754
    %v5228 = vpop.f32.mrf.mxu0
    %v5229 = vadd.f32 %v5020, %v5228
    %5230 = vmatmul.f32.gmra.mxu0 %v3755
    %v5231 = vpop.f32.mrf.mxu0
    %v5232 = vadd.f32 %v5023, %v5231
    %5233 = vmatmul.f32.gmra.mxu0 %v3756
    %v5234 = vpop.f32.mrf.mxu0
    %v5235 = vadd.f32 %v5026, %v5234
    %5236 = vmatmul.f32.gmra.mxu0 %v3757
    %v5237 = vpop.f32.mrf.mxu0
    %v5238 = vadd.f32 %v5029, %v5237
    %5239 = vmatmul.f32.gmra.mxu0 %v3758
    %v5240 = vpop.f32.mrf.mxu0
    %v5241 = vadd.f32 %v5032, %v5240
    %5242 = vmatmul.f32.gmra.mxu0 %v3759
    %v5243 = vpop.f32.mrf.mxu0
    %v5244 = vadd.f32 %v5035, %v5243
    %5245 = vmatmul.f32.gmra.mxu0 %v3760
    %v5246 = vpop.f32.mrf.mxu0
    %v5247 = vadd.f32 %v5038, %v5246
    %5248 = vmatmul.f32.gmra.mxu0 %v3761
    %v5249 = vpop.f32.mrf.mxu0
    %v5250 = vadd.f32 %v5041, %v5249
    %5251 = vmatmul.f32.gmra.mxu0 %v3762
    %v5252 = vpop.f32.mrf.mxu0
    %v5253 = vadd.f32 %v5044, %v5252
    %5254 = vmatmul.f32.gmra.mxu0 %v3763
    %v5255 = vpop.f32.mrf.mxu0
    %v5256 = vadd.f32 %v5047, %v5255
    %5257 = vmatmul.f32.gmra.mxu0 %v3764
    %v5258 = vpop.f32.mrf.mxu0
    %v5259 = vadd.f32 %v5050, %v5258
    %5260 = vmatmul.f32.gmra.mxu0 %v3765
    %v5261 = vpop.f32.mrf.mxu0
    %v5262 = vadd.f32 %v5053, %v5261
    %5263 = vmatmul.f32.gmra.mxu0 %v3766
    %v5264 = vpop.f32.mrf.mxu0
    %v5265 = vadd.f32 %v5056, %v5264
    %5266 = vmatmul.f32.gmra.mxu0 %v3767
    %v5267 = vpop.f32.mrf.mxu0
    %v5268 = vadd.f32 %v5059, %v5267
    %5269 = vmatmul.f32.gmra.mxu0 %v3768
    %v5270 = vpop.f32.mrf.mxu0
    %v5271 = vadd.f32 %v5062, %v5270
    %5272 = vmatmul.f32.gmra.mxu0 %v3769
    %v5273 = vpop.f32.mrf.mxu0
    %v5274 = vadd.f32 %v5065, %v5273
    %5275 = vmatmul.f32.gmra.mxu0 %v3770
    %v5276 = vpop.f32.mrf.mxu0
    %v5277 = vadd.f32 %v5068, %v5276
    %5278 = vmatmul.f32.gmra.mxu0 %v3771
    %v5279 = vpop.f32.mrf.mxu0
    %v5280 = vadd.f32 %v5071, %v5279
    %5281 = vmatmul.f32.gmra.mxu0 %v3772
    %v5282 = vpop.f32.mrf.mxu0
    %v5283 = vadd.f32 %v5074, %v5282
    %5284 = vmatmul.f32.gmra.mxu0 %v3773
    %v5285 = vpop.f32.mrf.mxu0
    %v5286 = vadd.f32 %v5077, %v5285
    %5287 = vmatmul.f32.gmra.mxu0 %v3774
    %v5288 = vpop.f32.mrf.mxu0
    %v5289 = vadd.f32 %v5080, %v5288
    %5290 = vmatmul.f32.gmra.mxu0 %v3775
    %v5291 = vpop.f32.mrf.mxu0
    %v5292 = vadd.f32 %v5083, %v5291
    %5293 = vmatmul.f32.gmra.mxu0 %v3776
    %v5294 = vpop.f32.mrf.mxu0
    %v5295 = vadd.f32 %v5086, %v5294
    %5296 = vmatmul.f32.gmra.mxu0 %v3777
    %v5297 = vpop.f32.mrf.mxu0
    %v5298 = vadd.f32 %v5089, %v5297
    %5299 = vmatmul.f32.gmra.mxu0 %v3778
    %v5300 = vpop.f32.mrf.mxu0
    %v5301 = vadd.f32 %v5092, %v5300
    %5302 = vmatmul.f32.gmra.mxu0 %v3779
    %v5303 = vpop.f32.mrf.mxu0
    %v5304 = vadd.f32 %v5095, %v5303
    %5305 = vmatmul.f32.gmra.mxu0 %v3780
    %v5306 = vpop.f32.mrf.mxu0
    %v5307 = vadd.f32 %v5098, %v5306
    %5308 = vmatmul.f32.gmra.mxu0 %v3781
    %v5309 = vpop.f32.mrf.mxu0
    %v5310 = vadd.f32 %v5101, %v5309
    %5311 = vmatmul.f32.gmra.mxu0 %v3782
    %v5312 = vpop.f32.mrf.mxu0
    %v5313 = vadd.f32 %v5104, %v5312
    %5314 = vmatmul.f32.gmra.mxu0 %v3783
    %v5315 = vpop.f32.mrf.mxu0
    %v5316 = vadd.f32 %v5107, %v5315
    %5317 = vmatmul.f32.gmra.mxu0 %v3784
    %v5318 = vpop.f32.mrf.mxu0
    %v5319 = vadd.f32 %v5110, %v5318
    %5320 = vmatmul.f32.gmra.mxu0 %v3785
    %v5321 = vpop.f32.mrf.mxu0
    %v5322 = vadd.f32 %v5113, %v5321
    %5323 = vmatmul.f32.gmra.mxu0 %v3786
    %v5324 = vpop.f32.mrf.mxu0
    %v5325 = vadd.f32 %v5116, %v5324
    %5326 = vmatmul.f32.gmra.mxu0 %v3787
    %v5327 = vpop.f32.mrf.mxu0
    %v5328 = vadd.f32 %v5119, %v5327
    %5329 = vmatmul.f32.gmra.mxu0 %v3788
    %v5330 = vpop.f32.mrf.mxu0
    %v5331 = vadd.f32 %v5122, %v5330
    %5332 = vmatmul.f32.gmra.mxu0 %v3789
    %v5333 = vpop.f32.mrf.mxu0
    %v5334 = vadd.f32 %v5125, %v5333
    %5335 = vmatmul.f32.gmra.mxu0 %v3790
    %v5336 = vpop.f32.mrf.mxu0
    %v5337 = vadd.f32 %v5128, %v5336
    %5338 = vmatmul.f32.gmra.mxu0 %v3791
    %v5339 = vpop.f32.mrf.mxu0
    %v5340 = vadd.f32 %v5131, %v5339
    %5341 = vmatmul.f32.gmra.mxu0 %v3792
    %v5342 = vpop.f32.mrf.mxu0
    %v5343 = vadd.f32 %v5134, %v5342
    %5344 = vmatmul.f32.gmra.mxu0 %v3793
    %v5345 = vpop.f32.mrf.mxu0
    %v5346 = vadd.f32 %v5137, %v5345
    %5347 = vmatmul.f32.gmra.mxu0 %v3794
    %v5348 = vpop.f32.mrf.mxu0
    %v5349 = vadd.f32 %v5140, %v5348
    %5350 = vmatmul.f32.gmra.mxu0 %v3795
    %v5351 = vpop.f32.mrf.mxu0
    %v5352 = vadd.f32 %v5143, %v5351
    %5353 = vmatmul.f32.gmra.mxu0 %v3796
    %v5354 = vpop.f32.mrf.mxu0
    %v5355 = vadd.f32 %v5146, %v5354
    %5356 = vmatmul.f32.gmra.mxu0 %v3797
    %v5357 = vpop.f32.mrf.mxu0
    %v5358 = vadd.f32 %v5149, %v5357
    %5359 = vmatmul.f32.gmra.mxu0 %v3798
    %v5360 = vpop.f32.mrf.mxu0
    %v5361 = vadd.f32 %v5152, %v5360
    %5362 = vmatmul.f32.gmra.mxu0 %v3799
    %v5363 = vpop.f32.mrf.mxu0
    %v5364 = vadd.f32 %v5155, %v5363
    %5365 = vmatmul.f32.gmra.mxu0 %v3800
    %v5366 = vpop.f32.mrf.mxu0
    %v5367 = vadd.f32 %v5158, %v5366
    %5368 = vmatmul.f32.gmra.mxu0 %v3801
    %v5369 = vpop.f32.mrf.mxu0
    %v5370 = vadd.f32 %v5161, %v5369
    %5371 = vmatmul.f32.gmra.mxu0 %v3802
    %v5372 = vpop.f32.mrf.mxu0
    %v5373 = vadd.f32 %v5164, %v5372
    %5374 = vmatmul.f32.gmra.mxu0 %v3803
    %v5375 = vpop.f32.mrf.mxu0
    %v5376 = vadd.f32 %v5167, %v5375
    %5377 = vmatmul.f32.gmra.mxu0 %v3804
    %v5378 = vpop.f32.mrf.mxu0
    %v5379 = vadd.f32 %v5170, %v5378
    %5380 = vmatmul.f32.gmra.mxu0 %v3805
    %v5381 = vpop.f32.mrf.mxu0
    %v5382 = vadd.f32 %v5173, %v5381
    %5383 = vmatmul.f32.gmra.mxu0 %v3806
    %v5384 = vpop.f32.mrf.mxu0
    %v5385 = vadd.f32 %v5176, %v5384
    %5386 = vmatmul.f32.gmra.mxu0 %v3807
    %v5387 = vpop.f32.mrf.mxu0
    %v5388 = vadd.f32 %v5179, %v5387
    %5389 = vmatmul.f32.gmra.mxu0 %v3808
    %v5390 = vpop.f32.mrf.mxu0
    %v5391 = vadd.f32 %v5182, %v5390
    %5392 = vmatmul.f32.gmra.mxu0 %v3809
    %v5393 = vpop.f32.mrf.mxu0
    %v5394 = vadd.f32 %v5185, %v5393
    %5395 = vmatmul.f32.gmra.mxu0 %v3810
    %v5396 = vpop.f32.mrf.mxu0
    %v5397 = vadd.f32 %v5188, %v5396
    %5398 = vmatmul.f32.gmra.mxu0 %v3811
    %v5399 = vpop.f32.mrf.mxu0
    %v5400 = vadd.f32 %v5191, %v5399
    %5401 = vdwg.mxu0
    %5402 = vmatpush.msra.mxu0 %v4115
    %5403 = vmatpush.msra.mxu0 %v4114
    %5404 = vmatpush.msra.mxu0 %v4113
    %5405 = vmatpush.msra.mxu0 %v4112
    %5406 = vmatpush.msra.mxu0 %v4111
    %5407 = vmatpush.msra.mxu0 %v4110
    %5408 = vmatpush.msra.mxu0 %v4109
    %5409 = vmatpush.msra.mxu0 %v4108
    %5410 = vmatpush.msra.mxu0 %v4107
    %5411 = vmatpush.msra.mxu0 %v4106
    %5412 = vmatpush.msra.mxu0 %v4105
    %5413 = vmatpush.msra.mxu0 %v4104
    %5414 = vmatpush.msra.mxu0 %v4103
    %5415 = vmatpush.msra.mxu0 %v4102
    %5416 = vmatpush.msra.mxu0 %v4101
    %5417 = vmatpush.msra.mxu0 %v4100
    %5418 = vmatmul.f32.gmra.mxu0 %v3812
    %v5419 = vpop.f32.mrf.mxu0
    %v5420 = vadd.f32 %v5211, %v5419
    %5421 = vmatmul.f32.gmra.mxu0 %v3813
    %v5422 = vpop.f32.mrf.mxu0
    %v5423 = vadd.f32 %v5214, %v5422
    %5424 = vmatmul.f32.gmra.mxu0 %v3814
    %v5425 = vpop.f32.mrf.mxu0
    %v5426 = vadd.f32 %v5217, %v5425
    %5427 = vmatmul.f32.gmra.mxu0 %v3815
    %v5428 = vpop.f32.mrf.mxu0
    %v5429 = vadd.f32 %v5220, %v5428
    %5430 = vmatmul.f32.gmra.mxu0 %v3816
    %v5431 = vpop.f32.mrf.mxu0
    %v5432 = vadd.f32 %v5223, %v5431
    %5433 = vmatmul.f32.gmra.mxu0 %v3817
    %v5434 = vpop.f32.mrf.mxu0
    %v5435 = vadd.f32 %v5226, %v5434
    %5436 = vmatmul.f32.gmra.mxu0 %v3818
    %v5437 = vpop.f32.mrf.mxu0
    %v5438 = vadd.f32 %v5229, %v5437
    %5439 = vmatmul.f32.gmra.mxu0 %v3819
    %v5440 = vpop.f32.mrf.mxu0
    %v5441 = vadd.f32 %v5232, %v5440
    %5442 = vmatmul.f32.gmra.mxu0 %v3820
    %v5443 = vpop.f32.mrf.mxu0
    %v5444 = vadd.f32 %v5235, %v5443
    %5445 = vmatmul.f32.gmra.mxu0 %v3821
    %v5446 = vpop.f32.mrf.mxu0
    %v5447 = vadd.f32 %v5238, %v5446
    %5448 = vmatmul.f32.gmra.mxu0 %v3822
    %v5449 = vpop.f32.mrf.mxu0
    %v5450 = vadd.f32 %v5241, %v5449
    %5451 = vmatmul.f32.gmra.mxu0 %v3823
    %v5452 = vpop.f32.mrf.mxu0
    %v5453 = vadd.f32 %v5244, %v5452
    %5454 = vmatmul.f32.gmra.mxu0 %v3824
    %v5455 = vpop.f32.mrf.mxu0
    %v5456 = vadd.f32 %v5247, %v5455
    %5457 = vmatmul.f32.gmra.mxu0 %v3825
    %v5458 = vpop.f32.mrf.mxu0
    %v5459 = vadd.f32 %v5250, %v5458
    %5460 = vmatmul.f32.gmra.mxu0 %v3826
    %v5461 = vpop.f32.mrf.mxu0
    %v5462 = vadd.f32 %v5253, %v5461
    %5463 = vmatmul.f32.gmra.mxu0 %v3827
    %v5464 = vpop.f32.mrf.mxu0
    %v5465 = vadd.f32 %v5256, %v5464
    %5466 = vmatmul.f32.gmra.mxu0 %v3828
    %v5467 = vpop.f32.mrf.mxu0
    %v5468 = vadd.f32 %v5259, %v5467
    %5469 = vmatmul.f32.gmra.mxu0 %v3829
    %v5470 = vpop.f32.mrf.mxu0
    %v5471 = vadd.f32 %v5262, %v5470
    %5472 = vmatmul.f32.gmra.mxu0 %v3830
    %v5473 = vpop.f32.mrf.mxu0
    %v5474 = vadd.f32 %v5265, %v5473
    %5475 = vmatmul.f32.gmra.mxu0 %v3831
    %v5476 = vpop.f32.mrf.mxu0
    %v5477 = vadd.f32 %v5268, %v5476
    %5478 = vmatmul.f32.gmra.mxu0 %v3832
    %v5479 = vpop.f32.mrf.mxu0
    %v5480 = vadd.f32 %v5271, %v5479
    %5481 = vmatmul.f32.gmra.mxu0 %v3833
    %v5482 = vpop.f32.mrf.mxu0
    %v5483 = vadd.f32 %v5274, %v5482
    %5484 = vmatmul.f32.gmra.mxu0 %v3834
    %v5485 = vpop.f32.mrf.mxu0
    %v5486 = vadd.f32 %v5277, %v5485
    %5487 = vmatmul.f32.gmra.mxu0 %v3835
    %v5488 = vpop.f32.mrf.mxu0
    %v5489 = vadd.f32 %v5280, %v5488
    %5490 = vmatmul.f32.gmra.mxu0 %v3836
    %v5491 = vpop.f32.mrf.mxu0
    %v5492 = vadd.f32 %v5283, %v5491
    %5493 = vmatmul.f32.gmra.mxu0 %v3837
    %v5494 = vpop.f32.mrf.mxu0
    %v5495 = vadd.f32 %v5286, %v5494
    %5496 = vmatmul.f32.gmra.mxu0 %v3838
    %v5497 = vpop.f32.mrf.mxu0
    %v5498 = vadd.f32 %v5289, %v5497
    %5499 = vmatmul.f32.gmra.mxu0 %v3839
    %v5500 = vpop.f32.mrf.mxu0
    %v5501 = vadd.f32 %v5292, %v5500
    %5502 = vmatmul.f32.gmra.mxu0 %v3840
    %v5503 = vpop.f32.mrf.mxu0
    %v5504 = vadd.f32 %v5295, %v5503
    %5505 = vmatmul.f32.gmra.mxu0 %v3841
    %v5506 = vpop.f32.mrf.mxu0
    %v5507 = vadd.f32 %v5298, %v5506
    %5508 = vmatmul.f32.gmra.mxu0 %v3842
    %v5509 = vpop.f32.mrf.mxu0
    %v5510 = vadd.f32 %v5301, %v5509
    %5511 = vmatmul.f32.gmra.mxu0 %v3843
    %v5512 = vpop.f32.mrf.mxu0
    %v5513 = vadd.f32 %v5304, %v5512
    %5514 = vmatmul.f32.gmra.mxu0 %v3844
    %v5515 = vpop.f32.mrf.mxu0
    %v5516 = vadd.f32 %v5307, %v5515
    %5517 = vmatmul.f32.gmra.mxu0 %v3845
    %v5518 = vpop.f32.mrf.mxu0
    %v5519 = vadd.f32 %v5310, %v5518
    %5520 = vmatmul.f32.gmra.mxu0 %v3846
    %v5521 = vpop.f32.mrf.mxu0
    %v5522 = vadd.f32 %v5313, %v5521
    %5523 = vmatmul.f32.gmra.mxu0 %v3847
    %v5524 = vpop.f32.mrf.mxu0
    %v5525 = vadd.f32 %v5316, %v5524
    %5526 = vmatmul.f32.gmra.mxu0 %v3848
    %v5527 = vpop.f32.mrf.mxu0
    %v5528 = vadd.f32 %v5319, %v5527
    %5529 = vmatmul.f32.gmra.mxu0 %v3849
    %v5530 = vpop.f32.mrf.mxu0
    %v5531 = vadd.f32 %v5322, %v5530
    %5532 = vmatmul.f32.gmra.mxu0 %v3850
    %v5533 = vpop.f32.mrf.mxu0
    %v5534 = vadd.f32 %v5325, %v5533
    %5535 = vmatmul.f32.gmra.mxu0 %v3851
    %v5536 = vpop.f32.mrf.mxu0
    %v5537 = vadd.f32 %v5328, %v5536
    %5538 = vmatmul.f32.gmra.mxu0 %v3852
    %v5539 = vpop.f32.mrf.mxu0
    %v5540 = vadd.f32 %v5331, %v5539
    %5541 = vmatmul.f32.gmra.mxu0 %v3853
    %v5542 = vpop.f32.mrf.mxu0
    %v5543 = vadd.f32 %v5334, %v5542
    %5544 = vmatmul.f32.gmra.mxu0 %v3854
    %v5545 = vpop.f32.mrf.mxu0
    %v5546 = vadd.f32 %v5337, %v5545
    %5547 = vmatmul.f32.gmra.mxu0 %v3855
    %v5548 = vpop.f32.mrf.mxu0
    %v5549 = vadd.f32 %v5340, %v5548
    %5550 = vmatmul.f32.gmra.mxu0 %v3856
    %v5551 = vpop.f32.mrf.mxu0
    %v5552 = vadd.f32 %v5343, %v5551
    %5553 = vmatmul.f32.gmra.mxu0 %v3857
    %v5554 = vpop.f32.mrf.mxu0
    %v5555 = vadd.f32 %v5346, %v5554
    %5556 = vmatmul.f32.gmra.mxu0 %v3858
    %v5557 = vpop.f32.mrf.mxu0
    %v5558 = vadd.f32 %v5349, %v5557
    %5559 = vmatmul.f32.gmra.mxu0 %v3859
    %v5560 = vpop.f32.mrf.mxu0
    %v5561 = vadd.f32 %v5352, %v5560
    %5562 = vmatmul.f32.gmra.mxu0 %v3860
    %v5563 = vpop.f32.mrf.mxu0
    %v5564 = vadd.f32 %v5355, %v5563
    %5565 = vmatmul.f32.gmra.mxu0 %v3861
    %v5566 = vpop.f32.mrf.mxu0
    %v5567 = vadd.f32 %v5358, %v5566
    %5568 = vmatmul.f32.gmra.mxu0 %v3862
    %v5569 = vpop.f32.mrf.mxu0
    %v5570 = vadd.f32 %v5361, %v5569
    %5571 = vmatmul.f32.gmra.mxu0 %v3863
    %v5572 = vpop.f32.mrf.mxu0
    %v5573 = vadd.f32 %v5364, %v5572
    %5574 = vmatmul.f32.gmra.mxu0 %v3864
    %v5575 = vpop.f32.mrf.mxu0
    %v5576 = vadd.f32 %v5367, %v5575
    %5577 = vmatmul.f32.gmra.mxu0 %v3865
    %v5578 = vpop.f32.mrf.mxu0
    %v5579 = vadd.f32 %v5370, %v5578
    %5580 = vmatmul.f32.gmra.mxu0 %v3866
    %v5581 = vpop.f32.mrf.mxu0
    %v5582 = vadd.f32 %v5373, %v5581
    %5583 = vmatmul.f32.gmra.mxu0 %v3867
    %v5584 = vpop.f32.mrf.mxu0
    %v5585 = vadd.f32 %v5376, %v5584
    %5586 = vmatmul.f32.gmra.mxu0 %v3868
    %v5587 = vpop.f32.mrf.mxu0
    %v5588 = vadd.f32 %v5379, %v5587
    %5589 = vmatmul.f32.gmra.mxu0 %v3869
    %v5590 = vpop.f32.mrf.mxu0
    %v5591 = vadd.f32 %v5382, %v5590
    %5592 = vmatmul.f32.gmra.mxu0 %v3870
    %v5593 = vpop.f32.mrf.mxu0
    %v5594 = vadd.f32 %v5385, %v5593
    %5595 = vmatmul.f32.gmra.mxu0 %v3871
    %v5596 = vpop.f32.mrf.mxu0
    %v5597 = vadd.f32 %v5388, %v5596
    %5598 = vmatmul.f32.gmra.mxu0 %v3872
    %v5599 = vpop.f32.mrf.mxu0
    %v5600 = vadd.f32 %v5391, %v5599
    %5601 = vmatmul.f32.gmra.mxu0 %v3873
    %v5602 = vpop.f32.mrf.mxu0
    %v5603 = vadd.f32 %v5394, %v5602
    %5604 = vmatmul.f32.gmra.mxu0 %v3874
    %v5605 = vpop.f32.mrf.mxu0
    %v5606 = vadd.f32 %v5397, %v5605
    %5607 = vmatmul.f32.gmra.mxu0 %v3875
    %v5608 = vpop.f32.mrf.mxu0
    %v5609 = vadd.f32 %v5400, %v5608
    %5610 = vdwg.mxu0
    %5611 = vmatpush.msra.mxu0 %v4131
    %5612 = vmatpush.msra.mxu0 %v4130
    %5613 = vmatpush.msra.mxu0 %v4129
    %5614 = vmatpush.msra.mxu0 %v4128
    %5615 = vmatpush.msra.mxu0 %v4127
    %5616 = vmatpush.msra.mxu0 %v4126
    %5617 = vmatpush.msra.mxu0 %v4125
    %5618 = vmatpush.msra.mxu0 %v4124
    %5619 = vmatpush.msra.mxu0 %v4123
    %5620 = vmatpush.msra.mxu0 %v4122
    %5621 = vmatpush.msra.mxu0 %v4121
    %5622 = vmatpush.msra.mxu0 %v4120
    %5623 = vmatpush.msra.mxu0 %v4119
    %5624 = vmatpush.msra.mxu0 %v4118
    %5625 = vmatpush.msra.mxu0 %v4117
    %5626 = vmatpush.msra.mxu0 %v4116
    %5627 = vmatmul.f32.gmra.mxu0 %v3876
    %v5628 = vpop.f32.mrf.mxu0
    %v5629 = vadd.f32 %v5420, %v5628
    %5630 = vmatmul.f32.gmra.mxu0 %v3877
    %v5631 = vpop.f32.mrf.mxu0
    %v5632 = vadd.f32 %v5423, %v5631
    %5633 = vmatmul.f32.gmra.mxu0 %v3878
    %v5634 = vpop.f32.mrf.mxu0
    %v5635 = vadd.f32 %v5426, %v5634
    %5636 = vmatmul.f32.gmra.mxu0 %v3879
    %v5637 = vpop.f32.mrf.mxu0
    %v5638 = vadd.f32 %v5429, %v5637
    %5639 = vmatmul.f32.gmra.mxu0 %v3880
    %v5640 = vpop.f32.mrf.mxu0
    %v5641 = vadd.f32 %v5432, %v5640
    %5642 = vmatmul.f32.gmra.mxu0 %v3881
    %v5643 = vpop.f32.mrf.mxu0
    %v5644 = vadd.f32 %v5435, %v5643
    %5645 = vmatmul.f32.gmra.mxu0 %v3882
    %v5646 = vpop.f32.mrf.mxu0
    %v5647 = vadd.f32 %v5438, %v5646
    %5648 = vmatmul.f32.gmra.mxu0 %v3883
    %v5649 = vpop.f32.mrf.mxu0
    %v5650 = vadd.f32 %v5441, %v5649
    %5651 = vmatmul.f32.gmra.mxu0 %v3884
    %v5652 = vpop.f32.mrf.mxu0
    %v5653 = vadd.f32 %v5444, %v5652
    %5654 = vmatmul.f32.gmra.mxu0 %v3885
    %v5655 = vpop.f32.mrf.mxu0
    %v5656 = vadd.f32 %v5447, %v5655
    %5657 = vmatmul.f32.gmra.mxu0 %v3886
    %v5658 = vpop.f32.mrf.mxu0
    %v5659 = vadd.f32 %v5450, %v5658
    %5660 = vmatmul.f32.gmra.mxu0 %v3887
    %v5661 = vpop.f32.mrf.mxu0
    %v5662 = vadd.f32 %v5453, %v5661
    %5663 = vmatmul.f32.gmra.mxu0 %v3888
    %v5664 = vpop.f32.mrf.mxu0
    %v5665 = vadd.f32 %v5456, %v5664
    %5666 = vmatmul.f32.gmra.mxu0 %v3889
    %v5667 = vpop.f32.mrf.mxu0
    %v5668 = vadd.f32 %v5459, %v5667
    %5669 = vmatmul.f32.gmra.mxu0 %v3890
    %v5670 = vpop.f32.mrf.mxu0
    %v5671 = vadd.f32 %v5462, %v5670
    %5672 = vmatmul.f32.gmra.mxu0 %v3891
    %v5673 = vpop.f32.mrf.mxu0
    %v5674 = vadd.f32 %v5465, %v5673
    %5675 = vmatmul.f32.gmra.mxu0 %v3892
    %v5676 = vpop.f32.mrf.mxu0
    %v5677 = vadd.f32 %v5468, %v5676
    %5678 = vmatmul.f32.gmra.mxu0 %v3893
    %v5679 = vpop.f32.mrf.mxu0
    %v5680 = vadd.f32 %v5471, %v5679
    %5681 = vmatmul.f32.gmra.mxu0 %v3894
    %v5682 = vpop.f32.mrf.mxu0
    %v5683 = vadd.f32 %v5474, %v5682
    %5684 = vmatmul.f32.gmra.mxu0 %v3895
    %v5685 = vpop.f32.mrf.mxu0
    %v5686 = vadd.f32 %v5477, %v5685
    %5687 = vmatmul.f32.gmra.mxu0 %v3896
    %v5688 = vpop.f32.mrf.mxu0
    %v5689 = vadd.f32 %v5480, %v5688
    %5690 = vmatmul.f32.gmra.mxu0 %v3897
    %v5691 = vpop.f32.mrf.mxu0
    %v5692 = vadd.f32 %v5483, %v5691
    %5693 = vmatmul.f32.gmra.mxu0 %v3898
    %v5694 = vpop.f32.mrf.mxu0
    %v5695 = vadd.f32 %v5486, %v5694
    %5696 = vmatmul.f32.gmra.mxu0 %v3899
    %v5697 = vpop.f32.mrf.mxu0
    %v5698 = vadd.f32 %v5489, %v5697
    %5699 = vmatmul.f32.gmra.mxu0 %v3900
    %v5700 = vpop.f32.mrf.mxu0
    %v5701 = vadd.f32 %v5492, %v5700
    %5702 = vmatmul.f32.gmra.mxu0 %v3901
    %v5703 = vpop.f32.mrf.mxu0
    %v5704 = vadd.f32 %v5495, %v5703
    %5705 = vmatmul.f32.gmra.mxu0 %v3902
    %v5706 = vpop.f32.mrf.mxu0
    %v5707 = vadd.f32 %v5498, %v5706
    %5708 = vmatmul.f32.gmra.mxu0 %v3903
    %v5709 = vpop.f32.mrf.mxu0
    %v5710 = vadd.f32 %v5501, %v5709
    %5711 = vmatmul.f32.gmra.mxu0 %v3904
    %v5712 = vpop.f32.mrf.mxu0
    %v5713 = vadd.f32 %v5504, %v5712
    %5714 = vmatmul.f32.gmra.mxu0 %v3905
    %v5715 = vpop.f32.mrf.mxu0
    %v5716 = vadd.f32 %v5507, %v5715
    %5717 = vmatmul.f32.gmra.mxu0 %v3906
    %v5718 = vpop.f32.mrf.mxu0
    %v5719 = vadd.f32 %v5510, %v5718
    %5720 = vmatmul.f32.gmra.mxu0 %v3907
    %v5721 = vpop.f32.mrf.mxu0
    %v5722 = vadd.f32 %v5513, %v5721
    %5723 = vmatmul.f32.gmra.mxu0 %v3908
    %v5724 = vpop.f32.mrf.mxu0
    %v5725 = vadd.f32 %v5516, %v5724
    %5726 = vmatmul.f32.gmra.mxu0 %v3909
    %v5727 = vpop.f32.mrf.mxu0
    %v5728 = vadd.f32 %v5519, %v5727
    %5729 = vmatmul.f32.gmra.mxu0 %v3910
    %v5730 = vpop.f32.mrf.mxu0
    %v5731 = vadd.f32 %v5522, %v5730
    %5732 = vmatmul.f32.gmra.mxu0 %v3911
    %v5733 = vpop.f32.mrf.mxu0
    %v5734 = vadd.f32 %v5525, %v5733
    %5735 = vmatmul.f32.gmra.mxu0 %v3912
    %v5736 = vpop.f32.mrf.mxu0
    %v5737 = vadd.f32 %v5528, %v5736
    %5738 = vmatmul.f32.gmra.mxu0 %v3913
    %v5739 = vpop.f32.mrf.mxu0
    %v5740 = vadd.f32 %v5531, %v5739
    %5741 = vmatmul.f32.gmra.mxu0 %v3914
    %v5742 = vpop.f32.mrf.mxu0
    %v5743 = vadd.f32 %v5534, %v5742
    %5744 = vmatmul.f32.gmra.mxu0 %v3915
    %v5745 = vpop.f32.mrf.mxu0
    %v5746 = vadd.f32 %v5537, %v5745
    %5747 = vmatmul.f32.gmra.mxu0 %v3916
    %v5748 = vpop.f32.mrf.mxu0
    %v5749 = vadd.f32 %v5540, %v5748
    %5750 = vmatmul.f32.gmra.mxu0 %v3917
    %v5751 = vpop.f32.mrf.mxu0
    %v5752 = vadd.f32 %v5543, %v5751
    %5753 = vmatmul.f32.gmra.mxu0 %v3918
    %v5754 = vpop.f32.mrf.mxu0
    %v5755 = vadd.f32 %v5546, %v5754
    %5756 = vmatmul.f32.gmra.mxu0 %v3919
    %v5757 = vpop.f32.mrf.mxu0
    %v5758 = vadd.f32 %v5549, %v5757
    %5759 = vmatmul.f32.gmra.mxu0 %v3920
    %v5760 = vpop.f32.mrf.mxu0
    %v5761 = vadd.f32 %v5552, %v5760
    %5762 = vmatmul.f32.gmra.mxu0 %v3921
    %v5763 = vpop.f32.mrf.mxu0
    %v5764 = vadd.f32 %v5555, %v5763
    %5765 = vmatmul.f32.gmra.mxu0 %v3922
    %v5766 = vpop.f32.mrf.mxu0
    %v5767 = vadd.f32 %v5558, %v5766
    %5768 = vmatmul.f32.gmra.mxu0 %v3923
    %v5769 = vpop.f32.mrf.mxu0
    %v5770 = vadd.f32 %v5561, %v5769
    %5771 = vmatmul.f32.gmra.mxu0 %v3924
    %v5772 = vpop.f32.mrf.mxu0
    %v5773 = vadd.f32 %v5564, %v5772
    %5774 = vmatmul.f32.gmra.mxu0 %v3925
    %v5775 = vpop.f32.mrf.mxu0
    %v5776 = vadd.f32 %v5567, %v5775
    %5777 = vmatmul.f32.gmra.mxu0 %v3926
    %v5778 = vpop.f32.mrf.mxu0
    %v5779 = vadd.f32 %v5570, %v5778
    %5780 = vmatmul.f32.gmra.mxu0 %v3927
    %v5781 = vpop.f32.mrf.mxu0
    %v5782 = vadd.f32 %v5573, %v5781
    %5783 = vmatmul.f32.gmra.mxu0 %v3928
    %v5784 = vpop.f32.mrf.mxu0
    %v5785 = vadd.f32 %v5576, %v5784
    %5786 = vmatmul.f32.gmra.mxu0 %v3929
    %v5787 = vpop.f32.mrf.mxu0
    %v5788 = vadd.f32 %v5579, %v5787
    %5789 = vmatmul.f32.gmra.mxu0 %v3930
    %v5790 = vpop.f32.mrf.mxu0
    %v5791 = vadd.f32 %v5582, %v5790
    %5792 = vmatmul.f32.gmra.mxu0 %v3931
    %v5793 = vpop.f32.mrf.mxu0
    %v5794 = vadd.f32 %v5585, %v5793
    %5795 = vmatmul.f32.gmra.mxu0 %v3932
    %v5796 = vpop.f32.mrf.mxu0
    %v5797 = vadd.f32 %v5588, %v5796
    %5798 = vmatmul.f32.gmra.mxu0 %v3933
    %v5799 = vpop.f32.mrf.mxu0
    %v5800 = vadd.f32 %v5591, %v5799
    %5801 = vmatmul.f32.gmra.mxu0 %v3934
    %v5802 = vpop.f32.mrf.mxu0
    %v5803 = vadd.f32 %v5594, %v5802
    %5804 = vmatmul.f32.gmra.mxu0 %v3935
    %v5805 = vpop.f32.mrf.mxu0
    %v5806 = vadd.f32 %v5597, %v5805
    %5807 = vmatmul.f32.gmra.mxu0 %v3936
    %v5808 = vpop.f32.mrf.mxu0
    %v5809 = vadd.f32 %v5600, %v5808
    %5810 = vmatmul.f32.gmra.mxu0 %v3937
    %v5811 = vpop.f32.mrf.mxu0
    %v5812 = vadd.f32 %v5603, %v5811
    %5813 = vmatmul.f32.gmra.mxu0 %v3938
    %v5814 = vpop.f32.mrf.mxu0
    %v5815 = vadd.f32 %v5606, %v5814
    %5816 = vmatmul.f32.gmra.mxu0 %v3939
    %v5817 = vpop.f32.mrf.mxu0
    %v5818 = vadd.f32 %v5609, %v5817
    %5819 = vdwg.mxu0
    %5820 = vmatpush.msra.mxu0 %v4147
    %5821 = vmatpush.msra.mxu0 %v4146
    %5822 = vmatpush.msra.mxu0 %v4145
    %5823 = vmatpush.msra.mxu0 %v4144
    %5824 = vmatpush.msra.mxu0 %v4143
    %5825 = vmatpush.msra.mxu0 %v4142
    %5826 = vmatpush.msra.mxu0 %v4141
    %5827 = vmatpush.msra.mxu0 %v4140
    %5828 = vmatpush.msra.mxu0 %v4139
    %5829 = vmatpush.msra.mxu0 %v4138
    %5830 = vmatpush.msra.mxu0 %v4137
    %5831 = vmatpush.msra.mxu0 %v4136
    %5832 = vmatpush.msra.mxu0 %v4135
    %5833 = vmatpush.msra.mxu0 %v4134
    %5834 = vmatpush.msra.mxu0 %v4133
    %5835 = vmatpush.msra.mxu0 %v4132
    %5836 = vmatmul.f32.gmra.mxu0 %v3940
    %v5837 = vpop.f32.mrf.mxu0
    %v5838 = vadd.f32 %v5629, %v5837
    %5839 = vmatmul.f32.gmra.mxu0 %v3941
    %v5840 = vpop.f32.mrf.mxu0
    %v5841 = vadd.f32 %v5632, %v5840
    %5842 = vmatmul.f32.gmra.mxu0 %v3942
    %v5843 = vpop.f32.mrf.mxu0
    %v5844 = vadd.f32 %v5635, %v5843
    %5845 = vmatmul.f32.gmra.mxu0 %v3943
    %v5846 = vpop.f32.mrf.mxu0
    %v5847 = vadd.f32 %v5638, %v5846
    %5848 = vmatmul.f32.gmra.mxu0 %v3944
    %v5849 = vpop.f32.mrf.mxu0
    %v5850 = vadd.f32 %v5641, %v5849
    %5851 = vmatmul.f32.gmra.mxu0 %v3945
    %v5852 = vpop.f32.mrf.mxu0
    %v5853 = vadd.f32 %v5644, %v5852
    %5854 = vmatmul.f32.gmra.mxu0 %v3946
    %v5855 = vpop.f32.mrf.mxu0
    %v5856 = vadd.f32 %v5647, %v5855
    %5857 = vmatmul.f32.gmra.mxu0 %v3947
    %v5858 = vpop.f32.mrf.mxu0
    %v5859 = vadd.f32 %v5650, %v5858
    %5860 = vmatmul.f32.gmra.mxu0 %v3948
    %v5861 = vpop.f32.mrf.mxu0
    %v5862 = vadd.f32 %v5653, %v5861
    %5863 = vmatmul.f32.gmra.mxu0 %v3949
    %v5864 = vpop.f32.mrf.mxu0
    %v5865 = vadd.f32 %v5656, %v5864
    %5866 = vmatmul.f32.gmra.mxu0 %v3950
    %v5867 = vpop.f32.mrf.mxu0
    %v5868 = vadd.f32 %v5659, %v5867
    %5869 = vmatmul.f32.gmra.mxu0 %v3951
    %v5870 = vpop.f32.mrf.mxu0
    %v5871 = vadd.f32 %v5662, %v5870
    %5872 = vmatmul.f32.gmra.mxu0 %v3952
    %v5873 = vpop.f32.mrf.mxu0
    %v5874 = vadd.f32 %v5665, %v5873
    %5875 = vmatmul.f32.gmra.mxu0 %v3953
    %v5876 = vpop.f32.mrf.mxu0
    %v5877 = vadd.f32 %v5668, %v5876
    %5878 = vmatmul.f32.gmra.mxu0 %v3954
    %v5879 = vpop.f32.mrf.mxu0
    %v5880 = vadd.f32 %v5671, %v5879
    %5881 = vmatmul.f32.gmra.mxu0 %v3955
    %v5882 = vpop.f32.mrf.mxu0
    %v5883 = vadd.f32 %v5674, %v5882
    %5884 = vmatmul.f32.gmra.mxu0 %v3956
    %v5885 = vpop.f32.mrf.mxu0
    %v5886 = vadd.f32 %v5677, %v5885
    %5887 = vmatmul.f32.gmra.mxu0 %v3957
    %v5888 = vpop.f32.mrf.mxu0
    %v5889 = vadd.f32 %v5680, %v5888
    %5890 = vmatmul.f32.gmra.mxu0 %v3958
    %v5891 = vpop.f32.mrf.mxu0
    %v5892 = vadd.f32 %v5683, %v5891
    %5893 = vmatmul.f32.gmra.mxu0 %v3959
    %v5894 = vpop.f32.mrf.mxu0
    %v5895 = vadd.f32 %v5686, %v5894
    %5896 = vmatmul.f32.gmra.mxu0 %v3960
    %v5897 = vpop.f32.mrf.mxu0
    %v5898 = vadd.f32 %v5689, %v5897
    %5899 = vmatmul.f32.gmra.mxu0 %v3961
    %v5900 = vpop.f32.mrf.mxu0
    %v5901 = vadd.f32 %v5692, %v5900
    %5902 = vmatmul.f32.gmra.mxu0 %v3962
    %v5903 = vpop.f32.mrf.mxu0
    %v5904 = vadd.f32 %v5695, %v5903
    %5905 = vmatmul.f32.gmra.mxu0 %v3963
    %v5906 = vpop.f32.mrf.mxu0
    %v5907 = vadd.f32 %v5698, %v5906
    %5908 = vmatmul.f32.gmra.mxu0 %v3964
    %v5909 = vpop.f32.mrf.mxu0
    %v5910 = vadd.f32 %v5701, %v5909
    %5911 = vmatmul.f32.gmra.mxu0 %v3965
    %v5912 = vpop.f32.mrf.mxu0
    %v5913 = vadd.f32 %v5704, %v5912
    %5914 = vmatmul.f32.gmra.mxu0 %v3966
    %v5915 = vpop.f32.mrf.mxu0
    %v5916 = vadd.f32 %v5707, %v5915
    %5917 = vmatmul.f32.gmra.mxu0 %v3967
    %v5918 = vpop.f32.mrf.mxu0
    %v5919 = vadd.f32 %v5710, %v5918
    %5920 = vmatmul.f32.gmra.mxu0 %v3968
    %v5921 = vpop.f32.mrf.mxu0
    %v5922 = vadd.f32 %v5713, %v5921
    %5923 = vmatmul.f32.gmra.mxu0 %v3969
    %v5924 = vpop.f32.mrf.mxu0
    %v5925 = vadd.f32 %v5716, %v5924
    %5926 = vmatmul.f32.gmra.mxu0 %v3970
    %v5927 = vpop.f32.mrf.mxu0
    %v5928 = vadd.f32 %v5719, %v5927
    %5929 = vmatmul.f32.gmra.mxu0 %v3971
    %v5930 = vpop.f32.mrf.mxu0
    %v5931 = vadd.f32 %v5722, %v5930
    %5932 = vmatmul.f32.gmra.mxu0 %v3972
    %v5933 = vpop.f32.mrf.mxu0
    %v5934 = vadd.f32 %v5725, %v5933
    %5935 = vmatmul.f32.gmra.mxu0 %v3973
    %v5936 = vpop.f32.mrf.mxu0
    %v5937 = vadd.f32 %v5728, %v5936
    %5938 = vmatmul.f32.gmra.mxu0 %v3974
    %v5939 = vpop.f32.mrf.mxu0
    %v5940 = vadd.f32 %v5731, %v5939
    %5941 = vmatmul.f32.gmra.mxu0 %v3975
    %v5942 = vpop.f32.mrf.mxu0
    %v5943 = vadd.f32 %v5734, %v5942
    %5944 = vmatmul.f32.gmra.mxu0 %v3976
    %v5945 = vpop.f32.mrf.mxu0
    %v5946 = vadd.f32 %v5737, %v5945
    %5947 = vmatmul.f32.gmra.mxu0 %v3977
    %v5948 = vpop.f32.mrf.mxu0
    %v5949 = vadd.f32 %v5740, %v5948
    %5950 = vmatmul.f32.gmra.mxu0 %v3978
    %v5951 = vpop.f32.mrf.mxu0
    %v5952 = vadd.f32 %v5743, %v5951
    %5953 = vmatmul.f32.gmra.mxu0 %v3979
    %v5954 = vpop.f32.mrf.mxu0
    %v5955 = vadd.f32 %v5746, %v5954
    %5956 = vmatmul.f32.gmra.mxu0 %v3980
    %v5957 = vpop.f32.mrf.mxu0
    %v5958 = vadd.f32 %v5749, %v5957
    %5959 = vmatmul.f32.gmra.mxu0 %v3981
    %v5960 = vpop.f32.mrf.mxu0
    %v5961 = vadd.f32 %v5752, %v5960
    %5962 = vmatmul.f32.gmra.mxu0 %v3982
    %v5963 = vpop.f32.mrf.mxu0
    %v5964 = vadd.f32 %v5755, %v5963
    %5965 = vmatmul.f32.gmra.mxu0 %v3983
    %v5966 = vpop.f32.mrf.mxu0
    %v5967 = vadd.f32 %v5758, %v5966
    %5968 = vmatmul.f32.gmra.mxu0 %v3984
    %v5969 = vpop.f32.mrf.mxu0
    %v5970 = vadd.f32 %v5761, %v5969
    %5971 = vmatmul.f32.gmra.mxu0 %v3985
    %v5972 = vpop.f32.mrf.mxu0
    %v5973 = vadd.f32 %v5764, %v5972
    %5974 = vmatmul.f32.gmra.mxu0 %v3986
    %v5975 = vpop.f32.mrf.mxu0
    %v5976 = vadd.f32 %v5767, %v5975
    %5977 = vmatmul.f32.gmra.mxu0 %v3987
    %v5978 = vpop.f32.mrf.mxu0
    %v5979 = vadd.f32 %v5770, %v5978
    %5980 = vmatmul.f32.gmra.mxu0 %v3988
    %v5981 = vpop.f32.mrf.mxu0
    %v5982 = vadd.f32 %v5773, %v5981
    %5983 = vmatmul.f32.gmra.mxu0 %v3989
    %v5984 = vpop.f32.mrf.mxu0
    %v5985 = vadd.f32 %v5776, %v5984
    %5986 = vmatmul.f32.gmra.mxu0 %v3990
    %v5987 = vpop.f32.mrf.mxu0
    %v5988 = vadd.f32 %v5779, %v5987
    %5989 = vmatmul.f32.gmra.mxu0 %v3991
    %v5990 = vpop.f32.mrf.mxu0
    %v5991 = vadd.f32 %v5782, %v5990
    %5992 = vmatmul.f32.gmra.mxu0 %v3992
    %v5993 = vpop.f32.mrf.mxu0
    %v5994 = vadd.f32 %v5785, %v5993
    %5995 = vmatmul.f32.gmra.mxu0 %v3993
    %v5996 = vpop.f32.mrf.mxu0
    %v5997 = vadd.f32 %v5788, %v5996
    %5998 = vmatmul.f32.gmra.mxu0 %v3994
    %v5999 = vpop.f32.mrf.mxu0
    %v6000 = vadd.f32 %v5791, %v5999
    %6001 = vmatmul.f32.gmra.mxu0 %v3995
    %v6002 = vpop.f32.mrf.mxu0
    %v6003 = vadd.f32 %v5794, %v6002
    %6004 = vmatmul.f32.gmra.mxu0 %v3996
    %v6005 = vpop.f32.mrf.mxu0
    %v6006 = vadd.f32 %v5797, %v6005
    %6007 = vmatmul.f32.gmra.mxu0 %v3997
    %v6008 = vpop.f32.mrf.mxu0
    %v6009 = vadd.f32 %v5800, %v6008
    %6010 = vmatmul.f32.gmra.mxu0 %v3998
    %v6011 = vpop.f32.mrf.mxu0
    %v6012 = vadd.f32 %v5803, %v6011
    %6013 = vmatmul.f32.gmra.mxu0 %v3999
    %v6014 = vpop.f32.mrf.mxu0
    %v6015 = vadd.f32 %v5806, %v6014
    %6016 = vmatmul.f32.gmra.mxu0 %v4000
    %v6017 = vpop.f32.mrf.mxu0
    %v6018 = vadd.f32 %v5809, %v6017
    %6019 = vmatmul.f32.gmra.mxu0 %v4001
    %v6020 = vpop.f32.mrf.mxu0
    %v6021 = vadd.f32 %v5812, %v6020
    %6022 = vmatmul.f32.gmra.mxu0 %v4002
    %v6023 = vpop.f32.mrf.mxu0
    %v6024 = vadd.f32 %v5815, %v6023
    %6025 = vmatmul.f32.gmra.mxu0 %v4003
    %v6026 = vpop.f32.mrf.mxu0
    %v6027 = vadd.f32 %v5818, %v6026
    %6028 = vdwg.mxu0
    %v6029 = vld [vmem:[%s5] sm:$0x1]
    %v6030 = vld [vmem:[%s6] sm:$0x1]
    %v6031 = vadd.f32 %v5838, %v5841
    %v6032 = vadd.f32 %v6031, %v5844
    %v6033 = vadd.f32 %v6032, %v5847
    %v6034 = vadd.f32 %v6033, %v5850
    %v6035 = vadd.f32 %v6034, %v5853
    %v6036 = vadd.f32 %v6035, %v5856
    %v6037 = vadd.f32 %v6036, %v5859
    %v6038 = vadd.f32 %v6037, %v5862
    %v6039 = vadd.f32 %v6038, %v5865
    %v6040 = vadd.f32 %v6039, %v5868
    %v6041 = vadd.f32 %v6040, %v5871
    %v6042 = vadd.f32 %v6041, %v5874
    %v6043 = vadd.f32 %v6042, %v5877
    %v6044 = vadd.f32 %v6043, %v5880
    %v6045 = vadd.f32 %v6044, %v5883
    %v6046 = vadd.f32 %v6045, %v5886
    %v6047 = vadd.f32 %v6046, %v5889
    %v6048 = vadd.f32 %v6047, %v5892
    %v6049 = vadd.f32 %v6048, %v5895
    %v6050 = vadd.f32 %v6049, %v5898
    %v6051 = vadd.f32 %v6050, %v5901
    %v6052 = vadd.f32 %v6051, %v5904
    %v6053 = vadd.f32 %v6052, %v5907
    %v6054 = vadd.f32 %v6053, %v5910
    %v6055 = vadd.f32 %v6054, %v5913
    %v6056 = vadd.f32 %v6055, %v5916
    %v6057 = vadd.f32 %v6056, %v5919
    %v6058 = vadd.f32 %v6057, %v5922
    %v6059 = vadd.f32 %v6058, %v5925
    %v6060 = vadd.f32 %v6059, %v5928
    %v6061 = vadd.f32 %v6060, %v5931
    %v6062 = vadd.f32 %v6061, %v5934
    %v6063 = vadd.f32 %v6062, %v5937
    %v6064 = vadd.f32 %v6063, %v5940
    %v6065 = vadd.f32 %v6064, %v5943
    %v6066 = vadd.f32 %v6065, %v5946
    %v6067 = vadd.f32 %v6066, %v5949
    %v6068 = vadd.f32 %v6067, %v5952
    %v6069 = vadd.f32 %v6068, %v5955
    %v6070 = vadd.f32 %v6069, %v5958
    %v6071 = vadd.f32 %v6070, %v5961
    %v6072 = vadd.f32 %v6071, %v5964
    %v6073 = vadd.f32 %v6072, %v5967
    %v6074 = vadd.f32 %v6073, %v5970
    %v6075 = vadd.f32 %v6074, %v5973
    %v6076 = vadd.f32 %v6075, %v5976
    %v6077 = vadd.f32 %v6076, %v5979
    %v6078 = vadd.f32 %v6077, %v5982
    %v6079 = vadd.f32 %v6078, %v5985
    %v6080 = vadd.f32 %v6079, %v5988
    %v6081 = vadd.f32 %v6080, %v5991
    %v6082 = vadd.f32 %v6081, %v5994
    %v6083 = vadd.f32 %v6082, %v5997
    %v6084 = vadd.f32 %v6083, %v6000
    %v6085 = vadd.f32 %v6084, %v6003
    %v6086 = vadd.f32 %v6085, %v6006
    %v6087 = vadd.f32 %v6086, %v6009
    %v6088 = vadd.f32 %v6087, %v6012
    %v6089 = vadd.f32 %v6088, %v6015
    %v6090 = vadd.f32 %v6089, %v6018
    %v6091 = vadd.f32 %v6090, %v6021
    %v6092 = vadd.f32 %v6091, %v6024
    %v6093 = vadd.f32 %v6092, %v6027
    %v6094 = vrot.slane %v6093, 4
    %v6095 = vadd.f32 %v6093, %v6094
    %v6096 = vrot.slane %v6095, 2
    %v6097 = vadd.f32 %v6095, %v6096
    %v6098 = vrot.slane %v6097, 1
    %v6099 = vadd.f32 %v6097, %v6098
    %v6100 = vmul.f32 %v6099, 0.001953125
    %v6101 = vsub.f32 %v5838, %v6100
    %v6102 = vsub.f32 %v5841, %v6100
    %v6103 = vsub.f32 %v5844, %v6100
    %v6104 = vsub.f32 %v5847, %v6100
    %v6105 = vsub.f32 %v5850, %v6100
    %v6106 = vsub.f32 %v5853, %v6100
    %v6107 = vsub.f32 %v5856, %v6100
    %v6108 = vsub.f32 %v5859, %v6100
    %v6109 = vsub.f32 %v5862, %v6100
    %v6110 = vsub.f32 %v5865, %v6100
    %v6111 = vsub.f32 %v5868, %v6100
    %v6112 = vsub.f32 %v5871, %v6100
    %v6113 = vsub.f32 %v5874, %v6100
    %v6114 = vsub.f32 %v5877, %v6100
    %v6115 = vsub.f32 %v5880, %v6100
    %v6116 = vsub.f32 %v5883, %v6100
    %v6117 = vsub.f32 %v5886, %v6100
    %v6118 = vsub.f32 %v5889, %v6100
    %v6119 = vsub.f32 %v5892, %v6100
    %v6120 = vsub.f32 %v5895, %v6100
    %v6121 = vsub.f32 %v5898, %v6100
    %v6122 = vsub.f32 %v5901, %v6100
    %v6123 = vsub.f32 %v5904, %v6100
    %v6124 = vsub.f32 %v5907, %v6100
    %v6125 = vsub.f32 %v5910, %v6100
    %v6126 = vsub.f32 %v5913, %v6100
    %v6127 = vsub.f32 %v5916, %v6100
    %v6128 = vsub.f32 %v5919, %v6100
    %v6129 = vsub.f32 %v5922, %v6100
    %v6130 = vsub.f32 %v5925, %v6100
    %v6131 = vsub.f32 %v5928, %v6100
    %v6132 = vsub.f32 %v5931, %v6100
    %v6133 = vsub.f32 %v5934, %v6100
    %v6134 = vsub.f32 %v5937, %v6100
    %v6135 = vsub.f32 %v5940, %v6100
    %v6136 = vsub.f32 %v5943, %v6100
    %v6137 = vsub.f32 %v5946, %v6100
    %v6138 = vsub.f32 %v5949, %v6100
    %v6139 = vsub.f32 %v5952, %v6100
    %v6140 = vsub.f32 %v5955, %v6100
    %v6141 = vsub.f32 %v5958, %v6100
    %v6142 = vsub.f32 %v5961, %v6100
    %v6143 = vsub.f32 %v5964, %v6100
    %v6144 = vsub.f32 %v5967, %v6100
    %v6145 = vsub.f32 %v5970, %v6100
    %v6146 = vsub.f32 %v5973, %v6100
    %v6147 = vsub.f32 %v5976, %v6100
    %v6148 = vsub.f32 %v5979, %v6100
    %v6149 = vsub.f32 %v5982, %v6100
    %v6150 = vsub.f32 %v5985, %v6100
    %v6151 = vsub.f32 %v5988, %v6100
    %v6152 = vsub.f32 %v5991, %v6100
    %v6153 = vsub.f32 %v5994, %v6100
    %v6154 = vsub.f32 %v5997, %v6100
    %v6155 = vsub.f32 %v6000, %v6100
    %v6156 = vsub.f32 %v6003, %v6100
    %v6157 = vsub.f32 %v6006, %v6100
    %v6158 = vsub.f32 %v6009, %v6100
    %v6159 = vsub.f32 %v6012, %v6100
    %v6160 = vsub.f32 %v6015, %v6100
    %v6161 = vsub.f32 %v6018, %v6100
    %v6162 = vsub.f32 %v6021, %v6100
    %v6163 = vsub.f32 %v6024, %v6100
    %v6164 = vsub.f32 %v6027, %v6100
    %v6165 = vmul.f32 %v6101, %v6101
    %v6166 = vmul.f32 %v6102, %v6102
    %v6167 = vmul.f32 %v6103, %v6103
    %v6168 = vmul.f32 %v6104, %v6104
    %v6169 = vmul.f32 %v6105, %v6105
    %v6170 = vmul.f32 %v6106, %v6106
    %v6171 = vmul.f32 %v6107, %v6107
    %v6172 = vmul.f32 %v6108, %v6108
    %v6173 = vmul.f32 %v6109, %v6109
    %v6174 = vmul.f32 %v6110, %v6110
    %v6175 = vmul.f32 %v6111, %v6111
    %v6176 = vmul.f32 %v6112, %v6112
    %v6177 = vmul.f32 %v6113, %v6113
    %v6178 = vmul.f32 %v6114, %v6114
    %v6179 = vmul.f32 %v6115, %v6115
    %v6180 = vmul.f32 %v6116, %v6116
    %v6181 = vmul.f32 %v6117, %v6117
    %v6182 = vmul.f32 %v6118, %v6118
    %v6183 = vmul.f32 %v6119, %v6119
    %v6184 = vmul.f32 %v6120, %v6120
    %v6185 = vmul.f32 %v6121, %v6121
    %v6186 = vmul.f32 %v6122, %v6122
    %v6187 = vmul.f32 %v6123, %v6123
    %v6188 = vmul.f32 %v6124, %v6124
    %v6189 = vmul.f32 %v6125, %v6125
    %v6190 = vmul.f32 %v6126, %v6126
    %v6191 = vmul.f32 %v6127, %v6127
    %v6192 = vmul.f32 %v6128, %v6128
    %v6193 = vmul.f32 %v6129, %v6129
    %v6194 = vmul.f32 %v6130, %v6130
    %v6195 = vmul.f32 %v6131, %v6131
    %v6196 = vmul.f32 %v6132, %v6132
    %v6197 = vmul.f32 %v6133, %v6133
    %v6198 = vmul.f32 %v6134, %v6134
    %v6199 = vmul.f32 %v6135, %v6135
    %v6200 = vmul.f32 %v6136, %v6136
    %v6201 = vmul.f32 %v6137, %v6137
    %v6202 = vmul.f32 %v6138, %v6138
    %v6203 = vmul.f32 %v6139, %v6139
    %v6204 = vmul.f32 %v6140, %v6140
    %v6205 = vmul.f32 %v6141, %v6141
    %v6206 = vmul.f32 %v6142, %v6142
    %v6207 = vmul.f32 %v6143, %v6143
    %v6208 = vmul.f32 %v6144, %v6144
    %v6209 = vmul.f32 %v6145, %v6145
    %v6210 = vmul.f32 %v6146, %v6146
    %v6211 = vmul.f32 %v6147, %v6147
    %v6212 = vmul.f32 %v6148, %v6148
    %v6213 = vmul.f32 %v6149, %v6149
    %v6214 = vmul.f32 %v6150, %v6150
    %v6215 = vmul.f32 %v6151, %v6151
    %v6216 = vmul.f32 %v6152, %v6152
    %v6217 = vmul.f32 %v6153, %v6153
    %v6218 = vmul.f32 %v6154, %v6154
    %v6219 = vmul.f32 %v6155, %v6155
    %v6220 = vmul.f32 %v6156, %v6156
    %v6221 = vmul.f32 %v6157, %v6157
    %v6222 = vmul.f32 %v6158, %v6158
    %v6223 = vmul.f32 %v6159, %v6159
    %v6224 = vmul.f32 %v6160, %v6160
    %v6225 = vmul.f32 %v6161, %v6161
    %v6226 = vmul.f32 %v6162, %v6162
    %v6227 = vmul.f32 %v6163, %v6163
    %v6228 = vmul.f32 %v6164, %v6164
    %v6229 = vadd.f32 %v6165, %v6166
    %v6230 = vadd.f32 %v6229, %v6167
    %v6231 = vadd.f32 %v6230, %v6168
    %v6232 = vadd.f32 %v6231, %v6169
    %v6233 = vadd.f32 %v6232, %v6170
    %v6234 = vadd.f32 %v6233, %v6171
    %v6235 = vadd.f32 %v6234, %v6172
    %v6236 = vadd.f32 %v6235, %v6173
    %v6237 = vadd.f32 %v6236, %v6174
    %v6238 = vadd.f32 %v6237, %v6175
    %v6239 = vadd.f32 %v6238, %v6176
    %v6240 = vadd.f32 %v6239, %v6177
    %v6241 = vadd.f32 %v6240, %v6178
    %v6242 = vadd.f32 %v6241, %v6179
    %v6243 = vadd.f32 %v6242, %v6180
    %v6244 = vadd.f32 %v6243, %v6181
    %v6245 = vadd.f32 %v6244, %v6182
    %v6246 = vadd.f32 %v6245, %v6183
    %v6247 = vadd.f32 %v6246, %v6184
    %v6248 = vadd.f32 %v6247, %v6185
    %v6249 = vadd.f32 %v6248, %v6186
    %v6250 = vadd.f32 %v6249, %v6187
    %v6251 = vadd.f32 %v6250, %v6188
    %v6252 = vadd.f32 %v6251, %v6189
    %v6253 = vadd.f32 %v6252, %v6190
    %v6254 = vadd.f32 %v6253, %v6191
    %v6255 = vadd.f32 %v6254, %v6192
    %v6256 = vadd.f32 %v6255, %v6193
    %v6257 = vadd.f32 %v6256, %v6194
    %v6258 = vadd.f32 %v6257, %v6195
    %v6259 = vadd.f32 %v6258, %v6196
    %v6260 = vadd.f32 %v6259, %v6197
    %v6261 = vadd.f32 %v6260, %v6198
    %v6262 = vadd.f32 %v6261, %v6199
    %v6263 = vadd.f32 %v6262, %v6200
    %v6264 = vadd.f32 %v6263, %v6201
    %v6265 = vadd.f32 %v6264, %v6202
    %v6266 = vadd.f32 %v6265, %v6203
    %v6267 = vadd.f32 %v6266, %v6204
    %v6268 = vadd.f32 %v6267, %v6205
    %v6269 = vadd.f32 %v6268, %v6206
    %v6270 = vadd.f32 %v6269, %v6207
    %v6271 = vadd.f32 %v6270, %v6208
    %v6272 = vadd.f32 %v6271, %v6209
    %v6273 = vadd.f32 %v6272, %v6210
    %v6274 = vadd.f32 %v6273, %v6211
    %v6275 = vadd.f32 %v6274, %v6212
    %v6276 = vadd.f32 %v6275, %v6213
    %v6277 = vadd.f32 %v6276, %v6214
    %v6278 = vadd.f32 %v6277, %v6215
    %v6279 = vadd.f32 %v6278, %v6216
    %v6280 = vadd.f32 %v6279, %v6217
    %v6281 = vadd.f32 %v6280, %v6218
    %v6282 = vadd.f32 %v6281, %v6219
    %v6283 = vadd.f32 %v6282, %v6220
    %v6284 = vadd.f32 %v6283, %v6221
    %v6285 = vadd.f32 %v6284, %v6222
    %v6286 = vadd.f32 %v6285, %v6223
    %v6287 = vadd.f32 %v6286, %v6224
    %v6288 = vadd.f32 %v6287, %v6225
    %v6289 = vadd.f32 %v6288, %v6226
    %v6290 = vadd.f32 %v6289, %v6227
    %v6291 = vadd.f32 %v6290, %v6228
    %v6292 = vrot.slane %v6291, 4
    %v6293 = vadd.f32 %v6291, %v6292
    %v6294 = vrot.slane %v6293, 2
    %v6295 = vadd.f32 %v6293, %v6294
    %v6296 = vrot.slane %v6295, 1
    %v6297 = vadd.f32 %v6295, %v6296
    %v6298 = vmul.f32 %v6297, 0.001953125
    %v6299 = vadd.f32 %v6298, 1e-05
    %v6300 = vrsqrt.pop %v6299
    %v6301 = vmul.f32 %v6300, %v6299
    %v6302 = vmul.f32 %v6301, %v6300
    %v6303 = vmul.f32 0.5, %v6302
    %v6304 = vsub.f32 1.5, %v6303
    %v6305 = vmul.f32 %v6300, %v6304
    %vm6306 = vweird.f32 %v6299
    %vm6307 = vweird.f32 %v6300
    %vm6308 = vmor %vm6306, %vm6307
    %v6309 = vsel %vm6308, %v6300, %v6305
    %v6310 = vmul.f32 %v6029, %v6309
    %v6311 = vmul.f32 %v6100, %v6310
    %v6312 = vsub.f32 %v6030, %v6311
    %v6314 = vperm.slane %v6310, 0
    %v6316 = vmul.f32 %v5838, %v6314
    %v6317 = vmul.f32 %v5841, %v6314
    %v6318 = vmul.f32 %v5844, %v6314
    %v6319 = vmul.f32 %v5847, %v6314
    %v6320 = vmul.f32 %v5850, %v6314
    %v6321 = vmul.f32 %v5853, %v6314
    %v6322 = vmul.f32 %v5856, %v6314
    %v6323 = vmul.f32 %v5859, %v6314
    %v6324 = vmul.f32 %v5862, %v6314
    %v6325 = vmul.f32 %v5865, %v6314
    %v6326 = vmul.f32 %v5868, %v6314
    %v6327 = vmul.f32 %v5871, %v6314
    %v6328 = vmul.f32 %v5874, %v6314
    %v6329 = vmul.f32 %v5877, %v6314
    %v6330 = vmul.f32 %v5880, %v6314
    %v6331 = vmul.f32 %v5883, %v6314
    %v6332 = vmul.f32 %v5886, %v6314
    %v6333 = vmul.f32 %v5889, %v6314
    %v6334 = vmul.f32 %v5892, %v6314
    %v6335 = vmul.f32 %v5895, %v6314
    %v6336 = vmul.f32 %v5898, %v6314
    %v6337 = vmul.f32 %v5901, %v6314
    %v6338 = vmul.f32 %v5904, %v6314
    %v6339 = vmul.f32 %v5907, %v6314
    %v6340 = vmul.f32 %v5910, %v6314
    %v6341 = vmul.f32 %v5913, %v6314
    %v6342 = vmul.f32 %v5916, %v6314
    %v6343 = vmul.f32 %v5919, %v6314
    %v6344 = vmul.f32 %v5922, %v6314
    %v6345 = vmul.f32 %v5925, %v6314
    %v6346 = vmul.f32 %v5928, %v6314
    %v6347 = vmul.f32 %v5931, %v6314
    %v6348 = vmul.f32 %v5934, %v6314
    %v6349 = vmul.f32 %v5937, %v6314
    %v6350 = vmul.f32 %v5940, %v6314
    %v6351 = vmul.f32 %v5943, %v6314
    %v6352 = vmul.f32 %v5946, %v6314
    %v6353 = vmul.f32 %v5949, %v6314
    %v6354 = vmul.f32 %v5952, %v6314
    %v6355 = vmul.f32 %v5955, %v6314
    %v6356 = vmul.f32 %v5958, %v6314
    %v6357 = vmul.f32 %v5961, %v6314
    %v6358 = vmul.f32 %v5964, %v6314
    %v6359 = vmul.f32 %v5967, %v6314
    %v6360 = vmul.f32 %v5970, %v6314
    %v6361 = vmul.f32 %v5973, %v6314
    %v6362 = vmul.f32 %v5976, %v6314
    %v6363 = vmul.f32 %v5979, %v6314
    %v6364 = vmul.f32 %v5982, %v6314
    %v6365 = vmul.f32 %v5985, %v6314
    %v6366 = vmul.f32 %v5988, %v6314
    %v6367 = vmul.f32 %v5991, %v6314
    %v6368 = vmul.f32 %v5994, %v6314
    %v6369 = vmul.f32 %v5997, %v6314
    %v6370 = vmul.f32 %v6000, %v6314
    %v6371 = vmul.f32 %v6003, %v6314
    %v6372 = vmul.f32 %v6006, %v6314
    %v6373 = vmul.f32 %v6009, %v6314
    %v6374 = vmul.f32 %v6012, %v6314
    %v6375 = vmul.f32 %v6015, %v6314
    %v6376 = vmul.f32 %v6018, %v6314
    %v6377 = vmul.f32 %v6021, %v6314
    %v6378 = vmul.f32 %v6024, %v6314
    %v6379 = vmul.f32 %v6027, %v6314
    %v6381 = vperm.slane %v6312, 0
    %v6383 = vadd.f32 %v6316, %v6381
    %v6384 = vadd.f32 %v6317, %v6381
    %v6385 = vadd.f32 %v6318, %v6381
    %v6386 = vadd.f32 %v6319, %v6381
    %v6387 = vadd.f32 %v6320, %v6381
    %v6388 = vadd.f32 %v6321, %v6381
    %v6389 = vadd.f32 %v6322, %v6381
    %v6390 = vadd.f32 %v6323, %v6381
    %v6391 = vadd.f32 %v6324, %v6381
    %v6392 = vadd.f32 %v6325, %v6381
    %v6393 = vadd.f32 %v6326, %v6381
    %v6394 = vadd.f32 %v6327, %v6381
    %v6395 = vadd.f32 %v6328, %v6381
    %v6396 = vadd.f32 %v6329, %v6381
    %v6397 = vadd.f32 %v6330, %v6381
    %v6398 = vadd.f32 %v6331, %v6381
    %v6399 = vadd.f32 %v6332, %v6381
    %v6400 = vadd.f32 %v6333, %v6381
    %v6401 = vadd.f32 %v6334, %v6381
    %v6402 = vadd.f32 %v6335, %v6381
    %v6403 = vadd.f32 %v6336, %v6381
    %v6404 = vadd.f32 %v6337, %v6381
    %v6405 = vadd.f32 %v6338, %v6381
    %v6406 = vadd.f32 %v6339, %v6381
    %v6407 = vadd.f32 %v6340, %v6381
    %v6408 = vadd.f32 %v6341, %v6381
    %v6409 = vadd.f32 %v6342, %v6381
    %v6410 = vadd.f32 %v6343, %v6381
    %v6411 = vadd.f32 %v6344, %v6381
    %v6412 = vadd.f32 %v6345, %v6381
    %v6413 = vadd.f32 %v6346, %v6381
    %v6414 = vadd.f32 %v6347, %v6381
    %v6415 = vadd.f32 %v6348, %v6381
    %v6416 = vadd.f32 %v6349, %v6381
    %v6417 = vadd.f32 %v6350, %v6381
    %v6418 = vadd.f32 %v6351, %v6381
    %v6419 = vadd.f32 %v6352, %v6381
    %v6420 = vadd.f32 %v6353, %v6381
    %v6421 = vadd.f32 %v6354, %v6381
    %v6422 = vadd.f32 %v6355, %v6381
    %v6423 = vadd.f32 %v6356, %v6381
    %v6424 = vadd.f32 %v6357, %v6381
    %v6425 = vadd.f32 %v6358, %v6381
    %v6426 = vadd.f32 %v6359, %v6381
    %v6427 = vadd.f32 %v6360, %v6381
    %v6428 = vadd.f32 %v6361, %v6381
    %v6429 = vadd.f32 %v6362, %v6381
    %v6430 = vadd.f32 %v6363, %v6381
    %v6431 = vadd.f32 %v6364, %v6381
    %v6432 = vadd.f32 %v6365, %v6381
    %v6433 = vadd.f32 %v6366, %v6381
    %v6434 = vadd.f32 %v6367, %v6381
    %v6435 = vadd.f32 %v6368, %v6381
    %v6436 = vadd.f32 %v6369, %v6381
    %v6437 = vadd.f32 %v6370, %v6381
    %v6438 = vadd.f32 %v6371, %v6381
    %v6439 = vadd.f32 %v6372, %v6381
    %v6440 = vadd.f32 %v6373, %v6381
    %v6441 = vadd.f32 %v6374, %v6381
    %v6442 = vadd.f32 %v6375, %v6381
    %v6443 = vadd.f32 %v6376, %v6381
    %v6444 = vadd.f32 %v6377, %v6381
    %v6445 = vadd.f32 %v6378, %v6381
    %v6446 = vadd.f32 %v6379, %v6381
    %v6447 = vld [vmem:[#allocation3] sm:$0xff]
    %v6448 = vld [vmem:[#allocation3 + $0x8] sm:$0xff]
    %v6449 = vld [vmem:[#allocation3 + $0x10] sm:$0xff]
    %v6450 = vld [vmem:[#allocation3 + $0x18] sm:$0xff]
    %v6451 = vld [vmem:[#allocation3 + $0x20] sm:$0xff]
    %v6452 = vld [vmem:[#allocation3 + $0x28] sm:$0xff]
    %v6453 = vld [vmem:[#allocation3 + $0x30] sm:$0xff]
    %v6454 = vld [vmem:[#allocation3 + $0x38] sm:$0xff]
    %v6455 = vld [vmem:[#allocation3 + $0x40] sm:$0xff]
    %v6456 = vld [vmem:[#allocation3 + $0x48] sm:$0xff]
    %v6457 = vld [vmem:[#allocation3 + $0x50] sm:$0xff]
    %v6458 = vld [vmem:[#allocation3 + $0x58] sm:$0xff]
    %v6459 = vld [vmem:[#allocation3 + $0x60] sm:$0xff]
    %v6460 = vld [vmem:[#allocation3 + $0x68] sm:$0xff]
    %v6461 = vld [vmem:[#allocation3 + $0x70] sm:$0xff]
    %v6462 = vld [vmem:[#allocation3 + $0x78] sm:$0xff]
    %v6463 = vld [vmem:[#allocation3 + $0x80] sm:$0xff]
    %v6464 = vld [vmem:[#allocation3 + $0x88] sm:$0xff]
    %v6465 = vld [vmem:[#allocation3 + $0x90] sm:$0xff]
    %v6466 = vld [vmem:[#allocation3 + $0x98] sm:$0xff]
    %v6467 = vld [vmem:[#allocation3 + $0xa0] sm:$0xff]
    %v6468 = vld [vmem:[#allocation3 + $0xa8] sm:$0xff]
    %v6469 = vld [vmem:[#allocation3 + $0xb0] sm:$0xff]
    %v6470 = vld [vmem:[#allocation3 + $0xb8] sm:$0xff]
    %v6471 = vld [vmem:[#allocation3 + $0xc0] sm:$0xff]
    %v6472 = vld [vmem:[#allocation3 + $0xc8] sm:$0xff]
    %v6473 = vld [vmem:[#allocation3 + $0xd0] sm:$0xff]
    %v6474 = vld [vmem:[#allocation3 + $0xd8] sm:$0xff]
    %v6475 = vld [vmem:[#allocation3 + $0xe0] sm:$0xff]
    %v6476 = vld [vmem:[#allocation3 + $0xe8] sm:$0xff]
    %v6477 = vld [vmem:[#allocation3 + $0xf0] sm:$0xff]
    %v6478 = vld [vmem:[#allocation3 + $0xf8] sm:$0xff]
    %v6479 = vld [vmem:[#allocation3 + $0x100] sm:$0xff]
    %v6480 = vld [vmem:[#allocation3 + $0x108] sm:$0xff]
    %v6481 = vld [vmem:[#allocation3 + $0x110] sm:$0xff]
    %v6482 = vld [vmem:[#allocation3 + $0x118] sm:$0xff]
    %v6483 = vld [vmem:[#allocation3 + $0x120] sm:$0xff]
    %v6484 = vld [vmem:[#allocation3 + $0x128] sm:$0xff]
    %v6485 = vld [vmem:[#allocation3 + $0x130] sm:$0xff]
    %v6486 = vld [vmem:[#allocation3 + $0x138] sm:$0xff]
    %v6487 = vld [vmem:[#allocation3 + $0x140] sm:$0xff]
    %v6488 = vld [vmem:[#allocation3 + $0x148] sm:$0xff]
    %v6489 = vld [vmem:[#allocation3 + $0x150] sm:$0xff]
    %v6490 = vld [vmem:[#allocation3 + $0x158] sm:$0xff]
    %v6491 = vld [vmem:[#allocation3 + $0x160] sm:$0xff]
    %v6492 = vld [vmem:[#allocation3 + $0x168] sm:$0xff]
    %v6493 = vld [vmem:[#allocation3 + $0x170] sm:$0xff]
    %v6494 = vld [vmem:[#allocation3 + $0x178] sm:$0xff]
    %v6495 = vld [vmem:[#allocation3 + $0x180] sm:$0xff]
    %v6496 = vld [vmem:[#allocation3 + $0x188] sm:$0xff]
    %v6497 = vld [vmem:[#allocation3 + $0x190] sm:$0xff]
    %v6498 = vld [vmem:[#allocation3 + $0x198] sm:$0xff]
    %v6499 = vld [vmem:[#allocation3 + $0x1a0] sm:$0xff]
    %v6500 = vld [vmem:[#allocation3 + $0x1a8] sm:$0xff]
    %v6501 = vld [vmem:[#allocation3 + $0x1b0] sm:$0xff]
    %v6502 = vld [vmem:[#allocation3 + $0x1b8] sm:$0xff]
    %v6503 = vld [vmem:[#allocation3 + $0x1c0] sm:$0xff]
    %v6504 = vld [vmem:[#allocation3 + $0x1c8] sm:$0xff]
    %v6505 = vld [vmem:[#allocation3 + $0x1d0] sm:$0xff]
    %v6506 = vld [vmem:[#allocation3 + $0x1d8] sm:$0xff]
    %v6507 = vld [vmem:[#allocation3 + $0x1e0] sm:$0xff]
    %v6508 = vld [vmem:[#allocation3 + $0x1e8] sm:$0xff]
    %v6509 = vld [vmem:[#allocation3 + $0x1f0] sm:$0xff]
    %v6510 = vld [vmem:[#allocation3 + $0x1f8] sm:$0xff]
    %v6511 = vadd.f32 %v6383, %v6447
    %v6512 = vadd.f32 %v6384, %v6448
    %v6513 = vadd.f32 %v6385, %v6449
    %v6514 = vadd.f32 %v6386, %v6450
    %v6515 = vadd.f32 %v6387, %v6451
    %v6516 = vadd.f32 %v6388, %v6452
    %v6517 = vadd.f32 %v6389, %v6453
    %v6518 = vadd.f32 %v6390, %v6454
    %v6519 = vadd.f32 %v6391, %v6455
    %v6520 = vadd.f32 %v6392, %v6456
    %v6521 = vadd.f32 %v6393, %v6457
    %v6522 = vadd.f32 %v6394, %v6458
    %v6523 = vadd.f32 %v6395, %v6459
    %v6524 = vadd.f32 %v6396, %v6460
    %v6525 = vadd.f32 %v6397, %v6461
    %v6526 = vadd.f32 %v6398, %v6462
    %v6527 = vadd.f32 %v6399, %v6463
    %v6528 = vadd.f32 %v6400, %v6464
    %v6529 = vadd.f32 %v6401, %v6465
    %v6530 = vadd.f32 %v6402, %v6466
    %v6531 = vadd.f32 %v6403, %v6467
    %v6532 = vadd.f32 %v6404, %v6468
    %v6533 = vadd.f32 %v6405, %v6469
    %v6534 = vadd.f32 %v6406, %v6470
    %v6535 = vadd.f32 %v6407, %v6471
    %v6536 = vadd.f32 %v6408, %v6472
    %v6537 = vadd.f32 %v6409, %v6473
    %v6538 = vadd.f32 %v6410, %v6474
    %v6539 = vadd.f32 %v6411, %v6475
    %v6540 = vadd.f32 %v6412, %v6476
    %v6541 = vadd.f32 %v6413, %v6477
    %v6542 = vadd.f32 %v6414, %v6478
    %v6543 = vadd.f32 %v6415, %v6479
    %v6544 = vadd.f32 %v6416, %v6480
    %v6545 = vadd.f32 %v6417, %v6481
    %v6546 = vadd.f32 %v6418, %v6482
    %v6547 = vadd.f32 %v6419, %v6483
    %v6548 = vadd.f32 %v6420, %v6484
    %v6549 = vadd.f32 %v6421, %v6485
    %v6550 = vadd.f32 %v6422, %v6486
    %v6551 = vadd.f32 %v6423, %v6487
    %v6552 = vadd.f32 %v6424, %v6488
    %v6553 = vadd.f32 %v6425, %v6489
    %v6554 = vadd.f32 %v6426, %v6490
    %v6555 = vadd.f32 %v6427, %v6491
    %v6556 = vadd.f32 %v6428, %v6492
    %v6557 = vadd.f32 %v6429, %v6493
    %v6558 = vadd.f32 %v6430, %v6494
    %v6559 = vadd.f32 %v6431, %v6495
    %v6560 = vadd.f32 %v6432, %v6496
    %v6561 = vadd.f32 %v6433, %v6497
    %v6562 = vadd.f32 %v6434, %v6498
    %v6563 = vadd.f32 %v6435, %v6499
    %v6564 = vadd.f32 %v6436, %v6500
    %v6565 = vadd.f32 %v6437, %v6501
    %v6566 = vadd.f32 %v6438, %v6502
    %v6567 = vadd.f32 %v6439, %v6503
    %v6568 = vadd.f32 %v6440, %v6504
    %v6569 = vadd.f32 %v6441, %v6505
    %v6570 = vadd.f32 %v6442, %v6506
    %v6571 = vadd.f32 %v6443, %v6507
    %v6572 = vadd.f32 %v6444, %v6508
    %v6573 = vadd.f32 %v6445, %v6509
    %v6574 = vadd.f32 %v6446, %v6510
    %v6575 = vmax.f32 %v6511, 0.0
    %v6576 = vmax.f32 %v6512, 0.0
    %v6577 = vmax.f32 %v6513, 0.0
    %v6578 = vmax.f32 %v6514, 0.0
    %v6579 = vmax.f32 %v6515, 0.0
    %v6580 = vmax.f32 %v6516, 0.0
    %v6581 = vmax.f32 %v6517, 0.0
    %v6582 = vmax.f32 %v6518, 0.0
    %v6583 = vmax.f32 %v6519, 0.0
    %v6584 = vmax.f32 %v6520, 0.0
    %v6585 = vmax.f32 %v6521, 0.0
    %v6586 = vmax.f32 %v6522, 0.0
    %v6587 = vmax.f32 %v6523, 0.0
    %v6588 = vmax.f32 %v6524, 0.0
    %v6589 = vmax.f32 %v6525, 0.0
    %v6590 = vmax.f32 %v6526, 0.0
    %v6591 = vmax.f32 %v6527, 0.0
    %v6592 = vmax.f32 %v6528, 0.0
    %v6593 = vmax.f32 %v6529, 0.0
    %v6594 = vmax.f32 %v6530, 0.0
    %v6595 = vmax.f32 %v6531, 0.0
    %v6596 = vmax.f32 %v6532, 0.0
    %v6597 = vmax.f32 %v6533, 0.0
    %v6598 = vmax.f32 %v6534, 0.0
    %v6599 = vmax.f32 %v6535, 0.0
    %v6600 = vmax.f32 %v6536, 0.0
    %v6601 = vmax.f32 %v6537, 0.0
    %v6602 = vmax.f32 %v6538, 0.0
    %v6603 = vmax.f32 %v6539, 0.0
    %v6604 = vmax.f32 %v6540, 0.0
    %v6605 = vmax.f32 %v6541, 0.0
    %v6606 = vmax.f32 %v6542, 0.0
    %v6607 = vmax.f32 %v6543, 0.0
    %v6608 = vmax.f32 %v6544, 0.0
    %v6609 = vmax.f32 %v6545, 0.0
    %v6610 = vmax.f32 %v6546, 0.0
    %v6611 = vmax.f32 %v6547, 0.0
    %v6612 = vmax.f32 %v6548, 0.0
    %v6613 = vmax.f32 %v6549, 0.0
    %v6614 = vmax.f32 %v6550, 0.0
    %v6615 = vmax.f32 %v6551, 0.0
    %v6616 = vmax.f32 %v6552, 0.0
    %v6617 = vmax.f32 %v6553, 0.0
    %v6618 = vmax.f32 %v6554, 0.0
    %v6619 = vmax.f32 %v6555, 0.0
    %v6620 = vmax.f32 %v6556, 0.0
    %v6621 = vmax.f32 %v6557, 0.0
    %v6622 = vmax.f32 %v6558, 0.0
    %v6623 = vmax.f32 %v6559, 0.0
    %v6624 = vmax.f32 %v6560, 0.0
    %v6625 = vmax.f32 %v6561, 0.0
    %v6626 = vmax.f32 %v6562, 0.0
    %v6627 = vmax.f32 %v6563, 0.0
    %v6628 = vmax.f32 %v6564, 0.0
    %v6629 = vmax.f32 %v6565, 0.0
    %v6630 = vmax.f32 %v6566, 0.0
    %v6631 = vmax.f32 %v6567, 0.0
    %v6632 = vmax.f32 %v6568, 0.0
    %v6633 = vmax.f32 %v6569, 0.0
    %v6634 = vmax.f32 %v6570, 0.0
    %v6635 = vmax.f32 %v6571, 0.0
    %v6636 = vmax.f32 %v6572, 0.0
    %v6637 = vmax.f32 %v6573, 0.0
    %v6638 = vmax.f32 %v6574, 0.0
    %6639 = vst [vmem:[#allocation9] sm:$0xff] %v6575
    %6640 = vst [vmem:[#allocation9 + $0x8] sm:$0xff] %v6576
    %6641 = vst [vmem:[#allocation9 + $0x10] sm:$0xff] %v6577
    %6642 = vst [vmem:[#allocation9 + $0x18] sm:$0xff] %v6578
    %6643 = vst [vmem:[#allocation9 + $0x20] sm:$0xff] %v6579
    %6644 = vst [vmem:[#allocation9 + $0x28] sm:$0xff] %v6580
    %6645 = vst [vmem:[#allocation9 + $0x30] sm:$0xff] %v6581
    %6646 = vst [vmem:[#allocation9 + $0x38] sm:$0xff] %v6582
    %6647 = vst [vmem:[#allocation9 + $0x40] sm:$0xff] %v6583
    %6648 = vst [vmem:[#allocation9 + $0x48] sm:$0xff] %v6584
    %6649 = vst [vmem:[#allocation9 + $0x50] sm:$0xff] %v6585
    %6650 = vst [vmem:[#allocation9 + $0x58] sm:$0xff] %v6586
    %6651 = vst [vmem:[#allocation9 + $0x60] sm:$0xff] %v6587
    %6652 = vst [vmem:[#allocation9 + $0x68] sm:$0xff] %v6588
    %6653 = vst [vmem:[#allocation9 + $0x70] sm:$0xff] %v6589
    %6654 = vst [vmem:[#allocation9 + $0x78] sm:$0xff] %v6590
    %6655 = vst [vmem:[#allocation9 + $0x80] sm:$0xff] %v6591
    %6656 = vst [vmem:[#allocation9 + $0x88] sm:$0xff] %v6592
    %6657 = vst [vmem:[#allocation9 + $0x90] sm:$0xff] %v6593
    %6658 = vst [vmem:[#allocation9 + $0x98] sm:$0xff] %v6594
    %6659 = vst [vmem:[#allocation9 + $0xa0] sm:$0xff] %v6595
    %6660 = vst [vmem:[#allocation9 + $0xa8] sm:$0xff] %v6596
    %6661 = vst [vmem:[#allocation9 + $0xb0] sm:$0xff] %v6597
    %6662 = vst [vmem:[#allocation9 + $0xb8] sm:$0xff] %v6598
    %6663 = vst [vmem:[#allocation9 + $0xc0] sm:$0xff] %v6599
    %6664 = vst [vmem:[#allocation9 + $0xc8] sm:$0xff] %v6600
    %6665 = vst [vmem:[#allocation9 + $0xd0] sm:$0xff] %v6601
    %6666 = vst [vmem:[#allocation9 + $0xd8] sm:$0xff] %v6602
    %6667 = vst [vmem:[#allocation9 + $0xe0] sm:$0xff] %v6603
    %6668 = vst [vmem:[#allocation9 + $0xe8] sm:$0xff] %v6604
    %6669 = vst [vmem:[#allocation9 + $0xf0] sm:$0xff] %v6605
    %6670 = vst [vmem:[#allocation9 + $0xf8] sm:$0xff] %v6606
    %6671 = vst [vmem:[#allocation9 + $0x100] sm:$0xff] %v6607
    %6672 = vst [vmem:[#allocation9 + $0x108] sm:$0xff] %v6608
    %6673 = vst [vmem:[#allocation9 + $0x110] sm:$0xff] %v6609
    %6674 = vst [vmem:[#allocation9 + $0x118] sm:$0xff] %v6610
    %6675 = vst [vmem:[#allocation9 + $0x120] sm:$0xff] %v6611
    %6676 = vst [vmem:[#allocation9 + $0x128] sm:$0xff] %v6612
    %6677 = vst [vmem:[#allocation9 + $0x130] sm:$0xff] %v6613
    %6678 = vst [vmem:[#allocation9 + $0x138] sm:$0xff] %v6614
    %6679 = vst [vmem:[#allocation9 + $0x140] sm:$0xff] %v6615
    %6680 = vst [vmem:[#allocation9 + $0x148] sm:$0xff] %v6616
    %6681 = vst [vmem:[#allocation9 + $0x150] sm:$0xff] %v6617
    %6682 = vst [vmem:[#allocation9 + $0x158] sm:$0xff] %v6618
    %6683 = vst [vmem:[#allocation9 + $0x160] sm:$0xff] %v6619
    %6684 = vst [vmem:[#allocation9 + $0x168] sm:$0xff] %v6620
    %6685 = vst [vmem:[#allocation9 + $0x170] sm:$0xff] %v6621
    %6686 = vst [vmem:[#allocation9 + $0x178] sm:$0xff] %v6622
    %6687 = vst [vmem:[#allocation9 + $0x180] sm:$0xff] %v6623
    %6688 = vst [vmem:[#allocation9 + $0x188] sm:$0xff] %v6624
    %6689 = vst [vmem:[#allocation9 + $0x190] sm:$0xff] %v6625
    %6690 = vst [vmem:[#allocation9 + $0x198] sm:$0xff] %v6626
    %6691 = vst [vmem:[#allocation9 + $0x1a0] sm:$0xff] %v6627
    %6692 = vst [vmem:[#allocation9 + $0x1a8] sm:$0xff] %v6628
    %6693 = vst [vmem:[#allocation9 + $0x1b0] sm:$0xff] %v6629
    %6694 = vst [vmem:[#allocation9 + $0x1b8] sm:$0xff] %v6630
    %6695 = vst [vmem:[#allocation9 + $0x1c0] sm:$0xff] %v6631
    %6696 = vst [vmem:[#allocation9 + $0x1c8] sm:$0xff] %v6632
    %6697 = vst [vmem:[#allocation9 + $0x1d0] sm:$0xff] %v6633
    %6698 = vst [vmem:[#allocation9 + $0x1d8] sm:$0xff] %v6634
    %6699 = vst [vmem:[#allocation9 + $0x1e0] sm:$0xff] %v6635
    %6700 = vst [vmem:[#allocation9 + $0x1e8] sm:$0xff] %v6636
    %6701 = vst [vmem:[#allocation9 + $0x1f0] sm:$0xff] %v6637
    %6702 = vst [vmem:[#allocation9 + $0x1f8] sm:$0xff] %v6638
    // Predicated region
    $region42: #{tpu_custom_call.1} parent=1 // pred_check
      _
    $region43: #{tpu_custom_call.1} parent=1 // pred_check_branch
      %6704 = sbr.rel (0) target = $region45
    $region44: #{tpu_custom_call.1} parent=1 // pred_region
      %6706 = vsyncadd [#allocation5], 0
      %s6707 = sshll.u32 [#allocation9], 4
      %s6708 = int_to_ptr.vmem [resolvable:$true] %s6707
      %s6709 = sshll.u32 %s7, 4
      %s6710 = int_to_ptr.hbm [resolvable:$true] %s6709
      %6715 = dma.vmem_to_hbm [thread:$0]  %s6708, 8192, %s6710, [#allocation5], 128, 128, 8
    $region45: #{tpu_custom_call.1} parent=1 // pred_fallthru
      _
    // Predicated region
    $region46: #{tpu_custom_call.1} parent=1 // pred_check
      _
    $region47: #{tpu_custom_call.1} parent=1 // pred_check_branch
      %6717 = sbr.rel (0) target = $region49
    $region48: #{tpu_custom_call.1} parent=1 // pred_region
      %6719 = dma.done [#allocation5], 8192
    $region49: #{tpu_custom_call.1} parent=1 // pred_fallthru
      _
    %6720 = vsyncpa [#allocation4], 1
    %6721 = vsyncpa [#allocation7], 1
    %6722 = vsyncpa [#allocation5], 1

</llo_original>
